<compile_context>
chip_gen: v6e
topology: v6e:2x2x1
jax: 0.10.0
libtpu: 0.0.40
codegen_flags: <defaults>
</compile_context>

<pallas_src>
import functools

import jax
import jax.numpy as jnp
from jax.experimental import pallas as pl
from jax.experimental.pallas import tpu as pltpu

K = 7      # depthwise kernel size
PAD = 3    # padding for the 7x7 "same" conv


def _round_up(x, m):
    return ((x + m - 1) // m) * m


def _pick_images_per_step(n):
    """Largest divisor nb of n with n // nb >= 2 (amortize per-step overhead,
    keep >= 2 parallel grid steps so both v7x TensorCores get work)."""
    if n <= 2:
        return 1
    for nb in range(n // 2, 0, -1):
        if n % nb == 0:
            return nb
    return 1


def _erf(x):
    """Abramowitz & Stegun 7.1.26 (|abs err| <= 1.5e-7): exact-GELU fidelity
    using only ops guaranteed to lower in Mosaic (mul/add/exp/div/select)."""
    a1, a2, a3, a4, a5 = (0.254829592, -0.284496736, 1.421413741,
                          -1.453152027, 1.061405429)
    p = 0.3275911
    ax = jnp.abs(x)
    t = 1.0 / (1.0 + p * ax)
    poly = ((((a5 * t + a4) * t + a3) * t + a2) * t + a1) * t
    y = 1.0 - poly * jnp.exp(-ax * ax)
    return jnp.where(x >= 0.0, y, -y)


def _stage_kernel(x_ref, dwp_ref, cmp_ref, dmp_ref, out_ref, xp_ref, *, W, LPAD):
    """Fused forward of `depth` ConvNeXtV2 blocks for a block of images.

    Working layout is channel-major fused-spatial: activations are (C, H*W)
    with the lane axis = H*W.  Packed params per block b:
      dwp_ref[b] : (C, K*K+1)   columns: 49 depthwise taps | depthwise bias
      cmp_ref[b] : (C, 4C+3)    columns: pw2_w^T | ln_w | ln_b | pw2_b
      dmp_ref[b] : (4C, C+3)    columns: pw1_w^T | pw1_b | grn_g | grn_b
    """
    depth = dwp_ref.shape[0]
    Nb, C, HW = x_ref.shape
    C4 = dmp_ref.shape[1]
    KK = K * K
    TOT = xp_ref.shape[1]

    # Zero only the halo regions once per grid step; the interior is rewritten
    # for every block/image.  The left/right zero halos also cover the vertical
    # (H) boundary in the fused H*W index space.
    xp_ref[:, :LPAD] = jnp.zeros((C, LPAD), jnp.float32)
    xp_ref[:, LPAD + HW:TOT] = jnp.zeros((C, TOT - LPAD - HW), jnp.float32)

    # Per-lane pixel column index (function of W only; shared everywhere).
    wcol = jax.lax.broadcasted_iota(jnp.int32, (C, HW), 1) % W

    inv_sqrt2 = 0.7071067811865476

    for n in range(Nb):
        x = x_ref[n]                                       # (C, HW) block input
        for b in range(depth):
            dw = dwp_ref[b]                                # (C, K*K+1)
            cm = cmp_ref[b]                                # (C, 4C+3)
            dm = dmp_ref[b]                                # (4C, C+3)

            # ---- 7x7 depthwise conv: dense lane-shifted slices straight from
            # the zero-halo scratch; outer-kx so the wrap mask is applied once
            # per column offset instead of once per tap. -----------------------
            xp_ref[:, LPAD:LPAD + HW] = x                  # lane-aligned write
            acc = jnp.zeros((C, HW), jnp.float32)
            for kx in range(K):
                ox = kx - PAD
                col = jnp.zeros((C, HW), jnp.float32)
                for ky in range(K):
                    s = LPAD + (ky - PAD) * W + ox
                    tap = dw[:, ky * K + kx:ky * K + kx + 1]     # (C, 1)
                    col = col + xp_ref[:, s:s + HW] * tap
                if ox < 0:                                  # zero row-wrapped px
                    col = jnp.where(wcol >= -ox, col, 0.0)
                elif ox > 0:
                    col = jnp.where(wcol < W - ox, col, 0.0)
                acc = acc + col
            acc = acc + dw[:, KK:KK + 1]                    # depthwise bias

            # ---- LayerNorm over channels (sublane axis), eps=1e-6,
            # one-pass variance E[x^2] - mean^2. --------------------------------
            mean = jnp.mean(acc, axis=0, keepdims=True)
            m2 = jnp.mean(acc * acc, axis=0, keepdims=True)
            inv = jax.lax.rsqrt(m2 - mean * mean + 1e-6)
            xn = (acc - mean) * inv
            xn = xn * cm[:, C4:C4 + 1] + cm[:, C4 + 1:C4 + 2]

            # ---- pwconv1 (C -> 4C) on the MXU + exact GELU --------------------
            h = jnp.dot(dm[:, :C], xn,
                        preferred_element_type=jnp.float32,
                        precision=jax.lax.Precision.HIGHEST)
            h = h + dm[:, C:C + 1]                          # pw1 bias
            h = 0.5 * h * (1.0 + _erf(h * inv_sqrt2))

            # ---- GRN: L2 over spatial (lane) axis, exact scalar divide --------
            gx = jnp.sqrt(jnp.sum(h * h, axis=1, keepdims=True))   # (4C, 1)
            mu = jnp.mean(gx, axis=0, keepdims=True)                # (1, 1)
            nx = gx / (mu + 1e-6)
            h = dm[:, C + 1:C + 2] * (h * nx) + dm[:, C + 2:C + 3] + h

            # ---- pwconv2 (4C -> C) on the MXU + residual ----------------------
            y = jnp.dot(cm[:, :C4], h,
                        preferred_element_type=jnp.float32,
                        precision=jax.lax.Precision.HIGHEST)
            y = y + cm[:, C4 + 2:C4 + 3]                    # pw2 bias
            # TODO(synk): DropPath (stochastic depth) not implemented; the
            # module default drop_path_rate=0.0 is an identity.
            x = x + y

        out_ref[n] = x                                      # lane-dense store


def _convnext_stage_pallas(x_nchw, stage_params):
    """ConvNeXtStage forward. x_nchw: (N, C, H, W) float32 (PyTorch layout)."""
    N, C, H, W = x_nchw.shape
    HW = H * W
    C4 = 4 * C
    depth = len(stage_params)
    KK = K * K

    # Pack the 10 per-block parameter tensors into 3 arrays (fewer tiny DMAs).
    dwp, cmp_, dmp = [], [], []
    for (dw_w, dw_b, ln_w, ln_b, pw1_w, pw1_b,
         grn_g, grn_b, pw2_w, pw2_b) in stage_params:
        dwp.append(jnp.concatenate([dw_w.T, dw_b[:, None]], axis=1))
        cmp_.append(jnp.concatenate(
            [pw2_w.T, ln_w[:, None], ln_b[:, None], pw2_b[:, None]], axis=1))
        dmp.append(jnp.concatenate(
            [pw1_w.T, pw1_b[:, None], grn_g[:, None], grn_b[:, None]], axis=1))
    dwp = jnp.stack(dwp)        # (depth, C, K*K+1)
    cmp_ = jnp.stack(cmp_)      # (depth, C, 4C+3)
    dmp = jnp.stack(dmp)        # (depth, 4C, C+3)

    lpad = _round_up(PAD * (W + 1), 128)        # left halo (lane-tile aligned)
    rpad = _round_up(PAD * (W + 1), 128)        # right halo
    # The zero halos must cover the full vertical reach of the 7x7 window.
    assert lpad >= PAD * W + PAD and rpad >= PAD * W + PAD, \
        "halo too small for the 7x7 vertical reach"
    tot = lpad + HW + rpad

    nb = _pick_images_per_step(N)               # images per grid step
    assert N % nb == 0
    grid_n = N // nb

    x = x_nchw.reshape(N, C, HW)                # NCHW is already channel-major

    # Explicit VMEM budget (tiny here; re-derive tiling at real stage sizes,
    # especially on v7x with 64 MiB physical VMEM).
    block_bytes = 4 * nb * C * HW
    param_bytes = 4 * depth * (C * (KK + 1) + C * (C4 + 3) + C4 * (C + 3))
    scratch_bytes = 4 * C * tot
    vmem_needed = 2 * (2 * block_bytes + param_bytes) + scratch_bytes
    vmem_limit = min(max(4 * vmem_needed, 4 * 1024 * 1024), 64 * 1024 * 1024)

    out = pl.pallas_call(
        functools.partial(_stage_kernel, W=W, LPAD=lpad),
        out_shape=jax.ShapeDtypeStruct((N, C, HW), jnp.float32),
        grid=(grid_n,),
        in_specs=[
            pl.BlockSpec((nb, C, HW), lambda n: (n, 0, 0)),
            pl.BlockSpec((depth, C, KK + 1), lambda n: (0, 0, 0)),
            pl.BlockSpec((depth, C, C4 + 3), lambda n: (0, 0, 0)),
            pl.BlockSpec((depth, C4, C + 3), lambda n: (0, 0, 0)),
        ],
        out_specs=pl.BlockSpec((nb, C, HW), lambda n: (n, 0, 0)),
        scratch_shapes=[pltpu.VMEM((C, tot), jnp.float32)],
        compiler_params=pltpu.CompilerParams(
            dimension_semantics=("parallel",),
            vmem_limit_bytes=vmem_limit),
    )(x, dwp, cmp_, dmp)
    return out.reshape(N, C, H, W)


@jax.jit
def convnext_stage(x_nchw, stage_params):
    return _convnext_stage_pallas(x_nchw, stage_params)


# ---------------- pure-JAX reference (for verification) ----------------
def _ref_block_nhwc(x, params):
    (dw_w, dw_b, ln_w, ln_b, pw1_w, pw1_b, grn_g, grn_b, pw2_w, pw2_b) = params
    C = x.shape[-1]
    rhs = dw_w.reshape(K, K, 1, C)                  # HWIO, depthwise
    y = jax.lax.conv_general_dilated(
        x, rhs, window_strides=(1, 1), padding=((PAD, PAD), (PAD, PAD)),
        dimension_numbers=("NHWC", "HWIO", "NHWC"), feature_group_count=C,
        precision=jax.lax.Precision.HIGHEST)
    y = y + dw_b
    mean = y.mean(-1, keepdims=True)
    var = ((y - mean) ** 2).mean(-1, keepdims=True)
    y = (y - mean) * jax.lax.rsqrt(var + 1e-6)
    y = y * ln_w + ln_b
    h = jnp.einsum("nhwc,cd->nhwd", y, pw1_w,
                   precision=jax.lax.Precision.HIGHEST) + pw1_b
    h = 0.5 * h * (1.0 + jax.lax.erf(h * 0.7071067811865476))
    gx = jnp.sqrt(jnp.sum(h * h, axis=(1, 2), keepdims=True))
    nx = gx / (jnp.mean(gx, axis=-1, keepdims=True) + 1e-6)
    h = grn_g * (h * nx) + grn_b + h
    out = jnp.einsum("nhwd,dc->nhwc", h, pw2_w,
                     precision=jax.lax.Precision.HIGHEST) + pw2_b
    return x + out


def convnext_stage_ref(x_nchw, stage_params):
    x = jnp.transpose(x_nchw, (0, 2, 3, 1))
    for params in stage_params:
        x = _ref_block_nhwc(x, params)
    return jnp.transpose(x, (0, 3, 1, 2))


# ---------------- deterministic synthetic parameters ----------------
def make_block_params(key, dim):
    ks = jax.random.split(key, 10)
    c4 = 4 * dim
    dw_w = 0.1 * jax.random.normal(ks[0], (K * K, dim), jnp.float32)
    dw_b = 0.05 * jax.random.normal(ks[1], (dim,), jnp.float32)
    ln_w = 1.0 + 0.1 * jax.random.normal(ks[2], (dim,), jnp.float32)
    ln_b = 0.05 * jax.random.normal(ks[3], (dim,), jnp.float32)
    pw1_w = (1.0 / jnp.sqrt(dim)) * jax.random.normal(ks[4], (dim, c4), jnp.float32)
    pw1_b = 0.05 * jax.random.normal(ks[5], (c4,), jnp.float32)
    grn_g = 0.1 * jax.random.normal(ks[6], (c4,), jnp.float32)
    grn_b = 0.1 * jax.random.normal(ks[7], (c4,), jnp.float32)
    pw2_w = (1.0 / jnp.sqrt(c4)) * jax.random.normal(ks[8], (c4, dim), jnp.float32)
    pw2_b = 0.05 * jax.random.normal(ks[9], (dim,), jnp.float32)
    return (dw_w, dw_b, ln_w, ln_b, pw1_w, pw1_b, grn_g, grn_b, pw2_w, pw2_b)


if __name__ == "__main__":
    N, C, H, W = 2, 8, 16, 16          # small shapes: batch=2, dim=8, 16x16 spatial
    depth = 2

    key = jax.random.PRNGKey(0)
    key, xk = jax.random.split(key)
    x_nchw = jax.random.normal(xk, (N, C, H, W), jnp.float32)

    stage_params = []
    for _ in range(depth):
        key, sub = jax.random.split(key)
        stage_params.append(make_block_params(sub, C))
    stage_params = tuple(stage_params)

    out = convnext_stage(x_nchw, stage_params)
    out = jax.block_until_ready(out)

    ref = convnext_stage_ref(x_nchw, stage_params)
    err = float(jnp.max(jnp.abs(out - ref)))
    assert out.shape == (N, C, H, W), out.shape
    assert bool(jnp.all(jnp.isfinite(out))), "non-finite output"
    assert err < 1e-2, f"mismatch vs reference, max abs err = {err}"
    print("KERNEL_OK")
</pallas_src>

<mosaic_0001>
module attributes {stable_mosaic.version = 11 : i64} {
  func.func @_stage_kernel(%arg0: i32, %arg1: memref<1x8x256xf32, #tpu.memory_space<vmem>>, %arg2: memref<2x8x50xf32, #tpu.memory_space<vmem>>, %arg3: memref<2x8x35xf32, #tpu.memory_space<vmem>>, %arg4: memref<2x32x11xf32, #tpu.memory_space<vmem>>, %arg5: memref<1x8x256xf32, #tpu.memory_space<vmem>>, %arg6: memref<8x512xf32, #tpu.memory_space<vmem>>) attributes {dimension_semantics = [#tpu.dimension_semantics<parallel>], iteration_bounds = array<i64: 2>, scalar_prefetch = 0 : i64, scratch_operands = 1 : i64, tpu.core_type = #tpu.core_type<tc>, window_params = [{transform_indices = @transform_0, window_bounds = array<i64: 1, 8, 256>}, {pipeline_mode = #tpu.pipeline_mode<synchronous>, transform_indices = @transform_1, window_bounds = array<i64: 2, 8, 50>}, {pipeline_mode = #tpu.pipeline_mode<synchronous>, transform_indices = @transform_2, window_bounds = array<i64: 2, 8, 35>}, {pipeline_mode = #tpu.pipeline_mode<synchronous>, transform_indices = @transform_3, window_bounds = array<i64: 2, 32, 11>}, {transform_indices = @transform_4, window_bounds = array<i64: 1, 8, 256>}]} {
    %cst = arith.constant 0.000000e+00 : f32
    %0 = vector.broadcast %cst : f32 to vector<8x128xf32>
    %c0 = arith.constant 0 : index
    %c0_0 = arith.constant 0 : index
    %1 = vector.load %arg6[%c0, %c0_0] : memref<8x512xf32, #tpu.memory_space<vmem>>, vector<8x128xf32>
    tpu.vector_store %arg6[%c0, %c0_0], %0 {strides = array<i32>} : memref<8x512xf32, #tpu.memory_space<vmem>>, vector<8x128xf32>,
    %cst_1 = arith.constant 0.000000e+00 : f32
    %2 = vector.broadcast %cst_1 : f32 to vector<8x128xf32>
    %c0_2 = arith.constant 0 : index
    %c384 = arith.constant 384 : index
    %3 = vector.load %arg6[%c0_2, %c384] : memref<8x512xf32, #tpu.memory_space<vmem>>, vector<8x128xf32>
    tpu.vector_store %arg6[%c0_2, %c384], %2 {strides = array<i32>} : memref<8x512xf32, #tpu.memory_space<vmem>>, vector<8x128xf32>,
    %4 = tpu.iota {dimensions = array<i32: 1>} : vector<8x256xi32>
    %c16_i32 = arith.constant 16 : i32
    %c0_i32 = arith.constant 0 : i32
    %5 = arith.cmpi eq, %c16_i32, %c0_i32 : i32
    %c1_i32 = arith.constant 1 : i32
    %6 = arith.select %5, %c1_i32, %c16_i32 : i32
    %7 = vector.broadcast %6 : i32 to vector<8x256xi32>
    %8 = arith.remsi %4, %7 : vector<8x256xi32>
    %c0_i32_3 = arith.constant 0 : i32
    %9 = vector.broadcast %c0_i32_3 : i32 to vector<8x256xi32>
    %10 = arith.cmpi ne, %8, %9 : vector<8x256xi32>
    %c0_i32_4 = arith.constant 0 : i32
    %11 = vector.broadcast %c0_i32_4 : i32 to vector<8x256xi32>
    %12 = arith.cmpi slt, %8, %11 : vector<8x256xi32>
    %c0_i32_5 = arith.constant 0 : i32
    %13 = arith.cmpi slt, %6, %c0_i32_5 : i32
    %14 = vector.broadcast %13 : i1 to vector<8x256xi1>
    %15 = vector.broadcast %14 : vector<8x256xi1> to vector<8x256xi1>
    %16 = arith.xori %12, %15 : vector<8x256xi1>
    %17 = arith.andi %16, %10 : vector<8x256xi1>
    %18 = vector.broadcast %6 : i32 to vector<8x256xi32>
    %19 = arith.addi %8, %18 : vector<8x256xi32>
    %20 = arith.select %17, %19, %8 : vector<8x256xi1>, vector<8x256xi32>
    %c0_6 = arith.constant 0 : index
    %c0_7 = arith.constant 0 : index
    %c0_8 = arith.constant 0 : index
    %21 = vector.load %arg1[%c0_6, %c0_7, %c0_8] : memref<1x8x256xf32, #tpu.memory_space<vmem>>, vector<1x8x256xf32>
    %22 = vector.shape_cast %21 : vector<1x8x256xf32> to vector<8x256xf32>
    %c0_9 = arith.constant 0 : index
    %c0_10 = arith.constant 0 : index
    %c0_11 = arith.constant 0 : index
    %23 = vector.load %arg2[%c0_9, %c0_10, %c0_11] : memref<2x8x50xf32, #tpu.memory_space<vmem>>, vector<1x8x50xf32>
    %24 = vector.shape_cast %23 : vector<1x8x50xf32> to vector<8x50xf32>
    %c0_12 = arith.constant 0 : index
    %c0_13 = arith.constant 0 : index
    %c0_14 = arith.constant 0 : index
    %25 = vector.load %arg3[%c0_12, %c0_13, %c0_14] : memref<2x8x35xf32, #tpu.memory_space<vmem>>, vector<1x8x35xf32>
    %26 = vector.shape_cast %25 : vector<1x8x35xf32> to vector<8x35xf32>
    %c0_15 = arith.constant 0 : index
    %c0_16 = arith.constant 0 : index
    %c0_17 = arith.constant 0 : index
    %27 = vector.load %arg4[%c0_15, %c0_16, %c0_17] : memref<2x32x11xf32, #tpu.memory_space<vmem>>, vector<1x32x11xf32>
    %28 = vector.shape_cast %27 : vector<1x32x11xf32> to vector<32x11xf32>
    %c0_18 = arith.constant 0 : index
    %c128 = arith.constant 128 : index
    %29 = vector.load %arg6[%c0_18, %c128] : memref<8x512xf32, #tpu.memory_space<vmem>>, vector<8x256xf32>
    tpu.vector_store %arg6[%c0_18, %c128], %22 {strides = array<i32>} : memref<8x512xf32, #tpu.memory_space<vmem>>, vector<8x256xf32>,
    %cst_19 = arith.constant 0.000000e+00 : f32
    %30 = vector.broadcast %cst_19 : f32 to vector<8x256xf32>
    %cst_20 = arith.constant 0.000000e+00 : f32
    %31 = vector.broadcast %cst_20 : f32 to vector<8x256xf32>
    %32 = vector.extract_strided_slice %24 {offsets = [0, 0], sizes = [8, 1], strides = [1, 1]} : vector<8x50xf32> to vector<8x1xf32>
    %c0_21 = arith.constant 0 : index
    %c77 = arith.constant 77 : index
    %33 = vector.load %arg6[%c0_21, %c77] : memref<8x512xf32, #tpu.memory_space<vmem>>, vector<8x256xf32>
    %34 = vector.broadcast %32 : vector<8x1xf32> to vector<8x256xf32>
    %35 = arith.mulf %33, %34 : vector<8x256xf32>
    %36 = arith.addf %31, %35 : vector<8x256xf32>
    %37 = vector.extract_strided_slice %24 {offsets = [0, 7], sizes = [8, 1], strides = [1, 1]} : vector<8x50xf32> to vector<8x1xf32>
    %c0_22 = arith.constant 0 : index
    %c93 = arith.constant 93 : index
    %38 = vector.load %arg6[%c0_22, %c93] : memref<8x512xf32, #tpu.memory_space<vmem>>, vector<8x256xf32>
    %39 = vector.broadcast %37 : vector<8x1xf32> to vector<8x256xf32>
    %40 = arith.mulf %38, %39 : vector<8x256xf32>
    %41 = arith.addf %36, %40 : vector<8x256xf32>
    %42 = vector.extract_strided_slice %24 {offsets = [0, 14], sizes = [8, 1], strides = [1, 1]} : vector<8x50xf32> to vector<8x1xf32>
    %c0_23 = arith.constant 0 : index
    %c109 = arith.constant 109 : index
    %43 = vector.load %arg6[%c0_23, %c109] : memref<8x512xf32, #tpu.memory_space<vmem>>, vector<8x256xf32>
    %44 = vector.broadcast %42 : vector<8x1xf32> to vector<8x256xf32>
    %45 = arith.mulf %43, %44 : vector<8x256xf32>
    %46 = arith.addf %41, %45 : vector<8x256xf32>
    %47 = vector.extract_strided_slice %24 {offsets = [0, 21], sizes = [8, 1], strides = [1, 1]} : vector<8x50xf32> to vector<8x1xf32>
    %c0_24 = arith.constant 0 : index
    %c125 = arith.constant 125 : index
    %48 = vector.load %arg6[%c0_24, %c125] : memref<8x512xf32, #tpu.memory_space<vmem>>, vector<8x256xf32>
    %49 = vector.broadcast %47 : vector<8x1xf32> to vector<8x256xf32>
    %50 = arith.mulf %48, %49 : vector<8x256xf32>
    %51 = arith.addf %46, %50 : vector<8x256xf32>
    %52 = vector.extract_strided_slice %24 {offsets = [0, 28], sizes = [8, 1], strides = [1, 1]} : vector<8x50xf32> to vector<8x1xf32>
    %c0_25 = arith.constant 0 : index
    %c141 = arith.constant 141 : index
    %53 = vector.load %arg6[%c0_25, %c141] : memref<8x512xf32, #tpu.memory_space<vmem>>, vector<8x256xf32>
    %54 = vector.broadcast %52 : vector<8x1xf32> to vector<8x256xf32>
    %55 = arith.mulf %53, %54 : vector<8x256xf32>
    %56 = arith.addf %51, %55 : vector<8x256xf32>
    %57 = vector.extract_strided_slice %24 {offsets = [0, 35], sizes = [8, 1], strides = [1, 1]} : vector<8x50xf32> to vector<8x1xf32>
    %c0_26 = arith.constant 0 : index
    %c157 = arith.constant 157 : index
    %58 = vector.load %arg6[%c0_26, %c157] : memref<8x512xf32, #tpu.memory_space<vmem>>, vector<8x256xf32>
    %59 = vector.broadcast %57 : vector<8x1xf32> to vector<8x256xf32>
    %60 = arith.mulf %58, %59 : vector<8x256xf32>
    %61 = arith.addf %56, %60 : vector<8x256xf32>
    %62 = vector.extract_strided_slice %24 {offsets = [0, 42], sizes = [8, 1], strides = [1, 1]} : vector<8x50xf32> to vector<8x1xf32>
    %c0_27 = arith.constant 0 : index
    %c173 = arith.constant 173 : index
    %63 = vector.load %arg6[%c0_27, %c173] : memref<8x512xf32, #tpu.memory_space<vmem>>, vector<8x256xf32>
    %64 = vector.broadcast %62 : vector<8x1xf32> to vector<8x256xf32>
    %65 = arith.mulf %63, %64 : vector<8x256xf32>
    %66 = arith.addf %61, %65 : vector<8x256xf32>
    %c3_i32 = arith.constant 3 : i32
    %67 = vector.broadcast %c3_i32 : i32 to vector<8x256xi32>
    %68 = arith.cmpi sge, %20, %67 : vector<8x256xi32>
    %cst_28 = arith.constant 0.000000e+00 : f32
    %69 = vector.broadcast %cst_28 : f32 to vector<8x256xf32>
    %70 = arith.select %68, %66, %69 : vector<8x256xi1>, vector<8x256xf32>
    %71 = arith.addf %30, %70 : vector<8x256xf32>
    %cst_29 = arith.constant 0.000000e+00 : f32
    %72 = vector.broadcast %cst_29 : f32 to vector<8x256xf32>
    %73 = vector.extract_strided_slice %24 {offsets = [0, 1], sizes = [8, 1], strides = [1, 1]} : vector<8x50xf32> to vector<8x1xf32>
    %c0_30 = arith.constant 0 : index
    %c78 = arith.constant 78 : index
    %74 = vector.load %arg6[%c0_30, %c78] : memref<8x512xf32, #tpu.memory_space<vmem>>, vector<8x256xf32>
    %75 = vector.broadcast %73 : vector<8x1xf32> to vector<8x256xf32>
    %76 = arith.mulf %74, %75 : vector<8x256xf32>
    %77 = arith.addf %72, %76 : vector<8x256xf32>
    %78 = vector.extract_strided_slice %24 {offsets = [0, 8], sizes = [8, 1], strides = [1, 1]} : vector<8x50xf32> to vector<8x1xf32>
    %c0_31 = arith.constant 0 : index
    %c94 = arith.constant 94 : index
    %79 = vector.load %arg6[%c0_31, %c94] : memref<8x512xf32, #tpu.memory_space<vmem>>, vector<8x256xf32>
    %80 = vector.broadcast %78 : vector<8x1xf32> to vector<8x256xf32>
    %81 = arith.mulf %79, %80 : vector<8x256xf32>
    %82 = arith.addf %77, %81 : vector<8x256xf32>
    %83 = vector.extract_strided_slice %24 {offsets = [0, 15], sizes = [8, 1], strides = [1, 1]} : vector<8x50xf32> to vector<8x1xf32>
    %c0_32 = arith.constant 0 : index
    %c110 = arith.constant 110 : index
    %84 = vector.load %arg6[%c0_32, %c110] : memref<8x512xf32, #tpu.memory_space<vmem>>, vector<8x256xf32>
    %85 = vector.broadcast %83 : vector<8x1xf32> to vector<8x256xf32>
    %86 = arith.mulf %84, %85 : vector<8x256xf32>
    %87 = arith.addf %82, %86 : vector<8x256xf32>
    %88 = vector.extract_strided_slice %24 {offsets = [0, 22], sizes = [8, 1], strides = [1, 1]} : vector<8x50xf32> to vector<8x1xf32>
    %c0_33 = arith.constant 0 : index
    %c126 = arith.constant 126 : index
    %89 = vector.load %arg6[%c0_33, %c126] : memref<8x512xf32, #tpu.memory_space<vmem>>, vector<8x256xf32>
    %90 = vector.broadcast %88 : vector<8x1xf32> to vector<8x256xf32>
    %91 = arith.mulf %89, %90 : vector<8x256xf32>
    %92 = arith.addf %87, %91 : vector<8x256xf32>
    %93 = vector.extract_strided_slice %24 {offsets = [0, 29], sizes = [8, 1], strides = [1, 1]} : vector<8x50xf32> to vector<8x1xf32>
    %c0_34 = arith.constant 0 : index
    %c142 = arith.constant 142 : index
    %94 = vector.load %arg6[%c0_34, %c142] : memref<8x512xf32, #tpu.memory_space<vmem>>, vector<8x256xf32>
    %95 = vector.broadcast %93 : vector<8x1xf32> to vector<8x256xf32>
    %96 = arith.mulf %94, %95 : vector<8x256xf32>
    %97 = arith.addf %92, %96 : vector<8x256xf32>
    %98 = vector.extract_strided_slice %24 {offsets = [0, 36], sizes = [8, 1], strides = [1, 1]} : vector<8x50xf32> to vector<8x1xf32>
    %c0_35 = arith.constant 0 : index
    %c158 = arith.constant 158 : index
    %99 = vector.load %arg6[%c0_35, %c158] : memref<8x512xf32, #tpu.memory_space<vmem>>, vector<8x256xf32>
    %100 = vector.broadcast %98 : vector<8x1xf32> to vector<8x256xf32>
    %101 = arith.mulf %99, %100 : vector<8x256xf32>
    %102 = arith.addf %97, %101 : vector<8x256xf32>
    %103 = vector.extract_strided_slice %24 {offsets = [0, 43], sizes = [8, 1], strides = [1, 1]} : vector<8x50xf32> to vector<8x1xf32>
    %c0_36 = arith.constant 0 : index
    %c174 = arith.constant 174 : index
    %104 = vector.load %arg6[%c0_36, %c174] : memref<8x512xf32, #tpu.memory_space<vmem>>, vector<8x256xf32>
    %105 = vector.broadcast %103 : vector<8x1xf32> to vector<8x256xf32>
    %106 = arith.mulf %104, %105 : vector<8x256xf32>
    %107 = arith.addf %102, %106 : vector<8x256xf32>
    %c2_i32 = arith.constant 2 : i32
    %108 = vector.broadcast %c2_i32 : i32 to vector<8x256xi32>
    %109 = arith.cmpi sge, %20, %108 : vector<8x256xi32>
    %cst_37 = arith.constant 0.000000e+00 : f32
    %110 = vector.broadcast %cst_37 : f32 to vector<8x256xf32>
    %111 = arith.select %109, %107, %110 : vector<8x256xi1>, vector<8x256xf32>
    %112 = arith.addf %71, %111 : vector<8x256xf32>
    %cst_38 = arith.constant 0.000000e+00 : f32
    %113 = vector.broadcast %cst_38 : f32 to vector<8x256xf32>
    %114 = vector.extract_strided_slice %24 {offsets = [0, 2], sizes = [8, 1], strides = [1, 1]} : vector<8x50xf32> to vector<8x1xf32>
    %c0_39 = arith.constant 0 : index
    %c79 = arith.constant 79 : index
    %115 = vector.load %arg6[%c0_39, %c79] : memref<8x512xf32, #tpu.memory_space<vmem>>, vector<8x256xf32>
    %116 = vector.broadcast %114 : vector<8x1xf32> to vector<8x256xf32>
    %117 = arith.mulf %115, %116 : vector<8x256xf32>
    %118 = arith.addf %113, %117 : vector<8x256xf32>
    %119 = vector.extract_strided_slice %24 {offsets = [0, 9], sizes = [8, 1], strides = [1, 1]} : vector<8x50xf32> to vector<8x1xf32>
    %c0_40 = arith.constant 0 : index
    %c95 = arith.constant 95 : index
    %120 = vector.load %arg6[%c0_40, %c95] : memref<8x512xf32, #tpu.memory_space<vmem>>, vector<8x256xf32>
    %121 = vector.broadcast %119 : vector<8x1xf32> to vector<8x256xf32>
    %122 = arith.mulf %120, %121 : vector<8x256xf32>
    %123 = arith.addf %118, %122 : vector<8x256xf32>
    %124 = vector.extract_strided_slice %24 {offsets = [0, 16], sizes = [8, 1], strides = [1, 1]} : vector<8x50xf32> to vector<8x1xf32>
    %c0_41 = arith.constant 0 : index
    %c111 = arith.constant 111 : index
    %125 = vector.load %arg6[%c0_41, %c111] : memref<8x512xf32, #tpu.memory_space<vmem>>, vector<8x256xf32>
    %126 = vector.broadcast %124 : vector<8x1xf32> to vector<8x256xf32>
    %127 = arith.mulf %125, %126 : vector<8x256xf32>
    %128 = arith.addf %123, %127 : vector<8x256xf32>
    %129 = vector.extract_strided_slice %24 {offsets = [0, 23], sizes = [8, 1], strides = [1, 1]} : vector<8x50xf32> to vector<8x1xf32>
    %c0_42 = arith.constant 0 : index
    %c127 = arith.constant 127 : index
    %130 = vector.load %arg6[%c0_42, %c127] : memref<8x512xf32, #tpu.memory_space<vmem>>, vector<8x256xf32>
    %131 = vector.broadcast %129 : vector<8x1xf32> to vector<8x256xf32>
    %132 = arith.mulf %130, %131 : vector<8x256xf32>
    %133 = arith.addf %128, %132 : vector<8x256xf32>
    %134 = vector.extract_strided_slice %24 {offsets = [0, 30], sizes = [8, 1], strides = [1, 1]} : vector<8x50xf32> to vector<8x1xf32>
    %c0_43 = arith.constant 0 : index
    %c143 = arith.constant 143 : index
    %135 = vector.load %arg6[%c0_43, %c143] : memref<8x512xf32, #tpu.memory_space<vmem>>, vector<8x256xf32>
    %136 = vector.broadcast %134 : vector<8x1xf32> to vector<8x256xf32>
    %137 = arith.mulf %135, %136 : vector<8x256xf32>
    %138 = arith.addf %133, %137 : vector<8x256xf32>
    %139 = vector.extract_strided_slice %24 {offsets = [0, 37], sizes = [8, 1], strides = [1, 1]} : vector<8x50xf32> to vector<8x1xf32>
    %c0_44 = arith.constant 0 : index
    %c159 = arith.constant 159 : index
    %140 = vector.load %arg6[%c0_44, %c159] : memref<8x512xf32, #tpu.memory_space<vmem>>, vector<8x256xf32>
    %141 = vector.broadcast %139 : vector<8x1xf32> to vector<8x256xf32>
    %142 = arith.mulf %140, %141 : vector<8x256xf32>
    %143 = arith.addf %138, %142 : vector<8x256xf32>
    %144 = vector.extract_strided_slice %24 {offsets = [0, 44], sizes = [8, 1], strides = [1, 1]} : vector<8x50xf32> to vector<8x1xf32>
    %c0_45 = arith.constant 0 : index
    %c175 = arith.constant 175 : index
    %145 = vector.load %arg6[%c0_45, %c175] : memref<8x512xf32, #tpu.memory_space<vmem>>, vector<8x256xf32>
    %146 = vector.broadcast %144 : vector<8x1xf32> to vector<8x256xf32>
    %147 = arith.mulf %145, %146 : vector<8x256xf32>
    %148 = arith.addf %143, %147 : vector<8x256xf32>
    %c1_i32_46 = arith.constant 1 : i32
    %149 = vector.broadcast %c1_i32_46 : i32 to vector<8x256xi32>
    %150 = arith.cmpi sge, %20, %149 : vector<8x256xi32>
    %cst_47 = arith.constant 0.000000e+00 : f32
    %151 = vector.broadcast %cst_47 : f32 to vector<8x256xf32>
    %152 = arith.select %150, %148, %151 : vector<8x256xi1>, vector<8x256xf32>
    %153 = arith.addf %112, %152 : vector<8x256xf32>
    %cst_48 = arith.constant 0.000000e+00 : f32
    %154 = vector.broadcast %cst_48 : f32 to vector<8x256xf32>
    %155 = vector.extract_strided_slice %24 {offsets = [0, 3], sizes = [8, 1], strides = [1, 1]} : vector<8x50xf32> to vector<8x1xf32>
    %c0_49 = arith.constant 0 : index
    %c80 = arith.constant 80 : index
    %156 = vector.load %arg6[%c0_49, %c80] : memref<8x512xf32, #tpu.memory_space<vmem>>, vector<8x256xf32>
    %157 = vector.broadcast %155 : vector<8x1xf32> to vector<8x256xf32>
    %158 = arith.mulf %156, %157 : vector<8x256xf32>
    %159 = arith.addf %154, %158 : vector<8x256xf32>
    %160 = vector.extract_strided_slice %24 {offsets = [0, 10], sizes = [8, 1], strides = [1, 1]} : vector<8x50xf32> to vector<8x1xf32>
    %c0_50 = arith.constant 0 : index
    %c96 = arith.constant 96 : index
    %161 = vector.load %arg6[%c0_50, %c96] : memref<8x512xf32, #tpu.memory_space<vmem>>, vector<8x256xf32>
    %162 = vector.broadcast %160 : vector<8x1xf32> to vector<8x256xf32>
    %163 = arith.mulf %161, %162 : vector<8x256xf32>
    %164 = arith.addf %159, %163 : vector<8x256xf32>
    %165 = vector.extract_strided_slice %24 {offsets = [0, 17], sizes = [8, 1], strides = [1, 1]} : vector<8x50xf32> to vector<8x1xf32>
    %c0_51 = arith.constant 0 : index
    %c112 = arith.constant 112 : index
    %166 = vector.load %arg6[%c0_51, %c112] : memref<8x512xf32, #tpu.memory_space<vmem>>, vector<8x256xf32>
    %167 = vector.broadcast %165 : vector<8x1xf32> to vector<8x256xf32>
    %168 = arith.mulf %166, %167 : vector<8x256xf32>
    %169 = arith.addf %164, %168 : vector<8x256xf32>
    %170 = vector.extract_strided_slice %24 {offsets = [0, 24], sizes = [8, 1], strides = [1, 1]} : vector<8x50xf32> to vector<8x1xf32>
    %c0_52 = arith.constant 0 : index
    %c128_53 = arith.constant 128 : index
    %171 = vector.load %arg6[%c0_52, %c128_53] : memref<8x512xf32, #tpu.memory_space<vmem>>, vector<8x256xf32>
    %172 = vector.broadcast %170 : vector<8x1xf32> to vector<8x256xf32>
    %173 = arith.mulf %171, %172 : vector<8x256xf32>
    %174 = arith.addf %169, %173 : vector<8x256xf32>
    %175 = vector.extract_strided_slice %24 {offsets = [0, 31], sizes = [8, 1], strides = [1, 1]} : vector<8x50xf32> to vector<8x1xf32>
    %c0_54 = arith.constant 0 : index
    %c144 = arith.constant 144 : index
    %176 = vector.load %arg6[%c0_54, %c144] : memref<8x512xf32, #tpu.memory_space<vmem>>, vector<8x256xf32>
    %177 = vector.broadcast %175 : vector<8x1xf32> to vector<8x256xf32>
    %178 = arith.mulf %176, %177 : vector<8x256xf32>
    %179 = arith.addf %174, %178 : vector<8x256xf32>
    %180 = vector.extract_strided_slice %24 {offsets = [0, 38], sizes = [8, 1], strides = [1, 1]} : vector<8x50xf32> to vector<8x1xf32>
    %c0_55 = arith.constant 0 : index
    %c160 = arith.constant 160 : index
    %181 = vector.load %arg6[%c0_55, %c160] : memref<8x512xf32, #tpu.memory_space<vmem>>, vector<8x256xf32>
    %182 = vector.broadcast %180 : vector<8x1xf32> to vector<8x256xf32>
    %183 = arith.mulf %181, %182 : vector<8x256xf32>
    %184 = arith.addf %179, %183 : vector<8x256xf32>
    %185 = vector.extract_strided_slice %24 {offsets = [0, 45], sizes = [8, 1], strides = [1, 1]} : vector<8x50xf32> to vector<8x1xf32>
    %c0_56 = arith.constant 0 : index
    %c176 = arith.constant 176 : index
    %186 = vector.load %arg6[%c0_56, %c176] : memref<8x512xf32, #tpu.memory_space<vmem>>, vector<8x256xf32>
    %187 = vector.broadcast %185 : vector<8x1xf32> to vector<8x256xf32>
    %188 = arith.mulf %186, %187 : vector<8x256xf32>
    %189 = arith.addf %184, %188 : vector<8x256xf32>
    %190 = arith.addf %153, %189 : vector<8x256xf32>
    %cst_57 = arith.constant 0.000000e+00 : f32
    %191 = vector.broadcast %cst_57 : f32 to vector<8x256xf32>
    %192 = vector.extract_strided_slice %24 {offsets = [0, 4], sizes = [8, 1], strides = [1, 1]} : vector<8x50xf32> to vector<8x1xf32>
    %c0_58 = arith.constant 0 : index
    %c81 = arith.constant 81 : index
    %193 = vector.load %arg6[%c0_58, %c81] : memref<8x512xf32, #tpu.memory_space<vmem>>, vector<8x256xf32>
    %194 = vector.broadcast %192 : vector<8x1xf32> to vector<8x256xf32>
    %195 = arith.mulf %193, %194 : vector<8x256xf32>
    %196 = arith.addf %191, %195 : vector<8x256xf32>
    %197 = vector.extract_strided_slice %24 {offsets = [0, 11], sizes = [8, 1], strides = [1, 1]} : vector<8x50xf32> to vector<8x1xf32>
    %c0_59 = arith.constant 0 : index
    %c97 = arith.constant 97 : index
    %198 = vector.load %arg6[%c0_59, %c97] : memref<8x512xf32, #tpu.memory_space<vmem>>, vector<8x256xf32>
    %199 = vector.broadcast %197 : vector<8x1xf32> to vector<8x256xf32>
    %200 = arith.mulf %198, %199 : vector<8x256xf32>
    %201 = arith.addf %196, %200 : vector<8x256xf32>
    %202 = vector.extract_strided_slice %24 {offsets = [0, 18], sizes = [8, 1], strides = [1, 1]} : vector<8x50xf32> to vector<8x1xf32>
    %c0_60 = arith.constant 0 : index
    %c113 = arith.constant 113 : index
    %203 = vector.load %arg6[%c0_60, %c113] : memref<8x512xf32, #tpu.memory_space<vmem>>, vector<8x256xf32>
    %204 = vector.broadcast %202 : vector<8x1xf32> to vector<8x256xf32>
    %205 = arith.mulf %203, %204 : vector<8x256xf32>
    %206 = arith.addf %201, %205 : vector<8x256xf32>
    %207 = vector.extract_strided_slice %24 {offsets = [0, 25], sizes = [8, 1], strides = [1, 1]} : vector<8x50xf32> to vector<8x1xf32>
    %c0_61 = arith.constant 0 : index
    %c129 = arith.constant 129 : index
    %208 = vector.load %arg6[%c0_61, %c129] : memref<8x512xf32, #tpu.memory_space<vmem>>, vector<8x256xf32>
    %209 = vector.broadcast %207 : vector<8x1xf32> to vector<8x256xf32>
    %210 = arith.mulf %208, %209 : vector<8x256xf32>
    %211 = arith.addf %206, %210 : vector<8x256xf32>
    %212 = vector.extract_strided_slice %24 {offsets = [0, 32], sizes = [8, 1], strides = [1, 1]} : vector<8x50xf32> to vector<8x1xf32>
    %c0_62 = arith.constant 0 : index
    %c145 = arith.constant 145 : index
    %213 = vector.load %arg6[%c0_62, %c145] : memref<8x512xf32, #tpu.memory_space<vmem>>, vector<8x256xf32>
    %214 = vector.broadcast %212 : vector<8x1xf32> to vector<8x256xf32>
    %215 = arith.mulf %213, %214 : vector<8x256xf32>
    %216 = arith.addf %211, %215 : vector<8x256xf32>
    %217 = vector.extract_strided_slice %24 {offsets = [0, 39], sizes = [8, 1], strides = [1, 1]} : vector<8x50xf32> to vector<8x1xf32>
    %c0_63 = arith.constant 0 : index
    %c161 = arith.constant 161 : index
    %218 = vector.load %arg6[%c0_63, %c161] : memref<8x512xf32, #tpu.memory_space<vmem>>, vector<8x256xf32>
    %219 = vector.broadcast %217 : vector<8x1xf32> to vector<8x256xf32>
    %220 = arith.mulf %218, %219 : vector<8x256xf32>
    %221 = arith.addf %216, %220 : vector<8x256xf32>
    %222 = vector.extract_strided_slice %24 {offsets = [0, 46], sizes = [8, 1], strides = [1, 1]} : vector<8x50xf32> to vector<8x1xf32>
    %c0_64 = arith.constant 0 : index
    %c177 = arith.constant 177 : index
    %223 = vector.load %arg6[%c0_64, %c177] : memref<8x512xf32, #tpu.memory_space<vmem>>, vector<8x256xf32>
    %224 = vector.broadcast %222 : vector<8x1xf32> to vector<8x256xf32>
    %225 = arith.mulf %223, %224 : vector<8x256xf32>
    %226 = arith.addf %221, %225 : vector<8x256xf32>
    %c15_i32 = arith.constant 15 : i32
    %227 = vector.broadcast %c15_i32 : i32 to vector<8x256xi32>
    %228 = arith.cmpi slt, %20, %227 : vector<8x256xi32>
    %cst_65 = arith.constant 0.000000e+00 : f32
    %229 = vector.broadcast %cst_65 : f32 to vector<8x256xf32>
    %230 = arith.select %228, %226, %229 : vector<8x256xi1>, vector<8x256xf32>
    %231 = arith.addf %190, %230 : vector<8x256xf32>
    %cst_66 = arith.constant 0.000000e+00 : f32
    %232 = vector.broadcast %cst_66 : f32 to vector<8x256xf32>
    %233 = vector.extract_strided_slice %24 {offsets = [0, 5], sizes = [8, 1], strides = [1, 1]} : vector<8x50xf32> to vector<8x1xf32>
    %c0_67 = arith.constant 0 : index
    %c82 = arith.constant 82 : index
    %234 = vector.load %arg6[%c0_67, %c82] : memref<8x512xf32, #tpu.memory_space<vmem>>, vector<8x256xf32>
    %235 = vector.broadcast %233 : vector<8x1xf32> to vector<8x256xf32>
    %236 = arith.mulf %234, %235 : vector<8x256xf32>
    %237 = arith.addf %232, %236 : vector<8x256xf32>
    %238 = vector.extract_strided_slice %24 {offsets = [0, 12], sizes = [8, 1], strides = [1, 1]} : vector<8x50xf32> to vector<8x1xf32>
    %c0_68 = arith.constant 0 : index
    %c98 = arith.constant 98 : index
    %239 = vector.load %arg6[%c0_68, %c98] : memref<8x512xf32, #tpu.memory_space<vmem>>, vector<8x256xf32>
    %240 = vector.broadcast %238 : vector<8x1xf32> to vector<8x256xf32>
    %241 = arith.mulf %239, %240 : vector<8x256xf32>
    %242 = arith.addf %237, %241 : vector<8x256xf32>
    %243 = vector.extract_strided_slice %24 {offsets = [0, 19], sizes = [8, 1], strides = [1, 1]} : vector<8x50xf32> to vector<8x1xf32>
    %c0_69 = arith.constant 0 : index
    %c114 = arith.constant 114 : index
    %244 = vector.load %arg6[%c0_69, %c114] : memref<8x512xf32, #tpu.memory_space<vmem>>, vector<8x256xf32>
    %245 = vector.broadcast %243 : vector<8x1xf32> to vector<8x256xf32>
    %246 = arith.mulf %244, %245 : vector<8x256xf32>
    %247 = arith.addf %242, %246 : vector<8x256xf32>
    %248 = vector.extract_strided_slice %24 {offsets = [0, 26], sizes = [8, 1], strides = [1, 1]} : vector<8x50xf32> to vector<8x1xf32>
    %c0_70 = arith.constant 0 : index
    %c130 = arith.constant 130 : index
    %249 = vector.load %arg6[%c0_70, %c130] : memref<8x512xf32, #tpu.memory_space<vmem>>, vector<8x256xf32>
    %250 = vector.broadcast %248 : vector<8x1xf32> to vector<8x256xf32>
    %251 = arith.mulf %249, %250 : vector<8x256xf32>
    %252 = arith.addf %247, %251 : vector<8x256xf32>
    %253 = vector.extract_strided_slice %24 {offsets = [0, 33], sizes = [8, 1], strides = [1, 1]} : vector<8x50xf32> to vector<8x1xf32>
    %c0_71 = arith.constant 0 : index
    %c146 = arith.constant 146 : index
    %254 = vector.load %arg6[%c0_71, %c146] : memref<8x512xf32, #tpu.memory_space<vmem>>, vector<8x256xf32>
    %255 = vector.broadcast %253 : vector<8x1xf32> to vector<8x256xf32>
    %256 = arith.mulf %254, %255 : vector<8x256xf32>
    %257 = arith.addf %252, %256 : vector<8x256xf32>
    %258 = vector.extract_strided_slice %24 {offsets = [0, 40], sizes = [8, 1], strides = [1, 1]} : vector<8x50xf32> to vector<8x1xf32>
    %c0_72 = arith.constant 0 : index
    %c162 = arith.constant 162 : index
    %259 = vector.load %arg6[%c0_72, %c162] : memref<8x512xf32, #tpu.memory_space<vmem>>, vector<8x256xf32>
    %260 = vector.broadcast %258 : vector<8x1xf32> to vector<8x256xf32>
    %261 = arith.mulf %259, %260 : vector<8x256xf32>
    %262 = arith.addf %257, %261 : vector<8x256xf32>
    %263 = vector.extract_strided_slice %24 {offsets = [0, 47], sizes = [8, 1], strides = [1, 1]} : vector<8x50xf32> to vector<8x1xf32>
    %c0_73 = arith.constant 0 : index
    %c178 = arith.constant 178 : index
    %264 = vector.load %arg6[%c0_73, %c178] : memref<8x512xf32, #tpu.memory_space<vmem>>, vector<8x256xf32>
    %265 = vector.broadcast %263 : vector<8x1xf32> to vector<8x256xf32>
    %266 = arith.mulf %264, %265 : vector<8x256xf32>
    %267 = arith.addf %262, %266 : vector<8x256xf32>
    %c14_i32 = arith.constant 14 : i32
    %268 = vector.broadcast %c14_i32 : i32 to vector<8x256xi32>
    %269 = arith.cmpi slt, %20, %268 : vector<8x256xi32>
    %cst_74 = arith.constant 0.000000e+00 : f32
    %270 = vector.broadcast %cst_74 : f32 to vector<8x256xf32>
    %271 = arith.select %269, %267, %270 : vector<8x256xi1>, vector<8x256xf32>
    %272 = arith.addf %231, %271 : vector<8x256xf32>
    %cst_75 = arith.constant 0.000000e+00 : f32
    %273 = vector.broadcast %cst_75 : f32 to vector<8x256xf32>
    %274 = vector.extract_strided_slice %24 {offsets = [0, 6], sizes = [8, 1], strides = [1, 1]} : vector<8x50xf32> to vector<8x1xf32>
    %c0_76 = arith.constant 0 : index
    %c83 = arith.constant 83 : index
    %275 = vector.load %arg6[%c0_76, %c83] : memref<8x512xf32, #tpu.memory_space<vmem>>, vector<8x256xf32>
    %276 = vector.broadcast %274 : vector<8x1xf32> to vector<8x256xf32>
    %277 = arith.mulf %275, %276 : vector<8x256xf32>
    %278 = arith.addf %273, %277 : vector<8x256xf32>
    %279 = vector.extract_strided_slice %24 {offsets = [0, 13], sizes = [8, 1], strides = [1, 1]} : vector<8x50xf32> to vector<8x1xf32>
    %c0_77 = arith.constant 0 : index
    %c99 = arith.constant 99 : index
    %280 = vector.load %arg6[%c0_77, %c99] : memref<8x512xf32, #tpu.memory_space<vmem>>, vector<8x256xf32>
    %281 = vector.broadcast %279 : vector<8x1xf32> to vector<8x256xf32>
    %282 = arith.mulf %280, %281 : vector<8x256xf32>
    %283 = arith.addf %278, %282 : vector<8x256xf32>
    %284 = vector.extract_strided_slice %24 {offsets = [0, 20], sizes = [8, 1], strides = [1, 1]} : vector<8x50xf32> to vector<8x1xf32>
    %c0_78 = arith.constant 0 : index
    %c115 = arith.constant 115 : index
    %285 = vector.load %arg6[%c0_78, %c115] : memref<8x512xf32, #tpu.memory_space<vmem>>, vector<8x256xf32>
    %286 = vector.broadcast %284 : vector<8x1xf32> to vector<8x256xf32>
    %287 = arith.mulf %285, %286 : vector<8x256xf32>
    %288 = arith.addf %283, %287 : vector<8x256xf32>
    %289 = vector.extract_strided_slice %24 {offsets = [0, 27], sizes = [8, 1], strides = [1, 1]} : vector<8x50xf32> to vector<8x1xf32>
    %c0_79 = arith.constant 0 : index
    %c131 = arith.constant 131 : index
    %290 = vector.load %arg6[%c0_79, %c131] : memref<8x512xf32, #tpu.memory_space<vmem>>, vector<8x256xf32>
    %291 = vector.broadcast %289 : vector<8x1xf32> to vector<8x256xf32>
    %292 = arith.mulf %290, %291 : vector<8x256xf32>
    %293 = arith.addf %288, %292 : vector<8x256xf32>
    %294 = vector.extract_strided_slice %24 {offsets = [0, 34], sizes = [8, 1], strides = [1, 1]} : vector<8x50xf32> to vector<8x1xf32>
    %c0_80 = arith.constant 0 : index
    %c147 = arith.constant 147 : index
    %295 = vector.load %arg6[%c0_80, %c147] : memref<8x512xf32, #tpu.memory_space<vmem>>, vector<8x256xf32>
    %296 = vector.broadcast %294 : vector<8x1xf32> to vector<8x256xf32>
    %297 = arith.mulf %295, %296 : vector<8x256xf32>
    %298 = arith.addf %293, %297 : vector<8x256xf32>
    %299 = vector.extract_strided_slice %24 {offsets = [0, 41], sizes = [8, 1], strides = [1, 1]} : vector<8x50xf32> to vector<8x1xf32>
    %c0_81 = arith.constant 0 : index
    %c163 = arith.constant 163 : index
    %300 = vector.load %arg6[%c0_81, %c163] : memref<8x512xf32, #tpu.memory_space<vmem>>, vector<8x256xf32>
    %301 = vector.broadcast %299 : vector<8x1xf32> to vector<8x256xf32>
    %302 = arith.mulf %300, %301 : vector<8x256xf32>
    %303 = arith.addf %298, %302 : vector<8x256xf32>
    %304 = vector.extract_strided_slice %24 {offsets = [0, 48], sizes = [8, 1], strides = [1, 1]} : vector<8x50xf32> to vector<8x1xf32>
    %c0_82 = arith.constant 0 : index
    %c179 = arith.constant 179 : index
    %305 = vector.load %arg6[%c0_82, %c179] : memref<8x512xf32, #tpu.memory_space<vmem>>, vector<8x256xf32>
    %306 = vector.broadcast %304 : vector<8x1xf32> to vector<8x256xf32>
    %307 = arith.mulf %305, %306 : vector<8x256xf32>
    %308 = arith.addf %303, %307 : vector<8x256xf32>
    %c13_i32 = arith.constant 13 : i32
    %309 = vector.broadcast %c13_i32 : i32 to vector<8x256xi32>
    %310 = arith.cmpi slt, %20, %309 : vector<8x256xi32>
    %cst_83 = arith.constant 0.000000e+00 : f32
    %311 = vector.broadcast %cst_83 : f32 to vector<8x256xf32>
    %312 = arith.select %310, %308, %311 : vector<8x256xi1>, vector<8x256xf32>
    %313 = arith.addf %272, %312 : vector<8x256xf32>
    %314 = vector.extract_strided_slice %24 {offsets = [0, 49], sizes = [8, 1], strides = [1, 1]} : vector<8x50xf32> to vector<8x1xf32>
    %315 = vector.broadcast %314 : vector<8x1xf32> to vector<8x256xf32>
    %316 = arith.addf %313, %315 : vector<8x256xf32>
    %cst_84 = arith.constant dense<0.000000e+00> : vector<256xf32>
    %317 = vector.multi_reduction <add>, %316, %cst_84 [0] : vector<8x256xf32> to vector<256xf32>
    %318 = vector.shape_cast %317 : vector<256xf32> to vector<1x256xf32>
    %cst_85 = arith.constant 8.000000e+00 : f32
    %319 = vector.broadcast %cst_85 : f32 to vector<1x256xf32>
    %320 = arith.divf %318, %319 : vector<1x256xf32>
    %321 = arith.mulf %316, %316 : vector<8x256xf32>
    %cst_86 = arith.constant dense<0.000000e+00> : vector<256xf32>
    %322 = vector.multi_reduction <add>, %321, %cst_86 [0] : vector<8x256xf32> to vector<256xf32>
    %323 = vector.shape_cast %322 : vector<256xf32> to vector<1x256xf32>
    %cst_87 = arith.constant 8.000000e+00 : f32
    %324 = vector.broadcast %cst_87 : f32 to vector<1x256xf32>
    %325 = arith.divf %323, %324 : vector<1x256xf32>
    %326 = arith.mulf %320, %320 : vector<1x256xf32>
    %327 = arith.subf %325, %326 : vector<1x256xf32>
    %cst_88 = arith.constant 9.99999997E-7 : f32
    %328 = vector.broadcast %cst_88 : f32 to vector<1x256xf32>
    %329 = arith.addf %327, %328 : vector<1x256xf32>
    %330 = math.rsqrt %329 : vector<1x256xf32>
    %331 = vector.broadcast %320 : vector<1x256xf32> to vector<8x256xf32>
    %332 = arith.subf %316, %331 : vector<8x256xf32>
    %333 = vector.broadcast %330 : vector<1x256xf32> to vector<8x256xf32>
    %334 = arith.mulf %332, %333 : vector<8x256xf32>
    %335 = vector.extract_strided_slice %26 {offsets = [0, 32], sizes = [8, 1], strides = [1, 1]} : vector<8x35xf32> to vector<8x1xf32>
    %336 = vector.broadcast %335 : vector<8x1xf32> to vector<8x256xf32>
    %337 = arith.mulf %334, %336 : vector<8x256xf32>
    %338 = vector.extract_strided_slice %26 {offsets = [0, 33], sizes = [8, 1], strides = [1, 1]} : vector<8x35xf32> to vector<8x1xf32>
    %339 = vector.broadcast %338 : vector<8x1xf32> to vector<8x256xf32>
    %340 = arith.addf %337, %339 : vector<8x256xf32>
    %341 = vector.extract_strided_slice %28 {offsets = [0, 0], sizes = [32, 8], strides = [1, 1]} : vector<32x11xf32> to vector<32x8xf32>
    %cst_89 = arith.constant dense<0.000000e+00> : vector<32x256xf32>
    %342 = tpu.matmul %341, %340, %cst_89 {dimension_numbers = #tpu.dot_dimension_numbers<[1], [0], [0], [1], [0, 0, 1, 1], [], []>, precision = #tpu.contract_precision<fp32>} : vector<32x8xf32>, vector<8x256xf32>, vector<32x256xf32> -> vector<32x256xf32>
    %343 = vector.extract_strided_slice %28 {offsets = [0, 8], sizes = [32, 1], strides = [1, 1]} : vector<32x11xf32> to vector<32x1xf32>
    %344 = vector.broadcast %343 : vector<32x1xf32> to vector<32x256xf32>
    %345 = arith.addf %342, %344 : vector<32x256xf32>
    %cst_90 = arith.constant 5.000000e-01 : f32
    %346 = vector.broadcast %cst_90 : f32 to vector<32x256xf32>
    %347 = arith.mulf %346, %345 : vector<32x256xf32>
    %cst_91 = arith.constant 0.707106769 : f32
    %348 = vector.broadcast %cst_91 : f32 to vector<32x256xf32>
    %349 = arith.mulf %345, %348 : vector<32x256xf32>
    %350 = math.absf %349 : vector<32x256xf32>
    %cst_92 = arith.constant 0.327591091 : f32
    %351 = vector.broadcast %cst_92 : f32 to vector<32x256xf32>
    %352 = arith.mulf %351, %350 : vector<32x256xf32>
    %cst_93 = arith.constant 1.000000e+00 : f32
    %353 = vector.broadcast %cst_93 : f32 to vector<32x256xf32>
    %354 = arith.addf %353, %352 : vector<32x256xf32>
    %cst_94 = arith.constant 1.000000e+00 : f32
    %355 = vector.broadcast %cst_94 : f32 to vector<32x256xf32>
    %356 = arith.divf %355, %354 : vector<32x256xf32>
    %cst_95 = arith.constant 1.06140542 : f32
    %357 = vector.broadcast %cst_95 : f32 to vector<32x256xf32>
    %358 = arith.mulf %357, %356 : vector<32x256xf32>
    %cst_96 = arith.constant -1.45315206 : f32
    %359 = vector.broadcast %cst_96 : f32 to vector<32x256xf32>
    %360 = arith.addf %358, %359 : vector<32x256xf32>
    %361 = arith.mulf %360, %356 : vector<32x256xf32>
    %cst_97 = arith.constant 1.42141378 : f32
    %362 = vector.broadcast %cst_97 : f32 to vector<32x256xf32>
    %363 = arith.addf %361, %362 : vector<32x256xf32>
    %364 = arith.mulf %363, %356 : vector<32x256xf32>
    %cst_98 = arith.constant -0.284496725 : f32
    %365 = vector.broadcast %cst_98 : f32 to vector<32x256xf32>
    %366 = arith.addf %364, %365 : vector<32x256xf32>
    %367 = arith.mulf %366, %356 : vector<32x256xf32>
    %cst_99 = arith.constant 0.254829586 : f32
    %368 = vector.broadcast %cst_99 : f32 to vector<32x256xf32>
    %369 = arith.addf %367, %368 : vector<32x256xf32>
    %370 = arith.mulf %369, %356 : vector<32x256xf32>
    %cst_100 = arith.constant 0.000000e+00 : f32
    %371 = vector.broadcast %cst_100 : f32 to vector<32x256xf32>
    %372 = arith.subf %371, %350 : vector<32x256xf32>
    %373 = arith.mulf %372, %350 : vector<32x256xf32>
    %374 = math.exp %373 : vector<32x256xf32>
    %375 = arith.mulf %370, %374 : vector<32x256xf32>
    %cst_101 = arith.constant 1.000000e+00 : f32
    %376 = vector.broadcast %cst_101 : f32 to vector<32x256xf32>
    %377 = arith.subf %376, %375 : vector<32x256xf32>
    %cst_102 = arith.constant 0.000000e+00 : f32
    %378 = vector.broadcast %cst_102 : f32 to vector<32x256xf32>
    %379 = arith.cmpf oge, %349, %378 : vector<32x256xf32>
    %cst_103 = arith.constant 0.000000e+00 : f32
    %380 = vector.broadcast %cst_103 : f32 to vector<32x256xf32>
    %381 = arith.subf %380, %377 : vector<32x256xf32>
    %382 = arith.select %379, %377, %381 : vector<32x256xi1>, vector<32x256xf32>
    %cst_104 = arith.constant 1.000000e+00 : f32
    %383 = vector.broadcast %cst_104 : f32 to vector<32x256xf32>
    %384 = arith.addf %383, %382 : vector<32x256xf32>
    %385 = arith.mulf %347, %384 : vector<32x256xf32>
    %386 = arith.mulf %385, %385 : vector<32x256xf32>
    %cst_105 = arith.constant dense<0.000000e+00> : vector<32xf32>
    %387 = vector.multi_reduction <add>, %386, %cst_105 [1] : vector<32x256xf32> to vector<32xf32>
    %388 = vector.shape_cast %387 : vector<32xf32> to vector<32x1xf32>
    %389 = math.sqrt %388 : vector<32x1xf32>
    %cst_106 = arith.constant dense<0.000000e+00> : vector<1xf32>
    %390 = vector.multi_reduction <add>, %389, %cst_106 [0] : vector<32x1xf32> to vector<1xf32>
    %391 = vector.shape_cast %390 : vector<1xf32> to vector<1x1xf32>
    %cst_107 = arith.constant 3.200000e+01 : f32
    %392 = vector.broadcast %cst_107 : f32 to vector<1x1xf32>
    %393 = arith.divf %391, %392 : vector<1x1xf32>
    %cst_108 = arith.constant 9.99999997E-7 : f32
    %394 = vector.broadcast %cst_108 : f32 to vector<1x1xf32>
    %395 = arith.addf %393, %394 : vector<1x1xf32>
    %396 = vector.broadcast %395 : vector<1x1xf32> to vector<32x1xf32>
    %397 = arith.divf %389, %396 : vector<32x1xf32>
    %398 = vector.extract_strided_slice %28 {offsets = [0, 9], sizes = [32, 1], strides = [1, 1]} : vector<32x11xf32> to vector<32x1xf32>
    %399 = vector.broadcast %397 : vector<32x1xf32> to vector<32x256xf32>
    %400 = arith.mulf %385, %399 : vector<32x256xf32>
    %401 = vector.broadcast %398 : vector<32x1xf32> to vector<32x256xf32>
    %402 = arith.mulf %401, %400 : vector<32x256xf32>
    %403 = vector.extract_strided_slice %28 {offsets = [0, 10], sizes = [32, 1], strides = [1, 1]} : vector<32x11xf32> to vector<32x1xf32>
    %404 = vector.broadcast %403 : vector<32x1xf32> to vector<32x256xf32>
    %405 = arith.addf %402, %404 : vector<32x256xf32>
    %406 = arith.addf %405, %385 : vector<32x256xf32>
    %407 = vector.extract_strided_slice %26 {offsets = [0, 0], sizes = [8, 32], strides = [1, 1]} : vector<8x35xf32> to vector<8x32xf32>
    %cst_109 = arith.constant dense<0.000000e+00> : vector<8x256xf32>
    %408 = tpu.matmul %407, %406, %cst_109 {dimension_numbers = #tpu.dot_dimension_numbers<[1], [0], [0], [1], [0, 0, 1, 1], [], []>, precision = #tpu.contract_precision<fp32>} : vector<8x32xf32>, vector<32x256xf32>, vector<8x256xf32> -> vector<8x256xf32>
    %409 = vector.extract_strided_slice %26 {offsets = [0, 34], sizes = [8, 1], strides = [1, 1]} : vector<8x35xf32> to vector<8x1xf32>
    %410 = vector.broadcast %409 : vector<8x1xf32> to vector<8x256xf32>
    %411 = arith.addf %408, %410 : vector<8x256xf32>
    %412 = arith.addf %22, %411 : vector<8x256xf32>
    %c1 = arith.constant 1 : index
    %c0_110 = arith.constant 0 : index
    %c0_111 = arith.constant 0 : index
    %413 = vector.load %arg2[%c1, %c0_110, %c0_111] : memref<2x8x50xf32, #tpu.memory_space<vmem>>, vector<1x8x50xf32>
    %414 = vector.shape_cast %413 : vector<1x8x50xf32> to vector<8x50xf32>
    %c1_112 = arith.constant 1 : index
    %c0_113 = arith.constant 0 : index
    %c0_114 = arith.constant 0 : index
    %415 = vector.load %arg3[%c1_112, %c0_113, %c0_114] : memref<2x8x35xf32, #tpu.memory_space<vmem>>, vector<1x8x35xf32>
    %416 = vector.shape_cast %415 : vector<1x8x35xf32> to vector<8x35xf32>
    %c1_115 = arith.constant 1 : index
    %c0_116 = arith.constant 0 : index
    %c0_117 = arith.constant 0 : index
    %417 = vector.load %arg4[%c1_115, %c0_116, %c0_117] : memref<2x32x11xf32, #tpu.memory_space<vmem>>, vector<1x32x11xf32>
    %418 = vector.shape_cast %417 : vector<1x32x11xf32> to vector<32x11xf32>
    %c0_118 = arith.constant 0 : index
    %c128_119 = arith.constant 128 : index
    %419 = vector.load %arg6[%c0_118, %c128_119] : memref<8x512xf32, #tpu.memory_space<vmem>>, vector<8x256xf32>
    tpu.vector_store %arg6[%c0_118, %c128_119], %412 {strides = array<i32>} : memref<8x512xf32, #tpu.memory_space<vmem>>, vector<8x256xf32>,
    %cst_120 = arith.constant 0.000000e+00 : f32
    %420 = vector.broadcast %cst_120 : f32 to vector<8x256xf32>
    %cst_121 = arith.constant 0.000000e+00 : f32
    %421 = vector.broadcast %cst_121 : f32 to vector<8x256xf32>
    %422 = vector.extract_strided_slice %414 {offsets = [0, 0], sizes = [8, 1], strides = [1, 1]} : vector<8x50xf32> to vector<8x1xf32>
    %c0_122 = arith.constant 0 : index
    %c77_123 = arith.constant 77 : index
    %423 = vector.load %arg6[%c0_122, %c77_123] : memref<8x512xf32, #tpu.memory_space<vmem>>, vector<8x256xf32>
    %424 = vector.broadcast %422 : vector<8x1xf32> to vector<8x256xf32>
    %425 = arith.mulf %423, %424 : vector<8x256xf32>
    %426 = arith.addf %421, %425 : vector<8x256xf32>
    %427 = vector.extract_strided_slice %414 {offsets = [0, 7], sizes = [8, 1], strides = [1, 1]} : vector<8x50xf32> to vector<8x1xf32>
    %c0_124 = arith.constant 0 : index
    %c93_125 = arith.constant 93 : index
    %428 = vector.load %arg6[%c0_124, %c93_125] : memref<8x512xf32, #tpu.memory_space<vmem>>, vector<8x256xf32>
    %429 = vector.broadcast %427 : vector<8x1xf32> to vector<8x256xf32>
    %430 = arith.mulf %428, %429 : vector<8x256xf32>
    %431 = arith.addf %426, %430 : vector<8x256xf32>
    %432 = vector.extract_strided_slice %414 {offsets = [0, 14], sizes = [8, 1], strides = [1, 1]} : vector<8x50xf32> to vector<8x1xf32>
    %c0_126 = arith.constant 0 : index
    %c109_127 = arith.constant 109 : index
    %433 = vector.load %arg6[%c0_126, %c109_127] : memref<8x512xf32, #tpu.memory_space<vmem>>, vector<8x256xf32>
    %434 = vector.broadcast %432 : vector<8x1xf32> to vector<8x256xf32>
    %435 = arith.mulf %433, %434 : vector<8x256xf32>
    %436 = arith.addf %431, %435 : vector<8x256xf32>
    %437 = vector.extract_strided_slice %414 {offsets = [0, 21], sizes = [8, 1], strides = [1, 1]} : vector<8x50xf32> to vector<8x1xf32>
    %c0_128 = arith.constant 0 : index
    %c125_129 = arith.constant 125 : index
    %438 = vector.load %arg6[%c0_128, %c125_129] : memref<8x512xf32, #tpu.memory_space<vmem>>, vector<8x256xf32>
    %439 = vector.broadcast %437 : vector<8x1xf32> to vector<8x256xf32>
    %440 = arith.mulf %438, %439 : vector<8x256xf32>
    %441 = arith.addf %436, %440 : vector<8x256xf32>
    %442 = vector.extract_strided_slice %414 {offsets = [0, 28], sizes = [8, 1], strides = [1, 1]} : vector<8x50xf32> to vector<8x1xf32>
    %c0_130 = arith.constant 0 : index
    %c141_131 = arith.constant 141 : index
    %443 = vector.load %arg6[%c0_130, %c141_131] : memref<8x512xf32, #tpu.memory_space<vmem>>, vector<8x256xf32>
    %444 = vector.broadcast %442 : vector<8x1xf32> to vector<8x256xf32>
    %445 = arith.mulf %443, %444 : vector<8x256xf32>
    %446 = arith.addf %441, %445 : vector<8x256xf32>
    %447 = vector.extract_strided_slice %414 {offsets = [0, 35], sizes = [8, 1], strides = [1, 1]} : vector<8x50xf32> to vector<8x1xf32>
    %c0_132 = arith.constant 0 : index
    %c157_133 = arith.constant 157 : index
    %448 = vector.load %arg6[%c0_132, %c157_133] : memref<8x512xf32, #tpu.memory_space<vmem>>, vector<8x256xf32>
    %449 = vector.broadcast %447 : vector<8x1xf32> to vector<8x256xf32>
    %450 = arith.mulf %448, %449 : vector<8x256xf32>
    %451 = arith.addf %446, %450 : vector<8x256xf32>
    %452 = vector.extract_strided_slice %414 {offsets = [0, 42], sizes = [8, 1], strides = [1, 1]} : vector<8x50xf32> to vector<8x1xf32>
    %c0_134 = arith.constant 0 : index
    %c173_135 = arith.constant 173 : index
    %453 = vector.load %arg6[%c0_134, %c173_135] : memref<8x512xf32, #tpu.memory_space<vmem>>, vector<8x256xf32>
    %454 = vector.broadcast %452 : vector<8x1xf32> to vector<8x256xf32>
    %455 = arith.mulf %453, %454 : vector<8x256xf32>
    %456 = arith.addf %451, %455 : vector<8x256xf32>
    %c3_i32_136 = arith.constant 3 : i32
    %457 = vector.broadcast %c3_i32_136 : i32 to vector<8x256xi32>
    %458 = arith.cmpi sge, %20, %457 : vector<8x256xi32>
    %cst_137 = arith.constant 0.000000e+00 : f32
    %459 = vector.broadcast %cst_137 : f32 to vector<8x256xf32>
    %460 = arith.select %458, %456, %459 : vector<8x256xi1>, vector<8x256xf32>
    %461 = arith.addf %420, %460 : vector<8x256xf32>
    %cst_138 = arith.constant 0.000000e+00 : f32
    %462 = vector.broadcast %cst_138 : f32 to vector<8x256xf32>
    %463 = vector.extract_strided_slice %414 {offsets = [0, 1], sizes = [8, 1], strides = [1, 1]} : vector<8x50xf32> to vector<8x1xf32>
    %c0_139 = arith.constant 0 : index
    %c78_140 = arith.constant 78 : index
    %464 = vector.load %arg6[%c0_139, %c78_140] : memref<8x512xf32, #tpu.memory_space<vmem>>, vector<8x256xf32>
    %465 = vector.broadcast %463 : vector<8x1xf32> to vector<8x256xf32>
    %466 = arith.mulf %464, %465 : vector<8x256xf32>
    %467 = arith.addf %462, %466 : vector<8x256xf32>
    %468 = vector.extract_strided_slice %414 {offsets = [0, 8], sizes = [8, 1], strides = [1, 1]} : vector<8x50xf32> to vector<8x1xf32>
    %c0_141 = arith.constant 0 : index
    %c94_142 = arith.constant 94 : index
    %469 = vector.load %arg6[%c0_141, %c94_142] : memref<8x512xf32, #tpu.memory_space<vmem>>, vector<8x256xf32>
    %470 = vector.broadcast %468 : vector<8x1xf32> to vector<8x256xf32>
    %471 = arith.mulf %469, %470 : vector<8x256xf32>
    %472 = arith.addf %467, %471 : vector<8x256xf32>
    %473 = vector.extract_strided_slice %414 {offsets = [0, 15], sizes = [8, 1], strides = [1, 1]} : vector<8x50xf32> to vector<8x1xf32>
    %c0_143 = arith.constant 0 : index
    %c110_144 = arith.constant 110 : index
    %474 = vector.load %arg6[%c0_143, %c110_144] : memref<8x512xf32, #tpu.memory_space<vmem>>, vector<8x256xf32>
    %475 = vector.broadcast %473 : vector<8x1xf32> to vector<8x256xf32>
    %476 = arith.mulf %474, %475 : vector<8x256xf32>
    %477 = arith.addf %472, %476 : vector<8x256xf32>
    %478 = vector.extract_strided_slice %414 {offsets = [0, 22], sizes = [8, 1], strides = [1, 1]} : vector<8x50xf32> to vector<8x1xf32>
    %c0_145 = arith.constant 0 : index
    %c126_146 = arith.constant 126 : index
    %479 = vector.load %arg6[%c0_145, %c126_146] : memref<8x512xf32, #tpu.memory_space<vmem>>, vector<8x256xf32>
    %480 = vector.broadcast %478 : vector<8x1xf32> to vector<8x256xf32>
    %481 = arith.mulf %479, %480 : vector<8x256xf32>
    %482 = arith.addf %477, %481 : vector<8x256xf32>
    %483 = vector.extract_strided_slice %414 {offsets = [0, 29], sizes = [8, 1], strides = [1, 1]} : vector<8x50xf32> to vector<8x1xf32>
    %c0_147 = arith.constant 0 : index
    %c142_148 = arith.constant 142 : index
    %484 = vector.load %arg6[%c0_147, %c142_148] : memref<8x512xf32, #tpu.memory_space<vmem>>, vector<8x256xf32>
    %485 = vector.broadcast %483 : vector<8x1xf32> to vector<8x256xf32>
    %486 = arith.mulf %484, %485 : vector<8x256xf32>
    %487 = arith.addf %482, %486 : vector<8x256xf32>
    %488 = vector.extract_strided_slice %414 {offsets = [0, 36], sizes = [8, 1], strides = [1, 1]} : vector<8x50xf32> to vector<8x1xf32>
    %c0_149 = arith.constant 0 : index
    %c158_150 = arith.constant 158 : index
    %489 = vector.load %arg6[%c0_149, %c158_150] : memref<8x512xf32, #tpu.memory_space<vmem>>, vector<8x256xf32>
    %490 = vector.broadcast %488 : vector<8x1xf32> to vector<8x256xf32>
    %491 = arith.mulf %489, %490 : vector<8x256xf32>
    %492 = arith.addf %487, %491 : vector<8x256xf32>
    %493 = vector.extract_strided_slice %414 {offsets = [0, 43], sizes = [8, 1], strides = [1, 1]} : vector<8x50xf32> to vector<8x1xf32>
    %c0_151 = arith.constant 0 : index
    %c174_152 = arith.constant 174 : index
    %494 = vector.load %arg6[%c0_151, %c174_152] : memref<8x512xf32, #tpu.memory_space<vmem>>, vector<8x256xf32>
    %495 = vector.broadcast %493 : vector<8x1xf32> to vector<8x256xf32>
    %496 = arith.mulf %494, %495 : vector<8x256xf32>
    %497 = arith.addf %492, %496 : vector<8x256xf32>
    %c2_i32_153 = arith.constant 2 : i32
    %498 = vector.broadcast %c2_i32_153 : i32 to vector<8x256xi32>
    %499 = arith.cmpi sge, %20, %498 : vector<8x256xi32>
    %cst_154 = arith.constant 0.000000e+00 : f32
    %500 = vector.broadcast %cst_154 : f32 to vector<8x256xf32>
    %501 = arith.select %499, %497, %500 : vector<8x256xi1>, vector<8x256xf32>
    %502 = arith.addf %461, %501 : vector<8x256xf32>
    %cst_155 = arith.constant 0.000000e+00 : f32
    %503 = vector.broadcast %cst_155 : f32 to vector<8x256xf32>
    %504 = vector.extract_strided_slice %414 {offsets = [0, 2], sizes = [8, 1], strides = [1, 1]} : vector<8x50xf32> to vector<8x1xf32>
    %c0_156 = arith.constant 0 : index
    %c79_157 = arith.constant 79 : index
    %505 = vector.load %arg6[%c0_156, %c79_157] : memref<8x512xf32, #tpu.memory_space<vmem>>, vector<8x256xf32>
    %506 = vector.broadcast %504 : vector<8x1xf32> to vector<8x256xf32>
    %507 = arith.mulf %505, %506 : vector<8x256xf32>
    %508 = arith.addf %503, %507 : vector<8x256xf32>
    %509 = vector.extract_strided_slice %414 {offsets = [0, 9], sizes = [8, 1], strides = [1, 1]} : vector<8x50xf32> to vector<8x1xf32>
    %c0_158 = arith.constant 0 : index
    %c95_159 = arith.constant 95 : index
    %510 = vector.load %arg6[%c0_158, %c95_159] : memref<8x512xf32, #tpu.memory_space<vmem>>, vector<8x256xf32>
    %511 = vector.broadcast %509 : vector<8x1xf32> to vector<8x256xf32>
    %512 = arith.mulf %510, %511 : vector<8x256xf32>
    %513 = arith.addf %508, %512 : vector<8x256xf32>
    %514 = vector.extract_strided_slice %414 {offsets = [0, 16], sizes = [8, 1], strides = [1, 1]} : vector<8x50xf32> to vector<8x1xf32>
    %c0_160 = arith.constant 0 : index
    %c111_161 = arith.constant 111 : index
    %515 = vector.load %arg6[%c0_160, %c111_161] : memref<8x512xf32, #tpu.memory_space<vmem>>, vector<8x256xf32>
    %516 = vector.broadcast %514 : vector<8x1xf32> to vector<8x256xf32>
    %517 = arith.mulf %515, %516 : vector<8x256xf32>
    %518 = arith.addf %513, %517 : vector<8x256xf32>
    %519 = vector.extract_strided_slice %414 {offsets = [0, 23], sizes = [8, 1], strides = [1, 1]} : vector<8x50xf32> to vector<8x1xf32>
    %c0_162 = arith.constant 0 : index
    %c127_163 = arith.constant 127 : index
    %520 = vector.load %arg6[%c0_162, %c127_163] : memref<8x512xf32, #tpu.memory_space<vmem>>, vector<8x256xf32>
    %521 = vector.broadcast %519 : vector<8x1xf32> to vector<8x256xf32>
    %522 = arith.mulf %520, %521 : vector<8x256xf32>
    %523 = arith.addf %518, %522 : vector<8x256xf32>
    %524 = vector.extract_strided_slice %414 {offsets = [0, 30], sizes = [8, 1], strides = [1, 1]} : vector<8x50xf32> to vector<8x1xf32>
    %c0_164 = arith.constant 0 : index
    %c143_165 = arith.constant 143 : index
    %525 = vector.load %arg6[%c0_164, %c143_165] : memref<8x512xf32, #tpu.memory_space<vmem>>, vector<8x256xf32>
    %526 = vector.broadcast %524 : vector<8x1xf32> to vector<8x256xf32>
    %527 = arith.mulf %525, %526 : vector<8x256xf32>
    %528 = arith.addf %523, %527 : vector<8x256xf32>
    %529 = vector.extract_strided_slice %414 {offsets = [0, 37], sizes = [8, 1], strides = [1, 1]} : vector<8x50xf32> to vector<8x1xf32>
    %c0_166 = arith.constant 0 : index
    %c159_167 = arith.constant 159 : index
    %530 = vector.load %arg6[%c0_166, %c159_167] : memref<8x512xf32, #tpu.memory_space<vmem>>, vector<8x256xf32>
    %531 = vector.broadcast %529 : vector<8x1xf32> to vector<8x256xf32>
    %532 = arith.mulf %530, %531 : vector<8x256xf32>
    %533 = arith.addf %528, %532 : vector<8x256xf32>
    %534 = vector.extract_strided_slice %414 {offsets = [0, 44], sizes = [8, 1], strides = [1, 1]} : vector<8x50xf32> to vector<8x1xf32>
    %c0_168 = arith.constant 0 : index
    %c175_169 = arith.constant 175 : index
    %535 = vector.load %arg6[%c0_168, %c175_169] : memref<8x512xf32, #tpu.memory_space<vmem>>, vector<8x256xf32>
    %536 = vector.broadcast %534 : vector<8x1xf32> to vector<8x256xf32>
    %537 = arith.mulf %535, %536 : vector<8x256xf32>
    %538 = arith.addf %533, %537 : vector<8x256xf32>
    %c1_i32_170 = arith.constant 1 : i32
    %539 = vector.broadcast %c1_i32_170 : i32 to vector<8x256xi32>
    %540 = arith.cmpi sge, %20, %539 : vector<8x256xi32>
    %cst_171 = arith.constant 0.000000e+00 : f32
    %541 = vector.broadcast %cst_171 : f32 to vector<8x256xf32>
    %542 = arith.select %540, %538, %541 : vector<8x256xi1>, vector<8x256xf32>
    %543 = arith.addf %502, %542 : vector<8x256xf32>
    %cst_172 = arith.constant 0.000000e+00 : f32
    %544 = vector.broadcast %cst_172 : f32 to vector<8x256xf32>
    %545 = vector.extract_strided_slice %414 {offsets = [0, 3], sizes = [8, 1], strides = [1, 1]} : vector<8x50xf32> to vector<8x1xf32>
    %c0_173 = arith.constant 0 : index
    %c80_174 = arith.constant 80 : index
    %546 = vector.load %arg6[%c0_173, %c80_174] : memref<8x512xf32, #tpu.memory_space<vmem>>, vector<8x256xf32>
    %547 = vector.broadcast %545 : vector<8x1xf32> to vector<8x256xf32>
    %548 = arith.mulf %546, %547 : vector<8x256xf32>
    %549 = arith.addf %544, %548 : vector<8x256xf32>
    %550 = vector.extract_strided_slice %414 {offsets = [0, 10], sizes = [8, 1], strides = [1, 1]} : vector<8x50xf32> to vector<8x1xf32>
    %c0_175 = arith.constant 0 : index
    %c96_176 = arith.constant 96 : index
    %551 = vector.load %arg6[%c0_175, %c96_176] : memref<8x512xf32, #tpu.memory_space<vmem>>, vector<8x256xf32>
    %552 = vector.broadcast %550 : vector<8x1xf32> to vector<8x256xf32>
    %553 = arith.mulf %551, %552 : vector<8x256xf32>
    %554 = arith.addf %549, %553 : vector<8x256xf32>
    %555 = vector.extract_strided_slice %414 {offsets = [0, 17], sizes = [8, 1], strides = [1, 1]} : vector<8x50xf32> to vector<8x1xf32>
    %c0_177 = arith.constant 0 : index
    %c112_178 = arith.constant 112 : index
    %556 = vector.load %arg6[%c0_177, %c112_178] : memref<8x512xf32, #tpu.memory_space<vmem>>, vector<8x256xf32>
    %557 = vector.broadcast %555 : vector<8x1xf32> to vector<8x256xf32>
    %558 = arith.mulf %556, %557 : vector<8x256xf32>
    %559 = arith.addf %554, %558 : vector<8x256xf32>
    %560 = vector.extract_strided_slice %414 {offsets = [0, 24], sizes = [8, 1], strides = [1, 1]} : vector<8x50xf32> to vector<8x1xf32>
    %c0_179 = arith.constant 0 : index
    %c128_180 = arith.constant 128 : index
    %561 = vector.load %arg6[%c0_179, %c128_180] : memref<8x512xf32, #tpu.memory_space<vmem>>, vector<8x256xf32>
    %562 = vector.broadcast %560 : vector<8x1xf32> to vector<8x256xf32>
    %563 = arith.mulf %561, %562 : vector<8x256xf32>
    %564 = arith.addf %559, %563 : vector<8x256xf32>
    %565 = vector.extract_strided_slice %414 {offsets = [0, 31], sizes = [8, 1], strides = [1, 1]} : vector<8x50xf32> to vector<8x1xf32>
    %c0_181 = arith.constant 0 : index
    %c144_182 = arith.constant 144 : index
    %566 = vector.load %arg6[%c0_181, %c144_182] : memref<8x512xf32, #tpu.memory_space<vmem>>, vector<8x256xf32>
    %567 = vector.broadcast %565 : vector<8x1xf32> to vector<8x256xf32>
    %568 = arith.mulf %566, %567 : vector<8x256xf32>
    %569 = arith.addf %564, %568 : vector<8x256xf32>
    %570 = vector.extract_strided_slice %414 {offsets = [0, 38], sizes = [8, 1], strides = [1, 1]} : vector<8x50xf32> to vector<8x1xf32>
    %c0_183 = arith.constant 0 : index
    %c160_184 = arith.constant 160 : index
    %571 = vector.load %arg6[%c0_183, %c160_184] : memref<8x512xf32, #tpu.memory_space<vmem>>, vector<8x256xf32>
    %572 = vector.broadcast %570 : vector<8x1xf32> to vector<8x256xf32>
    %573 = arith.mulf %571, %572 : vector<8x256xf32>
    %574 = arith.addf %569, %573 : vector<8x256xf32>
    %575 = vector.extract_strided_slice %414 {offsets = [0, 45], sizes = [8, 1], strides = [1, 1]} : vector<8x50xf32> to vector<8x1xf32>
    %c0_185 = arith.constant 0 : index
    %c176_186 = arith.constant 176 : index
    %576 = vector.load %arg6[%c0_185, %c176_186] : memref<8x512xf32, #tpu.memory_space<vmem>>, vector<8x256xf32>
    %577 = vector.broadcast %575 : vector<8x1xf32> to vector<8x256xf32>
    %578 = arith.mulf %576, %577 : vector<8x256xf32>
    %579 = arith.addf %574, %578 : vector<8x256xf32>
    %580 = arith.addf %543, %579 : vector<8x256xf32>
    %cst_187 = arith.constant 0.000000e+00 : f32
    %581 = vector.broadcast %cst_187 : f32 to vector<8x256xf32>
    %582 = vector.extract_strided_slice %414 {offsets = [0, 4], sizes = [8, 1], strides = [1, 1]} : vector<8x50xf32> to vector<8x1xf32>
    %c0_188 = arith.constant 0 : index
    %c81_189 = arith.constant 81 : index
    %583 = vector.load %arg6[%c0_188, %c81_189] : memref<8x512xf32, #tpu.memory_space<vmem>>, vector<8x256xf32>
    %584 = vector.broadcast %582 : vector<8x1xf32> to vector<8x256xf32>
    %585 = arith.mulf %583, %584 : vector<8x256xf32>
    %586 = arith.addf %581, %585 : vector<8x256xf32>
    %587 = vector.extract_strided_slice %414 {offsets = [0, 11], sizes = [8, 1], strides = [1, 1]} : vector<8x50xf32> to vector<8x1xf32>
    %c0_190 = arith.constant 0 : index
    %c97_191 = arith.constant 97 : index
    %588 = vector.load %arg6[%c0_190, %c97_191] : memref<8x512xf32, #tpu.memory_space<vmem>>, vector<8x256xf32>
    %589 = vector.broadcast %587 : vector<8x1xf32> to vector<8x256xf32>
    %590 = arith.mulf %588, %589 : vector<8x256xf32>
    %591 = arith.addf %586, %590 : vector<8x256xf32>
    %592 = vector.extract_strided_slice %414 {offsets = [0, 18], sizes = [8, 1], strides = [1, 1]} : vector<8x50xf32> to vector<8x1xf32>
    %c0_192 = arith.constant 0 : index
    %c113_193 = arith.constant 113 : index
    %593 = vector.load %arg6[%c0_192, %c113_193] : memref<8x512xf32, #tpu.memory_space<vmem>>, vector<8x256xf32>
    %594 = vector.broadcast %592 : vector<8x1xf32> to vector<8x256xf32>
    %595 = arith.mulf %593, %594 : vector<8x256xf32>
    %596 = arith.addf %591, %595 : vector<8x256xf32>
    %597 = vector.extract_strided_slice %414 {offsets = [0, 25], sizes = [8, 1], strides = [1, 1]} : vector<8x50xf32> to vector<8x1xf32>
    %c0_194 = arith.constant 0 : index
    %c129_195 = arith.constant 129 : index
    %598 = vector.load %arg6[%c0_194, %c129_195] : memref<8x512xf32, #tpu.memory_space<vmem>>, vector<8x256xf32>
    %599 = vector.broadcast %597 : vector<8x1xf32> to vector<8x256xf32>
    %600 = arith.mulf %598, %599 : vector<8x256xf32>
    %601 = arith.addf %596, %600 : vector<8x256xf32>
    %602 = vector.extract_strided_slice %414 {offsets = [0, 32], sizes = [8, 1], strides = [1, 1]} : vector<8x50xf32> to vector<8x1xf32>
    %c0_196 = arith.constant 0 : index
    %c145_197 = arith.constant 145 : index
    %603 = vector.load %arg6[%c0_196, %c145_197] : memref<8x512xf32, #tpu.memory_space<vmem>>, vector<8x256xf32>
    %604 = vector.broadcast %602 : vector<8x1xf32> to vector<8x256xf32>
    %605 = arith.mulf %603, %604 : vector<8x256xf32>
    %606 = arith.addf %601, %605 : vector<8x256xf32>
    %607 = vector.extract_strided_slice %414 {offsets = [0, 39], sizes = [8, 1], strides = [1, 1]} : vector<8x50xf32> to vector<8x1xf32>
    %c0_198 = arith.constant 0 : index
    %c161_199 = arith.constant 161 : index
    %608 = vector.load %arg6[%c0_198, %c161_199] : memref<8x512xf32, #tpu.memory_space<vmem>>, vector<8x256xf32>
    %609 = vector.broadcast %607 : vector<8x1xf32> to vector<8x256xf32>
    %610 = arith.mulf %608, %609 : vector<8x256xf32>
    %611 = arith.addf %606, %610 : vector<8x256xf32>
    %612 = vector.extract_strided_slice %414 {offsets = [0, 46], sizes = [8, 1], strides = [1, 1]} : vector<8x50xf32> to vector<8x1xf32>
    %c0_200 = arith.constant 0 : index
    %c177_201 = arith.constant 177 : index
    %613 = vector.load %arg6[%c0_200, %c177_201] : memref<8x512xf32, #tpu.memory_space<vmem>>, vector<8x256xf32>
    %614 = vector.broadcast %612 : vector<8x1xf32> to vector<8x256xf32>
    %615 = arith.mulf %613, %614 : vector<8x256xf32>
    %616 = arith.addf %611, %615 : vector<8x256xf32>
    %c15_i32_202 = arith.constant 15 : i32
    %617 = vector.broadcast %c15_i32_202 : i32 to vector<8x256xi32>
    %618 = arith.cmpi slt, %20, %617 : vector<8x256xi32>
    %cst_203 = arith.constant 0.000000e+00 : f32
    %619 = vector.broadcast %cst_203 : f32 to vector<8x256xf32>
    %620 = arith.select %618, %616, %619 : vector<8x256xi1>, vector<8x256xf32>
    %621 = arith.addf %580, %620 : vector<8x256xf32>
    %cst_204 = arith.constant 0.000000e+00 : f32
    %622 = vector.broadcast %cst_204 : f32 to vector<8x256xf32>
    %623 = vector.extract_strided_slice %414 {offsets = [0, 5], sizes = [8, 1], strides = [1, 1]} : vector<8x50xf32> to vector<8x1xf32>
    %c0_205 = arith.constant 0 : index
    %c82_206 = arith.constant 82 : index
    %624 = vector.load %arg6[%c0_205, %c82_206] : memref<8x512xf32, #tpu.memory_space<vmem>>, vector<8x256xf32>
    %625 = vector.broadcast %623 : vector<8x1xf32> to vector<8x256xf32>
    %626 = arith.mulf %624, %625 : vector<8x256xf32>
    %627 = arith.addf %622, %626 : vector<8x256xf32>
    %628 = vector.extract_strided_slice %414 {offsets = [0, 12], sizes = [8, 1], strides = [1, 1]} : vector<8x50xf32> to vector<8x1xf32>
    %c0_207 = arith.constant 0 : index
    %c98_208 = arith.constant 98 : index
    %629 = vector.load %arg6[%c0_207, %c98_208] : memref<8x512xf32, #tpu.memory_space<vmem>>, vector<8x256xf32>
    %630 = vector.broadcast %628 : vector<8x1xf32> to vector<8x256xf32>
    %631 = arith.mulf %629, %630 : vector<8x256xf32>
    %632 = arith.addf %627, %631 : vector<8x256xf32>
    %633 = vector.extract_strided_slice %414 {offsets = [0, 19], sizes = [8, 1], strides = [1, 1]} : vector<8x50xf32> to vector<8x1xf32>
    %c0_209 = arith.constant 0 : index
    %c114_210 = arith.constant 114 : index
    %634 = vector.load %arg6[%c0_209, %c114_210] : memref<8x512xf32, #tpu.memory_space<vmem>>, vector<8x256xf32>
    %635 = vector.broadcast %633 : vector<8x1xf32> to vector<8x256xf32>
    %636 = arith.mulf %634, %635 : vector<8x256xf32>
    %637 = arith.addf %632, %636 : vector<8x256xf32>
    %638 = vector.extract_strided_slice %414 {offsets = [0, 26], sizes = [8, 1], strides = [1, 1]} : vector<8x50xf32> to vector<8x1xf32>
    %c0_211 = arith.constant 0 : index
    %c130_212 = arith.constant 130 : index
    %639 = vector.load %arg6[%c0_211, %c130_212] : memref<8x512xf32, #tpu.memory_space<vmem>>, vector<8x256xf32>
    %640 = vector.broadcast %638 : vector<8x1xf32> to vector<8x256xf32>
    %641 = arith.mulf %639, %640 : vector<8x256xf32>
    %642 = arith.addf %637, %641 : vector<8x256xf32>
    %643 = vector.extract_strided_slice %414 {offsets = [0, 33], sizes = [8, 1], strides = [1, 1]} : vector<8x50xf32> to vector<8x1xf32>
    %c0_213 = arith.constant 0 : index
    %c146_214 = arith.constant 146 : index
    %644 = vector.load %arg6[%c0_213, %c146_214] : memref<8x512xf32, #tpu.memory_space<vmem>>, vector<8x256xf32>
    %645 = vector.broadcast %643 : vector<8x1xf32> to vector<8x256xf32>
    %646 = arith.mulf %644, %645 : vector<8x256xf32>
    %647 = arith.addf %642, %646 : vector<8x256xf32>
    %648 = vector.extract_strided_slice %414 {offsets = [0, 40], sizes = [8, 1], strides = [1, 1]} : vector<8x50xf32> to vector<8x1xf32>
    %c0_215 = arith.constant 0 : index
    %c162_216 = arith.constant 162 : index
    %649 = vector.load %arg6[%c0_215, %c162_216] : memref<8x512xf32, #tpu.memory_space<vmem>>, vector<8x256xf32>
    %650 = vector.broadcast %648 : vector<8x1xf32> to vector<8x256xf32>
    %651 = arith.mulf %649, %650 : vector<8x256xf32>
    %652 = arith.addf %647, %651 : vector<8x256xf32>
    %653 = vector.extract_strided_slice %414 {offsets = [0, 47], sizes = [8, 1], strides = [1, 1]} : vector<8x50xf32> to vector<8x1xf32>
    %c0_217 = arith.constant 0 : index
    %c178_218 = arith.constant 178 : index
    %654 = vector.load %arg6[%c0_217, %c178_218] : memref<8x512xf32, #tpu.memory_space<vmem>>, vector<8x256xf32>
    %655 = vector.broadcast %653 : vector<8x1xf32> to vector<8x256xf32>
    %656 = arith.mulf %654, %655 : vector<8x256xf32>
    %657 = arith.addf %652, %656 : vector<8x256xf32>
    %c14_i32_219 = arith.constant 14 : i32
    %658 = vector.broadcast %c14_i32_219 : i32 to vector<8x256xi32>
    %659 = arith.cmpi slt, %20, %658 : vector<8x256xi32>
    %cst_220 = arith.constant 0.000000e+00 : f32
    %660 = vector.broadcast %cst_220 : f32 to vector<8x256xf32>
    %661 = arith.select %659, %657, %660 : vector<8x256xi1>, vector<8x256xf32>
    %662 = arith.addf %621, %661 : vector<8x256xf32>
    %cst_221 = arith.constant 0.000000e+00 : f32
    %663 = vector.broadcast %cst_221 : f32 to vector<8x256xf32>
    %664 = vector.extract_strided_slice %414 {offsets = [0, 6], sizes = [8, 1], strides = [1, 1]} : vector<8x50xf32> to vector<8x1xf32>
    %c0_222 = arith.constant 0 : index
    %c83_223 = arith.constant 83 : index
    %665 = vector.load %arg6[%c0_222, %c83_223] : memref<8x512xf32, #tpu.memory_space<vmem>>, vector<8x256xf32>
    %666 = vector.broadcast %664 : vector<8x1xf32> to vector<8x256xf32>
    %667 = arith.mulf %665, %666 : vector<8x256xf32>
    %668 = arith.addf %663, %667 : vector<8x256xf32>
    %669 = vector.extract_strided_slice %414 {offsets = [0, 13], sizes = [8, 1], strides = [1, 1]} : vector<8x50xf32> to vector<8x1xf32>
    %c0_224 = arith.constant 0 : index
    %c99_225 = arith.constant 99 : index
    %670 = vector.load %arg6[%c0_224, %c99_225] : memref<8x512xf32, #tpu.memory_space<vmem>>, vector<8x256xf32>
    %671 = vector.broadcast %669 : vector<8x1xf32> to vector<8x256xf32>
    %672 = arith.mulf %670, %671 : vector<8x256xf32>
    %673 = arith.addf %668, %672 : vector<8x256xf32>
    %674 = vector.extract_strided_slice %414 {offsets = [0, 20], sizes = [8, 1], strides = [1, 1]} : vector<8x50xf32> to vector<8x1xf32>
    %c0_226 = arith.constant 0 : index
    %c115_227 = arith.constant 115 : index
    %675 = vector.load %arg6[%c0_226, %c115_227] : memref<8x512xf32, #tpu.memory_space<vmem>>, vector<8x256xf32>
    %676 = vector.broadcast %674 : vector<8x1xf32> to vector<8x256xf32>
    %677 = arith.mulf %675, %676 : vector<8x256xf32>
    %678 = arith.addf %673, %677 : vector<8x256xf32>
    %679 = vector.extract_strided_slice %414 {offsets = [0, 27], sizes = [8, 1], strides = [1, 1]} : vector<8x50xf32> to vector<8x1xf32>
    %c0_228 = arith.constant 0 : index
    %c131_229 = arith.constant 131 : index
    %680 = vector.load %arg6[%c0_228, %c131_229] : memref<8x512xf32, #tpu.memory_space<vmem>>, vector<8x256xf32>
    %681 = vector.broadcast %679 : vector<8x1xf32> to vector<8x256xf32>
    %682 = arith.mulf %680, %681 : vector<8x256xf32>
    %683 = arith.addf %678, %682 : vector<8x256xf32>
    %684 = vector.extract_strided_slice %414 {offsets = [0, 34], sizes = [8, 1], strides = [1, 1]} : vector<8x50xf32> to vector<8x1xf32>
    %c0_230 = arith.constant 0 : index
    %c147_231 = arith.constant 147 : index
    %685 = vector.load %arg6[%c0_230, %c147_231] : memref<8x512xf32, #tpu.memory_space<vmem>>, vector<8x256xf32>
    %686 = vector.broadcast %684 : vector<8x1xf32> to vector<8x256xf32>
    %687 = arith.mulf %685, %686 : vector<8x256xf32>
    %688 = arith.addf %683, %687 : vector<8x256xf32>
    %689 = vector.extract_strided_slice %414 {offsets = [0, 41], sizes = [8, 1], strides = [1, 1]} : vector<8x50xf32> to vector<8x1xf32>
    %c0_232 = arith.constant 0 : index
    %c163_233 = arith.constant 163 : index
    %690 = vector.load %arg6[%c0_232, %c163_233] : memref<8x512xf32, #tpu.memory_space<vmem>>, vector<8x256xf32>
    %691 = vector.broadcast %689 : vector<8x1xf32> to vector<8x256xf32>
    %692 = arith.mulf %690, %691 : vector<8x256xf32>
    %693 = arith.addf %688, %692 : vector<8x256xf32>
    %694 = vector.extract_strided_slice %414 {offsets = [0, 48], sizes = [8, 1], strides = [1, 1]} : vector<8x50xf32> to vector<8x1xf32>
    %c0_234 = arith.constant 0 : index
    %c179_235 = arith.constant 179 : index
    %695 = vector.load %arg6[%c0_234, %c179_235] : memref<8x512xf32, #tpu.memory_space<vmem>>, vector<8x256xf32>
    %696 = vector.broadcast %694 : vector<8x1xf32> to vector<8x256xf32>
    %697 = arith.mulf %695, %696 : vector<8x256xf32>
    %698 = arith.addf %693, %697 : vector<8x256xf32>
    %c13_i32_236 = arith.constant 13 : i32
    %699 = vector.broadcast %c13_i32_236 : i32 to vector<8x256xi32>
    %700 = arith.cmpi slt, %20, %699 : vector<8x256xi32>
    %cst_237 = arith.constant 0.000000e+00 : f32
    %701 = vector.broadcast %cst_237 : f32 to vector<8x256xf32>
    %702 = arith.select %700, %698, %701 : vector<8x256xi1>, vector<8x256xf32>
    %703 = arith.addf %662, %702 : vector<8x256xf32>
    %704 = vector.extract_strided_slice %414 {offsets = [0, 49], sizes = [8, 1], strides = [1, 1]} : vector<8x50xf32> to vector<8x1xf32>
    %705 = vector.broadcast %704 : vector<8x1xf32> to vector<8x256xf32>
    %706 = arith.addf %703, %705 : vector<8x256xf32>
    %cst_238 = arith.constant dense<0.000000e+00> : vector<256xf32>
    %707 = vector.multi_reduction <add>, %706, %cst_238 [0] : vector<8x256xf32> to vector<256xf32>
    %708 = vector.shape_cast %707 : vector<256xf32> to vector<1x256xf32>
    %cst_239 = arith.constant 8.000000e+00 : f32
    %709 = vector.broadcast %cst_239 : f32 to vector<1x256xf32>
    %710 = arith.divf %708, %709 : vector<1x256xf32>
    %711 = arith.mulf %706, %706 : vector<8x256xf32>
    %cst_240 = arith.constant dense<0.000000e+00> : vector<256xf32>
    %712 = vector.multi_reduction <add>, %711, %cst_240 [0] : vector<8x256xf32> to vector<256xf32>
    %713 = vector.shape_cast %712 : vector<256xf32> to vector<1x256xf32>
    %cst_241 = arith.constant 8.000000e+00 : f32
    %714 = vector.broadcast %cst_241 : f32 to vector<1x256xf32>
    %715 = arith.divf %713, %714 : vector<1x256xf32>
    %716 = arith.mulf %710, %710 : vector<1x256xf32>
    %717 = arith.subf %715, %716 : vector<1x256xf32>
    %cst_242 = arith.constant 9.99999997E-7 : f32
    %718 = vector.broadcast %cst_242 : f32 to vector<1x256xf32>
    %719 = arith.addf %717, %718 : vector<1x256xf32>
    %720 = math.rsqrt %719 : vector<1x256xf32>
    %721 = vector.broadcast %710 : vector<1x256xf32> to vector<8x256xf32>
    %722 = arith.subf %706, %721 : vector<8x256xf32>
    %723 = vector.broadcast %720 : vector<1x256xf32> to vector<8x256xf32>
    %724 = arith.mulf %722, %723 : vector<8x256xf32>
    %725 = vector.extract_strided_slice %416 {offsets = [0, 32], sizes = [8, 1], strides = [1, 1]} : vector<8x35xf32> to vector<8x1xf32>
    %726 = vector.broadcast %725 : vector<8x1xf32> to vector<8x256xf32>
    %727 = arith.mulf %724, %726 : vector<8x256xf32>
    %728 = vector.extract_strided_slice %416 {offsets = [0, 33], sizes = [8, 1], strides = [1, 1]} : vector<8x35xf32> to vector<8x1xf32>
    %729 = vector.broadcast %728 : vector<8x1xf32> to vector<8x256xf32>
    %730 = arith.addf %727, %729 : vector<8x256xf32>
    %731 = vector.extract_strided_slice %418 {offsets = [0, 0], sizes = [32, 8], strides = [1, 1]} : vector<32x11xf32> to vector<32x8xf32>
    %cst_243 = arith.constant dense<0.000000e+00> : vector<32x256xf32>
    %732 = tpu.matmul %731, %730, %cst_243 {dimension_numbers = #tpu.dot_dimension_numbers<[1], [0], [0], [1], [0, 0, 1, 1], [], []>, precision = #tpu.contract_precision<fp32>} : vector<32x8xf32>, vector<8x256xf32>, vector<32x256xf32> -> vector<32x256xf32>
    %733 = vector.extract_strided_slice %418 {offsets = [0, 8], sizes = [32, 1], strides = [1, 1]} : vector<32x11xf32> to vector<32x1xf32>
    %734 = vector.broadcast %733 : vector<32x1xf32> to vector<32x256xf32>
    %735 = arith.addf %732, %734 : vector<32x256xf32>
    %cst_244 = arith.constant 5.000000e-01 : f32
    %736 = vector.broadcast %cst_244 : f32 to vector<32x256xf32>
    %737 = arith.mulf %736, %735 : vector<32x256xf32>
    %cst_245 = arith.constant 0.707106769 : f32
    %738 = vector.broadcast %cst_245 : f32 to vector<32x256xf32>
    %739 = arith.mulf %735, %738 : vector<32x256xf32>
    %740 = math.absf %739 : vector<32x256xf32>
    %cst_246 = arith.constant 0.327591091 : f32
    %741 = vector.broadcast %cst_246 : f32 to vector<32x256xf32>
    %742 = arith.mulf %741, %740 : vector<32x256xf32>
    %cst_247 = arith.constant 1.000000e+00 : f32
    %743 = vector.broadcast %cst_247 : f32 to vector<32x256xf32>
    %744 = arith.addf %743, %742 : vector<32x256xf32>
    %cst_248 = arith.constant 1.000000e+00 : f32
    %745 = vector.broadcast %cst_248 : f32 to vector<32x256xf32>
    %746 = arith.divf %745, %744 : vector<32x256xf32>
    %cst_249 = arith.constant 1.06140542 : f32
    %747 = vector.broadcast %cst_249 : f32 to vector<32x256xf32>
    %748 = arith.mulf %747, %746 : vector<32x256xf32>
    %cst_250 = arith.constant -1.45315206 : f32
    %749 = vector.broadcast %cst_250 : f32 to vector<32x256xf32>
    %750 = arith.addf %748, %749 : vector<32x256xf32>
    %751 = arith.mulf %750, %746 : vector<32x256xf32>
    %cst_251 = arith.constant 1.42141378 : f32
    %752 = vector.broadcast %cst_251 : f32 to vector<32x256xf32>
    %753 = arith.addf %751, %752 : vector<32x256xf32>
    %754 = arith.mulf %753, %746 : vector<32x256xf32>
    %cst_252 = arith.constant -0.284496725 : f32
    %755 = vector.broadcast %cst_252 : f32 to vector<32x256xf32>
    %756 = arith.addf %754, %755 : vector<32x256xf32>
    %757 = arith.mulf %756, %746 : vector<32x256xf32>
    %cst_253 = arith.constant 0.254829586 : f32
    %758 = vector.broadcast %cst_253 : f32 to vector<32x256xf32>
    %759 = arith.addf %757, %758 : vector<32x256xf32>
    %760 = arith.mulf %759, %746 : vector<32x256xf32>
    %cst_254 = arith.constant 0.000000e+00 : f32
    %761 = vector.broadcast %cst_254 : f32 to vector<32x256xf32>
    %762 = arith.subf %761, %740 : vector<32x256xf32>
    %763 = arith.mulf %762, %740 : vector<32x256xf32>
    %764 = math.exp %763 : vector<32x256xf32>
    %765 = arith.mulf %760, %764 : vector<32x256xf32>
    %cst_255 = arith.constant 1.000000e+00 : f32
    %766 = vector.broadcast %cst_255 : f32 to vector<32x256xf32>
    %767 = arith.subf %766, %765 : vector<32x256xf32>
    %cst_256 = arith.constant 0.000000e+00 : f32
    %768 = vector.broadcast %cst_256 : f32 to vector<32x256xf32>
    %769 = arith.cmpf oge, %739, %768 : vector<32x256xf32>
    %cst_257 = arith.constant 0.000000e+00 : f32
    %770 = vector.broadcast %cst_257 : f32 to vector<32x256xf32>
    %771 = arith.subf %770, %767 : vector<32x256xf32>
    %772 = arith.select %769, %767, %771 : vector<32x256xi1>, vector<32x256xf32>
    %cst_258 = arith.constant 1.000000e+00 : f32
    %773 = vector.broadcast %cst_258 : f32 to vector<32x256xf32>
    %774 = arith.addf %773, %772 : vector<32x256xf32>
    %775 = arith.mulf %737, %774 : vector<32x256xf32>
    %776 = arith.mulf %775, %775 : vector<32x256xf32>
    %cst_259 = arith.constant dense<0.000000e+00> : vector<32xf32>
    %777 = vector.multi_reduction <add>, %776, %cst_259 [1] : vector<32x256xf32> to vector<32xf32>
    %778 = vector.shape_cast %777 : vector<32xf32> to vector<32x1xf32>
    %779 = math.sqrt %778 : vector<32x1xf32>
    %cst_260 = arith.constant dense<0.000000e+00> : vector<1xf32>
    %780 = vector.multi_reduction <add>, %779, %cst_260 [0] : vector<32x1xf32> to vector<1xf32>
    %781 = vector.shape_cast %780 : vector<1xf32> to vector<1x1xf32>
    %cst_261 = arith.constant 3.200000e+01 : f32
    %782 = vector.broadcast %cst_261 : f32 to vector<1x1xf32>
    %783 = arith.divf %781, %782 : vector<1x1xf32>
    %cst_262 = arith.constant 9.99999997E-7 : f32
    %784 = vector.broadcast %cst_262 : f32 to vector<1x1xf32>
    %785 = arith.addf %783, %784 : vector<1x1xf32>
    %786 = vector.broadcast %785 : vector<1x1xf32> to vector<32x1xf32>
    %787 = arith.divf %779, %786 : vector<32x1xf32>
    %788 = vector.extract_strided_slice %418 {offsets = [0, 9], sizes = [32, 1], strides = [1, 1]} : vector<32x11xf32> to vector<32x1xf32>
    %789 = vector.broadcast %787 : vector<32x1xf32> to vector<32x256xf32>
    %790 = arith.mulf %775, %789 : vector<32x256xf32>
    %791 = vector.broadcast %788 : vector<32x1xf32> to vector<32x256xf32>
    %792 = arith.mulf %791, %790 : vector<32x256xf32>
    %793 = vector.extract_strided_slice %418 {offsets = [0, 10], sizes = [32, 1], strides = [1, 1]} : vector<32x11xf32> to vector<32x1xf32>
    %794 = vector.broadcast %793 : vector<32x1xf32> to vector<32x256xf32>
    %795 = arith.addf %792, %794 : vector<32x256xf32>
    %796 = arith.addf %795, %775 : vector<32x256xf32>
    %797 = vector.extract_strided_slice %416 {offsets = [0, 0], sizes = [8, 32], strides = [1, 1]} : vector<8x35xf32> to vector<8x32xf32>
    %cst_263 = arith.constant dense<0.000000e+00> : vector<8x256xf32>
    %798 = tpu.matmul %797, %796, %cst_263 {dimension_numbers = #tpu.dot_dimension_numbers<[1], [0], [0], [1], [0, 0, 1, 1], [], []>, precision = #tpu.contract_precision<fp32>} : vector<8x32xf32>, vector<32x256xf32>, vector<8x256xf32> -> vector<8x256xf32>
    %799 = vector.extract_strided_slice %416 {offsets = [0, 34], sizes = [8, 1], strides = [1, 1]} : vector<8x35xf32> to vector<8x1xf32>
    %800 = vector.broadcast %799 : vector<8x1xf32> to vector<8x256xf32>
    %801 = arith.addf %798, %800 : vector<8x256xf32>
    %802 = arith.addf %412, %801 : vector<8x256xf32>
    %c0_264 = arith.constant 0 : index
    %c0_265 = arith.constant 0 : index
    %c0_266 = arith.constant 0 : index
    %803 = vector.load %arg5[%c0_264, %c0_265, %c0_266] : memref<1x8x256xf32, #tpu.memory_space<vmem>>, vector<1x8x256xf32>
    %804 = vector.shape_cast %803 : vector<1x8x256xf32> to vector<8x256xf32>
    %805 = vector.shape_cast %802 : vector<8x256xf32> to vector<1x8x256xf32>
    tpu.vector_store %arg5[%c0_264, %c0_265, %c0_266], %805 {strides = array<i32>} : memref<1x8x256xf32, #tpu.memory_space<vmem>>, vector<1x8x256xf32>,
    return
  }
  func.func @transform_0(%arg0: i32) -> (i32, i32, i32) {
    %c0_i32 = arith.constant 0 : i32
    %c0_i32_0 = arith.constant 0 : i32
    %c0_i32_1 = arith.constant 0 : i32
    return %arg0, %c0_i32, %c0_i32_0 : i32, i32, i32
  }
  func.func @transform_1(%arg0: i32) -> (i32, i32, i32) {
    %c0_i32 = arith.constant 0 : i32
    %c0_i32_0 = arith.constant 0 : i32
    %c0_i32_1 = arith.constant 0 : i32
    %c0_i32_2 = arith.constant 0 : i32
    return %c0_i32, %c0_i32_0, %c0_i32_1 : i32, i32, i32
  }
  func.func @transform_2(%arg0: i32) -> (i32, i32, i32) {
    %c0_i32 = arith.constant 0 : i32
    %c0_i32_0 = arith.constant 0 : i32
    %c0_i32_1 = arith.constant 0 : i32
    %c0_i32_2 = arith.constant 0 : i32
    return %c0_i32, %c0_i32_0, %c0_i32_1 : i32, i32, i32
  }
  func.func @transform_3(%arg0: i32) -> (i32, i32, i32) {
    %c0_i32 = arith.constant 0 : i32
    %c0_i32_0 = arith.constant 0 : i32
    %c0_i32_1 = arith.constant 0 : i32
    %c0_i32_2 = arith.constant 0 : i32
    return %c0_i32, %c0_i32_0, %c0_i32_1 : i32, i32, i32
  }
  func.func @transform_4(%arg0: i32) -> (i32, i32, i32) {
    %c0_i32 = arith.constant 0 : i32
    %c0_i32_0 = arith.constant 0 : i32
    %c0_i32_1 = arith.constant 0 : i32
    return %arg0, %c0_i32, %c0_i32_0 : i32, i32, i32
  }
}

</mosaic_0001>

<llo_original>
// kernel: convnext_stage.1
$region0: #{convnext_stage.1}
  #allocation0 [shape = 'u32[]', space=smem, size = 0x4, offset = 0x4, fixed_abs, tag = 'smem constant byte address 0x4 - core index']
  #allocation1 [shape = 'u32[144,128]{1,0:T(1,128)}', space=vmem, size = 0x12000, scoped, tag = 'internal scratch']
  #allocation2 [shape = 'f32[8,512]{1,0:T(8,128)}', space=vmem, size = 0x4000, scoped, tag = 'scratch operand']
  %s0 = inlined_call_operand.vmem [shape: f32[2,8,256], index: 0, kind: input, shape index: {}]
  %s1 = inlined_call_operand.vmem [shape: f32[2,8,50], index: 1, kind: input, shape index: {}]
  %s2 = inlined_call_operand.vmem [shape: f32[2,8,35], index: 2, kind: input, shape index: {}]
  %s3 = inlined_call_operand.vmem [shape: f32[2,32,11], index: 3, kind: input, shape index: {}]
  %s4 = inlined_call_operand.vmem [shape: f32[2,8,256], index: 4, kind: output, shape index: {}]
  %s5 = sld [smem:[#allocation0]]
  $region49: #{convnext_stage.1} parent=0
    _
  %s7 = ssub.s32 1, %s5
  %s8 = scalar_select 0, %s7, %s5
  loop: start=0, step=1, limit=4
  $region2: #{convnext_stage.1} parent=0 // loop_pre_header
    _
  $region3: #{convnext_stage.1} parent=0 // loop_header
    %s10 = sphi 0, %s14
    %p11 = scmp.ge.s32.totalorder %s10, 4
    %s20 = sphi 0, %s22
    %s23 = sphi 0, %s20
    %s24 = sphi 0, %s23
    %s40 = sphi 0, %s24
    %s44 = sphi 0, %s44
    %s46 = sphi 0, %s44
    %s47 = sphi 0, %s46
    %s61 = sphi 0, %s47
    %s65 = sphi 0, %s65
    %s67 = sphi 0, %s65
    %s68 = sphi 0, %s67
    %s82 = sphi 0, %s68
    %s86 = sphi 0, %s86
    %s88 = sphi 0, %s86
    %s89 = sphi 0, %s88
    %s103 = sphi 0, %s89
    %s109 = sphi 0, %s111
    %s112 = sphi 0, %s109
    %s113 = sphi 0, %s112
    %s129 = sphi 0, %s113
  $region4: #{convnext_stage.1} parent=0 // loop_header_branch
    %13 = sbr.rel (%p11) target = $region8
  $region5: #{convnext_stage.1} parent=0 // loop_body
    %s15 = ssub.s32 %s10, 1
    %s16 = ssub.s32 %s10, 2
    %s17 = sadd.s32 %s10, 1
    %s18 = ssub.s32 %s10, %s17
    %p19 = scmp.eq.s32.totalorder %s18, 0
    %s21 = sadd.s32 %s20, 1
    %s22 = scalar_select %p19, %s20, %s21
    %p25 = pneg %p19
    %p26 = scmp.eq.s32.totalorder %s10, 1
    %p27 = por %p25, %p26
    %p28 = scmp.ne.s32.totalorder %s20, %s23
    %p29 = scmp.eq.s32.totalorder %s10, 0
    %p30 = por %p28, %p29
    %p31 = scmp.ne.s32.totalorder %s20, %s23
    %p32 = scmp.eq.s32.totalorder %s15, 1
    %p33 = por %p31, %p32
    %p34 = scmp.ne.s32.totalorder %s23, %s24
    %p35 = scmp.eq.s32.totalorder %s15, 0
    %p36 = por %p34, %p35
    %p37 = scmp.ne.s32.totalorder %s23, %s24
    %p38 = scmp.eq.s32.totalorder %s16, 1
    %p39 = por %p37, %p38
    %p41 = scmp.ne.s32.totalorder %s24, %s40
    %p42 = scmp.eq.s32.totalorder %s16, 0
    %p43 = por %p41, %p42
    %s45 = sadd.s32 %s44, 1
    %p48 = scmp.eq.s32.totalorder %s10, 1
    %p49 = scmp.ne.s32.totalorder %s44, %s46
    %p50 = scmp.eq.s32.totalorder %s10, 0
    %p51 = por %p49, %p50
    %p52 = scmp.ne.s32.totalorder %s44, %s46
    %p53 = scmp.eq.s32.totalorder %s15, 1
    %p54 = por %p52, %p53
    %p55 = scmp.ne.s32.totalorder %s46, %s47
    %p56 = scmp.eq.s32.totalorder %s15, 0
    %p57 = por %p55, %p56
    %p58 = scmp.ne.s32.totalorder %s46, %s47
    %p59 = scmp.eq.s32.totalorder %s16, 1
    %p60 = por %p58, %p59
    %p62 = scmp.ne.s32.totalorder %s47, %s61
    %p63 = scmp.eq.s32.totalorder %s16, 0
    %p64 = por %p62, %p63
    %s66 = sadd.s32 %s65, 1
    %p69 = scmp.eq.s32.totalorder %s10, 1
    %p70 = scmp.ne.s32.totalorder %s65, %s67
    %p71 = scmp.eq.s32.totalorder %s10, 0
    %p72 = por %p70, %p71
    %p73 = scmp.ne.s32.totalorder %s65, %s67
    %p74 = scmp.eq.s32.totalorder %s15, 1
    %p75 = por %p73, %p74
    %p76 = scmp.ne.s32.totalorder %s67, %s68
    %p77 = scmp.eq.s32.totalorder %s15, 0
    %p78 = por %p76, %p77
    %p79 = scmp.ne.s32.totalorder %s67, %s68
    %p80 = scmp.eq.s32.totalorder %s16, 1
    %p81 = por %p79, %p80
    %p83 = scmp.ne.s32.totalorder %s68, %s82
    %p84 = scmp.eq.s32.totalorder %s16, 0
    %p85 = por %p83, %p84
    %s87 = sadd.s32 %s86, 1
    %p90 = scmp.eq.s32.totalorder %s10, 1
    %p91 = scmp.ne.s32.totalorder %s86, %s88
    %p92 = scmp.eq.s32.totalorder %s10, 0
    %p93 = por %p91, %p92
    %p94 = scmp.ne.s32.totalorder %s86, %s88
    %p95 = scmp.eq.s32.totalorder %s15, 1
    %p96 = por %p94, %p95
    %p97 = scmp.ne.s32.totalorder %s88, %s89
    %p98 = scmp.eq.s32.totalorder %s15, 0
    %p99 = por %p97, %p98
    %p100 = scmp.ne.s32.totalorder %s88, %s89
    %p101 = scmp.eq.s32.totalorder %s16, 1
    %p102 = por %p100, %p101
    %p104 = scmp.ne.s32.totalorder %s89, %s103
    %p105 = scmp.eq.s32.totalorder %s16, 0
    %p106 = por %p104, %p105
    %s107 = ssub.s32 %s10, %s17
    %p108 = scmp.eq.s32.totalorder %s107, 0
    %s110 = sadd.s32 %s109, 1
    %s111 = scalar_select %p108, %s109, %s110
    %p114 = pneg %p108
    %p115 = scmp.eq.s32.totalorder %s10, 1
    %p116 = por %p114, %p115
    %p117 = scmp.ne.s32.totalorder %s109, %s112
    %p118 = scmp.eq.s32.totalorder %s10, 0
    %p119 = por %p117, %p118
    %p120 = scmp.ne.s32.totalorder %s109, %s112
    %p121 = scmp.eq.s32.totalorder %s15, 1
    %p122 = por %p120, %p121
    %p123 = scmp.ne.s32.totalorder %s112, %s113
    %p124 = scmp.eq.s32.totalorder %s15, 0
    %p125 = por %p123, %p124
    %p126 = scmp.ne.s32.totalorder %s112, %s113
    %p127 = scmp.eq.s32.totalorder %s16, 1
    %p128 = por %p126, %p127
    %p130 = scmp.ne.s32.totalorder %s113, %s129
    %p131 = scmp.eq.s32.totalorder %s16, 0
    %p132 = por %p130, %p131
    %p133 = scmp.le.s32.totalorder 1, %s10
    %p134 = scmp.lt.s32.totalorder %s10, 3
    %p135 = pnand %p133, %p134
    %p136 = pneg %p135
    // Predicated region
    $region9: #{convnext_stage.1} parent=5 // pred_check
      _
    $region10: #{convnext_stage.1} parent=5 // pred_check_branch
      %138 = sbr.rel (%p135) target = $region12
    $region11: #{convnext_stage.1} parent=5 // pred_region
      %s139 = ssub.s32 %s10, 1
      // Predicated region
      $region13: #{convnext_stage.1} parent=11 // pred_check
        %p140 = pneg %p57
      $region14: #{convnext_stage.1} parent=11 // pred_check_branch
        %142 = sbr.rel (%p140) target = $region16
      $region15: #{convnext_stage.1} parent=11 // pred_region
        _
      $region16: #{convnext_stage.1} parent=11 // pred_fallthru
        _
      // Predicated region
      $region17: #{convnext_stage.1} parent=11 // pred_check
        %p143 = pneg %p78
      $region18: #{convnext_stage.1} parent=11 // pred_check_branch
        %145 = sbr.rel (%p143) target = $region20
      $region19: #{convnext_stage.1} parent=11 // pred_region
        _
      $region20: #{convnext_stage.1} parent=11 // pred_fallthru
        _
      // Predicated region
      $region21: #{convnext_stage.1} parent=11 // pred_check
        %p146 = pneg %p99
      $region22: #{convnext_stage.1} parent=11 // pred_check_branch
        %148 = sbr.rel (%p146) target = $region24
      $region23: #{convnext_stage.1} parent=11 // pred_region
        _
      $region24: #{convnext_stage.1} parent=11 // pred_fallthru
        _
    $region12: #{convnext_stage.1} parent=5 // pred_fallthru
      _
    %p149 = scmp.lt.s32.totalorder %s10, 2
    // Predicated region
    $region25: #{convnext_stage.1} parent=5 // pred_check
      %p150 = pneg %p149
    $region26: #{convnext_stage.1} parent=5 // pred_check_branch
      %152 = sbr.rel (%p150) target = $region28
    $region27: #{convnext_stage.1} parent=5 // pred_region
      // Predicated region
      $region29: #{convnext_stage.1} parent=27 // pred_check
        %p153 = pneg %p30
      $region30: #{convnext_stage.1} parent=27 // pred_check_branch
        %155 = sbr.rel (%p153) target = $region32
      $region31: #{convnext_stage.1} parent=27 // pred_region
        %p156 = scmp.lt.s32.totalorder %s10, 1
        %s157 = scalar_select %p156, %s10, 1
        %s158 = smul.addr %s157, 2
        %s159 = smul.addr %s158, 8
        %s160 = scalar_lea.vmem %s0, %s159
      $region32: #{convnext_stage.1} parent=27 // pred_fallthru
        _
    $region28: #{convnext_stage.1} parent=5 // pred_fallthru
      _
    %p161 = scmp.le.s32.totalorder 1, %s10
    %p162 = scmp.lt.s32.totalorder %s10, 3
    %p163 = pnand %p161, %p162
    %p164 = pneg %p163
    // Predicated region
    $region33: #{convnext_stage.1} parent=5 // pred_check
      _
    $region34: #{convnext_stage.1} parent=5 // pred_check_branch
      %166 = sbr.rel (%p163) target = $region36
    $region35: #{convnext_stage.1} parent=5 // pred_region
      %s167 = ssub.s32 %s10, 1
      %p168 = scmp.lt.s32.totalorder %s15, 1
      %s169 = scalar_select %p168, %s15, 1
      %s170 = smul.addr %s169, 2
      %s171 = smul.addr %s170, 8
      %s172 = scalar_lea.vmem %s0, %s171
      %p173 = pneg %p36
      %p174 = pneg %p33
      %p175 = pneg %p57
      %p176 = pneg %p54
      %p177 = pneg %p78
      %p178 = pneg %p75
      %p179 = pneg %p99
      %p180 = pneg %p96
      %p181 = pneg %p125
      %p182 = pneg %p122
      %p183 = scmp.lt.s32.totalorder %s15, 1
      %s184 = scalar_select %p183, %s15, 1
      %s185 = smul.addr %s184, 2
      %s186 = smul.addr %s185, 8
      %s187 = scalar_lea.vmem %s4, %s186
      %p188 = scmp.lt.s32.totalorder %s15, 1
      %s189 = scalar_select %p188, %s15, 1
      %s190 = smul.addr %s189, 2
      %s191 = smul.addr %s190, 8
      %s192 = scalar_lea.vmem %s0, %s191
      %p193 = scmp.lt.s32.totalorder %s15, 1
      %s194 = scalar_select %p193, %s15, 1
      %s195 = smul.addr %s194, 2
      %s196 = smul.addr %s195, 8
      %s197 = scalar_lea.vmem %s4, %s196
      %198 = vst [vmem:[#allocation2] sm:$0xff] 0.0
      %199 = vst [vmem:[#allocation2 + $0x18] sm:$0xff] 0.0
      %v200 = vlaneseq
      %v201 = vand.u32 %v200, 127
      %v202 = vadd.s32 %v201, 128
      %vm203 = vcmp.lt.s32.totalorder %v201, 0
      %v204 = vsub.s32 0, %v201
      %v205 = vsel %vm203, %v204, %v201
      %v206 = vshrl.u32 %v205, 4
      %v207 = vand.u32 %v205, 15
      %v208 = vsub.s32 0, %v207
      %v209 = vsel %vm203, %v208, %v207
      %vm210 = vcmp.lt.s32.totalorder %v202, 0
      %v211 = vsub.s32 0, %v202
      %v212 = vsel %vm210, %v211, %v202
      %v213 = vshrl.u32 %v212, 4
      %v214 = vand.u32 %v212, 15
      %v215 = vsub.s32 0, %v214
      %v216 = vsel %vm210, %v215, %v214
      %vm217 = vcmp.ne.s32.totalorder %v209, 0
      %vm218 = vcmp.ne.s32.totalorder %v216, 0
      %vm219 = vcmp.lt.s32.totalorder %v209, 0
      %vm220 = vcmp.lt.s32.totalorder %v216, 0
      %vm221 = vmand %vm219, %vm217
      %vm222 = vmand %vm220, %vm218
      %v223 = vadd.s32 %v209, 16
      %v224 = vadd.s32 %v216, 16
      %v225 = vsel %vm221, %v223, %v209
      %v226 = vsel %vm222, %v224, %v216
      %v227 = vld [vmem:[%s192] sm:$0xff]
      %v228 = vld [vmem:[%s192 + $0x8] sm:$0xff]
      %v229 = vld [vmem:[%s1] sm:$0xff]
      %v230 = vld [vmem:[%s2] sm:$0xff]
      %v231 = vld [vmem:[%s3] sm:$0xff]
      %v232 = vld [vmem:[%s3 + $0x8] sm:$0xff]
      %v233 = vld [vmem:[%s3 + $0x10] sm:$0xff]
      %v234 = vld [vmem:[%s3 + $0x18] sm:$0xff]
      %235 = vst [vmem:[#allocation2 + $0x8] sm:$0xff] %v227
      %236 = vst [vmem:[#allocation2 + $0x10] sm:$0xff] %v228
      %v237 = vld [vmem:[#allocation2] sm:$0xff]
      %v238 = vld [vmem:[#allocation2 + $0x8] sm:$0xff]
      %v239 = vld [vmem:[#allocation2 + $0x10] sm:$0xff]
      %241 = vset.pattern.permute.xlu0 0
      %242 = vperm.xlu0 %241, %v229
      %v243 = vpop.permute.xlu0 %242
      %v245 = vmul.f32 %v237, %v243
      %v246 = vmul.f32 %v238, %v243
      %v247 = vmul.f32 %v239, %v243
      %v248 = vadd.f32 %v245, 0.0
      %v249 = vadd.f32 %v246, 0.0
      %v250 = vadd.f32 %v247, 0.0
      %251 = vset.pattern.permute.xlu0 7
      %252 = vperm.xlu0 %251, %v229
      %v253 = vpop.permute.xlu0 %252
      %v255 = vmul.f32 %v237, %v253
      %v256 = vmul.f32 %v238, %v253
      %v257 = vmul.f32 %v239, %v253
      %261 = vrot.lane.b32.xlu0 %v255, 112
      %v262 = vpop.permute.xlu0 %261
      %263 = vrot.lane.b32.xlu0 %v256, 112
      %v264 = vpop.permute.xlu0 %263
      %265 = vrot.lane.b32.xlu0 %v257, 112
      %v266 = vpop.permute.xlu0 %265
      %vm267 = vcmask 916480
      %v268 = vsel %vm267, %v262, %v264
      %v269 = vsel %vm267, %v264, %v266
      %v273 = vadd.f32 %v248, %v268
      %v274 = vadd.f32 %v249, %v269
      %v275 = vadd.f32 %v250, %v266
      %276 = vset.pattern.permute.xlu0 14
      %277 = vperm.xlu0 %276, %v229
      %v278 = vpop.permute.xlu0 %277
      %v280 = vmul.f32 %v237, %v278
      %v281 = vmul.f32 %v238, %v278
      %v282 = vmul.f32 %v239, %v278
      %286 = vrot.lane.b32.xlu0 %v280, 96
      %v287 = vpop.permute.xlu0 %286
      %288 = vrot.lane.b32.xlu0 %v281, 96
      %v289 = vpop.permute.xlu0 %288
      %290 = vrot.lane.b32.xlu0 %v282, 96
      %v291 = vpop.permute.xlu0 %290
      %vm292 = vcmask 785408
      %v293 = vsel %vm292, %v287, %v289
      %v294 = vsel %vm292, %v289, %v291
      %v298 = vadd.f32 %v273, %v293
      %v299 = vadd.f32 %v274, %v294
      %v300 = vadd.f32 %v275, %v291
      %301 = vset.pattern.permute.xlu0 21
      %302 = vperm.xlu0 %301, %v229
      %v303 = vpop.permute.xlu0 %302
      %v305 = vmul.f32 %v237, %v303
      %v306 = vmul.f32 %v238, %v303
      %v307 = vmul.f32 %v239, %v303
      %311 = vrot.lane.b32.xlu0 %v305, 80
      %v312 = vpop.permute.xlu0 %311
      %313 = vrot.lane.b32.xlu0 %v306, 80
      %v314 = vpop.permute.xlu0 %313
      %315 = vrot.lane.b32.xlu0 %v307, 80
      %v316 = vpop.permute.xlu0 %315
      %vm317 = vcmask 654336
      %v318 = vsel %vm317, %v312, %v314
      %v319 = vsel %vm317, %v314, %v316
      %v323 = vadd.f32 %v298, %v318
      %v324 = vadd.f32 %v299, %v319
      %v325 = vadd.f32 %v300, %v316
      %v326 = vld [vmem:[#allocation2 + $0x8] sm:$0xff]
      %v327 = vld [vmem:[#allocation2 + $0x10] sm:$0xff]
      %v328 = vld [vmem:[#allocation2 + $0x18] sm:$0xff]
      %329 = vset.pattern.permute.xlu0 28
      %330 = vperm.xlu0 %329, %v229
      %v331 = vpop.permute.xlu0 %330
      %v333 = vmul.f32 %v326, %v331
      %v334 = vmul.f32 %v327, %v331
      %v335 = vmul.f32 %v328, %v331
      %339 = vrot.lane.b32.xlu0 %v333, 64
      %v340 = vpop.permute.xlu0 %339
      %341 = vrot.lane.b32.xlu0 %v334, 64
      %v342 = vpop.permute.xlu0 %341
      %343 = vrot.lane.b32.xlu0 %v335, 64
      %v344 = vpop.permute.xlu0 %343
      %vm345 = vcmask 523264
      %v346 = vsel %vm345, %v340, %v342
      %v347 = vsel %vm345, %v342, %v344
      %v351 = vadd.f32 %v323, %v340
      %v352 = vadd.f32 %v324, %v346
      %v353 = vadd.f32 %v325, %v347
      %354 = vset.pattern.permute.xlu0 35
      %355 = vperm.xlu0 %354, %v229
      %v356 = vpop.permute.xlu0 %355
      %v358 = vmul.f32 %v326, %v356
      %v359 = vmul.f32 %v327, %v356
      %v360 = vmul.f32 %v328, %v356
      %364 = vrot.lane.b32.xlu0 %v358, 48
      %v365 = vpop.permute.xlu0 %364
      %366 = vrot.lane.b32.xlu0 %v359, 48
      %v367 = vpop.permute.xlu0 %366
      %368 = vrot.lane.b32.xlu0 %v360, 48
      %v369 = vpop.permute.xlu0 %368
      %vm370 = vcmask 392192
      %v371 = vsel %vm370, %v365, %v367
      %v372 = vsel %vm370, %v367, %v369
      %v376 = vadd.f32 %v351, %v365
      %v377 = vadd.f32 %v352, %v371
      %v378 = vadd.f32 %v353, %v372
      %379 = vset.pattern.permute.xlu0 42
      %380 = vperm.xlu0 %379, %v229
      %v381 = vpop.permute.xlu0 %380
      %v383 = vmul.f32 %v326, %v381
      %v384 = vmul.f32 %v327, %v381
      %v385 = vmul.f32 %v328, %v381
      %389 = vrot.lane.b32.xlu0 %v383, 32
      %v390 = vpop.permute.xlu0 %389
      %391 = vrot.lane.b32.xlu0 %v384, 32
      %v392 = vpop.permute.xlu0 %391
      %393 = vrot.lane.b32.xlu0 %v385, 32
      %v394 = vpop.permute.xlu0 %393
      %vm395 = vcmask 261120
      %v396 = vsel %vm395, %v390, %v392
      %v397 = vsel %vm395, %v392, %v394
      %v401 = vadd.f32 %v376, %v390
      %v402 = vadd.f32 %v377, %v396
      %v403 = vadd.f32 %v378, %v397
      %vm404 = vcmp.ge.s32.totalorder %v225, 3
      %vm405 = vcmp.ge.s32.totalorder %v226, 3
      %409 = vrot.lane.b32.xlu0 %v401, 51
      %v410 = vpop.permute.xlu0 %409
      %411 = vrot.lane.b32.xlu0 %v402, 51
      %v412 = vpop.permute.xlu0 %411
      %413 = vrot.lane.b32.xlu0 %v403, 51
      %v414 = vpop.permute.xlu0 %413
      %vm415 = vcmask 416768
      %v416 = vsel %vm415, %v410, %v412
      %v417 = vsel %vm415, %v412, %v414
      %v420 = vsel %vm404, %v416, 0.0
      %v421 = vsel %vm405, %v417, 0.0
      %v422 = vadd.f32 %v420, 0.0
      %v423 = vadd.f32 %v421, 0.0
      %424 = vset.pattern.permute.xlu0 1
      %425 = vperm.xlu0 %424, %v229
      %v426 = vpop.permute.xlu0 %425
      %v428 = vmul.f32 %v237, %v426
      %v429 = vmul.f32 %v238, %v426
      %v430 = vmul.f32 %v239, %v426
      %v431 = vadd.f32 %v428, 0.0
      %v432 = vadd.f32 %v429, 0.0
      %v433 = vadd.f32 %v430, 0.0
      %434 = vset.pattern.permute.xlu0 8
      %435 = vperm.xlu0 %434, %v229
      %v436 = vpop.permute.xlu0 %435
      %v438 = vmul.f32 %v237, %v436
      %v439 = vmul.f32 %v238, %v436
      %v440 = vmul.f32 %v239, %v436
      %444 = vrot.lane.b32.xlu0 %v438, 112
      %v445 = vpop.permute.xlu0 %444
      %446 = vrot.lane.b32.xlu0 %v439, 112
      %v447 = vpop.permute.xlu0 %446
      %448 = vrot.lane.b32.xlu0 %v440, 112
      %v449 = vpop.permute.xlu0 %448
      %v450 = vsel %vm267, %v445, %v447
      %v451 = vsel %vm267, %v447, %v449
      %v455 = vadd.f32 %v431, %v450
      %v456 = vadd.f32 %v432, %v451
      %v457 = vadd.f32 %v433, %v449
      %458 = vset.pattern.permute.xlu0 15
      %459 = vperm.xlu0 %458, %v229
      %v460 = vpop.permute.xlu0 %459
      %v462 = vmul.f32 %v237, %v460
      %v463 = vmul.f32 %v238, %v460
      %v464 = vmul.f32 %v239, %v460
      %468 = vrot.lane.b32.xlu0 %v462, 96
      %v469 = vpop.permute.xlu0 %468
      %470 = vrot.lane.b32.xlu0 %v463, 96
      %v471 = vpop.permute.xlu0 %470
      %472 = vrot.lane.b32.xlu0 %v464, 96
      %v473 = vpop.permute.xlu0 %472
      %v474 = vsel %vm292, %v469, %v471
      %v475 = vsel %vm292, %v471, %v473
      %v479 = vadd.f32 %v455, %v474
      %v480 = vadd.f32 %v456, %v475
      %v481 = vadd.f32 %v457, %v473
      %482 = vset.pattern.permute.xlu0 22
      %483 = vperm.xlu0 %482, %v229
      %v484 = vpop.permute.xlu0 %483
      %v486 = vmul.f32 %v237, %v484
      %v487 = vmul.f32 %v238, %v484
      %v488 = vmul.f32 %v239, %v484
      %492 = vrot.lane.b32.xlu0 %v486, 80
      %v493 = vpop.permute.xlu0 %492
      %494 = vrot.lane.b32.xlu0 %v487, 80
      %v495 = vpop.permute.xlu0 %494
      %496 = vrot.lane.b32.xlu0 %v488, 80
      %v497 = vpop.permute.xlu0 %496
      %v498 = vsel %vm317, %v493, %v495
      %v499 = vsel %vm317, %v495, %v497
      %v503 = vadd.f32 %v479, %v498
      %v504 = vadd.f32 %v480, %v499
      %v505 = vadd.f32 %v481, %v497
      %506 = vset.pattern.permute.xlu0 29
      %507 = vperm.xlu0 %506, %v229
      %v508 = vpop.permute.xlu0 %507
      %v510 = vmul.f32 %v326, %v508
      %v511 = vmul.f32 %v327, %v508
      %v512 = vmul.f32 %v328, %v508
      %516 = vrot.lane.b32.xlu0 %v510, 64
      %v517 = vpop.permute.xlu0 %516
      %518 = vrot.lane.b32.xlu0 %v511, 64
      %v519 = vpop.permute.xlu0 %518
      %520 = vrot.lane.b32.xlu0 %v512, 64
      %v521 = vpop.permute.xlu0 %520
      %v522 = vsel %vm345, %v517, %v519
      %v523 = vsel %vm345, %v519, %v521
      %v527 = vadd.f32 %v503, %v517
      %v528 = vadd.f32 %v504, %v522
      %v529 = vadd.f32 %v505, %v523
      %530 = vset.pattern.permute.xlu0 36
      %531 = vperm.xlu0 %530, %v229
      %v532 = vpop.permute.xlu0 %531
      %v534 = vmul.f32 %v326, %v532
      %v535 = vmul.f32 %v327, %v532
      %v536 = vmul.f32 %v328, %v532
      %540 = vrot.lane.b32.xlu0 %v534, 48
      %v541 = vpop.permute.xlu0 %540
      %542 = vrot.lane.b32.xlu0 %v535, 48
      %v543 = vpop.permute.xlu0 %542
      %544 = vrot.lane.b32.xlu0 %v536, 48
      %v545 = vpop.permute.xlu0 %544
      %v546 = vsel %vm370, %v541, %v543
      %v547 = vsel %vm370, %v543, %v545
      %v551 = vadd.f32 %v527, %v541
      %v552 = vadd.f32 %v528, %v546
      %v553 = vadd.f32 %v529, %v547
      %554 = vset.pattern.permute.xlu0 43
      %555 = vperm.xlu0 %554, %v229
      %v556 = vpop.permute.xlu0 %555
      %v558 = vmul.f32 %v326, %v556
      %v559 = vmul.f32 %v327, %v556
      %v560 = vmul.f32 %v328, %v556
      %564 = vrot.lane.b32.xlu0 %v558, 32
      %v565 = vpop.permute.xlu0 %564
      %566 = vrot.lane.b32.xlu0 %v559, 32
      %v567 = vpop.permute.xlu0 %566
      %568 = vrot.lane.b32.xlu0 %v560, 32
      %v569 = vpop.permute.xlu0 %568
      %v570 = vsel %vm395, %v565, %v567
      %v571 = vsel %vm395, %v567, %v569
      %v575 = vadd.f32 %v551, %v565
      %v576 = vadd.f32 %v552, %v570
      %v577 = vadd.f32 %v553, %v571
      %vm578 = vcmp.ge.s32.totalorder %v225, 2
      %vm579 = vcmp.ge.s32.totalorder %v226, 2
      %583 = vrot.lane.b32.xlu0 %v575, 50
      %v584 = vpop.permute.xlu0 %583
      %585 = vrot.lane.b32.xlu0 %v576, 50
      %v586 = vpop.permute.xlu0 %585
      %587 = vrot.lane.b32.xlu0 %v577, 50
      %v588 = vpop.permute.xlu0 %587
      %vm589 = vcmask 408576
      %v590 = vsel %vm589, %v584, %v586
      %v591 = vsel %vm589, %v586, %v588
      %v594 = vsel %vm578, %v590, 0.0
      %v595 = vsel %vm579, %v591, 0.0
      %v596 = vadd.f32 %v422, %v594
      %v597 = vadd.f32 %v423, %v595
      %598 = vset.pattern.permute.xlu0 2
      %599 = vperm.xlu0 %598, %v229
      %v600 = vpop.permute.xlu0 %599
      %v602 = vmul.f32 %v237, %v600
      %v603 = vmul.f32 %v238, %v600
      %v604 = vmul.f32 %v239, %v600
      %v605 = vadd.f32 %v602, 0.0
      %v606 = vadd.f32 %v603, 0.0
      %v607 = vadd.f32 %v604, 0.0
      %608 = vset.pattern.permute.xlu0 9
      %609 = vperm.xlu0 %608, %v229
      %v610 = vpop.permute.xlu0 %609
      %v612 = vmul.f32 %v237, %v610
      %v613 = vmul.f32 %v238, %v610
      %v614 = vmul.f32 %v239, %v610
      %618 = vrot.lane.b32.xlu0 %v612, 112
      %v619 = vpop.permute.xlu0 %618
      %620 = vrot.lane.b32.xlu0 %v613, 112
      %v621 = vpop.permute.xlu0 %620
      %622 = vrot.lane.b32.xlu0 %v614, 112
      %v623 = vpop.permute.xlu0 %622
      %v624 = vsel %vm267, %v619, %v621
      %v625 = vsel %vm267, %v621, %v623
      %v629 = vadd.f32 %v605, %v624
      %v630 = vadd.f32 %v606, %v625
      %v631 = vadd.f32 %v607, %v623
      %632 = vset.pattern.permute.xlu0 16
      %633 = vperm.xlu0 %632, %v229
      %v634 = vpop.permute.xlu0 %633
      %v636 = vmul.f32 %v237, %v634
      %v637 = vmul.f32 %v238, %v634
      %v638 = vmul.f32 %v239, %v634
      %642 = vrot.lane.b32.xlu0 %v636, 96
      %v643 = vpop.permute.xlu0 %642
      %644 = vrot.lane.b32.xlu0 %v637, 96
      %v645 = vpop.permute.xlu0 %644
      %646 = vrot.lane.b32.xlu0 %v638, 96
      %v647 = vpop.permute.xlu0 %646
      %v648 = vsel %vm292, %v643, %v645
      %v649 = vsel %vm292, %v645, %v647
      %v653 = vadd.f32 %v629, %v648
      %v654 = vadd.f32 %v630, %v649
      %v655 = vadd.f32 %v631, %v647
      %656 = vset.pattern.permute.xlu0 23
      %657 = vperm.xlu0 %656, %v229
      %v658 = vpop.permute.xlu0 %657
      %v660 = vmul.f32 %v237, %v658
      %v661 = vmul.f32 %v238, %v658
      %v662 = vmul.f32 %v239, %v658
      %666 = vrot.lane.b32.xlu0 %v660, 80
      %v667 = vpop.permute.xlu0 %666
      %668 = vrot.lane.b32.xlu0 %v661, 80
      %v669 = vpop.permute.xlu0 %668
      %670 = vrot.lane.b32.xlu0 %v662, 80
      %v671 = vpop.permute.xlu0 %670
      %v672 = vsel %vm317, %v667, %v669
      %v673 = vsel %vm317, %v669, %v671
      %v677 = vadd.f32 %v653, %v672
      %v678 = vadd.f32 %v654, %v673
      %v679 = vadd.f32 %v655, %v671
      %680 = vset.pattern.permute.xlu0 30
      %681 = vperm.xlu0 %680, %v229
      %v682 = vpop.permute.xlu0 %681
      %v684 = vmul.f32 %v326, %v682
      %v685 = vmul.f32 %v327, %v682
      %v686 = vmul.f32 %v328, %v682
      %690 = vrot.lane.b32.xlu0 %v684, 64
      %v691 = vpop.permute.xlu0 %690
      %692 = vrot.lane.b32.xlu0 %v685, 64
      %v693 = vpop.permute.xlu0 %692
      %694 = vrot.lane.b32.xlu0 %v686, 64
      %v695 = vpop.permute.xlu0 %694
      %v696 = vsel %vm345, %v691, %v693
      %v697 = vsel %vm345, %v693, %v695
      %v701 = vadd.f32 %v677, %v691
      %v702 = vadd.f32 %v678, %v696
      %v703 = vadd.f32 %v679, %v697
      %704 = vset.pattern.permute.xlu0 37
      %705 = vperm.xlu0 %704, %v229
      %v706 = vpop.permute.xlu0 %705
      %v708 = vmul.f32 %v326, %v706
      %v709 = vmul.f32 %v327, %v706
      %v710 = vmul.f32 %v328, %v706
      %714 = vrot.lane.b32.xlu0 %v708, 48
      %v715 = vpop.permute.xlu0 %714
      %716 = vrot.lane.b32.xlu0 %v709, 48
      %v717 = vpop.permute.xlu0 %716
      %718 = vrot.lane.b32.xlu0 %v710, 48
      %v719 = vpop.permute.xlu0 %718
      %v720 = vsel %vm370, %v715, %v717
      %v721 = vsel %vm370, %v717, %v719
      %v725 = vadd.f32 %v701, %v715
      %v726 = vadd.f32 %v702, %v720
      %v727 = vadd.f32 %v703, %v721
      %728 = vset.pattern.permute.xlu0 44
      %729 = vperm.xlu0 %728, %v229
      %v730 = vpop.permute.xlu0 %729
      %v732 = vmul.f32 %v326, %v730
      %v733 = vmul.f32 %v327, %v730
      %v734 = vmul.f32 %v328, %v730
      %738 = vrot.lane.b32.xlu0 %v732, 32
      %v739 = vpop.permute.xlu0 %738
      %740 = vrot.lane.b32.xlu0 %v733, 32
      %v741 = vpop.permute.xlu0 %740
      %742 = vrot.lane.b32.xlu0 %v734, 32
      %v743 = vpop.permute.xlu0 %742
      %v744 = vsel %vm395, %v739, %v741
      %v745 = vsel %vm395, %v741, %v743
      %v749 = vadd.f32 %v725, %v739
      %v750 = vadd.f32 %v726, %v744
      %v751 = vadd.f32 %v727, %v745
      %vm752 = vcmp.ge.s32.totalorder %v225, 1
      %vm753 = vcmp.ge.s32.totalorder %v226, 1
      %757 = vrot.lane.b32.xlu0 %v749, 49
      %v758 = vpop.permute.xlu0 %757
      %759 = vrot.lane.b32.xlu0 %v750, 49
      %v760 = vpop.permute.xlu0 %759
      %761 = vrot.lane.b32.xlu0 %v751, 49
      %v762 = vpop.permute.xlu0 %761
      %vm763 = vcmask 400384
      %v764 = vsel %vm763, %v758, %v760
      %v765 = vsel %vm763, %v760, %v762
      %v768 = vsel %vm752, %v764, 0.0
      %v769 = vsel %vm753, %v765, 0.0
      %v770 = vadd.f32 %v596, %v768
      %v771 = vadd.f32 %v597, %v769
      %772 = vset.pattern.permute.xlu0 3
      %773 = vperm.xlu0 %772, %v229
      %v774 = vpop.permute.xlu0 %773
      %v776 = vmul.f32 %v237, %v774
      %v777 = vmul.f32 %v238, %v774
      %v778 = vmul.f32 %v239, %v774
      %v779 = vadd.f32 %v776, 0.0
      %v780 = vadd.f32 %v777, 0.0
      %v781 = vadd.f32 %v778, 0.0
      %782 = vset.pattern.permute.xlu0 10
      %783 = vperm.xlu0 %782, %v229
      %v784 = vpop.permute.xlu0 %783
      %v786 = vmul.f32 %v237, %v784
      %v787 = vmul.f32 %v238, %v784
      %v788 = vmul.f32 %v239, %v784
      %792 = vrot.lane.b32.xlu0 %v786, 112
      %v793 = vpop.permute.xlu0 %792
      %794 = vrot.lane.b32.xlu0 %v787, 112
      %v795 = vpop.permute.xlu0 %794
      %796 = vrot.lane.b32.xlu0 %v788, 112
      %v797 = vpop.permute.xlu0 %796
      %v798 = vsel %vm267, %v793, %v795
      %v799 = vsel %vm267, %v795, %v797
      %v803 = vadd.f32 %v779, %v798
      %v804 = vadd.f32 %v780, %v799
      %v805 = vadd.f32 %v781, %v797
      %806 = vset.pattern.permute.xlu0 17
      %807 = vperm.xlu0 %806, %v229
      %v808 = vpop.permute.xlu0 %807
      %v810 = vmul.f32 %v237, %v808
      %v811 = vmul.f32 %v238, %v808
      %v812 = vmul.f32 %v239, %v808
      %816 = vrot.lane.b32.xlu0 %v810, 96
      %v817 = vpop.permute.xlu0 %816
      %818 = vrot.lane.b32.xlu0 %v811, 96
      %v819 = vpop.permute.xlu0 %818
      %820 = vrot.lane.b32.xlu0 %v812, 96
      %v821 = vpop.permute.xlu0 %820
      %v822 = vsel %vm292, %v817, %v819
      %v823 = vsel %vm292, %v819, %v821
      %v827 = vadd.f32 %v803, %v822
      %v828 = vadd.f32 %v804, %v823
      %v829 = vadd.f32 %v805, %v821
      %830 = vset.pattern.permute.xlu0 24
      %831 = vperm.xlu0 %830, %v229
      %v832 = vpop.permute.xlu0 %831
      %v834 = vmul.f32 %v238, %v832
      %v835 = vmul.f32 %v239, %v832
      %838 = vrot.lane.b32.xlu0 %v834, 80
      %v839 = vpop.permute.xlu0 %838
      %840 = vrot.lane.b32.xlu0 %v835, 80
      %v841 = vpop.permute.xlu0 %840
      %v842 = vsel %vm317, %v839, %v841
      %v846 = vadd.f32 %v827, %v839
      %v847 = vadd.f32 %v828, %v842
      %v848 = vadd.f32 %v829, %v841
      %849 = vset.pattern.permute.xlu0 31
      %850 = vperm.xlu0 %849, %v229
      %v851 = vpop.permute.xlu0 %850
      %v853 = vmul.f32 %v326, %v851
      %v854 = vmul.f32 %v327, %v851
      %v855 = vmul.f32 %v328, %v851
      %859 = vrot.lane.b32.xlu0 %v853, 64
      %v860 = vpop.permute.xlu0 %859
      %861 = vrot.lane.b32.xlu0 %v854, 64
      %v862 = vpop.permute.xlu0 %861
      %863 = vrot.lane.b32.xlu0 %v855, 64
      %v864 = vpop.permute.xlu0 %863
      %v865 = vsel %vm345, %v860, %v862
      %v866 = vsel %vm345, %v862, %v864
      %v870 = vadd.f32 %v846, %v860
      %v871 = vadd.f32 %v847, %v865
      %v872 = vadd.f32 %v848, %v866
      %873 = vset.pattern.permute.xlu0 38
      %874 = vperm.xlu0 %873, %v229
      %v875 = vpop.permute.xlu0 %874
      %v877 = vmul.f32 %v326, %v875
      %v878 = vmul.f32 %v327, %v875
      %v879 = vmul.f32 %v328, %v875
      %883 = vrot.lane.b32.xlu0 %v877, 48
      %v884 = vpop.permute.xlu0 %883
      %885 = vrot.lane.b32.xlu0 %v878, 48
      %v886 = vpop.permute.xlu0 %885
      %887 = vrot.lane.b32.xlu0 %v879, 48
      %v888 = vpop.permute.xlu0 %887
      %v889 = vsel %vm370, %v884, %v886
      %v890 = vsel %vm370, %v886, %v888
      %v894 = vadd.f32 %v870, %v884
      %v895 = vadd.f32 %v871, %v889
      %v896 = vadd.f32 %v872, %v890
      %897 = vset.pattern.permute.xlu0 45
      %898 = vperm.xlu0 %897, %v229
      %v899 = vpop.permute.xlu0 %898
      %v901 = vmul.f32 %v326, %v899
      %v902 = vmul.f32 %v327, %v899
      %v903 = vmul.f32 %v328, %v899
      %907 = vrot.lane.b32.xlu0 %v901, 32
      %v908 = vpop.permute.xlu0 %907
      %909 = vrot.lane.b32.xlu0 %v902, 32
      %v910 = vpop.permute.xlu0 %909
      %911 = vrot.lane.b32.xlu0 %v903, 32
      %v912 = vpop.permute.xlu0 %911
      %v913 = vsel %vm395, %v908, %v910
      %v914 = vsel %vm395, %v910, %v912
      %v918 = vadd.f32 %v894, %v908
      %v919 = vadd.f32 %v895, %v913
      %v920 = vadd.f32 %v896, %v914
      %924 = vrot.lane.b32.xlu0 %v918, 48
      %v925 = vpop.permute.xlu0 %924
      %926 = vrot.lane.b32.xlu0 %v919, 48
      %v927 = vpop.permute.xlu0 %926
      %928 = vrot.lane.b32.xlu0 %v920, 48
      %v929 = vpop.permute.xlu0 %928
      %v930 = vsel %vm370, %v925, %v927
      %v931 = vsel %vm370, %v927, %v929
      %v934 = vadd.f32 %v770, %v930
      %v935 = vadd.f32 %v771, %v931
      %936 = vset.pattern.permute.xlu0 4
      %937 = vperm.xlu0 %936, %v229
      %v938 = vpop.permute.xlu0 %937
      %v940 = vmul.f32 %v237, %v938
      %v941 = vmul.f32 %v238, %v938
      %v942 = vmul.f32 %v239, %v938
      %v943 = vadd.f32 %v940, 0.0
      %v944 = vadd.f32 %v941, 0.0
      %v945 = vadd.f32 %v942, 0.0
      %946 = vset.pattern.permute.xlu0 11
      %947 = vperm.xlu0 %946, %v229
      %v948 = vpop.permute.xlu0 %947
      %v950 = vmul.f32 %v237, %v948
      %v951 = vmul.f32 %v238, %v948
      %v952 = vmul.f32 %v239, %v948
      %956 = vrot.lane.b32.xlu0 %v950, 112
      %v957 = vpop.permute.xlu0 %956
      %958 = vrot.lane.b32.xlu0 %v951, 112
      %v959 = vpop.permute.xlu0 %958
      %960 = vrot.lane.b32.xlu0 %v952, 112
      %v961 = vpop.permute.xlu0 %960
      %v962 = vsel %vm267, %v957, %v959
      %v963 = vsel %vm267, %v959, %v961
      %v967 = vadd.f32 %v943, %v962
      %v968 = vadd.f32 %v944, %v963
      %v969 = vadd.f32 %v945, %v961
      %970 = vset.pattern.permute.xlu0 18
      %971 = vperm.xlu0 %970, %v229
      %v972 = vpop.permute.xlu0 %971
      %v974 = vmul.f32 %v237, %v972
      %v975 = vmul.f32 %v238, %v972
      %v976 = vmul.f32 %v239, %v972
      %980 = vrot.lane.b32.xlu0 %v974, 96
      %v981 = vpop.permute.xlu0 %980
      %982 = vrot.lane.b32.xlu0 %v975, 96
      %v983 = vpop.permute.xlu0 %982
      %984 = vrot.lane.b32.xlu0 %v976, 96
      %v985 = vpop.permute.xlu0 %984
      %v986 = vsel %vm292, %v981, %v983
      %v987 = vsel %vm292, %v983, %v985
      %v991 = vadd.f32 %v967, %v986
      %v992 = vadd.f32 %v968, %v987
      %v993 = vadd.f32 %v969, %v985
      %994 = vset.pattern.permute.xlu0 25
      %995 = vperm.xlu0 %994, %v229
      %v996 = vpop.permute.xlu0 %995
      %v998 = vmul.f32 %v326, %v996
      %v999 = vmul.f32 %v327, %v996
      %v1000 = vmul.f32 %v328, %v996
      %1004 = vrot.lane.b32.xlu0 %v998, 80
      %v1005 = vpop.permute.xlu0 %1004
      %1006 = vrot.lane.b32.xlu0 %v999, 80
      %v1007 = vpop.permute.xlu0 %1006
      %1008 = vrot.lane.b32.xlu0 %v1000, 80
      %v1009 = vpop.permute.xlu0 %1008
      %v1010 = vsel %vm317, %v1005, %v1007
      %v1011 = vsel %vm317, %v1007, %v1009
      %v1015 = vadd.f32 %v991, %v1005
      %v1016 = vadd.f32 %v992, %v1010
      %v1017 = vadd.f32 %v993, %v1011
      %1018 = vset.pattern.permute.xlu0 32
      %1019 = vperm.xlu0 %1018, %v229
      %v1020 = vpop.permute.xlu0 %1019
      %v1022 = vmul.f32 %v326, %v1020
      %v1023 = vmul.f32 %v327, %v1020
      %v1024 = vmul.f32 %v328, %v1020
      %1028 = vrot.lane.b32.xlu0 %v1022, 64
      %v1029 = vpop.permute.xlu0 %1028
      %1030 = vrot.lane.b32.xlu0 %v1023, 64
      %v1031 = vpop.permute.xlu0 %1030
      %1032 = vrot.lane.b32.xlu0 %v1024, 64
      %v1033 = vpop.permute.xlu0 %1032
      %v1034 = vsel %vm345, %v1029, %v1031
      %v1035 = vsel %vm345, %v1031, %v1033
      %v1039 = vadd.f32 %v1015, %v1029
      %v1040 = vadd.f32 %v1016, %v1034
      %v1041 = vadd.f32 %v1017, %v1035
      %1042 = vset.pattern.permute.xlu0 39
      %1043 = vperm.xlu0 %1042, %v229
      %v1044 = vpop.permute.xlu0 %1043
      %v1046 = vmul.f32 %v326, %v1044
      %v1047 = vmul.f32 %v327, %v1044
      %v1048 = vmul.f32 %v328, %v1044
      %1052 = vrot.lane.b32.xlu0 %v1046, 48
      %v1053 = vpop.permute.xlu0 %1052
      %1054 = vrot.lane.b32.xlu0 %v1047, 48
      %v1055 = vpop.permute.xlu0 %1054
      %1056 = vrot.lane.b32.xlu0 %v1048, 48
      %v1057 = vpop.permute.xlu0 %1056
      %v1058 = vsel %vm370, %v1053, %v1055
      %v1059 = vsel %vm370, %v1055, %v1057
      %v1063 = vadd.f32 %v1039, %v1053
      %v1064 = vadd.f32 %v1040, %v1058
      %v1065 = vadd.f32 %v1041, %v1059
      %1066 = vset.pattern.permute.xlu0 46
      %1067 = vperm.xlu0 %1066, %v229
      %v1068 = vpop.permute.xlu0 %1067
      %v1070 = vmul.f32 %v326, %v1068
      %v1071 = vmul.f32 %v327, %v1068
      %v1072 = vmul.f32 %v328, %v1068
      %1076 = vrot.lane.b32.xlu0 %v1070, 32
      %v1077 = vpop.permute.xlu0 %1076
      %1078 = vrot.lane.b32.xlu0 %v1071, 32
      %v1079 = vpop.permute.xlu0 %1078
      %1080 = vrot.lane.b32.xlu0 %v1072, 32
      %v1081 = vpop.permute.xlu0 %1080
      %v1082 = vsel %vm395, %v1077, %v1079
      %v1083 = vsel %vm395, %v1079, %v1081
      %v1087 = vadd.f32 %v1063, %v1077
      %v1088 = vadd.f32 %v1064, %v1082
      %v1089 = vadd.f32 %v1065, %v1083
      %vm1090 = vcmp.lt.s32.totalorder %v225, 15
      %vm1091 = vcmp.lt.s32.totalorder %v226, 15
      %1095 = vrot.lane.b32.xlu0 %v1087, 47
      %v1096 = vpop.permute.xlu0 %1095
      %1097 = vrot.lane.b32.xlu0 %v1088, 47
      %v1098 = vpop.permute.xlu0 %1097
      %1099 = vrot.lane.b32.xlu0 %v1089, 47
      %v1100 = vpop.permute.xlu0 %1099
      %vm1101 = vcmask 384000
      %v1102 = vsel %vm1101, %v1096, %v1098
      %v1103 = vsel %vm1101, %v1098, %v1100
      %v1106 = vsel %vm1090, %v1102, 0.0
      %v1107 = vsel %vm1091, %v1103, 0.0
      %v1108 = vadd.f32 %v934, %v1106
      %v1109 = vadd.f32 %v935, %v1107
      %1110 = vset.pattern.permute.xlu0 5
      %1111 = vperm.xlu0 %1110, %v229
      %v1112 = vpop.permute.xlu0 %1111
      %v1114 = vmul.f32 %v237, %v1112
      %v1115 = vmul.f32 %v238, %v1112
      %v1116 = vmul.f32 %v239, %v1112
      %v1117 = vadd.f32 %v1114, 0.0
      %v1118 = vadd.f32 %v1115, 0.0
      %v1119 = vadd.f32 %v1116, 0.0
      %1120 = vset.pattern.permute.xlu0 12
      %1121 = vperm.xlu0 %1120, %v229
      %v1122 = vpop.permute.xlu0 %1121
      %v1124 = vmul.f32 %v237, %v1122
      %v1125 = vmul.f32 %v238, %v1122
      %v1126 = vmul.f32 %v239, %v1122
      %1130 = vrot.lane.b32.xlu0 %v1124, 112
      %v1131 = vpop.permute.xlu0 %1130
      %1132 = vrot.lane.b32.xlu0 %v1125, 112
      %v1133 = vpop.permute.xlu0 %1132
      %1134 = vrot.lane.b32.xlu0 %v1126, 112
      %v1135 = vpop.permute.xlu0 %1134
      %v1136 = vsel %vm267, %v1131, %v1133
      %v1137 = vsel %vm267, %v1133, %v1135
      %v1141 = vadd.f32 %v1117, %v1136
      %v1142 = vadd.f32 %v1118, %v1137
      %v1143 = vadd.f32 %v1119, %v1135
      %1144 = vset.pattern.permute.xlu0 19
      %1145 = vperm.xlu0 %1144, %v229
      %v1146 = vpop.permute.xlu0 %1145
      %v1148 = vmul.f32 %v237, %v1146
      %v1149 = vmul.f32 %v238, %v1146
      %v1150 = vmul.f32 %v239, %v1146
      %1154 = vrot.lane.b32.xlu0 %v1148, 96
      %v1155 = vpop.permute.xlu0 %1154
      %1156 = vrot.lane.b32.xlu0 %v1149, 96
      %v1157 = vpop.permute.xlu0 %1156
      %1158 = vrot.lane.b32.xlu0 %v1150, 96
      %v1159 = vpop.permute.xlu0 %1158
      %v1160 = vsel %vm292, %v1155, %v1157
      %v1161 = vsel %vm292, %v1157, %v1159
      %v1165 = vadd.f32 %v1141, %v1160
      %v1166 = vadd.f32 %v1142, %v1161
      %v1167 = vadd.f32 %v1143, %v1159
      %1168 = vset.pattern.permute.xlu0 26
      %1169 = vperm.xlu0 %1168, %v229
      %v1170 = vpop.permute.xlu0 %1169
      %v1172 = vmul.f32 %v326, %v1170
      %v1173 = vmul.f32 %v327, %v1170
      %v1174 = vmul.f32 %v328, %v1170
      %1178 = vrot.lane.b32.xlu0 %v1172, 80
      %v1179 = vpop.permute.xlu0 %1178
      %1180 = vrot.lane.b32.xlu0 %v1173, 80
      %v1181 = vpop.permute.xlu0 %1180
      %1182 = vrot.lane.b32.xlu0 %v1174, 80
      %v1183 = vpop.permute.xlu0 %1182
      %v1184 = vsel %vm317, %v1179, %v1181
      %v1185 = vsel %vm317, %v1181, %v1183
      %v1189 = vadd.f32 %v1165, %v1179
      %v1190 = vadd.f32 %v1166, %v1184
      %v1191 = vadd.f32 %v1167, %v1185
      %1192 = vset.pattern.permute.xlu0 33
      %1193 = vperm.xlu0 %1192, %v229
      %v1194 = vpop.permute.xlu0 %1193
      %v1196 = vmul.f32 %v326, %v1194
      %v1197 = vmul.f32 %v327, %v1194
      %v1198 = vmul.f32 %v328, %v1194
      %1202 = vrot.lane.b32.xlu0 %v1196, 64
      %v1203 = vpop.permute.xlu0 %1202
      %1204 = vrot.lane.b32.xlu0 %v1197, 64
      %v1205 = vpop.permute.xlu0 %1204
      %1206 = vrot.lane.b32.xlu0 %v1198, 64
      %v1207 = vpop.permute.xlu0 %1206
      %v1208 = vsel %vm345, %v1203, %v1205
      %v1209 = vsel %vm345, %v1205, %v1207
      %v1213 = vadd.f32 %v1189, %v1203
      %v1214 = vadd.f32 %v1190, %v1208
      %v1215 = vadd.f32 %v1191, %v1209
      %1216 = vset.pattern.permute.xlu0 40
      %1217 = vperm.xlu0 %1216, %v229
      %v1218 = vpop.permute.xlu0 %1217
      %v1220 = vmul.f32 %v326, %v1218
      %v1221 = vmul.f32 %v327, %v1218
      %v1222 = vmul.f32 %v328, %v1218
      %1226 = vrot.lane.b32.xlu0 %v1220, 48
      %v1227 = vpop.permute.xlu0 %1226
      %1228 = vrot.lane.b32.xlu0 %v1221, 48
      %v1229 = vpop.permute.xlu0 %1228
      %1230 = vrot.lane.b32.xlu0 %v1222, 48
      %v1231 = vpop.permute.xlu0 %1230
      %v1232 = vsel %vm370, %v1227, %v1229
      %v1233 = vsel %vm370, %v1229, %v1231
      %v1237 = vadd.f32 %v1213, %v1227
      %v1238 = vadd.f32 %v1214, %v1232
      %v1239 = vadd.f32 %v1215, %v1233
      %1240 = vset.pattern.permute.xlu0 47
      %1241 = vperm.xlu0 %1240, %v229
      %v1242 = vpop.permute.xlu0 %1241
      %v1244 = vmul.f32 %v326, %v1242
      %v1245 = vmul.f32 %v327, %v1242
      %v1246 = vmul.f32 %v328, %v1242
      %1250 = vrot.lane.b32.xlu0 %v1244, 32
      %v1251 = vpop.permute.xlu0 %1250
      %1252 = vrot.lane.b32.xlu0 %v1245, 32
      %v1253 = vpop.permute.xlu0 %1252
      %1254 = vrot.lane.b32.xlu0 %v1246, 32
      %v1255 = vpop.permute.xlu0 %1254
      %v1256 = vsel %vm395, %v1251, %v1253
      %v1257 = vsel %vm395, %v1253, %v1255
      %v1261 = vadd.f32 %v1237, %v1251
      %v1262 = vadd.f32 %v1238, %v1256
      %v1263 = vadd.f32 %v1239, %v1257
      %vm1264 = vcmp.lt.s32.totalorder %v225, 14
      %vm1265 = vcmp.lt.s32.totalorder %v226, 14
      %1269 = vrot.lane.b32.xlu0 %v1261, 46
      %v1270 = vpop.permute.xlu0 %1269
      %1271 = vrot.lane.b32.xlu0 %v1262, 46
      %v1272 = vpop.permute.xlu0 %1271
      %1273 = vrot.lane.b32.xlu0 %v1263, 46
      %v1274 = vpop.permute.xlu0 %1273
      %vm1275 = vcmask 375808
      %v1276 = vsel %vm1275, %v1270, %v1272
      %v1277 = vsel %vm1275, %v1272, %v1274
      %v1280 = vsel %vm1264, %v1276, 0.0
      %v1281 = vsel %vm1265, %v1277, 0.0
      %v1282 = vadd.f32 %v1108, %v1280
      %v1283 = vadd.f32 %v1109, %v1281
      %1284 = vset.pattern.permute.xlu0 6
      %1285 = vperm.xlu0 %1284, %v229
      %v1286 = vpop.permute.xlu0 %1285
      %v1288 = vmul.f32 %v237, %v1286
      %v1289 = vmul.f32 %v238, %v1286
      %v1290 = vmul.f32 %v239, %v1286
      %v1291 = vadd.f32 %v1288, 0.0
      %v1292 = vadd.f32 %v1289, 0.0
      %v1293 = vadd.f32 %v1290, 0.0
      %1294 = vset.pattern.permute.xlu0 13
      %1295 = vperm.xlu0 %1294, %v229
      %v1296 = vpop.permute.xlu0 %1295
      %v1298 = vmul.f32 %v237, %v1296
      %v1299 = vmul.f32 %v238, %v1296
      %v1300 = vmul.f32 %v239, %v1296
      %1304 = vrot.lane.b32.xlu0 %v1298, 112
      %v1305 = vpop.permute.xlu0 %1304
      %1306 = vrot.lane.b32.xlu0 %v1299, 112
      %v1307 = vpop.permute.xlu0 %1306
      %1308 = vrot.lane.b32.xlu0 %v1300, 112
      %v1309 = vpop.permute.xlu0 %1308
      %v1310 = vsel %vm267, %v1305, %v1307
      %v1311 = vsel %vm267, %v1307, %v1309
      %v1315 = vadd.f32 %v1291, %v1310
      %v1316 = vadd.f32 %v1292, %v1311
      %v1317 = vadd.f32 %v1293, %v1309
      %1318 = vset.pattern.permute.xlu0 20
      %1319 = vperm.xlu0 %1318, %v229
      %v1320 = vpop.permute.xlu0 %1319
      %v1322 = vmul.f32 %v237, %v1320
      %v1323 = vmul.f32 %v238, %v1320
      %v1324 = vmul.f32 %v239, %v1320
      %1328 = vrot.lane.b32.xlu0 %v1322, 96
      %v1329 = vpop.permute.xlu0 %1328
      %1330 = vrot.lane.b32.xlu0 %v1323, 96
      %v1331 = vpop.permute.xlu0 %1330
      %1332 = vrot.lane.b32.xlu0 %v1324, 96
      %v1333 = vpop.permute.xlu0 %1332
      %v1334 = vsel %vm292, %v1329, %v1331
      %v1335 = vsel %vm292, %v1331, %v1333
      %v1339 = vadd.f32 %v1315, %v1334
      %v1340 = vadd.f32 %v1316, %v1335
      %v1341 = vadd.f32 %v1317, %v1333
      %1342 = vset.pattern.permute.xlu0 27
      %1343 = vperm.xlu0 %1342, %v229
      %v1344 = vpop.permute.xlu0 %1343
      %v1346 = vmul.f32 %v326, %v1344
      %v1347 = vmul.f32 %v327, %v1344
      %v1348 = vmul.f32 %v328, %v1344
      %1352 = vrot.lane.b32.xlu0 %v1346, 80
      %v1353 = vpop.permute.xlu0 %1352
      %1354 = vrot.lane.b32.xlu0 %v1347, 80
      %v1355 = vpop.permute.xlu0 %1354
      %1356 = vrot.lane.b32.xlu0 %v1348, 80
      %v1357 = vpop.permute.xlu0 %1356
      %v1358 = vsel %vm317, %v1353, %v1355
      %v1359 = vsel %vm317, %v1355, %v1357
      %v1363 = vadd.f32 %v1339, %v1353
      %v1364 = vadd.f32 %v1340, %v1358
      %v1365 = vadd.f32 %v1341, %v1359
      %1366 = vset.pattern.permute.xlu0 34
      %1367 = vperm.xlu0 %1366, %v229
      %v1368 = vpop.permute.xlu0 %1367
      %v1370 = vmul.f32 %v326, %v1368
      %v1371 = vmul.f32 %v327, %v1368
      %v1372 = vmul.f32 %v328, %v1368
      %1376 = vrot.lane.b32.xlu0 %v1370, 64
      %v1377 = vpop.permute.xlu0 %1376
      %1378 = vrot.lane.b32.xlu0 %v1371, 64
      %v1379 = vpop.permute.xlu0 %1378
      %1380 = vrot.lane.b32.xlu0 %v1372, 64
      %v1381 = vpop.permute.xlu0 %1380
      %v1382 = vsel %vm345, %v1377, %v1379
      %v1383 = vsel %vm345, %v1379, %v1381
      %v1387 = vadd.f32 %v1363, %v1377
      %v1388 = vadd.f32 %v1364, %v1382
      %v1389 = vadd.f32 %v1365, %v1383
      %1390 = vset.pattern.permute.xlu0 41
      %1391 = vperm.xlu0 %1390, %v229
      %v1392 = vpop.permute.xlu0 %1391
      %v1394 = vmul.f32 %v326, %v1392
      %v1395 = vmul.f32 %v327, %v1392
      %v1396 = vmul.f32 %v328, %v1392
      %1400 = vrot.lane.b32.xlu0 %v1394, 48
      %v1401 = vpop.permute.xlu0 %1400
      %1402 = vrot.lane.b32.xlu0 %v1395, 48
      %v1403 = vpop.permute.xlu0 %1402
      %1404 = vrot.lane.b32.xlu0 %v1396, 48
      %v1405 = vpop.permute.xlu0 %1404
      %v1406 = vsel %vm370, %v1401, %v1403
      %v1407 = vsel %vm370, %v1403, %v1405
      %v1411 = vadd.f32 %v1387, %v1401
      %v1412 = vadd.f32 %v1388, %v1406
      %v1413 = vadd.f32 %v1389, %v1407
      %1414 = vset.pattern.permute.xlu0 48
      %1415 = vperm.xlu0 %1414, %v229
      %v1416 = vpop.permute.xlu0 %1415
      %v1418 = vmul.f32 %v326, %v1416
      %v1419 = vmul.f32 %v327, %v1416
      %v1420 = vmul.f32 %v328, %v1416
      %1424 = vrot.lane.b32.xlu0 %v1418, 32
      %v1425 = vpop.permute.xlu0 %1424
      %1426 = vrot.lane.b32.xlu0 %v1419, 32
      %v1427 = vpop.permute.xlu0 %1426
      %1428 = vrot.lane.b32.xlu0 %v1420, 32
      %v1429 = vpop.permute.xlu0 %1428
      %v1430 = vsel %vm395, %v1425, %v1427
      %v1431 = vsel %vm395, %v1427, %v1429
      %v1435 = vadd.f32 %v1411, %v1425
      %v1436 = vadd.f32 %v1412, %v1430
      %v1437 = vadd.f32 %v1413, %v1431
      %vm1438 = vcmp.lt.s32.totalorder %v225, 13
      %vm1439 = vcmp.lt.s32.totalorder %v226, 13
      %1443 = vrot.lane.b32.xlu0 %v1435, 45
      %v1444 = vpop.permute.xlu0 %1443
      %1445 = vrot.lane.b32.xlu0 %v1436, 45
      %v1446 = vpop.permute.xlu0 %1445
      %1447 = vrot.lane.b32.xlu0 %v1437, 45
      %v1448 = vpop.permute.xlu0 %1447
      %vm1449 = vcmask 367616
      %v1450 = vsel %vm1449, %v1444, %v1446
      %v1451 = vsel %vm1449, %v1446, %v1448
      %v1454 = vsel %vm1438, %v1450, 0.0
      %v1455 = vsel %vm1439, %v1451, 0.0
      %v1456 = vadd.f32 %v1282, %v1454
      %v1457 = vadd.f32 %v1283, %v1455
      %1458 = vset.pattern.permute.xlu0 49
      %1459 = vperm.xlu0 %1458, %v229
      %v1460 = vpop.permute.xlu0 %1459
      %v1462 = vadd.f32 %v1456, %v1460
      %v1463 = vadd.f32 %v1457, %v1460
      %v1464 = vrot.slane %v1462, 4
      %v1465 = vadd.f32 %v1462, %v1464
      %v1466 = vrot.slane %v1465, 2
      %v1467 = vadd.f32 %v1465, %v1466
      %v1468 = vrot.slane %v1467, 1
      %v1469 = vadd.f32 %v1467, %v1468
      %v1470 = vrot.slane %v1463, 4
      %v1471 = vadd.f32 %v1463, %v1470
      %v1472 = vrot.slane %v1471, 2
      %v1473 = vadd.f32 %v1471, %v1472
      %v1474 = vrot.slane %v1473, 1
      %v1475 = vadd.f32 %v1473, %v1474
      %v1476 = vrcp.pop 8.0
      %v1477 = vmul.f32 %v1469, %v1476
      %v1478 = vmul.f32 %v1475, %v1476
      %v1479 = vmul.f32 %v1462, %v1462
      %v1480 = vmul.f32 %v1463, %v1463
      %v1481 = vrot.slane %v1479, 4
      %v1482 = vadd.f32 %v1479, %v1481
      %v1483 = vrot.slane %v1482, 2
      %v1484 = vadd.f32 %v1482, %v1483
      %v1485 = vrot.slane %v1484, 1
      %v1486 = vadd.f32 %v1484, %v1485
      %v1487 = vrot.slane %v1480, 4
      %v1488 = vadd.f32 %v1480, %v1487
      %v1489 = vrot.slane %v1488, 2
      %v1490 = vadd.f32 %v1488, %v1489
      %v1491 = vrot.slane %v1490, 1
      %v1492 = vadd.f32 %v1490, %v1491
      %v1493 = vmul.f32 %v1486, %v1476
      %v1494 = vmul.f32 %v1492, %v1476
      %v1495 = vmul.f32 %v1477, %v1477
      %v1496 = vmul.f32 %v1478, %v1478
      %v1497 = vsub.f32 %v1493, %v1495
      %v1498 = vsub.f32 %v1494, %v1496
      %v1499 = vadd.f32 %v1497, 1e-06
      %v1500 = vadd.f32 %v1498, 1e-06
      %v1501 = vrsqrt.pop %v1499
      %v1502 = vrsqrt.pop %v1500
      %v1503 = vsub.f32 %v1462, %v1477
      %v1504 = vsub.f32 %v1463, %v1478
      %v1505 = vmul.f32 %v1503, %v1501
      %v1506 = vmul.f32 %v1504, %v1502
      %1508 = vset.pattern.permute.xlu0 32
      %1509 = vperm.xlu0 %1508, %v230
      %v1510 = vpop.permute.xlu0 %1509
      %v1512 = vmul.f32 %v1505, %v1510
      %v1513 = vmul.f32 %v1506, %v1510
      %1514 = vset.pattern.permute.xlu0 33
      %1515 = vperm.xlu0 %1514, %v230
      %v1516 = vpop.permute.xlu0 %1515
      %v1518 = vadd.f32 %v1512, %v1516
      %v1519 = vadd.f32 %v1513, %v1516
      %1521 = vset.pattern.permute.xlu0 8
      %1522 = vperm.xlu0 %1521, %v231
      %v1523 = vpop.permute.xlu0 %1522
      %1526 = vset.pattern.permute.xlu0 8
      %1527 = vperm.xlu0 %1526, %v232
      %v1528 = vpop.permute.xlu0 %1527
      %1531 = vset.pattern.permute.xlu0 8
      %1532 = vperm.xlu0 %1531, %v233
      %v1533 = vpop.permute.xlu0 %1532
      %1536 = vset.pattern.permute.xlu0 8
      %1537 = vperm.xlu0 %1536, %v234
      %v1538 = vpop.permute.xlu0 %1537
      %vm1540 = vcmask 64512
      %v1541 = vsel %vm1540, %v231, 0
      %v1543 = vsel %vm1540, %v232, 0
      %v1545 = vsel %vm1540, %v233, 0
      %v1547 = vsel %vm1540, %v234, 0
      %1549 = vmatprep.subr.mxu0 0.0
      %1550 = vmatpush1.msra.mxu0 0.0
      %1551 = vmatprep.subr.mxu0 0.0
      %1552 = vmatpush1.msra.mxu0 0.0
      %1553 = vmatprep.subr.mxu0 0.0
      %1554 = vmatpush1.msra.mxu0 0.0
      %1555 = vmatprep.subr.mxu0 0.0
      %1556 = vmatpush1.msra.mxu0 0.0
      %1557 = vmatprep.subr.mxu0 0.0
      %1558 = vmatpush1.msra.mxu0 0.0
      %1559 = vmatprep.subr.mxu0 0.0
      %1560 = vmatpush1.msra.mxu0 0.0
      %1561 = vmatprep.subr.mxu0 0.0
      %1562 = vmatpush1.msra.mxu0 0.0
      %1563 = vmatprep.subr.mxu0 0.0
      %1564 = vmatpush1.msra.mxu0 0.0
      %1565 = vmatprep.subr.mxu0 0.0
      %1566 = vmatpush1.msra.mxu0 0.0
      %1567 = vmatprep.subr.mxu0 0.0
      %1568 = vmatpush1.msra.mxu0 0.0
      %1569 = vmatprep.subr.mxu0 0.0
      %1570 = vmatpush1.msra.mxu0 0.0
      %1571 = vmatprep.subr.mxu0 0.0
      %1572 = vmatpush1.msra.mxu0 0.0
      %1573 = vmatprep.subr.mxu0 0.0
      %1574 = vmatpush1.msra.mxu0 0.0
      %1575 = vmatprep.subr.mxu0 0.0
      %1576 = vmatpush1.msra.mxu0 0.0
      %1577 = vmatprep.subr.mxu0 0.0
      %1578 = vmatpush1.msra.mxu0 0.0
      %v1579 = vand.u32 %v1519, 4294901760
      %1580 = vmatprep.subr.mxu0 %v1579
      %v1581 = vand.u32 %v1518, 4294901760
      %1582 = vmatpush1.msra.mxu0 %v1581
      %1583 = vmatprep.subr.mxu0 0.0
      %1584 = vmatpush2.msra.mxu0 0.0
      %1585 = vmatprep.subr.mxu0 0.0
      %1586 = vmatpush2.msra.mxu0 0.0
      %1587 = vmatprep.subr.mxu0 0.0
      %1588 = vmatpush2.msra.mxu0 0.0
      %1589 = vmatprep.subr.mxu0 0.0
      %1590 = vmatpush2.msra.mxu0 0.0
      %1591 = vmatprep.subr.mxu0 0.0
      %1592 = vmatpush2.msra.mxu0 0.0
      %1593 = vmatprep.subr.mxu0 0.0
      %1594 = vmatpush2.msra.mxu0 0.0
      %1595 = vmatprep.subr.mxu0 0.0
      %1596 = vmatpush2.msra.mxu0 0.0
      %1597 = vmatprep.subr.mxu0 0.0
      %1598 = vmatpush2.msra.mxu0 0.0
      %1599 = vmatprep.subr.mxu0 0.0
      %1600 = vmatpush2.msra.mxu0 0.0
      %1601 = vmatprep.subr.mxu0 0.0
      %1602 = vmatpush2.msra.mxu0 0.0
      %1603 = vmatprep.subr.mxu0 0.0
      %1604 = vmatpush2.msra.mxu0 0.0
      %1605 = vmatprep.subr.mxu0 0.0
      %1606 = vmatpush2.msra.mxu0 0.0
      %1607 = vmatprep.subr.mxu0 0.0
      %1608 = vmatpush2.msra.mxu0 0.0
      %1609 = vmatprep.subr.mxu0 0.0
      %1610 = vmatpush2.msra.mxu0 0.0
      %1611 = vmatprep.subr.mxu0 0.0
      %1612 = vmatpush2.msra.mxu0 0.0
      %1613 = vmatprep.subr.mxu0 0.0
      %1614 = vmatpush2.msra.mxu0 0.0
      %1615 = vmatprep.mubr.f32.mxu0 0.0
      %v1616 = vand.u32 %v1541, 4294901760
      %v1617 = vsub.f32 %v1541, %v1616
      %v1618 = vand.u32 %v1617, 4294901760
      %v1619 = vsub.f32 %v1617, %v1618
      %v1620 = vand.u32 %v1619, 4294901760
      %1621 = vmatmul.mubr.f32.gmra.mxu0 %v1620
      %v1622 = vpop.f32.mrf.mxu0
      %v1623 = vadd.f32 %v1523, %v1622
      %v1624 = vpop.f32.mrf.mxu0
      %v1625 = vadd.f32 %v1523, %v1624
      %1626 = vmatprep.mubr.f32.mxu0 0.0
      %v1627 = vand.u32 %v1543, 4294901760
      %v1628 = vsub.f32 %v1543, %v1627
      %v1629 = vand.u32 %v1628, 4294901760
      %v1630 = vsub.f32 %v1628, %v1629
      %v1631 = vand.u32 %v1630, 4294901760
      %1632 = vmatmul.mubr.f32.gmra.mxu0 %v1631
      %v1633 = vpop.f32.mrf.mxu0
      %v1634 = vadd.f32 %v1528, %v1633
      %v1635 = vpop.f32.mrf.mxu0
      %v1636 = vadd.f32 %v1528, %v1635
      %1637 = vmatprep.mubr.f32.mxu0 0.0
      %v1638 = vand.u32 %v1545, 4294901760
      %v1639 = vsub.f32 %v1545, %v1638
      %v1640 = vand.u32 %v1639, 4294901760
      %v1641 = vsub.f32 %v1639, %v1640
      %v1642 = vand.u32 %v1641, 4294901760
      %1643 = vmatmul.mubr.f32.gmra.mxu0 %v1642
      %v1644 = vpop.f32.mrf.mxu0
      %v1645 = vadd.f32 %v1533, %v1644
      %v1646 = vpop.f32.mrf.mxu0
      %v1647 = vadd.f32 %v1533, %v1646
      %1648 = vmatprep.mubr.f32.mxu0 0.0
      %v1649 = vand.u32 %v1547, 4294901760
      %v1650 = vsub.f32 %v1547, %v1649
      %v1651 = vand.u32 %v1650, 4294901760
      %v1652 = vsub.f32 %v1650, %v1651
      %v1653 = vand.u32 %v1652, 4294901760
      %1654 = vmatmul.mubr.f32.gmra.mxu0 %v1653
      %v1655 = vpop.f32.mrf.mxu0
      %v1656 = vadd.f32 %v1538, %v1655
      %v1657 = vpop.f32.mrf.mxu0
      %v1658 = vadd.f32 %v1538, %v1657
      %1659 = vdwg.mxu0
      %1660 = vmatprep.subr.mxu0 0.0
      %1661 = vmatpush1.msra.mxu0 0.0
      %1662 = vmatprep.subr.mxu0 0.0
      %1663 = vmatpush1.msra.mxu0 0.0
      %1664 = vmatprep.subr.mxu0 0.0
      %1665 = vmatpush1.msra.mxu0 0.0
      %1666 = vmatprep.subr.mxu0 0.0
      %1667 = vmatpush1.msra.mxu0 0.0
      %1668 = vmatprep.subr.mxu0 0.0
      %1669 = vmatpush1.msra.mxu0 0.0
      %1670 = vmatprep.subr.mxu0 0.0
      %1671 = vmatpush1.msra.mxu0 0.0
      %1672 = vmatprep.subr.mxu0 0.0
      %1673 = vmatpush1.msra.mxu0 0.0
      %1674 = vmatprep.subr.mxu0 0.0
      %1675 = vmatpush1.msra.mxu0 0.0
      %1676 = vmatprep.subr.mxu0 0.0
      %1677 = vmatpush1.msra.mxu0 0.0
      %1678 = vmatprep.subr.mxu0 0.0
      %1679 = vmatpush1.msra.mxu0 0.0
      %1680 = vmatprep.subr.mxu0 0.0
      %1681 = vmatpush1.msra.mxu0 0.0
      %1682 = vmatprep.subr.mxu0 0.0
      %1683 = vmatpush1.msra.mxu0 0.0
      %1684 = vmatprep.subr.mxu0 0.0
      %1685 = vmatpush1.msra.mxu0 0.0
      %1686 = vmatprep.subr.mxu0 0.0
      %1687 = vmatpush1.msra.mxu0 0.0
      %1688 = vmatprep.subr.mxu0 0.0
      %1689 = vmatpush1.msra.mxu0 0.0
      %v1690 = vand.u32 %v1519, 4294901760
      %v1691 = vsub.f32 %v1519, %v1690
      %v1692 = vand.u32 %v1691, 4294901760
      %v1693 = vsub.f32 %v1691, %v1692
      %v1694 = vand.u32 %v1693, 4294901760
      %1695 = vmatprep.subr.mxu0 %v1694
      %v1696 = vand.u32 %v1518, 4294901760
      %v1697 = vsub.f32 %v1518, %v1696
      %v1698 = vand.u32 %v1697, 4294901760
      %v1699 = vsub.f32 %v1697, %v1698
      %v1700 = vand.u32 %v1699, 4294901760
      %1701 = vmatpush1.msra.mxu0 %v1700
      %1702 = vmatprep.subr.mxu0 0.0
      %1703 = vmatpush2.msra.mxu0 0.0
      %1704 = vmatprep.subr.mxu0 0.0
      %1705 = vmatpush2.msra.mxu0 0.0
      %1706 = vmatprep.subr.mxu0 0.0
      %1707 = vmatpush2.msra.mxu0 0.0
      %1708 = vmatprep.subr.mxu0 0.0
      %1709 = vmatpush2.msra.mxu0 0.0
      %1710 = vmatprep.subr.mxu0 0.0
      %1711 = vmatpush2.msra.mxu0 0.0
      %1712 = vmatprep.subr.mxu0 0.0
      %1713 = vmatpush2.msra.mxu0 0.0
      %1714 = vmatprep.subr.mxu0 0.0
      %1715 = vmatpush2.msra.mxu0 0.0
      %1716 = vmatprep.subr.mxu0 0.0
      %1717 = vmatpush2.msra.mxu0 0.0
      %1718 = vmatprep.subr.mxu0 0.0
      %1719 = vmatpush2.msra.mxu0 0.0
      %1720 = vmatprep.subr.mxu0 0.0
      %1721 = vmatpush2.msra.mxu0 0.0
      %1722 = vmatprep.subr.mxu0 0.0
      %1723 = vmatpush2.msra.mxu0 0.0
      %1724 = vmatprep.subr.mxu0 0.0
      %1725 = vmatpush2.msra.mxu0 0.0
      %1726 = vmatprep.subr.mxu0 0.0
      %1727 = vmatpush2.msra.mxu0 0.0
      %1728 = vmatprep.subr.mxu0 0.0
      %1729 = vmatpush2.msra.mxu0 0.0
      %1730 = vmatprep.subr.mxu0 0.0
      %1731 = vmatpush2.msra.mxu0 0.0
      %1732 = vmatprep.subr.mxu0 0.0
      %1733 = vmatpush2.msra.mxu0 0.0
      %1734 = vmatprep.mubr.f32.mxu0 0.0
      %v1735 = vand.u32 %v1541, 4294901760
      %1736 = vmatmul.mubr.f32.gmra.mxu0 %v1735
      %v1737 = vpop.f32.mrf.mxu0
      %v1738 = vadd.f32 %v1623, %v1737
      %v1739 = vpop.f32.mrf.mxu0
      %v1740 = vadd.f32 %v1625, %v1739
      %1741 = vmatprep.mubr.f32.mxu0 0.0
      %v1742 = vand.u32 %v1543, 4294901760
      %1743 = vmatmul.mubr.f32.gmra.mxu0 %v1742
      %v1744 = vpop.f32.mrf.mxu0
      %v1745 = vadd.f32 %v1634, %v1744
      %v1746 = vpop.f32.mrf.mxu0
      %v1747 = vadd.f32 %v1636, %v1746
      %1748 = vmatprep.mubr.f32.mxu0 0.0
      %v1749 = vand.u32 %v1545, 4294901760
      %1750 = vmatmul.mubr.f32.gmra.mxu0 %v1749
      %v1751 = vpop.f32.mrf.mxu0
      %v1752 = vadd.f32 %v1645, %v1751
      %v1753 = vpop.f32.mrf.mxu0
      %v1754 = vadd.f32 %v1647, %v1753
      %1755 = vmatprep.mubr.f32.mxu0 0.0
      %v1756 = vand.u32 %v1547, 4294901760
      %1757 = vmatmul.mubr.f32.gmra.mxu0 %v1756
      %v1758 = vpop.f32.mrf.mxu0
      %v1759 = vadd.f32 %v1656, %v1758
      %v1760 = vpop.f32.mrf.mxu0
      %v1761 = vadd.f32 %v1658, %v1760
      %1762 = vdwg.mxu0
      %1763 = vmatprep.subr.mxu0 0.0
      %1764 = vmatpush1.msra.mxu0 0.0
      %1765 = vmatprep.subr.mxu0 0.0
      %1766 = vmatpush1.msra.mxu0 0.0
      %1767 = vmatprep.subr.mxu0 0.0
      %1768 = vmatpush1.msra.mxu0 0.0
      %1769 = vmatprep.subr.mxu0 0.0
      %1770 = vmatpush1.msra.mxu0 0.0
      %1771 = vmatprep.subr.mxu0 0.0
      %1772 = vmatpush1.msra.mxu0 0.0
      %1773 = vmatprep.subr.mxu0 0.0
      %1774 = vmatpush1.msra.mxu0 0.0
      %1775 = vmatprep.subr.mxu0 0.0
      %1776 = vmatpush1.msra.mxu0 0.0
      %1777 = vmatprep.subr.mxu0 0.0
      %1778 = vmatpush1.msra.mxu0 0.0
      %1779 = vmatprep.subr.mxu0 0.0
      %1780 = vmatpush1.msra.mxu0 0.0
      %1781 = vmatprep.subr.mxu0 0.0
      %1782 = vmatpush1.msra.mxu0 0.0
      %1783 = vmatprep.subr.mxu0 0.0
      %1784 = vmatpush1.msra.mxu0 0.0
      %1785 = vmatprep.subr.mxu0 0.0
      %1786 = vmatpush1.msra.mxu0 0.0
      %1787 = vmatprep.subr.mxu0 0.0
      %1788 = vmatpush1.msra.mxu0 0.0
      %1789 = vmatprep.subr.mxu0 0.0
      %1790 = vmatpush1.msra.mxu0 0.0
      %1791 = vmatprep.subr.mxu0 0.0
      %1792 = vmatpush1.msra.mxu0 0.0
      %v1793 = vand.u32 %v1519, 4294901760
      %v1794 = vsub.f32 %v1519, %v1793
      %1795 = vmatprep.subr.mxu0 %v1794
      %v1796 = vand.u32 %v1518, 4294901760
      %v1797 = vsub.f32 %v1518, %v1796
      %1798 = vmatpush1.msra.mxu0 %v1797
      %1799 = vmatprep.subr.mxu0 0.0
      %1800 = vmatpush2.msra.mxu0 0.0
      %1801 = vmatprep.subr.mxu0 0.0
      %1802 = vmatpush2.msra.mxu0 0.0
      %1803 = vmatprep.subr.mxu0 0.0
      %1804 = vmatpush2.msra.mxu0 0.0
      %1805 = vmatprep.subr.mxu0 0.0
      %1806 = vmatpush2.msra.mxu0 0.0
      %1807 = vmatprep.subr.mxu0 0.0
      %1808 = vmatpush2.msra.mxu0 0.0
      %1809 = vmatprep.subr.mxu0 0.0
      %1810 = vmatpush2.msra.mxu0 0.0
      %1811 = vmatprep.subr.mxu0 0.0
      %1812 = vmatpush2.msra.mxu0 0.0
      %1813 = vmatprep.subr.mxu0 0.0
      %1814 = vmatpush2.msra.mxu0 0.0
      %1815 = vmatprep.subr.mxu0 0.0
      %1816 = vmatpush2.msra.mxu0 0.0
      %1817 = vmatprep.subr.mxu0 0.0
      %1818 = vmatpush2.msra.mxu0 0.0
      %1819 = vmatprep.subr.mxu0 0.0
      %1820 = vmatpush2.msra.mxu0 0.0
      %1821 = vmatprep.subr.mxu0 0.0
      %1822 = vmatpush2.msra.mxu0 0.0
      %1823 = vmatprep.subr.mxu0 0.0
      %1824 = vmatpush2.msra.mxu0 0.0
      %1825 = vmatprep.subr.mxu0 0.0
      %1826 = vmatpush2.msra.mxu0 0.0
      %1827 = vmatprep.subr.mxu0 0.0
      %1828 = vmatpush2.msra.mxu0 0.0
      %1829 = vmatprep.subr.mxu0 0.0
      %1830 = vmatpush2.msra.mxu0 0.0
      %1831 = vmatprep.mubr.f32.mxu0 0.0
      %v1832 = vand.u32 %v1541, 4294901760
      %v1833 = vsub.f32 %v1541, %v1832
      %1834 = vmatmul.mubr.f32.gmra.mxu0 %v1833
      %v1835 = vpop.f32.mrf.mxu0
      %v1836 = vadd.f32 %v1738, %v1835
      %v1837 = vpop.f32.mrf.mxu0
      %v1838 = vadd.f32 %v1740, %v1837
      %1839 = vmatprep.mubr.f32.mxu0 0.0
      %v1840 = vand.u32 %v1543, 4294901760
      %v1841 = vsub.f32 %v1543, %v1840
      %1842 = vmatmul.mubr.f32.gmra.mxu0 %v1841
      %v1843 = vpop.f32.mrf.mxu0
      %v1844 = vadd.f32 %v1745, %v1843
      %v1845 = vpop.f32.mrf.mxu0
      %v1846 = vadd.f32 %v1747, %v1845
      %1847 = vmatprep.mubr.f32.mxu0 0.0
      %v1848 = vand.u32 %v1545, 4294901760
      %v1849 = vsub.f32 %v1545, %v1848
      %1850 = vmatmul.mubr.f32.gmra.mxu0 %v1849
      %v1851 = vpop.f32.mrf.mxu0
      %v1852 = vadd.f32 %v1752, %v1851
      %v1853 = vpop.f32.mrf.mxu0
      %v1854 = vadd.f32 %v1754, %v1853
      %1855 = vmatprep.mubr.f32.mxu0 0.0
      %v1856 = vand.u32 %v1547, 4294901760
      %v1857 = vsub.f32 %v1547, %v1856
      %1858 = vmatmul.mubr.f32.gmra.mxu0 %v1857
      %v1859 = vpop.f32.mrf.mxu0
      %v1860 = vadd.f32 %v1759, %v1859
      %v1861 = vpop.f32.mrf.mxu0
      %v1862 = vadd.f32 %v1761, %v1861
      %1863 = vdwg.mxu0
      %1864 = vmatprep.subr.mxu0 0.0
      %1865 = vmatpush1.msra.mxu0 0.0
      %1866 = vmatprep.subr.mxu0 0.0
      %1867 = vmatpush1.msra.mxu0 0.0
      %1868 = vmatprep.subr.mxu0 0.0
      %1869 = vmatpush1.msra.mxu0 0.0
      %1870 = vmatprep.subr.mxu0 0.0
      %1871 = vmatpush1.msra.mxu0 0.0
      %1872 = vmatprep.subr.mxu0 0.0
      %1873 = vmatpush1.msra.mxu0 0.0
      %1874 = vmatprep.subr.mxu0 0.0
      %1875 = vmatpush1.msra.mxu0 0.0
      %1876 = vmatprep.subr.mxu0 0.0
      %1877 = vmatpush1.msra.mxu0 0.0
      %1878 = vmatprep.subr.mxu0 0.0
      %1879 = vmatpush1.msra.mxu0 0.0
      %1880 = vmatprep.subr.mxu0 0.0
      %1881 = vmatpush1.msra.mxu0 0.0
      %1882 = vmatprep.subr.mxu0 0.0
      %1883 = vmatpush1.msra.mxu0 0.0
      %1884 = vmatprep.subr.mxu0 0.0
      %1885 = vmatpush1.msra.mxu0 0.0
      %1886 = vmatprep.subr.mxu0 0.0
      %1887 = vmatpush1.msra.mxu0 0.0
      %1888 = vmatprep.subr.mxu0 0.0
      %1889 = vmatpush1.msra.mxu0 0.0
      %1890 = vmatprep.subr.mxu0 0.0
      %1891 = vmatpush1.msra.mxu0 0.0
      %1892 = vmatprep.subr.mxu0 0.0
      %1893 = vmatpush1.msra.mxu0 0.0
      %v1894 = vand.u32 %v1519, 4294901760
      %1895 = vmatprep.subr.mxu0 %v1894
      %v1896 = vand.u32 %v1518, 4294901760
      %1897 = vmatpush1.msra.mxu0 %v1896
      %1898 = vmatprep.subr.mxu0 0.0
      %1899 = vmatpush2.msra.mxu0 0.0
      %1900 = vmatprep.subr.mxu0 0.0
      %1901 = vmatpush2.msra.mxu0 0.0
      %1902 = vmatprep.subr.mxu0 0.0
      %1903 = vmatpush2.msra.mxu0 0.0
      %1904 = vmatprep.subr.mxu0 0.0
      %1905 = vmatpush2.msra.mxu0 0.0
      %1906 = vmatprep.subr.mxu0 0.0
      %1907 = vmatpush2.msra.mxu0 0.0
      %1908 = vmatprep.subr.mxu0 0.0
      %1909 = vmatpush2.msra.mxu0 0.0
      %1910 = vmatprep.subr.mxu0 0.0
      %1911 = vmatpush2.msra.mxu0 0.0
      %1912 = vmatprep.subr.mxu0 0.0
      %1913 = vmatpush2.msra.mxu0 0.0
      %1914 = vmatprep.subr.mxu0 0.0
      %1915 = vmatpush2.msra.mxu0 0.0
      %1916 = vmatprep.subr.mxu0 0.0
      %1917 = vmatpush2.msra.mxu0 0.0
      %1918 = vmatprep.subr.mxu0 0.0
      %1919 = vmatpush2.msra.mxu0 0.0
      %1920 = vmatprep.subr.mxu0 0.0
      %1921 = vmatpush2.msra.mxu0 0.0
      %1922 = vmatprep.subr.mxu0 0.0
      %1923 = vmatpush2.msra.mxu0 0.0
      %1924 = vmatprep.subr.mxu0 0.0
      %1925 = vmatpush2.msra.mxu0 0.0
      %1926 = vmatprep.subr.mxu0 0.0
      %1927 = vmatpush2.msra.mxu0 0.0
      %1928 = vmatprep.subr.mxu0 0.0
      %1929 = vmatpush2.msra.mxu0 0.0
      %1930 = vmatprep.mubr.f32.mxu0 0.0
      %v1931 = vand.u32 %v1541, 4294901760
      %v1932 = vsub.f32 %v1541, %v1931
      %v1933 = vand.u32 %v1932, 4294901760
      %1934 = vmatmul.mubr.f32.gmra.mxu0 %v1933
      %v1935 = vpop.f32.mrf.mxu0
      %v1936 = vadd.f32 %v1836, %v1935
      %v1937 = vpop.f32.mrf.mxu0
      %v1938 = vadd.f32 %v1838, %v1937
      %1939 = vmatprep.mubr.f32.mxu0 0.0
      %v1940 = vand.u32 %v1543, 4294901760
      %v1941 = vsub.f32 %v1543, %v1940
      %v1942 = vand.u32 %v1941, 4294901760
      %1943 = vmatmul.mubr.f32.gmra.mxu0 %v1942
      %v1944 = vpop.f32.mrf.mxu0
      %v1945 = vadd.f32 %v1844, %v1944
      %v1946 = vpop.f32.mrf.mxu0
      %v1947 = vadd.f32 %v1846, %v1946
      %1948 = vmatprep.mubr.f32.mxu0 0.0
      %v1949 = vand.u32 %v1545, 4294901760
      %v1950 = vsub.f32 %v1545, %v1949
      %v1951 = vand.u32 %v1950, 4294901760
      %1952 = vmatmul.mubr.f32.gmra.mxu0 %v1951
      %v1953 = vpop.f32.mrf.mxu0
      %v1954 = vadd.f32 %v1852, %v1953
      %v1955 = vpop.f32.mrf.mxu0
      %v1956 = vadd.f32 %v1854, %v1955
      %1957 = vmatprep.mubr.f32.mxu0 0.0
      %v1958 = vand.u32 %v1547, 4294901760
      %v1959 = vsub.f32 %v1547, %v1958
      %v1960 = vand.u32 %v1959, 4294901760
      %1961 = vmatmul.mubr.f32.gmra.mxu0 %v1960
      %v1962 = vpop.f32.mrf.mxu0
      %v1963 = vadd.f32 %v1860, %v1962
      %v1964 = vpop.f32.mrf.mxu0
      %v1965 = vadd.f32 %v1862, %v1964
      %1966 = vdwg.mxu0
      %1967 = vmatprep.subr.mxu0 0.0
      %1968 = vmatpush1.msra.mxu0 0.0
      %1969 = vmatprep.subr.mxu0 0.0
      %1970 = vmatpush1.msra.mxu0 0.0
      %1971 = vmatprep.subr.mxu0 0.0
      %1972 = vmatpush1.msra.mxu0 0.0
      %1973 = vmatprep.subr.mxu0 0.0
      %1974 = vmatpush1.msra.mxu0 0.0
      %1975 = vmatprep.subr.mxu0 0.0
      %1976 = vmatpush1.msra.mxu0 0.0
      %1977 = vmatprep.subr.mxu0 0.0
      %1978 = vmatpush1.msra.mxu0 0.0
      %1979 = vmatprep.subr.mxu0 0.0
      %1980 = vmatpush1.msra.mxu0 0.0
      %1981 = vmatprep.subr.mxu0 0.0
      %1982 = vmatpush1.msra.mxu0 0.0
      %1983 = vmatprep.subr.mxu0 0.0
      %1984 = vmatpush1.msra.mxu0 0.0
      %1985 = vmatprep.subr.mxu0 0.0
      %1986 = vmatpush1.msra.mxu0 0.0
      %1987 = vmatprep.subr.mxu0 0.0
      %1988 = vmatpush1.msra.mxu0 0.0
      %1989 = vmatprep.subr.mxu0 0.0
      %1990 = vmatpush1.msra.mxu0 0.0
      %1991 = vmatprep.subr.mxu0 0.0
      %1992 = vmatpush1.msra.mxu0 0.0
      %1993 = vmatprep.subr.mxu0 0.0
      %1994 = vmatpush1.msra.mxu0 0.0
      %1995 = vmatprep.subr.mxu0 0.0
      %1996 = vmatpush1.msra.mxu0 0.0
      %v1997 = vand.u32 %v1519, 4294901760
      %v1998 = vsub.f32 %v1519, %v1997
      %v1999 = vand.u32 %v1998, 4294901760
      %2000 = vmatprep.subr.mxu0 %v1999
      %v2001 = vand.u32 %v1518, 4294901760
      %v2002 = vsub.f32 %v1518, %v2001
      %v2003 = vand.u32 %v2002, 4294901760
      %2004 = vmatpush1.msra.mxu0 %v2003
      %2005 = vmatprep.subr.mxu0 0.0
      %2006 = vmatpush2.msra.mxu0 0.0
      %2007 = vmatprep.subr.mxu0 0.0
      %2008 = vmatpush2.msra.mxu0 0.0
      %2009 = vmatprep.subr.mxu0 0.0
      %2010 = vmatpush2.msra.mxu0 0.0
      %2011 = vmatprep.subr.mxu0 0.0
      %2012 = vmatpush2.msra.mxu0 0.0
      %2013 = vmatprep.subr.mxu0 0.0
      %2014 = vmatpush2.msra.mxu0 0.0
      %2015 = vmatprep.subr.mxu0 0.0
      %2016 = vmatpush2.msra.mxu0 0.0
      %2017 = vmatprep.subr.mxu0 0.0
      %2018 = vmatpush2.msra.mxu0 0.0
      %2019 = vmatprep.subr.mxu0 0.0
      %2020 = vmatpush2.msra.mxu0 0.0
      %2021 = vmatprep.subr.mxu0 0.0
      %2022 = vmatpush2.msra.mxu0 0.0
      %2023 = vmatprep.subr.mxu0 0.0
      %2024 = vmatpush2.msra.mxu0 0.0
      %2025 = vmatprep.subr.mxu0 0.0
      %2026 = vmatpush2.msra.mxu0 0.0
      %2027 = vmatprep.subr.mxu0 0.0
      %2028 = vmatpush2.msra.mxu0 0.0
      %2029 = vmatprep.subr.mxu0 0.0
      %2030 = vmatpush2.msra.mxu0 0.0
      %2031 = vmatprep.subr.mxu0 0.0
      %2032 = vmatpush2.msra.mxu0 0.0
      %2033 = vmatprep.subr.mxu0 0.0
      %2034 = vmatpush2.msra.mxu0 0.0
      %2035 = vmatprep.subr.mxu0 0.0
      %2036 = vmatpush2.msra.mxu0 0.0
      %2037 = vmatprep.mubr.f32.mxu0 0.0
      %v2038 = vand.u32 %v1541, 4294901760
      %2039 = vmatmul.mubr.f32.gmra.mxu0 %v2038
      %v2040 = vpop.f32.mrf.mxu0
      %v2041 = vadd.f32 %v1936, %v2040
      %v2042 = vpop.f32.mrf.mxu0
      %v2043 = vadd.f32 %v1938, %v2042
      %2044 = vmatprep.mubr.f32.mxu0 0.0
      %v2045 = vand.u32 %v1543, 4294901760
      %2046 = vmatmul.mubr.f32.gmra.mxu0 %v2045
      %v2047 = vpop.f32.mrf.mxu0
      %v2048 = vadd.f32 %v1945, %v2047
      %v2049 = vpop.f32.mrf.mxu0
      %v2050 = vadd.f32 %v1947, %v2049
      %2051 = vmatprep.mubr.f32.mxu0 0.0
      %v2052 = vand.u32 %v1545, 4294901760
      %2053 = vmatmul.mubr.f32.gmra.mxu0 %v2052
      %v2054 = vpop.f32.mrf.mxu0
      %v2055 = vadd.f32 %v1954, %v2054
      %v2056 = vpop.f32.mrf.mxu0
      %v2057 = vadd.f32 %v1956, %v2056
      %2058 = vmatprep.mubr.f32.mxu0 0.0
      %v2059 = vand.u32 %v1547, 4294901760
      %2060 = vmatmul.mubr.f32.gmra.mxu0 %v2059
      %v2061 = vpop.f32.mrf.mxu0
      %v2062 = vadd.f32 %v1963, %v2061
      %v2063 = vpop.f32.mrf.mxu0
      %v2064 = vadd.f32 %v1965, %v2063
      %2065 = vdwg.mxu0
      %2066 = vmatprep.subr.mxu0 0.0
      %2067 = vmatpush1.msra.mxu0 0.0
      %2068 = vmatprep.subr.mxu0 0.0
      %2069 = vmatpush1.msra.mxu0 0.0
      %2070 = vmatprep.subr.mxu0 0.0
      %2071 = vmatpush1.msra.mxu0 0.0
      %2072 = vmatprep.subr.mxu0 0.0
      %2073 = vmatpush1.msra.mxu0 0.0
      %2074 = vmatprep.subr.mxu0 0.0
      %2075 = vmatpush1.msra.mxu0 0.0
      %2076 = vmatprep.subr.mxu0 0.0
      %2077 = vmatpush1.msra.mxu0 0.0
      %2078 = vmatprep.subr.mxu0 0.0
      %2079 = vmatpush1.msra.mxu0 0.0
      %2080 = vmatprep.subr.mxu0 0.0
      %2081 = vmatpush1.msra.mxu0 0.0
      %2082 = vmatprep.subr.mxu0 0.0
      %2083 = vmatpush1.msra.mxu0 0.0
      %2084 = vmatprep.subr.mxu0 0.0
      %2085 = vmatpush1.msra.mxu0 0.0
      %2086 = vmatprep.subr.mxu0 0.0
      %2087 = vmatpush1.msra.mxu0 0.0
      %2088 = vmatprep.subr.mxu0 0.0
      %2089 = vmatpush1.msra.mxu0 0.0
      %2090 = vmatprep.subr.mxu0 0.0
      %2091 = vmatpush1.msra.mxu0 0.0
      %2092 = vmatprep.subr.mxu0 0.0
      %2093 = vmatpush1.msra.mxu0 0.0
      %2094 = vmatprep.subr.mxu0 0.0
      %2095 = vmatpush1.msra.mxu0 0.0
      %v2096 = vand.u32 %v1519, 4294901760
      %2097 = vmatprep.subr.mxu0 %v2096
      %v2098 = vand.u32 %v1518, 4294901760
      %2099 = vmatpush1.msra.mxu0 %v2098
      %2100 = vmatprep.subr.mxu0 0.0
      %2101 = vmatpush2.msra.mxu0 0.0
      %2102 = vmatprep.subr.mxu0 0.0
      %2103 = vmatpush2.msra.mxu0 0.0
      %2104 = vmatprep.subr.mxu0 0.0
      %2105 = vmatpush2.msra.mxu0 0.0
      %2106 = vmatprep.subr.mxu0 0.0
      %2107 = vmatpush2.msra.mxu0 0.0
      %2108 = vmatprep.subr.mxu0 0.0
      %2109 = vmatpush2.msra.mxu0 0.0
      %2110 = vmatprep.subr.mxu0 0.0
      %2111 = vmatpush2.msra.mxu0 0.0
      %2112 = vmatprep.subr.mxu0 0.0
      %2113 = vmatpush2.msra.mxu0 0.0
      %2114 = vmatprep.subr.mxu0 0.0
      %2115 = vmatpush2.msra.mxu0 0.0
      %2116 = vmatprep.subr.mxu0 0.0
      %2117 = vmatpush2.msra.mxu0 0.0
      %2118 = vmatprep.subr.mxu0 0.0
      %2119 = vmatpush2.msra.mxu0 0.0
      %2120 = vmatprep.subr.mxu0 0.0
      %2121 = vmatpush2.msra.mxu0 0.0
      %2122 = vmatprep.subr.mxu0 0.0
      %2123 = vmatpush2.msra.mxu0 0.0
      %2124 = vmatprep.subr.mxu0 0.0
      %2125 = vmatpush2.msra.mxu0 0.0
      %2126 = vmatprep.subr.mxu0 0.0
      %2127 = vmatpush2.msra.mxu0 0.0
      %2128 = vmatprep.subr.mxu0 0.0
      %2129 = vmatpush2.msra.mxu0 0.0
      %2130 = vmatprep.subr.mxu0 0.0
      %2131 = vmatpush2.msra.mxu0 0.0
      %2132 = vmatprep.mubr.f32.mxu0 0.0
      %v2133 = vand.u32 %v1541, 4294901760
      %2134 = vmatmul.mubr.f32.gmra.mxu0 %v2133
      %v2135 = vpop.f32.mrf.mxu0
      %v2136 = vadd.f32 %v2041, %v2135
      %v2137 = vpop.f32.mrf.mxu0
      %v2138 = vadd.f32 %v2043, %v2137
      %2139 = vmatprep.mubr.f32.mxu0 0.0
      %v2140 = vand.u32 %v1543, 4294901760
      %2141 = vmatmul.mubr.f32.gmra.mxu0 %v2140
      %v2142 = vpop.f32.mrf.mxu0
      %v2143 = vadd.f32 %v2048, %v2142
      %v2144 = vpop.f32.mrf.mxu0
      %v2145 = vadd.f32 %v2050, %v2144
      %2146 = vmatprep.mubr.f32.mxu0 0.0
      %v2147 = vand.u32 %v1545, 4294901760
      %2148 = vmatmul.mubr.f32.gmra.mxu0 %v2147
      %v2149 = vpop.f32.mrf.mxu0
      %v2150 = vadd.f32 %v2055, %v2149
      %v2151 = vpop.f32.mrf.mxu0
      %v2152 = vadd.f32 %v2057, %v2151
      %2153 = vmatprep.mubr.f32.mxu0 0.0
      %v2154 = vand.u32 %v1547, 4294901760
      %2155 = vmatmul.mubr.f32.gmra.mxu0 %v2154
      %v2156 = vpop.f32.mrf.mxu0
      %v2157 = vadd.f32 %v2062, %v2156
      %v2158 = vpop.f32.mrf.mxu0
      %v2159 = vadd.f32 %v2064, %v2158
      %2160 = vdwg.mxu0
      %v2161 = vmul.f32 %v2136, 0.5
      %v2162 = vmul.f32 %v2138, 0.5
      %v2163 = vmul.f32 %v2143, 0.5
      %v2164 = vmul.f32 %v2145, 0.5
      %v2165 = vmul.f32 %v2150, 0.5
      %v2166 = vmul.f32 %v2152, 0.5
      %v2167 = vmul.f32 %v2157, 0.5
      %v2168 = vmul.f32 %v2159, 0.5
      %v2169 = vmul.f32 %v2136, 0.70710677
      %v2170 = vmul.f32 %v2138, 0.70710677
      %v2171 = vmul.f32 %v2143, 0.70710677
      %v2172 = vmul.f32 %v2145, 0.70710677
      %v2173 = vmul.f32 %v2150, 0.70710677
      %v2174 = vmul.f32 %v2152, 0.70710677
      %v2175 = vmul.f32 %v2157, 0.70710677
      %v2176 = vmul.f32 %v2159, 0.70710677
      %v2177 = vand.u32 2147483647, %v2169
      %v2178 = vand.u32 2147483647, %v2170
      %v2179 = vand.u32 2147483647, %v2171
      %v2180 = vand.u32 2147483647, %v2172
      %v2181 = vand.u32 2147483647, %v2173
      %v2182 = vand.u32 2147483647, %v2174
      %v2183 = vand.u32 2147483647, %v2175
      %v2184 = vand.u32 2147483647, %v2176
      %v2185 = vmul.f32 %v2177, 0.3275911
      %v2186 = vmul.f32 %v2178, 0.3275911
      %v2187 = vmul.f32 %v2179, 0.3275911
      %v2188 = vmul.f32 %v2180, 0.3275911
      %v2189 = vmul.f32 %v2181, 0.3275911
      %v2190 = vmul.f32 %v2182, 0.3275911
      %v2191 = vmul.f32 %v2183, 0.3275911
      %v2192 = vmul.f32 %v2184, 0.3275911
      %v2193 = vadd.f32 %v2185, 1.0
      %v2194 = vadd.f32 %v2186, 1.0
      %v2195 = vadd.f32 %v2187, 1.0
      %v2196 = vadd.f32 %v2188, 1.0
      %v2197 = vadd.f32 %v2189, 1.0
      %v2198 = vadd.f32 %v2190, 1.0
      %v2199 = vadd.f32 %v2191, 1.0
      %v2200 = vadd.f32 %v2192, 1.0
      %v2201 = vrcp.pop %v2193
      %v2202 = vmul.f32 1.0, %v2201
      %v2203 = vrcp.pop %v2194
      %v2204 = vmul.f32 1.0, %v2203
      %v2205 = vrcp.pop %v2195
      %v2206 = vmul.f32 1.0, %v2205
      %v2207 = vrcp.pop %v2196
      %v2208 = vmul.f32 1.0, %v2207
      %v2209 = vrcp.pop %v2197
      %v2210 = vmul.f32 1.0, %v2209
      %v2211 = vrcp.pop %v2198
      %v2212 = vmul.f32 1.0, %v2211
      %v2213 = vrcp.pop %v2199
      %v2214 = vmul.f32 1.0, %v2213
      %v2215 = vrcp.pop %v2200
      %v2216 = vmul.f32 1.0, %v2215
      %v2217 = vmul.f32 %v2202, 1.0614054
      %v2218 = vmul.f32 %v2204, 1.0614054
      %v2219 = vmul.f32 %v2206, 1.0614054
      %v2220 = vmul.f32 %v2208, 1.0614054
      %v2221 = vmul.f32 %v2210, 1.0614054
      %v2222 = vmul.f32 %v2212, 1.0614054
      %v2223 = vmul.f32 %v2214, 1.0614054
      %v2224 = vmul.f32 %v2216, 1.0614054
      %v2225 = vadd.f32 %v2217, -1.4531521
      %v2226 = vadd.f32 %v2218, -1.4531521
      %v2227 = vadd.f32 %v2219, -1.4531521
      %v2228 = vadd.f32 %v2220, -1.4531521
      %v2229 = vadd.f32 %v2221, -1.4531521
      %v2230 = vadd.f32 %v2222, -1.4531521
      %v2231 = vadd.f32 %v2223, -1.4531521
      %v2232 = vadd.f32 %v2224, -1.4531521
      %v2233 = vmul.f32 %v2225, %v2202
      %v2234 = vmul.f32 %v2226, %v2204
      %v2235 = vmul.f32 %v2227, %v2206
      %v2236 = vmul.f32 %v2228, %v2208
      %v2237 = vmul.f32 %v2229, %v2210
      %v2238 = vmul.f32 %v2230, %v2212
      %v2239 = vmul.f32 %v2231, %v2214
      %v2240 = vmul.f32 %v2232, %v2216
      %v2241 = vadd.f32 %v2233, 1.4214138
      %v2242 = vadd.f32 %v2234, 1.4214138
      %v2243 = vadd.f32 %v2235, 1.4214138
      %v2244 = vadd.f32 %v2236, 1.4214138
      %v2245 = vadd.f32 %v2237, 1.4214138
      %v2246 = vadd.f32 %v2238, 1.4214138
      %v2247 = vadd.f32 %v2239, 1.4214138
      %v2248 = vadd.f32 %v2240, 1.4214138
      %v2249 = vmul.f32 %v2241, %v2202
      %v2250 = vmul.f32 %v2242, %v2204
      %v2251 = vmul.f32 %v2243, %v2206
      %v2252 = vmul.f32 %v2244, %v2208
      %v2253 = vmul.f32 %v2245, %v2210
      %v2254 = vmul.f32 %v2246, %v2212
      %v2255 = vmul.f32 %v2247, %v2214
      %v2256 = vmul.f32 %v2248, %v2216
      %v2257 = vadd.f32 %v2249, -0.28449672
      %v2258 = vadd.f32 %v2250, -0.28449672
      %v2259 = vadd.f32 %v2251, -0.28449672
      %v2260 = vadd.f32 %v2252, -0.28449672
      %v2261 = vadd.f32 %v2253, -0.28449672
      %v2262 = vadd.f32 %v2254, -0.28449672
      %v2263 = vadd.f32 %v2255, -0.28449672
      %v2264 = vadd.f32 %v2256, -0.28449672
      %v2265 = vmul.f32 %v2257, %v2202
      %v2266 = vmul.f32 %v2258, %v2204
      %v2267 = vmul.f32 %v2259, %v2206
      %v2268 = vmul.f32 %v2260, %v2208
      %v2269 = vmul.f32 %v2261, %v2210
      %v2270 = vmul.f32 %v2262, %v2212
      %v2271 = vmul.f32 %v2263, %v2214
      %v2272 = vmul.f32 %v2264, %v2216
      %v2273 = vadd.f32 %v2265, 0.2548296
      %v2274 = vadd.f32 %v2266, 0.2548296
      %v2275 = vadd.f32 %v2267, 0.2548296
      %v2276 = vadd.f32 %v2268, 0.2548296
      %v2277 = vadd.f32 %v2269, 0.2548296
      %v2278 = vadd.f32 %v2270, 0.2548296
      %v2279 = vadd.f32 %v2271, 0.2548296
      %v2280 = vadd.f32 %v2272, 0.2548296
      %v2281 = vmul.f32 %v2273, %v2202
      %v2282 = vmul.f32 %v2274, %v2204
      %v2283 = vmul.f32 %v2275, %v2206
      %v2284 = vmul.f32 %v2276, %v2208
      %v2285 = vmul.f32 %v2277, %v2210
      %v2286 = vmul.f32 %v2278, %v2212
      %v2287 = vmul.f32 %v2279, %v2214
      %v2288 = vmul.f32 %v2280, %v2216
      %v2289 = vsub.f32 0.0, %v2177
      %v2290 = vsub.f32 0.0, %v2178
      %v2291 = vsub.f32 0.0, %v2179
      %v2292 = vsub.f32 0.0, %v2180
      %v2293 = vsub.f32 0.0, %v2181
      %v2294 = vsub.f32 0.0, %v2182
      %v2295 = vsub.f32 0.0, %v2183
      %v2296 = vsub.f32 0.0, %v2184
      %v2297 = vmul.f32 %v2289, %v2177
      %v2298 = vmul.f32 %v2290, %v2178
      %v2299 = vmul.f32 %v2291, %v2179
      %v2300 = vmul.f32 %v2292, %v2180
      %v2301 = vmul.f32 %v2293, %v2181
      %v2302 = vmul.f32 %v2294, %v2182
      %v2303 = vmul.f32 %v2295, %v2183
      %v2304 = vmul.f32 %v2296, %v2184
      %v2305 = vmul.f32 %v2297, 1.442695
      %v2306 = vpow.pop %v2305
      %v2307 = vmul.f32 %v2298, 1.442695
      %v2308 = vpow.pop %v2307
      %v2309 = vmul.f32 %v2299, 1.442695
      %v2310 = vpow.pop %v2309
      %v2311 = vmul.f32 %v2300, 1.442695
      %v2312 = vpow.pop %v2311
      %v2313 = vmul.f32 %v2301, 1.442695
      %v2314 = vpow.pop %v2313
      %v2315 = vmul.f32 %v2302, 1.442695
      %v2316 = vpow.pop %v2315
      %v2317 = vmul.f32 %v2303, 1.442695
      %v2318 = vpow.pop %v2317
      %v2319 = vmul.f32 %v2304, 1.442695
      %v2320 = vpow.pop %v2319
      %v2321 = vmul.f32 %v2281, %v2306
      %v2322 = vmul.f32 %v2282, %v2308
      %v2323 = vmul.f32 %v2283, %v2310
      %v2324 = vmul.f32 %v2284, %v2312
      %v2325 = vmul.f32 %v2285, %v2314
      %v2326 = vmul.f32 %v2286, %v2316
      %v2327 = vmul.f32 %v2287, %v2318
      %v2328 = vmul.f32 %v2288, %v2320
      %v2329 = vsub.f32 1.0, %v2321
      %v2330 = vsub.f32 1.0, %v2322
      %v2331 = vsub.f32 1.0, %v2323
      %v2332 = vsub.f32 1.0, %v2324
      %v2333 = vsub.f32 1.0, %v2325
      %v2334 = vsub.f32 1.0, %v2326
      %v2335 = vsub.f32 1.0, %v2327
      %v2336 = vsub.f32 1.0, %v2328
      %vm2337 = vcmp.ge.f32.partialorder %v2169, 0.0
      %vm2338 = vcmp.ge.f32.partialorder %v2170, 0.0
      %vm2339 = vcmp.ge.f32.partialorder %v2171, 0.0
      %vm2340 = vcmp.ge.f32.partialorder %v2172, 0.0
      %vm2341 = vcmp.ge.f32.partialorder %v2173, 0.0
      %vm2342 = vcmp.ge.f32.partialorder %v2174, 0.0
      %vm2343 = vcmp.ge.f32.partialorder %v2175, 0.0
      %vm2344 = vcmp.ge.f32.partialorder %v2176, 0.0
      %v2345 = vsub.f32 0.0, %v2329
      %v2346 = vsub.f32 0.0, %v2330
      %v2347 = vsub.f32 0.0, %v2331
      %v2348 = vsub.f32 0.0, %v2332
      %v2349 = vsub.f32 0.0, %v2333
      %v2350 = vsub.f32 0.0, %v2334
      %v2351 = vsub.f32 0.0, %v2335
      %v2352 = vsub.f32 0.0, %v2336
      %v2353 = vsel %vm2337, %v2329, %v2345
      %v2354 = vsel %vm2338, %v2330, %v2346
      %v2355 = vsel %vm2339, %v2331, %v2347
      %v2356 = vsel %vm2340, %v2332, %v2348
      %v2357 = vsel %vm2341, %v2333, %v2349
      %v2358 = vsel %vm2342, %v2334, %v2350
      %v2359 = vsel %vm2343, %v2335, %v2351
      %v2360 = vsel %vm2344, %v2336, %v2352
      %v2361 = vadd.f32 %v2353, 1.0
      %v2362 = vadd.f32 %v2354, 1.0
      %v2363 = vadd.f32 %v2355, 1.0
      %v2364 = vadd.f32 %v2356, 1.0
      %v2365 = vadd.f32 %v2357, 1.0
      %v2366 = vadd.f32 %v2358, 1.0
      %v2367 = vadd.f32 %v2359, 1.0
      %v2368 = vadd.f32 %v2360, 1.0
      %v2369 = vmul.f32 %v2161, %v2361
      %v2370 = vmul.f32 %v2162, %v2362
      %v2371 = vmul.f32 %v2163, %v2363
      %v2372 = vmul.f32 %v2164, %v2364
      %v2373 = vmul.f32 %v2165, %v2365
      %v2374 = vmul.f32 %v2166, %v2366
      %v2375 = vmul.f32 %v2167, %v2367
      %v2376 = vmul.f32 %v2168, %v2368
      %v2377 = vmul.f32 %v2369, %v2369
      %v2378 = vmul.f32 %v2370, %v2370
      %v2379 = vmul.f32 %v2371, %v2371
      %v2380 = vmul.f32 %v2372, %v2372
      %v2381 = vmul.f32 %v2373, %v2373
      %v2382 = vmul.f32 %v2374, %v2374
      %v2383 = vmul.f32 %v2375, %v2375
      %v2384 = vmul.f32 %v2376, %v2376
      %v2385 = vadd.f32 %v2377, %v2378
      %2386 = vadd.xlane.f32.xlu0 %v2385
      %v2387 = vpop.xlane.xlu0 %2386
      %v2388 = vadd.f32 %v2379, %v2380
      %2389 = vadd.xlane.f32.xlu0 %v2388
      %v2390 = vpop.xlane.xlu0 %2389
      %v2391 = vadd.f32 %v2381, %v2382
      %2392 = vadd.xlane.f32.xlu0 %v2391
      %v2393 = vpop.xlane.xlu0 %2392
      %v2394 = vadd.f32 %v2383, %v2384
      %2395 = vadd.xlane.f32.xlu0 %v2394
      %v2396 = vpop.xlane.xlu0 %2395
      %v2397 = vrsqrt.pop %v2387
      %v2398 = vmul.f32 %v2387, %v2397
      %vm2399 = vcmp.eq.f32.partialorder %v2387, inf
      %v2400 = vsel %vm2399, %v2387, %v2398
      %vm2401 = vcmp.eq.f32.partialorder %v2387, 0.0
      %v2402 = vand.u32 %v2387, 2147483648
      %v2403 = vsel %vm2401, %v2402, %v2400
      %v2404 = vrsqrt.pop %v2390
      %v2405 = vmul.f32 %v2390, %v2404
      %vm2406 = vcmp.eq.f32.partialorder %v2390, inf
      %v2407 = vsel %vm2406, %v2390, %v2405
      %vm2408 = vcmp.eq.f32.partialorder %v2390, 0.0
      %v2409 = vand.u32 %v2390, 2147483648
      %v2410 = vsel %vm2408, %v2409, %v2407
      %v2411 = vrsqrt.pop %v2393
      %v2412 = vmul.f32 %v2393, %v2411
      %vm2413 = vcmp.eq.f32.partialorder %v2393, inf
      %v2414 = vsel %vm2413, %v2393, %v2412
      %vm2415 = vcmp.eq.f32.partialorder %v2393, 0.0
      %v2416 = vand.u32 %v2393, 2147483648
      %v2417 = vsel %vm2415, %v2416, %v2414
      %v2418 = vrsqrt.pop %v2396
      %v2419 = vmul.f32 %v2396, %v2418
      %vm2420 = vcmp.eq.f32.partialorder %v2396, inf
      %v2421 = vsel %vm2420, %v2396, %v2419
      %vm2422 = vcmp.eq.f32.partialorder %v2396, 0.0
      %v2423 = vand.u32 %v2396, 2147483648
      %v2424 = vsel %vm2422, %v2423, %v2421
      %v2425 = vadd.f32 %v2403, %v2410
      %v2426 = vadd.f32 %v2425, %v2417
      %v2427 = vadd.f32 %v2426, %v2424
      %v2428 = vrot.slane %v2427, 4
      %v2429 = vadd.f32 %v2427, %v2428
      %v2430 = vrot.slane %v2429, 2
      %v2431 = vadd.f32 %v2429, %v2430
      %v2432 = vrot.slane %v2431, 1
      %v2433 = vadd.f32 %v2431, %v2432
      %v2434 = vrcp.pop 32.0
      %v2435 = vmul.f32 %v2433, %v2434
      %v2436 = vadd.f32 %v2435, 1e-06
      %v2437 = vrcp.pop %v2436
      %v2438 = vmul.f32 %v2403, %v2437
      %v2439 = vmul.f32 %v2410, %v2437
      %v2440 = vmul.f32 %v2417, %v2437
      %v2441 = vmul.f32 %v2424, %v2437
      %v2442 = vmul.f32 %v2369, %v2438
      %v2443 = vmul.f32 %v2370, %v2438
      %v2444 = vmul.f32 %v2371, %v2439
      %v2445 = vmul.f32 %v2372, %v2439
      %v2446 = vmul.f32 %v2373, %v2440
      %v2447 = vmul.f32 %v2374, %v2440
      %v2448 = vmul.f32 %v2375, %v2441
      %v2449 = vmul.f32 %v2376, %v2441
      %2450 = vset.pattern.permute.xlu0 9
      %2451 = vperm.xlu0 %2450, %v231
      %v2452 = vpop.permute.xlu0 %2451
      %2454 = vset.pattern.permute.xlu0 9
      %2455 = vperm.xlu0 %2454, %v232
      %v2456 = vpop.permute.xlu0 %2455
      %2458 = vset.pattern.permute.xlu0 9
      %2459 = vperm.xlu0 %2458, %v233
      %v2460 = vpop.permute.xlu0 %2459
      %2462 = vset.pattern.permute.xlu0 9
      %2463 = vperm.xlu0 %2462, %v234
      %v2464 = vpop.permute.xlu0 %2463
      %v2466 = vmul.f32 %v2452, %v2442
      %v2467 = vmul.f32 %v2452, %v2443
      %v2468 = vmul.f32 %v2456, %v2444
      %v2469 = vmul.f32 %v2456, %v2445
      %v2470 = vmul.f32 %v2460, %v2446
      %v2471 = vmul.f32 %v2460, %v2447
      %v2472 = vmul.f32 %v2464, %v2448
      %v2473 = vmul.f32 %v2464, %v2449
      %2474 = vset.pattern.permute.xlu0 10
      %2475 = vperm.xlu0 %2474, %v231
      %v2476 = vpop.permute.xlu0 %2475
      %2478 = vset.pattern.permute.xlu0 10
      %2479 = vperm.xlu0 %2478, %v232
      %v2480 = vpop.permute.xlu0 %2479
      %2482 = vset.pattern.permute.xlu0 10
      %2483 = vperm.xlu0 %2482, %v233
      %v2484 = vpop.permute.xlu0 %2483
      %2486 = vset.pattern.permute.xlu0 10
      %2487 = vperm.xlu0 %2486, %v234
      %v2488 = vpop.permute.xlu0 %2487
      %v2490 = vadd.f32 %v2466, %v2476
      %v2491 = vadd.f32 %v2467, %v2476
      %v2492 = vadd.f32 %v2468, %v2480
      %v2493 = vadd.f32 %v2469, %v2480
      %v2494 = vadd.f32 %v2470, %v2484
      %v2495 = vadd.f32 %v2471, %v2484
      %v2496 = vadd.f32 %v2472, %v2488
      %v2497 = vadd.f32 %v2473, %v2488
      %v2498 = vadd.f32 %v2490, %v2369
      %v2499 = vadd.f32 %v2491, %v2370
      %v2500 = vadd.f32 %v2492, %v2371
      %v2501 = vadd.f32 %v2493, %v2372
      %v2502 = vadd.f32 %v2494, %v2373
      %v2503 = vadd.f32 %v2495, %v2374
      %v2504 = vadd.f32 %v2496, %v2375
      %v2505 = vadd.f32 %v2497, %v2376
      %2506 = vset.pattern.permute.xlu0 34
      %2507 = vperm.xlu0 %2506, %v230
      %v2508 = vpop.permute.xlu0 %2507
      %v2510 = vsel %vm395, %v230, 0
      %2512 = vmatprep.subr.mxu0 0.0
      %2513 = vmatpush1.msra.mxu0 0.0
      %2514 = vmatprep.subr.mxu0 0.0
      %2515 = vmatpush1.msra.mxu0 0.0
      %2516 = vmatprep.subr.mxu0 0.0
      %2517 = vmatpush1.msra.mxu0 0.0
      %2518 = vmatprep.subr.mxu0 0.0
      %2519 = vmatpush1.msra.mxu0 0.0
      %2520 = vmatprep.subr.mxu0 0.0
      %2521 = vmatpush1.msra.mxu0 0.0
      %2522 = vmatprep.subr.mxu0 0.0
      %2523 = vmatpush1.msra.mxu0 0.0
      %2524 = vmatprep.subr.mxu0 0.0
      %2525 = vmatpush1.msra.mxu0 0.0
      %2526 = vmatprep.subr.mxu0 0.0
      %2527 = vmatpush1.msra.mxu0 0.0
      %2528 = vmatprep.subr.mxu0 0.0
      %2529 = vmatpush1.msra.mxu0 0.0
      %2530 = vmatprep.subr.mxu0 0.0
      %2531 = vmatpush1.msra.mxu0 0.0
      %2532 = vmatprep.subr.mxu0 0.0
      %2533 = vmatpush1.msra.mxu0 0.0
      %2534 = vmatprep.subr.mxu0 0.0
      %2535 = vmatpush1.msra.mxu0 0.0
      %v2536 = vand.u32 %v2505, 4294901760
      %2537 = vmatprep.subr.mxu0 %v2536
      %v2538 = vand.u32 %v2504, 4294901760
      %2539 = vmatpush1.msra.mxu0 %v2538
      %v2540 = vand.u32 %v2503, 4294901760
      %2541 = vmatprep.subr.mxu0 %v2540
      %v2542 = vand.u32 %v2502, 4294901760
      %2543 = vmatpush1.msra.mxu0 %v2542
      %v2544 = vand.u32 %v2501, 4294901760
      %2545 = vmatprep.subr.mxu0 %v2544
      %v2546 = vand.u32 %v2500, 4294901760
      %2547 = vmatpush1.msra.mxu0 %v2546
      %v2548 = vand.u32 %v2499, 4294901760
      %2549 = vmatprep.subr.mxu0 %v2548
      %v2550 = vand.u32 %v2498, 4294901760
      %2551 = vmatpush1.msra.mxu0 %v2550
      %2552 = vmatprep.subr.mxu0 0.0
      %2553 = vmatpush2.msra.mxu0 0.0
      %2554 = vmatprep.subr.mxu0 0.0
      %2555 = vmatpush2.msra.mxu0 0.0
      %2556 = vmatprep.subr.mxu0 0.0
      %2557 = vmatpush2.msra.mxu0 0.0
      %2558 = vmatprep.subr.mxu0 0.0
      %2559 = vmatpush2.msra.mxu0 0.0
      %2560 = vmatprep.subr.mxu0 0.0
      %2561 = vmatpush2.msra.mxu0 0.0
      %2562 = vmatprep.subr.mxu0 0.0
      %2563 = vmatpush2.msra.mxu0 0.0
      %2564 = vmatprep.subr.mxu0 0.0
      %2565 = vmatpush2.msra.mxu0 0.0
      %2566 = vmatprep.subr.mxu0 0.0
      %2567 = vmatpush2.msra.mxu0 0.0
      %2568 = vmatprep.subr.mxu0 0.0
      %2569 = vmatpush2.msra.mxu0 0.0
      %2570 = vmatprep.subr.mxu0 0.0
      %2571 = vmatpush2.msra.mxu0 0.0
      %2572 = vmatprep.subr.mxu0 0.0
      %2573 = vmatpush2.msra.mxu0 0.0
      %2574 = vmatprep.subr.mxu0 0.0
      %2575 = vmatpush2.msra.mxu0 0.0
      %2576 = vmatprep.subr.mxu0 0.0
      %2577 = vmatpush2.msra.mxu0 0.0
      %2578 = vmatprep.subr.mxu0 0.0
      %2579 = vmatpush2.msra.mxu0 0.0
      %2580 = vmatprep.subr.mxu0 0.0
      %2581 = vmatpush2.msra.mxu0 0.0
      %2582 = vmatprep.subr.mxu0 0.0
      %2583 = vmatpush2.msra.mxu0 0.0
      %2584 = vmatprep.mubr.f32.mxu0 0.0
      %v2585 = vand.u32 %v2510, 4294901760
      %v2586 = vsub.f32 %v2510, %v2585
      %v2587 = vand.u32 %v2586, 4294901760
      %v2588 = vsub.f32 %v2586, %v2587
      %v2589 = vand.u32 %v2588, 4294901760
      %2590 = vmatmul.mubr.f32.gmra.mxu0 %v2589
      %v2591 = vpop.f32.mrf.mxu0
      %v2592 = vadd.f32 %v2508, %v2591
      %v2593 = vpop.f32.mrf.mxu0
      %v2594 = vadd.f32 %v2508, %v2593
      %2595 = vdwg.mxu0
      %2596 = vmatprep.subr.mxu0 0.0
      %2597 = vmatpush1.msra.mxu0 0.0
      %2598 = vmatprep.subr.mxu0 0.0
      %2599 = vmatpush1.msra.mxu0 0.0
      %2600 = vmatprep.subr.mxu0 0.0
      %2601 = vmatpush1.msra.mxu0 0.0
      %2602 = vmatprep.subr.mxu0 0.0
      %2603 = vmatpush1.msra.mxu0 0.0
      %2604 = vmatprep.subr.mxu0 0.0
      %2605 = vmatpush1.msra.mxu0 0.0
      %2606 = vmatprep.subr.mxu0 0.0
      %2607 = vmatpush1.msra.mxu0 0.0
      %2608 = vmatprep.subr.mxu0 0.0
      %2609 = vmatpush1.msra.mxu0 0.0
      %2610 = vmatprep.subr.mxu0 0.0
      %2611 = vmatpush1.msra.mxu0 0.0
      %2612 = vmatprep.subr.mxu0 0.0
      %2613 = vmatpush1.msra.mxu0 0.0
      %2614 = vmatprep.subr.mxu0 0.0
      %2615 = vmatpush1.msra.mxu0 0.0
      %2616 = vmatprep.subr.mxu0 0.0
      %2617 = vmatpush1.msra.mxu0 0.0
      %2618 = vmatprep.subr.mxu0 0.0
      %2619 = vmatpush1.msra.mxu0 0.0
      %v2620 = vand.u32 %v2505, 4294901760
      %v2621 = vsub.f32 %v2505, %v2620
      %v2622 = vand.u32 %v2621, 4294901760
      %v2623 = vsub.f32 %v2621, %v2622
      %v2624 = vand.u32 %v2623, 4294901760
      %2625 = vmatprep.subr.mxu0 %v2624
      %v2626 = vand.u32 %v2504, 4294901760
      %v2627 = vsub.f32 %v2504, %v2626
      %v2628 = vand.u32 %v2627, 4294901760
      %v2629 = vsub.f32 %v2627, %v2628
      %v2630 = vand.u32 %v2629, 4294901760
      %2631 = vmatpush1.msra.mxu0 %v2630
      %v2632 = vand.u32 %v2503, 4294901760
      %v2633 = vsub.f32 %v2503, %v2632
      %v2634 = vand.u32 %v2633, 4294901760
      %v2635 = vsub.f32 %v2633, %v2634
      %v2636 = vand.u32 %v2635, 4294901760
      %2637 = vmatprep.subr.mxu0 %v2636
      %v2638 = vand.u32 %v2502, 4294901760
      %v2639 = vsub.f32 %v2502, %v2638
      %v2640 = vand.u32 %v2639, 4294901760
      %v2641 = vsub.f32 %v2639, %v2640
      %v2642 = vand.u32 %v2641, 4294901760
      %2643 = vmatpush1.msra.mxu0 %v2642
      %v2644 = vand.u32 %v2501, 4294901760
      %v2645 = vsub.f32 %v2501, %v2644
      %v2646 = vand.u32 %v2645, 4294901760
      %v2647 = vsub.f32 %v2645, %v2646
      %v2648 = vand.u32 %v2647, 4294901760
      %2649 = vmatprep.subr.mxu0 %v2648
      %v2650 = vand.u32 %v2500, 4294901760
      %v2651 = vsub.f32 %v2500, %v2650
      %v2652 = vand.u32 %v2651, 4294901760
      %v2653 = vsub.f32 %v2651, %v2652
      %v2654 = vand.u32 %v2653, 4294901760
      %2655 = vmatpush1.msra.mxu0 %v2654
      %v2656 = vand.u32 %v2499, 4294901760
      %v2657 = vsub.f32 %v2499, %v2656
      %v2658 = vand.u32 %v2657, 4294901760
      %v2659 = vsub.f32 %v2657, %v2658
      %v2660 = vand.u32 %v2659, 4294901760
      %2661 = vmatprep.subr.mxu0 %v2660
      %v2662 = vand.u32 %v2498, 4294901760
      %v2663 = vsub.f32 %v2498, %v2662
      %v2664 = vand.u32 %v2663, 4294901760
      %v2665 = vsub.f32 %v2663, %v2664
      %v2666 = vand.u32 %v2665, 4294901760
      %2667 = vmatpush1.msra.mxu0 %v2666
      %2668 = vmatprep.subr.mxu0 0.0
      %2669 = vmatpush2.msra.mxu0 0.0
      %2670 = vmatprep.subr.mxu0 0.0
      %2671 = vmatpush2.msra.mxu0 0.0
      %2672 = vmatprep.subr.mxu0 0.0
      %2673 = vmatpush2.msra.mxu0 0.0
      %2674 = vmatprep.subr.mxu0 0.0
      %2675 = vmatpush2.msra.mxu0 0.0
      %2676 = vmatprep.subr.mxu0 0.0
      %2677 = vmatpush2.msra.mxu0 0.0
      %2678 = vmatprep.subr.mxu0 0.0
      %2679 = vmatpush2.msra.mxu0 0.0
      %2680 = vmatprep.subr.mxu0 0.0
      %2681 = vmatpush2.msra.mxu0 0.0
      %2682 = vmatprep.subr.mxu0 0.0
      %2683 = vmatpush2.msra.mxu0 0.0
      %2684 = vmatprep.subr.mxu0 0.0
      %2685 = vmatpush2.msra.mxu0 0.0
      %2686 = vmatprep.subr.mxu0 0.0
      %2687 = vmatpush2.msra.mxu0 0.0
      %2688 = vmatprep.subr.mxu0 0.0
      %2689 = vmatpush2.msra.mxu0 0.0
      %2690 = vmatprep.subr.mxu0 0.0
      %2691 = vmatpush2.msra.mxu0 0.0
      %2692 = vmatprep.subr.mxu0 0.0
      %2693 = vmatpush2.msra.mxu0 0.0
      %2694 = vmatprep.subr.mxu0 0.0
      %2695 = vmatpush2.msra.mxu0 0.0
      %2696 = vmatprep.subr.mxu0 0.0
      %2697 = vmatpush2.msra.mxu0 0.0
      %2698 = vmatprep.subr.mxu0 0.0
      %2699 = vmatpush2.msra.mxu0 0.0
      %2700 = vmatprep.mubr.f32.mxu0 0.0
      %v2701 = vand.u32 %v2510, 4294901760
      %2702 = vmatmul.mubr.f32.gmra.mxu0 %v2701
      %v2703 = vpop.f32.mrf.mxu0
      %v2704 = vadd.f32 %v2592, %v2703
      %v2705 = vpop.f32.mrf.mxu0
      %v2706 = vadd.f32 %v2594, %v2705
      %2707 = vdwg.mxu0
      %2708 = vmatprep.subr.mxu0 0.0
      %2709 = vmatpush1.msra.mxu0 0.0
      %2710 = vmatprep.subr.mxu0 0.0
      %2711 = vmatpush1.msra.mxu0 0.0
      %2712 = vmatprep.subr.mxu0 0.0
      %2713 = vmatpush1.msra.mxu0 0.0
      %2714 = vmatprep.subr.mxu0 0.0
      %2715 = vmatpush1.msra.mxu0 0.0
      %2716 = vmatprep.subr.mxu0 0.0
      %2717 = vmatpush1.msra.mxu0 0.0
      %2718 = vmatprep.subr.mxu0 0.0
      %2719 = vmatpush1.msra.mxu0 0.0
      %2720 = vmatprep.subr.mxu0 0.0
      %2721 = vmatpush1.msra.mxu0 0.0
      %2722 = vmatprep.subr.mxu0 0.0
      %2723 = vmatpush1.msra.mxu0 0.0
      %2724 = vmatprep.subr.mxu0 0.0
      %2725 = vmatpush1.msra.mxu0 0.0
      %2726 = vmatprep.subr.mxu0 0.0
      %2727 = vmatpush1.msra.mxu0 0.0
      %2728 = vmatprep.subr.mxu0 0.0
      %2729 = vmatpush1.msra.mxu0 0.0
      %2730 = vmatprep.subr.mxu0 0.0
      %2731 = vmatpush1.msra.mxu0 0.0
      %v2732 = vand.u32 %v2505, 4294901760
      %v2733 = vsub.f32 %v2505, %v2732
      %2734 = vmatprep.subr.mxu0 %v2733
      %v2735 = vand.u32 %v2504, 4294901760
      %v2736 = vsub.f32 %v2504, %v2735
      %2737 = vmatpush1.msra.mxu0 %v2736
      %v2738 = vand.u32 %v2503, 4294901760
      %v2739 = vsub.f32 %v2503, %v2738
      %2740 = vmatprep.subr.mxu0 %v2739
      %v2741 = vand.u32 %v2502, 4294901760
      %v2742 = vsub.f32 %v2502, %v2741
      %2743 = vmatpush1.msra.mxu0 %v2742
      %v2744 = vand.u32 %v2501, 4294901760
      %v2745 = vsub.f32 %v2501, %v2744
      %2746 = vmatprep.subr.mxu0 %v2745
      %v2747 = vand.u32 %v2500, 4294901760
      %v2748 = vsub.f32 %v2500, %v2747
      %2749 = vmatpush1.msra.mxu0 %v2748
      %v2750 = vand.u32 %v2499, 4294901760
      %v2751 = vsub.f32 %v2499, %v2750
      %2752 = vmatprep.subr.mxu0 %v2751
      %v2753 = vand.u32 %v2498, 4294901760
      %v2754 = vsub.f32 %v2498, %v2753
      %2755 = vmatpush1.msra.mxu0 %v2754
      %2756 = vmatprep.subr.mxu0 0.0
      %2757 = vmatpush2.msra.mxu0 0.0
      %2758 = vmatprep.subr.mxu0 0.0
      %2759 = vmatpush2.msra.mxu0 0.0
      %2760 = vmatprep.subr.mxu0 0.0
      %2761 = vmatpush2.msra.mxu0 0.0
      %2762 = vmatprep.subr.mxu0 0.0
      %2763 = vmatpush2.msra.mxu0 0.0
      %2764 = vmatprep.subr.mxu0 0.0
      %2765 = vmatpush2.msra.mxu0 0.0
      %2766 = vmatprep.subr.mxu0 0.0
      %2767 = vmatpush2.msra.mxu0 0.0
      %2768 = vmatprep.subr.mxu0 0.0
      %2769 = vmatpush2.msra.mxu0 0.0
      %2770 = vmatprep.subr.mxu0 0.0
      %2771 = vmatpush2.msra.mxu0 0.0
      %2772 = vmatprep.subr.mxu0 0.0
      %2773 = vmatpush2.msra.mxu0 0.0
      %2774 = vmatprep.subr.mxu0 0.0
      %2775 = vmatpush2.msra.mxu0 0.0
      %2776 = vmatprep.subr.mxu0 0.0
      %2777 = vmatpush2.msra.mxu0 0.0
      %2778 = vmatprep.subr.mxu0 0.0
      %2779 = vmatpush2.msra.mxu0 0.0
      %2780 = vmatprep.subr.mxu0 0.0
      %2781 = vmatpush2.msra.mxu0 0.0
      %2782 = vmatprep.subr.mxu0 0.0
      %2783 = vmatpush2.msra.mxu0 0.0
      %2784 = vmatprep.subr.mxu0 0.0
      %2785 = vmatpush2.msra.mxu0 0.0
      %2786 = vmatprep.subr.mxu0 0.0
      %2787 = vmatpush2.msra.mxu0 0.0
      %2788 = vmatprep.mubr.f32.mxu0 0.0
      %v2789 = vand.u32 %v2510, 4294901760
      %v2790 = vsub.f32 %v2510, %v2789
      %2791 = vmatmul.mubr.f32.gmra.mxu0 %v2790
      %v2792 = vpop.f32.mrf.mxu0
      %v2793 = vadd.f32 %v2704, %v2792
      %v2794 = vpop.f32.mrf.mxu0
      %v2795 = vadd.f32 %v2706, %v2794
      %2796 = vdwg.mxu0
      %2797 = vmatprep.subr.mxu0 0.0
      %2798 = vmatpush1.msra.mxu0 0.0
      %2799 = vmatprep.subr.mxu0 0.0
      %2800 = vmatpush1.msra.mxu0 0.0
      %2801 = vmatprep.subr.mxu0 0.0
      %2802 = vmatpush1.msra.mxu0 0.0
      %2803 = vmatprep.subr.mxu0 0.0
      %2804 = vmatpush1.msra.mxu0 0.0
      %2805 = vmatprep.subr.mxu0 0.0
      %2806 = vmatpush1.msra.mxu0 0.0
      %2807 = vmatprep.subr.mxu0 0.0
      %2808 = vmatpush1.msra.mxu0 0.0
      %2809 = vmatprep.subr.mxu0 0.0
      %2810 = vmatpush1.msra.mxu0 0.0
      %2811 = vmatprep.subr.mxu0 0.0
      %2812 = vmatpush1.msra.mxu0 0.0
      %2813 = vmatprep.subr.mxu0 0.0
      %2814 = vmatpush1.msra.mxu0 0.0
      %2815 = vmatprep.subr.mxu0 0.0
      %2816 = vmatpush1.msra.mxu0 0.0
      %2817 = vmatprep.subr.mxu0 0.0
      %2818 = vmatpush1.msra.mxu0 0.0
      %2819 = vmatprep.subr.mxu0 0.0
      %2820 = vmatpush1.msra.mxu0 0.0
      %v2821 = vand.u32 %v2505, 4294901760
      %2822 = vmatprep.subr.mxu0 %v2821
      %v2823 = vand.u32 %v2504, 4294901760
      %2824 = vmatpush1.msra.mxu0 %v2823
      %v2825 = vand.u32 %v2503, 4294901760
      %2826 = vmatprep.subr.mxu0 %v2825
      %v2827 = vand.u32 %v2502, 4294901760
      %2828 = vmatpush1.msra.mxu0 %v2827
      %v2829 = vand.u32 %v2501, 4294901760
      %2830 = vmatprep.subr.mxu0 %v2829
      %v2831 = vand.u32 %v2500, 4294901760
      %2832 = vmatpush1.msra.mxu0 %v2831
      %v2833 = vand.u32 %v2499, 4294901760
      %2834 = vmatprep.subr.mxu0 %v2833
      %v2835 = vand.u32 %v2498, 4294901760
      %2836 = vmatpush1.msra.mxu0 %v2835
      %2837 = vmatprep.subr.mxu0 0.0
      %2838 = vmatpush2.msra.mxu0 0.0
      %2839 = vmatprep.subr.mxu0 0.0
      %2840 = vmatpush2.msra.mxu0 0.0
      %2841 = vmatprep.subr.mxu0 0.0
      %2842 = vmatpush2.msra.mxu0 0.0
      %2843 = vmatprep.subr.mxu0 0.0
      %2844 = vmatpush2.msra.mxu0 0.0
      %2845 = vmatprep.subr.mxu0 0.0
      %2846 = vmatpush2.msra.mxu0 0.0
      %2847 = vmatprep.subr.mxu0 0.0
      %2848 = vmatpush2.msra.mxu0 0.0
      %2849 = vmatprep.subr.mxu0 0.0
      %2850 = vmatpush2.msra.mxu0 0.0
      %2851 = vmatprep.subr.mxu0 0.0
      %2852 = vmatpush2.msra.mxu0 0.0
      %2853 = vmatprep.subr.mxu0 0.0
      %2854 = vmatpush2.msra.mxu0 0.0
      %2855 = vmatprep.subr.mxu0 0.0
      %2856 = vmatpush2.msra.mxu0 0.0
      %2857 = vmatprep.subr.mxu0 0.0
      %2858 = vmatpush2.msra.mxu0 0.0
      %2859 = vmatprep.subr.mxu0 0.0
      %2860 = vmatpush2.msra.mxu0 0.0
      %2861 = vmatprep.subr.mxu0 0.0
      %2862 = vmatpush2.msra.mxu0 0.0
      %2863 = vmatprep.subr.mxu0 0.0
      %2864 = vmatpush2.msra.mxu0 0.0
      %2865 = vmatprep.subr.mxu0 0.0
      %2866 = vmatpush2.msra.mxu0 0.0
      %2867 = vmatprep.subr.mxu0 0.0
      %2868 = vmatpush2.msra.mxu0 0.0
      %2869 = vmatprep.mubr.f32.mxu0 0.0
      %v2870 = vand.u32 %v2510, 4294901760
      %v2871 = vsub.f32 %v2510, %v2870
      %v2872 = vand.u32 %v2871, 4294901760
      %2873 = vmatmul.mubr.f32.gmra.mxu0 %v2872
      %v2874 = vpop.f32.mrf.mxu0
      %v2875 = vadd.f32 %v2793, %v2874
      %v2876 = vpop.f32.mrf.mxu0
      %v2877 = vadd.f32 %v2795, %v2876
      %2878 = vdwg.mxu0
      %2879 = vmatprep.subr.mxu0 0.0
      %2880 = vmatpush1.msra.mxu0 0.0
      %2881 = vmatprep.subr.mxu0 0.0
      %2882 = vmatpush1.msra.mxu0 0.0
      %2883 = vmatprep.subr.mxu0 0.0
      %2884 = vmatpush1.msra.mxu0 0.0
      %2885 = vmatprep.subr.mxu0 0.0
      %2886 = vmatpush1.msra.mxu0 0.0
      %2887 = vmatprep.subr.mxu0 0.0
      %2888 = vmatpush1.msra.mxu0 0.0
      %2889 = vmatprep.subr.mxu0 0.0
      %2890 = vmatpush1.msra.mxu0 0.0
      %2891 = vmatprep.subr.mxu0 0.0
      %2892 = vmatpush1.msra.mxu0 0.0
      %2893 = vmatprep.subr.mxu0 0.0
      %2894 = vmatpush1.msra.mxu0 0.0
      %2895 = vmatprep.subr.mxu0 0.0
      %2896 = vmatpush1.msra.mxu0 0.0
      %2897 = vmatprep.subr.mxu0 0.0
      %2898 = vmatpush1.msra.mxu0 0.0
      %2899 = vmatprep.subr.mxu0 0.0
      %2900 = vmatpush1.msra.mxu0 0.0
      %2901 = vmatprep.subr.mxu0 0.0
      %2902 = vmatpush1.msra.mxu0 0.0
      %v2903 = vand.u32 %v2505, 4294901760
      %v2904 = vsub.f32 %v2505, %v2903
      %v2905 = vand.u32 %v2904, 4294901760
      %2906 = vmatprep.subr.mxu0 %v2905
      %v2907 = vand.u32 %v2504, 4294901760
      %v2908 = vsub.f32 %v2504, %v2907
      %v2909 = vand.u32 %v2908, 4294901760
      %2910 = vmatpush1.msra.mxu0 %v2909
      %v2911 = vand.u32 %v2503, 4294901760
      %v2912 = vsub.f32 %v2503, %v2911
      %v2913 = vand.u32 %v2912, 4294901760
      %2914 = vmatprep.subr.mxu0 %v2913
      %v2915 = vand.u32 %v2502, 4294901760
      %v2916 = vsub.f32 %v2502, %v2915
      %v2917 = vand.u32 %v2916, 4294901760
      %2918 = vmatpush1.msra.mxu0 %v2917
      %v2919 = vand.u32 %v2501, 4294901760
      %v2920 = vsub.f32 %v2501, %v2919
      %v2921 = vand.u32 %v2920, 4294901760
      %2922 = vmatprep.subr.mxu0 %v2921
      %v2923 = vand.u32 %v2500, 4294901760
      %v2924 = vsub.f32 %v2500, %v2923
      %v2925 = vand.u32 %v2924, 4294901760
      %2926 = vmatpush1.msra.mxu0 %v2925
      %v2927 = vand.u32 %v2499, 4294901760
      %v2928 = vsub.f32 %v2499, %v2927
      %v2929 = vand.u32 %v2928, 4294901760
      %2930 = vmatprep.subr.mxu0 %v2929
      %v2931 = vand.u32 %v2498, 4294901760
      %v2932 = vsub.f32 %v2498, %v2931
      %v2933 = vand.u32 %v2932, 4294901760
      %2934 = vmatpush1.msra.mxu0 %v2933
      %2935 = vmatprep.subr.mxu0 0.0
      %2936 = vmatpush2.msra.mxu0 0.0
      %2937 = vmatprep.subr.mxu0 0.0
      %2938 = vmatpush2.msra.mxu0 0.0
      %2939 = vmatprep.subr.mxu0 0.0
      %2940 = vmatpush2.msra.mxu0 0.0
      %2941 = vmatprep.subr.mxu0 0.0
      %2942 = vmatpush2.msra.mxu0 0.0
      %2943 = vmatprep.subr.mxu0 0.0
      %2944 = vmatpush2.msra.mxu0 0.0
      %2945 = vmatprep.subr.mxu0 0.0
      %2946 = vmatpush2.msra.mxu0 0.0
      %2947 = vmatprep.subr.mxu0 0.0
      %2948 = vmatpush2.msra.mxu0 0.0
      %2949 = vmatprep.subr.mxu0 0.0
      %2950 = vmatpush2.msra.mxu0 0.0
      %2951 = vmatprep.subr.mxu0 0.0
      %2952 = vmatpush2.msra.mxu0 0.0
      %2953 = vmatprep.subr.mxu0 0.0
      %2954 = vmatpush2.msra.mxu0 0.0
      %2955 = vmatprep.subr.mxu0 0.0
      %2956 = vmatpush2.msra.mxu0 0.0
      %2957 = vmatprep.subr.mxu0 0.0
      %2958 = vmatpush2.msra.mxu0 0.0
      %2959 = vmatprep.subr.mxu0 0.0
      %2960 = vmatpush2.msra.mxu0 0.0
      %2961 = vmatprep.subr.mxu0 0.0
      %2962 = vmatpush2.msra.mxu0 0.0
      %2963 = vmatprep.subr.mxu0 0.0
      %2964 = vmatpush2.msra.mxu0 0.0
      %2965 = vmatprep.subr.mxu0 0.0
      %2966 = vmatpush2.msra.mxu0 0.0
      %2967 = vmatprep.mubr.f32.mxu0 0.0
      %v2968 = vand.u32 %v2510, 4294901760
      %2969 = vmatmul.mubr.f32.gmra.mxu0 %v2968
      %v2970 = vpop.f32.mrf.mxu0
      %v2971 = vadd.f32 %v2875, %v2970
      %v2972 = vpop.f32.mrf.mxu0
      %v2973 = vadd.f32 %v2877, %v2972
      %2974 = vdwg.mxu0
      %2975 = vmatprep.subr.mxu0 0.0
      %2976 = vmatpush1.msra.mxu0 0.0
      %2977 = vmatprep.subr.mxu0 0.0
      %2978 = vmatpush1.msra.mxu0 0.0
      %2979 = vmatprep.subr.mxu0 0.0
      %2980 = vmatpush1.msra.mxu0 0.0
      %2981 = vmatprep.subr.mxu0 0.0
      %2982 = vmatpush1.msra.mxu0 0.0
      %2983 = vmatprep.subr.mxu0 0.0
      %2984 = vmatpush1.msra.mxu0 0.0
      %2985 = vmatprep.subr.mxu0 0.0
      %2986 = vmatpush1.msra.mxu0 0.0
      %2987 = vmatprep.subr.mxu0 0.0
      %2988 = vmatpush1.msra.mxu0 0.0
      %2989 = vmatprep.subr.mxu0 0.0
      %2990 = vmatpush1.msra.mxu0 0.0
      %2991 = vmatprep.subr.mxu0 0.0
      %2992 = vmatpush1.msra.mxu0 0.0
      %2993 = vmatprep.subr.mxu0 0.0
      %2994 = vmatpush1.msra.mxu0 0.0
      %2995 = vmatprep.subr.mxu0 0.0
      %2996 = vmatpush1.msra.mxu0 0.0
      %2997 = vmatprep.subr.mxu0 0.0
      %2998 = vmatpush1.msra.mxu0 0.0
      %v2999 = vand.u32 %v2505, 4294901760
      %3000 = vmatprep.subr.mxu0 %v2999
      %v3001 = vand.u32 %v2504, 4294901760
      %3002 = vmatpush1.msra.mxu0 %v3001
      %v3003 = vand.u32 %v2503, 4294901760
      %3004 = vmatprep.subr.mxu0 %v3003
      %v3005 = vand.u32 %v2502, 4294901760
      %3006 = vmatpush1.msra.mxu0 %v3005
      %v3007 = vand.u32 %v2501, 4294901760
      %3008 = vmatprep.subr.mxu0 %v3007
      %v3009 = vand.u32 %v2500, 4294901760
      %3010 = vmatpush1.msra.mxu0 %v3009
      %v3011 = vand.u32 %v2499, 4294901760
      %3012 = vmatprep.subr.mxu0 %v3011
      %v3013 = vand.u32 %v2498, 4294901760
      %3014 = vmatpush1.msra.mxu0 %v3013
      %3015 = vmatprep.subr.mxu0 0.0
      %3016 = vmatpush2.msra.mxu0 0.0
      %3017 = vmatprep.subr.mxu0 0.0
      %3018 = vmatpush2.msra.mxu0 0.0
      %3019 = vmatprep.subr.mxu0 0.0
      %3020 = vmatpush2.msra.mxu0 0.0
      %3021 = vmatprep.subr.mxu0 0.0
      %3022 = vmatpush2.msra.mxu0 0.0
      %3023 = vmatprep.subr.mxu0 0.0
      %3024 = vmatpush2.msra.mxu0 0.0
      %3025 = vmatprep.subr.mxu0 0.0
      %3026 = vmatpush2.msra.mxu0 0.0
      %3027 = vmatprep.subr.mxu0 0.0
      %3028 = vmatpush2.msra.mxu0 0.0
      %3029 = vmatprep.subr.mxu0 0.0
      %3030 = vmatpush2.msra.mxu0 0.0
      %3031 = vmatprep.subr.mxu0 0.0
      %3032 = vmatpush2.msra.mxu0 0.0
      %3033 = vmatprep.subr.mxu0 0.0
      %3034 = vmatpush2.msra.mxu0 0.0
      %3035 = vmatprep.subr.mxu0 0.0
      %3036 = vmatpush2.msra.mxu0 0.0
      %3037 = vmatprep.subr.mxu0 0.0
      %3038 = vmatpush2.msra.mxu0 0.0
      %3039 = vmatprep.subr.mxu0 0.0
      %3040 = vmatpush2.msra.mxu0 0.0
      %3041 = vmatprep.subr.mxu0 0.0
      %3042 = vmatpush2.msra.mxu0 0.0
      %3043 = vmatprep.subr.mxu0 0.0
      %3044 = vmatpush2.msra.mxu0 0.0
      %3045 = vmatprep.subr.mxu0 0.0
      %3046 = vmatpush2.msra.mxu0 0.0
      %3047 = vmatprep.mubr.f32.mxu0 0.0
      %v3048 = vand.u32 %v2510, 4294901760
      %3049 = vmatmul.mubr.f32.gmra.mxu0 %v3048
      %v3050 = vpop.f32.mrf.mxu0
      %v3051 = vadd.f32 %v2971, %v3050
      %v3052 = vpop.f32.mrf.mxu0
      %v3053 = vadd.f32 %v2973, %v3052
      %3054 = vdwg.mxu0
      %v3055 = vadd.f32 %v227, %v3051
      %v3056 = vadd.f32 %v228, %v3053
      %s3057 = scalar_lea.vmem %s1, 8
      %v3058 = vld [vmem:[%s3057] sm:$0xff]
      %s3059 = scalar_lea.vmem %s2, 8
      %v3060 = vld [vmem:[%s3059] sm:$0xff]
      %s3061 = scalar_lea.vmem %s3, 32
      %v3062 = vld [vmem:[%s3061] sm:$0xff]
      %v3063 = vld [vmem:[%s3061 + $0x8] sm:$0xff]
      %v3064 = vld [vmem:[%s3061 + $0x10] sm:$0xff]
      %v3065 = vld [vmem:[%s3061 + $0x18] sm:$0xff]
      %3066 = vst [vmem:[#allocation2 + $0x8] sm:$0xff] %v3055
      %3067 = vst [vmem:[#allocation2 + $0x10] sm:$0xff] %v3056
      %v3068 = vld [vmem:[#allocation2] sm:$0xff]
      %v3069 = vld [vmem:[#allocation2 + $0x8] sm:$0xff]
      %v3070 = vld [vmem:[#allocation2 + $0x10] sm:$0xff]
      %3072 = vset.pattern.permute.xlu0 0
      %3073 = vperm.xlu0 %3072, %v3058
      %v3074 = vpop.permute.xlu0 %3073
      %v3076 = vmul.f32 %v3068, %v3074
      %v3077 = vmul.f32 %v3069, %v3074
      %v3078 = vmul.f32 %v3070, %v3074
      %v3079 = vadd.f32 %v3076, 0.0
      %v3080 = vadd.f32 %v3077, 0.0
      %v3081 = vadd.f32 %v3078, 0.0
      %3082 = vset.pattern.permute.xlu0 7
      %3083 = vperm.xlu0 %3082, %v3058
      %v3084 = vpop.permute.xlu0 %3083
      %v3086 = vmul.f32 %v3068, %v3084
      %v3087 = vmul.f32 %v3069, %v3084
      %v3088 = vmul.f32 %v3070, %v3084
      %3092 = vrot.lane.b32.xlu0 %v3086, 112
      %v3093 = vpop.permute.xlu0 %3092
      %3094 = vrot.lane.b32.xlu0 %v3087, 112
      %v3095 = vpop.permute.xlu0 %3094
      %3096 = vrot.lane.b32.xlu0 %v3088, 112
      %v3097 = vpop.permute.xlu0 %3096
      %v3098 = vsel %vm267, %v3093, %v3095
      %v3099 = vsel %vm267, %v3095, %v3097
      %v3103 = vadd.f32 %v3079, %v3098
      %v3104 = vadd.f32 %v3080, %v3099
      %v3105 = vadd.f32 %v3081, %v3097
      %3106 = vset.pattern.permute.xlu0 14
      %3107 = vperm.xlu0 %3106, %v3058
      %v3108 = vpop.permute.xlu0 %3107
      %v3110 = vmul.f32 %v3068, %v3108
      %v3111 = vmul.f32 %v3069, %v3108
      %v3112 = vmul.f32 %v3070, %v3108
      %3116 = vrot.lane.b32.xlu0 %v3110, 96
      %v3117 = vpop.permute.xlu0 %3116
      %3118 = vrot.lane.b32.xlu0 %v3111, 96
      %v3119 = vpop.permute.xlu0 %3118
      %3120 = vrot.lane.b32.xlu0 %v3112, 96
      %v3121 = vpop.permute.xlu0 %3120
      %v3122 = vsel %vm292, %v3117, %v3119
      %v3123 = vsel %vm292, %v3119, %v3121
      %v3127 = vadd.f32 %v3103, %v3122
      %v3128 = vadd.f32 %v3104, %v3123
      %v3129 = vadd.f32 %v3105, %v3121
      %3130 = vset.pattern.permute.xlu0 21
      %3131 = vperm.xlu0 %3130, %v3058
      %v3132 = vpop.permute.xlu0 %3131
      %v3134 = vmul.f32 %v3068, %v3132
      %v3135 = vmul.f32 %v3069, %v3132
      %v3136 = vmul.f32 %v3070, %v3132
      %3140 = vrot.lane.b32.xlu0 %v3134, 80
      %v3141 = vpop.permute.xlu0 %3140
      %3142 = vrot.lane.b32.xlu0 %v3135, 80
      %v3143 = vpop.permute.xlu0 %3142
      %3144 = vrot.lane.b32.xlu0 %v3136, 80
      %v3145 = vpop.permute.xlu0 %3144
      %v3146 = vsel %vm317, %v3141, %v3143
      %v3147 = vsel %vm317, %v3143, %v3145
      %v3151 = vadd.f32 %v3127, %v3146
      %v3152 = vadd.f32 %v3128, %v3147
      %v3153 = vadd.f32 %v3129, %v3145
      %v3154 = vld [vmem:[#allocation2 + $0x8] sm:$0xff]
      %v3155 = vld [vmem:[#allocation2 + $0x10] sm:$0xff]
      %v3156 = vld [vmem:[#allocation2 + $0x18] sm:$0xff]
      %3157 = vset.pattern.permute.xlu0 28
      %3158 = vperm.xlu0 %3157, %v3058
      %v3159 = vpop.permute.xlu0 %3158
      %v3161 = vmul.f32 %v3154, %v3159
      %v3162 = vmul.f32 %v3155, %v3159
      %v3163 = vmul.f32 %v3156, %v3159
      %3167 = vrot.lane.b32.xlu0 %v3161, 64
      %v3168 = vpop.permute.xlu0 %3167
      %3169 = vrot.lane.b32.xlu0 %v3162, 64
      %v3170 = vpop.permute.xlu0 %3169
      %3171 = vrot.lane.b32.xlu0 %v3163, 64
      %v3172 = vpop.permute.xlu0 %3171
      %v3173 = vsel %vm345, %v3168, %v3170
      %v3174 = vsel %vm345, %v3170, %v3172
      %v3178 = vadd.f32 %v3151, %v3168
      %v3179 = vadd.f32 %v3152, %v3173
      %v3180 = vadd.f32 %v3153, %v3174
      %3181 = vset.pattern.permute.xlu0 35
      %3182 = vperm.xlu0 %3181, %v3058
      %v3183 = vpop.permute.xlu0 %3182
      %v3185 = vmul.f32 %v3154, %v3183
      %v3186 = vmul.f32 %v3155, %v3183
      %v3187 = vmul.f32 %v3156, %v3183
      %3191 = vrot.lane.b32.xlu0 %v3185, 48
      %v3192 = vpop.permute.xlu0 %3191
      %3193 = vrot.lane.b32.xlu0 %v3186, 48
      %v3194 = vpop.permute.xlu0 %3193
      %3195 = vrot.lane.b32.xlu0 %v3187, 48
      %v3196 = vpop.permute.xlu0 %3195
      %v3197 = vsel %vm370, %v3192, %v3194
      %v3198 = vsel %vm370, %v3194, %v3196
      %v3202 = vadd.f32 %v3178, %v3192
      %v3203 = vadd.f32 %v3179, %v3197
      %v3204 = vadd.f32 %v3180, %v3198
      %3205 = vset.pattern.permute.xlu0 42
      %3206 = vperm.xlu0 %3205, %v3058
      %v3207 = vpop.permute.xlu0 %3206
      %v3209 = vmul.f32 %v3154, %v3207
      %v3210 = vmul.f32 %v3155, %v3207
      %v3211 = vmul.f32 %v3156, %v3207
      %3215 = vrot.lane.b32.xlu0 %v3209, 32
      %v3216 = vpop.permute.xlu0 %3215
      %3217 = vrot.lane.b32.xlu0 %v3210, 32
      %v3218 = vpop.permute.xlu0 %3217
      %3219 = vrot.lane.b32.xlu0 %v3211, 32
      %v3220 = vpop.permute.xlu0 %3219
      %v3221 = vsel %vm395, %v3216, %v3218
      %v3222 = vsel %vm395, %v3218, %v3220
      %v3226 = vadd.f32 %v3202, %v3216
      %v3227 = vadd.f32 %v3203, %v3221
      %v3228 = vadd.f32 %v3204, %v3222
      %3232 = vrot.lane.b32.xlu0 %v3226, 51
      %v3233 = vpop.permute.xlu0 %3232
      %3234 = vrot.lane.b32.xlu0 %v3227, 51
      %v3235 = vpop.permute.xlu0 %3234
      %3236 = vrot.lane.b32.xlu0 %v3228, 51
      %v3237 = vpop.permute.xlu0 %3236
      %v3238 = vsel %vm415, %v3233, %v3235
      %v3239 = vsel %vm415, %v3235, %v3237
      %v3242 = vsel %vm404, %v3238, 0.0
      %v3243 = vsel %vm405, %v3239, 0.0
      %v3244 = vadd.f32 %v3242, 0.0
      %v3245 = vadd.f32 %v3243, 0.0
      %3246 = vset.pattern.permute.xlu0 1
      %3247 = vperm.xlu0 %3246, %v3058
      %v3248 = vpop.permute.xlu0 %3247
      %v3250 = vmul.f32 %v3068, %v3248
      %v3251 = vmul.f32 %v3069, %v3248
      %v3252 = vmul.f32 %v3070, %v3248
      %v3253 = vadd.f32 %v3250, 0.0
      %v3254 = vadd.f32 %v3251, 0.0
      %v3255 = vadd.f32 %v3252, 0.0
      %3256 = vset.pattern.permute.xlu0 8
      %3257 = vperm.xlu0 %3256, %v3058
      %v3258 = vpop.permute.xlu0 %3257
      %v3260 = vmul.f32 %v3068, %v3258
      %v3261 = vmul.f32 %v3069, %v3258
      %v3262 = vmul.f32 %v3070, %v3258
      %3266 = vrot.lane.b32.xlu0 %v3260, 112
      %v3267 = vpop.permute.xlu0 %3266
      %3268 = vrot.lane.b32.xlu0 %v3261, 112
      %v3269 = vpop.permute.xlu0 %3268
      %3270 = vrot.lane.b32.xlu0 %v3262, 112
      %v3271 = vpop.permute.xlu0 %3270
      %v3272 = vsel %vm267, %v3267, %v3269
      %v3273 = vsel %vm267, %v3269, %v3271
      %v3277 = vadd.f32 %v3253, %v3272
      %v3278 = vadd.f32 %v3254, %v3273
      %v3279 = vadd.f32 %v3255, %v3271
      %3280 = vset.pattern.permute.xlu0 15
      %3281 = vperm.xlu0 %3280, %v3058
      %v3282 = vpop.permute.xlu0 %3281
      %v3284 = vmul.f32 %v3068, %v3282
      %v3285 = vmul.f32 %v3069, %v3282
      %v3286 = vmul.f32 %v3070, %v3282
      %3290 = vrot.lane.b32.xlu0 %v3284, 96
      %v3291 = vpop.permute.xlu0 %3290
      %3292 = vrot.lane.b32.xlu0 %v3285, 96
      %v3293 = vpop.permute.xlu0 %3292
      %3294 = vrot.lane.b32.xlu0 %v3286, 96
      %v3295 = vpop.permute.xlu0 %3294
      %v3296 = vsel %vm292, %v3291, %v3293
      %v3297 = vsel %vm292, %v3293, %v3295
      %v3301 = vadd.f32 %v3277, %v3296
      %v3302 = vadd.f32 %v3278, %v3297
      %v3303 = vadd.f32 %v3279, %v3295
      %3304 = vset.pattern.permute.xlu0 22
      %3305 = vperm.xlu0 %3304, %v3058
      %v3306 = vpop.permute.xlu0 %3305
      %v3308 = vmul.f32 %v3068, %v3306
      %v3309 = vmul.f32 %v3069, %v3306
      %v3310 = vmul.f32 %v3070, %v3306
      %3314 = vrot.lane.b32.xlu0 %v3308, 80
      %v3315 = vpop.permute.xlu0 %3314
      %3316 = vrot.lane.b32.xlu0 %v3309, 80
      %v3317 = vpop.permute.xlu0 %3316
      %3318 = vrot.lane.b32.xlu0 %v3310, 80
      %v3319 = vpop.permute.xlu0 %3318
      %v3320 = vsel %vm317, %v3315, %v3317
      %v3321 = vsel %vm317, %v3317, %v3319
      %v3325 = vadd.f32 %v3301, %v3320
      %v3326 = vadd.f32 %v3302, %v3321
      %v3327 = vadd.f32 %v3303, %v3319
      %3328 = vset.pattern.permute.xlu0 29
      %3329 = vperm.xlu0 %3328, %v3058
      %v3330 = vpop.permute.xlu0 %3329
      %v3332 = vmul.f32 %v3154, %v3330
      %v3333 = vmul.f32 %v3155, %v3330
      %v3334 = vmul.f32 %v3156, %v3330
      %3338 = vrot.lane.b32.xlu0 %v3332, 64
      %v3339 = vpop.permute.xlu0 %3338
      %3340 = vrot.lane.b32.xlu0 %v3333, 64
      %v3341 = vpop.permute.xlu0 %3340
      %3342 = vrot.lane.b32.xlu0 %v3334, 64
      %v3343 = vpop.permute.xlu0 %3342
      %v3344 = vsel %vm345, %v3339, %v3341
      %v3345 = vsel %vm345, %v3341, %v3343
      %v3349 = vadd.f32 %v3325, %v3339
      %v3350 = vadd.f32 %v3326, %v3344
      %v3351 = vadd.f32 %v3327, %v3345
      %3352 = vset.pattern.permute.xlu0 36
      %3353 = vperm.xlu0 %3352, %v3058
      %v3354 = vpop.permute.xlu0 %3353
      %v3356 = vmul.f32 %v3154, %v3354
      %v3357 = vmul.f32 %v3155, %v3354
      %v3358 = vmul.f32 %v3156, %v3354
      %3362 = vrot.lane.b32.xlu0 %v3356, 48
      %v3363 = vpop.permute.xlu0 %3362
      %3364 = vrot.lane.b32.xlu0 %v3357, 48
      %v3365 = vpop.permute.xlu0 %3364
      %3366 = vrot.lane.b32.xlu0 %v3358, 48
      %v3367 = vpop.permute.xlu0 %3366
      %v3368 = vsel %vm370, %v3363, %v3365
      %v3369 = vsel %vm370, %v3365, %v3367
      %v3373 = vadd.f32 %v3349, %v3363
      %v3374 = vadd.f32 %v3350, %v3368
      %v3375 = vadd.f32 %v3351, %v3369
      %3376 = vset.pattern.permute.xlu0 43
      %3377 = vperm.xlu0 %3376, %v3058
      %v3378 = vpop.permute.xlu0 %3377
      %v3380 = vmul.f32 %v3154, %v3378
      %v3381 = vmul.f32 %v3155, %v3378
      %v3382 = vmul.f32 %v3156, %v3378
      %3386 = vrot.lane.b32.xlu0 %v3380, 32
      %v3387 = vpop.permute.xlu0 %3386
      %3388 = vrot.lane.b32.xlu0 %v3381, 32
      %v3389 = vpop.permute.xlu0 %3388
      %3390 = vrot.lane.b32.xlu0 %v3382, 32
      %v3391 = vpop.permute.xlu0 %3390
      %v3392 = vsel %vm395, %v3387, %v3389
      %v3393 = vsel %vm395, %v3389, %v3391
      %v3397 = vadd.f32 %v3373, %v3387
      %v3398 = vadd.f32 %v3374, %v3392
      %v3399 = vadd.f32 %v3375, %v3393
      %3403 = vrot.lane.b32.xlu0 %v3397, 50
      %v3404 = vpop.permute.xlu0 %3403
      %3405 = vrot.lane.b32.xlu0 %v3398, 50
      %v3406 = vpop.permute.xlu0 %3405
      %3407 = vrot.lane.b32.xlu0 %v3399, 50
      %v3408 = vpop.permute.xlu0 %3407
      %v3409 = vsel %vm589, %v3404, %v3406
      %v3410 = vsel %vm589, %v3406, %v3408
      %v3413 = vsel %vm578, %v3409, 0.0
      %v3414 = vsel %vm579, %v3410, 0.0
      %v3415 = vadd.f32 %v3244, %v3413
      %v3416 = vadd.f32 %v3245, %v3414
      %3417 = vset.pattern.permute.xlu0 2
      %3418 = vperm.xlu0 %3417, %v3058
      %v3419 = vpop.permute.xlu0 %3418
      %v3421 = vmul.f32 %v3068, %v3419
      %v3422 = vmul.f32 %v3069, %v3419
      %v3423 = vmul.f32 %v3070, %v3419
      %v3424 = vadd.f32 %v3421, 0.0
      %v3425 = vadd.f32 %v3422, 0.0
      %v3426 = vadd.f32 %v3423, 0.0
      %3427 = vset.pattern.permute.xlu0 9
      %3428 = vperm.xlu0 %3427, %v3058
      %v3429 = vpop.permute.xlu0 %3428
      %v3431 = vmul.f32 %v3068, %v3429
      %v3432 = vmul.f32 %v3069, %v3429
      %v3433 = vmul.f32 %v3070, %v3429
      %3437 = vrot.lane.b32.xlu0 %v3431, 112
      %v3438 = vpop.permute.xlu0 %3437
      %3439 = vrot.lane.b32.xlu0 %v3432, 112
      %v3440 = vpop.permute.xlu0 %3439
      %3441 = vrot.lane.b32.xlu0 %v3433, 112
      %v3442 = vpop.permute.xlu0 %3441
      %v3443 = vsel %vm267, %v3438, %v3440
      %v3444 = vsel %vm267, %v3440, %v3442
      %v3448 = vadd.f32 %v3424, %v3443
      %v3449 = vadd.f32 %v3425, %v3444
      %v3450 = vadd.f32 %v3426, %v3442
      %3451 = vset.pattern.permute.xlu0 16
      %3452 = vperm.xlu0 %3451, %v3058
      %v3453 = vpop.permute.xlu0 %3452
      %v3455 = vmul.f32 %v3068, %v3453
      %v3456 = vmul.f32 %v3069, %v3453
      %v3457 = vmul.f32 %v3070, %v3453
      %3461 = vrot.lane.b32.xlu0 %v3455, 96
      %v3462 = vpop.permute.xlu0 %3461
      %3463 = vrot.lane.b32.xlu0 %v3456, 96
      %v3464 = vpop.permute.xlu0 %3463
      %3465 = vrot.lane.b32.xlu0 %v3457, 96
      %v3466 = vpop.permute.xlu0 %3465
      %v3467 = vsel %vm292, %v3462, %v3464
      %v3468 = vsel %vm292, %v3464, %v3466
      %v3472 = vadd.f32 %v3448, %v3467
      %v3473 = vadd.f32 %v3449, %v3468
      %v3474 = vadd.f32 %v3450, %v3466
      %3475 = vset.pattern.permute.xlu0 23
      %3476 = vperm.xlu0 %3475, %v3058
      %v3477 = vpop.permute.xlu0 %3476
      %v3479 = vmul.f32 %v3068, %v3477
      %v3480 = vmul.f32 %v3069, %v3477
      %v3481 = vmul.f32 %v3070, %v3477
      %3485 = vrot.lane.b32.xlu0 %v3479, 80
      %v3486 = vpop.permute.xlu0 %3485
      %3487 = vrot.lane.b32.xlu0 %v3480, 80
      %v3488 = vpop.permute.xlu0 %3487
      %3489 = vrot.lane.b32.xlu0 %v3481, 80
      %v3490 = vpop.permute.xlu0 %3489
      %v3491 = vsel %vm317, %v3486, %v3488
      %v3492 = vsel %vm317, %v3488, %v3490
      %v3496 = vadd.f32 %v3472, %v3491
      %v3497 = vadd.f32 %v3473, %v3492
      %v3498 = vadd.f32 %v3474, %v3490
      %3499 = vset.pattern.permute.xlu0 30
      %3500 = vperm.xlu0 %3499, %v3058
      %v3501 = vpop.permute.xlu0 %3500
      %v3503 = vmul.f32 %v3154, %v3501
      %v3504 = vmul.f32 %v3155, %v3501
      %v3505 = vmul.f32 %v3156, %v3501
      %3509 = vrot.lane.b32.xlu0 %v3503, 64
      %v3510 = vpop.permute.xlu0 %3509
      %3511 = vrot.lane.b32.xlu0 %v3504, 64
      %v3512 = vpop.permute.xlu0 %3511
      %3513 = vrot.lane.b32.xlu0 %v3505, 64
      %v3514 = vpop.permute.xlu0 %3513
      %v3515 = vsel %vm345, %v3510, %v3512
      %v3516 = vsel %vm345, %v3512, %v3514
      %v3520 = vadd.f32 %v3496, %v3510
      %v3521 = vadd.f32 %v3497, %v3515
      %v3522 = vadd.f32 %v3498, %v3516
      %3523 = vset.pattern.permute.xlu0 37
      %3524 = vperm.xlu0 %3523, %v3058
      %v3525 = vpop.permute.xlu0 %3524
      %v3527 = vmul.f32 %v3154, %v3525
      %v3528 = vmul.f32 %v3155, %v3525
      %v3529 = vmul.f32 %v3156, %v3525
      %3533 = vrot.lane.b32.xlu0 %v3527, 48
      %v3534 = vpop.permute.xlu0 %3533
      %3535 = vrot.lane.b32.xlu0 %v3528, 48
      %v3536 = vpop.permute.xlu0 %3535
      %3537 = vrot.lane.b32.xlu0 %v3529, 48
      %v3538 = vpop.permute.xlu0 %3537
      %v3539 = vsel %vm370, %v3534, %v3536
      %v3540 = vsel %vm370, %v3536, %v3538
      %v3544 = vadd.f32 %v3520, %v3534
      %v3545 = vadd.f32 %v3521, %v3539
      %v3546 = vadd.f32 %v3522, %v3540
      %3547 = vset.pattern.permute.xlu0 44
      %3548 = vperm.xlu0 %3547, %v3058
      %v3549 = vpop.permute.xlu0 %3548
      %v3551 = vmul.f32 %v3154, %v3549
      %v3552 = vmul.f32 %v3155, %v3549
      %v3553 = vmul.f32 %v3156, %v3549
      %3557 = vrot.lane.b32.xlu0 %v3551, 32
      %v3558 = vpop.permute.xlu0 %3557
      %3559 = vrot.lane.b32.xlu0 %v3552, 32
      %v3560 = vpop.permute.xlu0 %3559
      %3561 = vrot.lane.b32.xlu0 %v3553, 32
      %v3562 = vpop.permute.xlu0 %3561
      %v3563 = vsel %vm395, %v3558, %v3560
      %v3564 = vsel %vm395, %v3560, %v3562
      %v3568 = vadd.f32 %v3544, %v3558
      %v3569 = vadd.f32 %v3545, %v3563
      %v3570 = vadd.f32 %v3546, %v3564
      %3574 = vrot.lane.b32.xlu0 %v3568, 49
      %v3575 = vpop.permute.xlu0 %3574
      %3576 = vrot.lane.b32.xlu0 %v3569, 49
      %v3577 = vpop.permute.xlu0 %3576
      %3578 = vrot.lane.b32.xlu0 %v3570, 49
      %v3579 = vpop.permute.xlu0 %3578
      %v3580 = vsel %vm763, %v3575, %v3577
      %v3581 = vsel %vm763, %v3577, %v3579
      %v3584 = vsel %vm752, %v3580, 0.0
      %v3585 = vsel %vm753, %v3581, 0.0
      %v3586 = vadd.f32 %v3415, %v3584
      %v3587 = vadd.f32 %v3416, %v3585
      %3588 = vset.pattern.permute.xlu0 3
      %3589 = vperm.xlu0 %3588, %v3058
      %v3590 = vpop.permute.xlu0 %3589
      %v3592 = vmul.f32 %v3068, %v3590
      %v3593 = vmul.f32 %v3069, %v3590
      %v3594 = vmul.f32 %v3070, %v3590
      %v3595 = vadd.f32 %v3592, 0.0
      %v3596 = vadd.f32 %v3593, 0.0
      %v3597 = vadd.f32 %v3594, 0.0
      %3598 = vset.pattern.permute.xlu0 10
      %3599 = vperm.xlu0 %3598, %v3058
      %v3600 = vpop.permute.xlu0 %3599
      %v3602 = vmul.f32 %v3068, %v3600
      %v3603 = vmul.f32 %v3069, %v3600
      %v3604 = vmul.f32 %v3070, %v3600
      %3608 = vrot.lane.b32.xlu0 %v3602, 112
      %v3609 = vpop.permute.xlu0 %3608
      %3610 = vrot.lane.b32.xlu0 %v3603, 112
      %v3611 = vpop.permute.xlu0 %3610
      %3612 = vrot.lane.b32.xlu0 %v3604, 112
      %v3613 = vpop.permute.xlu0 %3612
      %v3614 = vsel %vm267, %v3609, %v3611
      %v3615 = vsel %vm267, %v3611, %v3613
      %v3619 = vadd.f32 %v3595, %v3614
      %v3620 = vadd.f32 %v3596, %v3615
      %v3621 = vadd.f32 %v3597, %v3613
      %3622 = vset.pattern.permute.xlu0 17
      %3623 = vperm.xlu0 %3622, %v3058
      %v3624 = vpop.permute.xlu0 %3623
      %v3626 = vmul.f32 %v3068, %v3624
      %v3627 = vmul.f32 %v3069, %v3624
      %v3628 = vmul.f32 %v3070, %v3624
      %3632 = vrot.lane.b32.xlu0 %v3626, 96
      %v3633 = vpop.permute.xlu0 %3632
      %3634 = vrot.lane.b32.xlu0 %v3627, 96
      %v3635 = vpop.permute.xlu0 %3634
      %3636 = vrot.lane.b32.xlu0 %v3628, 96
      %v3637 = vpop.permute.xlu0 %3636
      %v3638 = vsel %vm292, %v3633, %v3635
      %v3639 = vsel %vm292, %v3635, %v3637
      %v3643 = vadd.f32 %v3619, %v3638
      %v3644 = vadd.f32 %v3620, %v3639
      %v3645 = vadd.f32 %v3621, %v3637
      %3646 = vset.pattern.permute.xlu0 24
      %3647 = vperm.xlu0 %3646, %v3058
      %v3648 = vpop.permute.xlu0 %3647
      %v3650 = vmul.f32 %v3069, %v3648
      %v3651 = vmul.f32 %v3070, %v3648
      %3654 = vrot.lane.b32.xlu0 %v3650, 80
      %v3655 = vpop.permute.xlu0 %3654
      %3656 = vrot.lane.b32.xlu0 %v3651, 80
      %v3657 = vpop.permute.xlu0 %3656
      %v3658 = vsel %vm317, %v3655, %v3657
      %v3662 = vadd.f32 %v3643, %v3655
      %v3663 = vadd.f32 %v3644, %v3658
      %v3664 = vadd.f32 %v3645, %v3657
      %3665 = vset.pattern.permute.xlu0 31
      %3666 = vperm.xlu0 %3665, %v3058
      %v3667 = vpop.permute.xlu0 %3666
      %v3669 = vmul.f32 %v3154, %v3667
      %v3670 = vmul.f32 %v3155, %v3667
      %v3671 = vmul.f32 %v3156, %v3667
      %3675 = vrot.lane.b32.xlu0 %v3669, 64
      %v3676 = vpop.permute.xlu0 %3675
      %3677 = vrot.lane.b32.xlu0 %v3670, 64
      %v3678 = vpop.permute.xlu0 %3677
      %3679 = vrot.lane.b32.xlu0 %v3671, 64
      %v3680 = vpop.permute.xlu0 %3679
      %v3681 = vsel %vm345, %v3676, %v3678
      %v3682 = vsel %vm345, %v3678, %v3680
      %v3686 = vadd.f32 %v3662, %v3676
      %v3687 = vadd.f32 %v3663, %v3681
      %v3688 = vadd.f32 %v3664, %v3682
      %3689 = vset.pattern.permute.xlu0 38
      %3690 = vperm.xlu0 %3689, %v3058
      %v3691 = vpop.permute.xlu0 %3690
      %v3693 = vmul.f32 %v3154, %v3691
      %v3694 = vmul.f32 %v3155, %v3691
      %v3695 = vmul.f32 %v3156, %v3691
      %3699 = vrot.lane.b32.xlu0 %v3693, 48
      %v3700 = vpop.permute.xlu0 %3699
      %3701 = vrot.lane.b32.xlu0 %v3694, 48
      %v3702 = vpop.permute.xlu0 %3701
      %3703 = vrot.lane.b32.xlu0 %v3695, 48
      %v3704 = vpop.permute.xlu0 %3703
      %v3705 = vsel %vm370, %v3700, %v3702
      %v3706 = vsel %vm370, %v3702, %v3704
      %v3710 = vadd.f32 %v3686, %v3700
      %v3711 = vadd.f32 %v3687, %v3705
      %v3712 = vadd.f32 %v3688, %v3706
      %3713 = vset.pattern.permute.xlu0 45
      %3714 = vperm.xlu0 %3713, %v3058
      %v3715 = vpop.permute.xlu0 %3714
      %v3717 = vmul.f32 %v3154, %v3715
      %v3718 = vmul.f32 %v3155, %v3715
      %v3719 = vmul.f32 %v3156, %v3715
      %3723 = vrot.lane.b32.xlu0 %v3717, 32
      %v3724 = vpop.permute.xlu0 %3723
      %3725 = vrot.lane.b32.xlu0 %v3718, 32
      %v3726 = vpop.permute.xlu0 %3725
      %3727 = vrot.lane.b32.xlu0 %v3719, 32
      %v3728 = vpop.permute.xlu0 %3727
      %v3729 = vsel %vm395, %v3724, %v3726
      %v3730 = vsel %vm395, %v3726, %v3728
      %v3734 = vadd.f32 %v3710, %v3724
      %v3735 = vadd.f32 %v3711, %v3729
      %v3736 = vadd.f32 %v3712, %v3730
      %3740 = vrot.lane.b32.xlu0 %v3734, 48
      %v3741 = vpop.permute.xlu0 %3740
      %3742 = vrot.lane.b32.xlu0 %v3735, 48
      %v3743 = vpop.permute.xlu0 %3742
      %3744 = vrot.lane.b32.xlu0 %v3736, 48
      %v3745 = vpop.permute.xlu0 %3744
      %v3746 = vsel %vm370, %v3741, %v3743
      %v3747 = vsel %vm370, %v3743, %v3745
      %v3750 = vadd.f32 %v3586, %v3746
      %v3751 = vadd.f32 %v3587, %v3747
      %3752 = vset.pattern.permute.xlu0 4
      %3753 = vperm.xlu0 %3752, %v3058
      %v3754 = vpop.permute.xlu0 %3753
      %v3756 = vmul.f32 %v3068, %v3754
      %v3757 = vmul.f32 %v3069, %v3754
      %v3758 = vmul.f32 %v3070, %v3754
      %v3759 = vadd.f32 %v3756, 0.0
      %v3760 = vadd.f32 %v3757, 0.0
      %v3761 = vadd.f32 %v3758, 0.0
      %3762 = vset.pattern.permute.xlu0 11
      %3763 = vperm.xlu0 %3762, %v3058
      %v3764 = vpop.permute.xlu0 %3763
      %v3766 = vmul.f32 %v3068, %v3764
      %v3767 = vmul.f32 %v3069, %v3764
      %v3768 = vmul.f32 %v3070, %v3764
      %3772 = vrot.lane.b32.xlu0 %v3766, 112
      %v3773 = vpop.permute.xlu0 %3772
      %3774 = vrot.lane.b32.xlu0 %v3767, 112
      %v3775 = vpop.permute.xlu0 %3774
      %3776 = vrot.lane.b32.xlu0 %v3768, 112
      %v3777 = vpop.permute.xlu0 %3776
      %v3778 = vsel %vm267, %v3773, %v3775
      %v3779 = vsel %vm267, %v3775, %v3777
      %v3783 = vadd.f32 %v3759, %v3778
      %v3784 = vadd.f32 %v3760, %v3779
      %v3785 = vadd.f32 %v3761, %v3777
      %3786 = vset.pattern.permute.xlu0 18
      %3787 = vperm.xlu0 %3786, %v3058
      %v3788 = vpop.permute.xlu0 %3787
      %v3790 = vmul.f32 %v3068, %v3788
      %v3791 = vmul.f32 %v3069, %v3788
      %v3792 = vmul.f32 %v3070, %v3788
      %3796 = vrot.lane.b32.xlu0 %v3790, 96
      %v3797 = vpop.permute.xlu0 %3796
      %3798 = vrot.lane.b32.xlu0 %v3791, 96
      %v3799 = vpop.permute.xlu0 %3798
      %3800 = vrot.lane.b32.xlu0 %v3792, 96
      %v3801 = vpop.permute.xlu0 %3800
      %v3802 = vsel %vm292, %v3797, %v3799
      %v3803 = vsel %vm292, %v3799, %v3801
      %v3807 = vadd.f32 %v3783, %v3802
      %v3808 = vadd.f32 %v3784, %v3803
      %v3809 = vadd.f32 %v3785, %v3801
      %3810 = vset.pattern.permute.xlu0 25
      %3811 = vperm.xlu0 %3810, %v3058
      %v3812 = vpop.permute.xlu0 %3811
      %v3814 = vmul.f32 %v3154, %v3812
      %v3815 = vmul.f32 %v3155, %v3812
      %v3816 = vmul.f32 %v3156, %v3812
      %3820 = vrot.lane.b32.xlu0 %v3814, 80
      %v3821 = vpop.permute.xlu0 %3820
      %3822 = vrot.lane.b32.xlu0 %v3815, 80
      %v3823 = vpop.permute.xlu0 %3822
      %3824 = vrot.lane.b32.xlu0 %v3816, 80
      %v3825 = vpop.permute.xlu0 %3824
      %v3826 = vsel %vm317, %v3821, %v3823
      %v3827 = vsel %vm317, %v3823, %v3825
      %v3831 = vadd.f32 %v3807, %v3821
      %v3832 = vadd.f32 %v3808, %v3826
      %v3833 = vadd.f32 %v3809, %v3827
      %3834 = vset.pattern.permute.xlu0 32
      %3835 = vperm.xlu0 %3834, %v3058
      %v3836 = vpop.permute.xlu0 %3835
      %v3838 = vmul.f32 %v3154, %v3836
      %v3839 = vmul.f32 %v3155, %v3836
      %v3840 = vmul.f32 %v3156, %v3836
      %3844 = vrot.lane.b32.xlu0 %v3838, 64
      %v3845 = vpop.permute.xlu0 %3844
      %3846 = vrot.lane.b32.xlu0 %v3839, 64
      %v3847 = vpop.permute.xlu0 %3846
      %3848 = vrot.lane.b32.xlu0 %v3840, 64
      %v3849 = vpop.permute.xlu0 %3848
      %v3850 = vsel %vm345, %v3845, %v3847
      %v3851 = vsel %vm345, %v3847, %v3849
      %v3855 = vadd.f32 %v3831, %v3845
      %v3856 = vadd.f32 %v3832, %v3850
      %v3857 = vadd.f32 %v3833, %v3851
      %3858 = vset.pattern.permute.xlu0 39
      %3859 = vperm.xlu0 %3858, %v3058
      %v3860 = vpop.permute.xlu0 %3859
      %v3862 = vmul.f32 %v3154, %v3860
      %v3863 = vmul.f32 %v3155, %v3860
      %v3864 = vmul.f32 %v3156, %v3860
      %3868 = vrot.lane.b32.xlu0 %v3862, 48
      %v3869 = vpop.permute.xlu0 %3868
      %3870 = vrot.lane.b32.xlu0 %v3863, 48
      %v3871 = vpop.permute.xlu0 %3870
      %3872 = vrot.lane.b32.xlu0 %v3864, 48
      %v3873 = vpop.permute.xlu0 %3872
      %v3874 = vsel %vm370, %v3869, %v3871
      %v3875 = vsel %vm370, %v3871, %v3873
      %v3879 = vadd.f32 %v3855, %v3869
      %v3880 = vadd.f32 %v3856, %v3874
      %v3881 = vadd.f32 %v3857, %v3875
      %3882 = vset.pattern.permute.xlu0 46
      %3883 = vperm.xlu0 %3882, %v3058
      %v3884 = vpop.permute.xlu0 %3883
      %v3886 = vmul.f32 %v3154, %v3884
      %v3887 = vmul.f32 %v3155, %v3884
      %v3888 = vmul.f32 %v3156, %v3884
      %3892 = vrot.lane.b32.xlu0 %v3886, 32
      %v3893 = vpop.permute.xlu0 %3892
      %3894 = vrot.lane.b32.xlu0 %v3887, 32
      %v3895 = vpop.permute.xlu0 %3894
      %3896 = vrot.lane.b32.xlu0 %v3888, 32
      %v3897 = vpop.permute.xlu0 %3896
      %v3898 = vsel %vm395, %v3893, %v3895
      %v3899 = vsel %vm395, %v3895, %v3897
      %v3903 = vadd.f32 %v3879, %v3893
      %v3904 = vadd.f32 %v3880, %v3898
      %v3905 = vadd.f32 %v3881, %v3899
      %3909 = vrot.lane.b32.xlu0 %v3903, 47
      %v3910 = vpop.permute.xlu0 %3909
      %3911 = vrot.lane.b32.xlu0 %v3904, 47
      %v3912 = vpop.permute.xlu0 %3911
      %3913 = vrot.lane.b32.xlu0 %v3905, 47
      %v3914 = vpop.permute.xlu0 %3913
      %v3915 = vsel %vm1101, %v3910, %v3912
      %v3916 = vsel %vm1101, %v3912, %v3914
      %v3919 = vsel %vm1090, %v3915, 0.0
      %v3920 = vsel %vm1091, %v3916, 0.0
      %v3921 = vadd.f32 %v3750, %v3919
      %v3922 = vadd.f32 %v3751, %v3920
      %3923 = vset.pattern.permute.xlu0 5
      %3924 = vperm.xlu0 %3923, %v3058
      %v3925 = vpop.permute.xlu0 %3924
      %v3927 = vmul.f32 %v3068, %v3925
      %v3928 = vmul.f32 %v3069, %v3925
      %v3929 = vmul.f32 %v3070, %v3925
      %v3930 = vadd.f32 %v3927, 0.0
      %v3931 = vadd.f32 %v3928, 0.0
      %v3932 = vadd.f32 %v3929, 0.0
      %3933 = vset.pattern.permute.xlu0 12
      %3934 = vperm.xlu0 %3933, %v3058
      %v3935 = vpop.permute.xlu0 %3934
      %v3937 = vmul.f32 %v3068, %v3935
      %v3938 = vmul.f32 %v3069, %v3935
      %v3939 = vmul.f32 %v3070, %v3935
      %3943 = vrot.lane.b32.xlu0 %v3937, 112
      %v3944 = vpop.permute.xlu0 %3943
      %3945 = vrot.lane.b32.xlu0 %v3938, 112
      %v3946 = vpop.permute.xlu0 %3945
      %3947 = vrot.lane.b32.xlu0 %v3939, 112
      %v3948 = vpop.permute.xlu0 %3947
      %v3949 = vsel %vm267, %v3944, %v3946
      %v3950 = vsel %vm267, %v3946, %v3948
      %v3954 = vadd.f32 %v3930, %v3949
      %v3955 = vadd.f32 %v3931, %v3950
      %v3956 = vadd.f32 %v3932, %v3948
      %3957 = vset.pattern.permute.xlu0 19
      %3958 = vperm.xlu0 %3957, %v3058
      %v3959 = vpop.permute.xlu0 %3958
      %v3961 = vmul.f32 %v3068, %v3959
      %v3962 = vmul.f32 %v3069, %v3959
      %v3963 = vmul.f32 %v3070, %v3959
      %3967 = vrot.lane.b32.xlu0 %v3961, 96
      %v3968 = vpop.permute.xlu0 %3967
      %3969 = vrot.lane.b32.xlu0 %v3962, 96
      %v3970 = vpop.permute.xlu0 %3969
      %3971 = vrot.lane.b32.xlu0 %v3963, 96
      %v3972 = vpop.permute.xlu0 %3971
      %v3973 = vsel %vm292, %v3968, %v3970
      %v3974 = vsel %vm292, %v3970, %v3972
      %v3978 = vadd.f32 %v3954, %v3973
      %v3979 = vadd.f32 %v3955, %v3974
      %v3980 = vadd.f32 %v3956, %v3972
      %3981 = vset.pattern.permute.xlu0 26
      %3982 = vperm.xlu0 %3981, %v3058
      %v3983 = vpop.permute.xlu0 %3982
      %v3985 = vmul.f32 %v3154, %v3983
      %v3986 = vmul.f32 %v3155, %v3983
      %v3987 = vmul.f32 %v3156, %v3983
      %3991 = vrot.lane.b32.xlu0 %v3985, 80
      %v3992 = vpop.permute.xlu0 %3991
      %3993 = vrot.lane.b32.xlu0 %v3986, 80
      %v3994 = vpop.permute.xlu0 %3993
      %3995 = vrot.lane.b32.xlu0 %v3987, 80
      %v3996 = vpop.permute.xlu0 %3995
      %v3997 = vsel %vm317, %v3992, %v3994
      %v3998 = vsel %vm317, %v3994, %v3996
      %v4002 = vadd.f32 %v3978, %v3992
      %v4003 = vadd.f32 %v3979, %v3997
      %v4004 = vadd.f32 %v3980, %v3998
      %4005 = vset.pattern.permute.xlu0 33
      %4006 = vperm.xlu0 %4005, %v3058
      %v4007 = vpop.permute.xlu0 %4006
      %v4009 = vmul.f32 %v3154, %v4007
      %v4010 = vmul.f32 %v3155, %v4007
      %v4011 = vmul.f32 %v3156, %v4007
      %4015 = vrot.lane.b32.xlu0 %v4009, 64
      %v4016 = vpop.permute.xlu0 %4015
      %4017 = vrot.lane.b32.xlu0 %v4010, 64
      %v4018 = vpop.permute.xlu0 %4017
      %4019 = vrot.lane.b32.xlu0 %v4011, 64
      %v4020 = vpop.permute.xlu0 %4019
      %v4021 = vsel %vm345, %v4016, %v4018
      %v4022 = vsel %vm345, %v4018, %v4020
      %v4026 = vadd.f32 %v4002, %v4016
      %v4027 = vadd.f32 %v4003, %v4021
      %v4028 = vadd.f32 %v4004, %v4022
      %4029 = vset.pattern.permute.xlu0 40
      %4030 = vperm.xlu0 %4029, %v3058
      %v4031 = vpop.permute.xlu0 %4030
      %v4033 = vmul.f32 %v3154, %v4031
      %v4034 = vmul.f32 %v3155, %v4031
      %v4035 = vmul.f32 %v3156, %v4031
      %4039 = vrot.lane.b32.xlu0 %v4033, 48
      %v4040 = vpop.permute.xlu0 %4039
      %4041 = vrot.lane.b32.xlu0 %v4034, 48
      %v4042 = vpop.permute.xlu0 %4041
      %4043 = vrot.lane.b32.xlu0 %v4035, 48
      %v4044 = vpop.permute.xlu0 %4043
      %v4045 = vsel %vm370, %v4040, %v4042
      %v4046 = vsel %vm370, %v4042, %v4044
      %v4050 = vadd.f32 %v4026, %v4040
      %v4051 = vadd.f32 %v4027, %v4045
      %v4052 = vadd.f32 %v4028, %v4046
      %4053 = vset.pattern.permute.xlu0 47
      %4054 = vperm.xlu0 %4053, %v3058
      %v4055 = vpop.permute.xlu0 %4054
      %v4057 = vmul.f32 %v3154, %v4055
      %v4058 = vmul.f32 %v3155, %v4055
      %v4059 = vmul.f32 %v3156, %v4055
      %4063 = vrot.lane.b32.xlu0 %v4057, 32
      %v4064 = vpop.permute.xlu0 %4063
      %4065 = vrot.lane.b32.xlu0 %v4058, 32
      %v4066 = vpop.permute.xlu0 %4065
      %4067 = vrot.lane.b32.xlu0 %v4059, 32
      %v4068 = vpop.permute.xlu0 %4067
      %v4069 = vsel %vm395, %v4064, %v4066
      %v4070 = vsel %vm395, %v4066, %v4068
      %v4074 = vadd.f32 %v4050, %v4064
      %v4075 = vadd.f32 %v4051, %v4069
      %v4076 = vadd.f32 %v4052, %v4070
      %4080 = vrot.lane.b32.xlu0 %v4074, 46
      %v4081 = vpop.permute.xlu0 %4080
      %4082 = vrot.lane.b32.xlu0 %v4075, 46
      %v4083 = vpop.permute.xlu0 %4082
      %4084 = vrot.lane.b32.xlu0 %v4076, 46
      %v4085 = vpop.permute.xlu0 %4084
      %v4086 = vsel %vm1275, %v4081, %v4083
      %v4087 = vsel %vm1275, %v4083, %v4085
      %v4090 = vsel %vm1264, %v4086, 0.0
      %v4091 = vsel %vm1265, %v4087, 0.0
      %v4092 = vadd.f32 %v3921, %v4090
      %v4093 = vadd.f32 %v3922, %v4091
      %4094 = vset.pattern.permute.xlu0 6
      %4095 = vperm.xlu0 %4094, %v3058
      %v4096 = vpop.permute.xlu0 %4095
      %v4098 = vmul.f32 %v3068, %v4096
      %v4099 = vmul.f32 %v3069, %v4096
      %v4100 = vmul.f32 %v3070, %v4096
      %v4101 = vadd.f32 %v4098, 0.0
      %v4102 = vadd.f32 %v4099, 0.0
      %v4103 = vadd.f32 %v4100, 0.0
      %4104 = vset.pattern.permute.xlu0 13
      %4105 = vperm.xlu0 %4104, %v3058
      %v4106 = vpop.permute.xlu0 %4105
      %v4108 = vmul.f32 %v3068, %v4106
      %v4109 = vmul.f32 %v3069, %v4106
      %v4110 = vmul.f32 %v3070, %v4106
      %4114 = vrot.lane.b32.xlu0 %v4108, 112
      %v4115 = vpop.permute.xlu0 %4114
      %4116 = vrot.lane.b32.xlu0 %v4109, 112
      %v4117 = vpop.permute.xlu0 %4116
      %4118 = vrot.lane.b32.xlu0 %v4110, 112
      %v4119 = vpop.permute.xlu0 %4118
      %v4120 = vsel %vm267, %v4115, %v4117
      %v4121 = vsel %vm267, %v4117, %v4119
      %v4125 = vadd.f32 %v4101, %v4120
      %v4126 = vadd.f32 %v4102, %v4121
      %v4127 = vadd.f32 %v4103, %v4119
      %4128 = vset.pattern.permute.xlu0 20
      %4129 = vperm.xlu0 %4128, %v3058
      %v4130 = vpop.permute.xlu0 %4129
      %v4132 = vmul.f32 %v3068, %v4130
      %v4133 = vmul.f32 %v3069, %v4130
      %v4134 = vmul.f32 %v3070, %v4130
      %4138 = vrot.lane.b32.xlu0 %v4132, 96
      %v4139 = vpop.permute.xlu0 %4138
      %4140 = vrot.lane.b32.xlu0 %v4133, 96
      %v4141 = vpop.permute.xlu0 %4140
      %4142 = vrot.lane.b32.xlu0 %v4134, 96
      %v4143 = vpop.permute.xlu0 %4142
      %v4144 = vsel %vm292, %v4139, %v4141
      %v4145 = vsel %vm292, %v4141, %v4143
      %v4149 = vadd.f32 %v4125, %v4144
      %v4150 = vadd.f32 %v4126, %v4145
      %v4151 = vadd.f32 %v4127, %v4143
      %4152 = vset.pattern.permute.xlu0 27
      %4153 = vperm.xlu0 %4152, %v3058
      %v4154 = vpop.permute.xlu0 %4153
      %v4156 = vmul.f32 %v3154, %v4154
      %v4157 = vmul.f32 %v3155, %v4154
      %v4158 = vmul.f32 %v3156, %v4154
      %4162 = vrot.lane.b32.xlu0 %v4156, 80
      %v4163 = vpop.permute.xlu0 %4162
      %4164 = vrot.lane.b32.xlu0 %v4157, 80
      %v4165 = vpop.permute.xlu0 %4164
      %4166 = vrot.lane.b32.xlu0 %v4158, 80
      %v4167 = vpop.permute.xlu0 %4166
      %v4168 = vsel %vm317, %v4163, %v4165
      %v4169 = vsel %vm317, %v4165, %v4167
      %v4173 = vadd.f32 %v4149, %v4163
      %v4174 = vadd.f32 %v4150, %v4168
      %v4175 = vadd.f32 %v4151, %v4169
      %4176 = vset.pattern.permute.xlu0 34
      %4177 = vperm.xlu0 %4176, %v3058
      %v4178 = vpop.permute.xlu0 %4177
      %v4180 = vmul.f32 %v3154, %v4178
      %v4181 = vmul.f32 %v3155, %v4178
      %v4182 = vmul.f32 %v3156, %v4178
      %4186 = vrot.lane.b32.xlu0 %v4180, 64
      %v4187 = vpop.permute.xlu0 %4186
      %4188 = vrot.lane.b32.xlu0 %v4181, 64
      %v4189 = vpop.permute.xlu0 %4188
      %4190 = vrot.lane.b32.xlu0 %v4182, 64
      %v4191 = vpop.permute.xlu0 %4190
      %v4192 = vsel %vm345, %v4187, %v4189
      %v4193 = vsel %vm345, %v4189, %v4191
      %v4197 = vadd.f32 %v4173, %v4187
      %v4198 = vadd.f32 %v4174, %v4192
      %v4199 = vadd.f32 %v4175, %v4193
      %4200 = vset.pattern.permute.xlu0 41
      %4201 = vperm.xlu0 %4200, %v3058
      %v4202 = vpop.permute.xlu0 %4201
      %v4204 = vmul.f32 %v3154, %v4202
      %v4205 = vmul.f32 %v3155, %v4202
      %v4206 = vmul.f32 %v3156, %v4202
      %4210 = vrot.lane.b32.xlu0 %v4204, 48
      %v4211 = vpop.permute.xlu0 %4210
      %4212 = vrot.lane.b32.xlu0 %v4205, 48
      %v4213 = vpop.permute.xlu0 %4212
      %4214 = vrot.lane.b32.xlu0 %v4206, 48
      %v4215 = vpop.permute.xlu0 %4214
      %v4216 = vsel %vm370, %v4211, %v4213
      %v4217 = vsel %vm370, %v4213, %v4215
      %v4221 = vadd.f32 %v4197, %v4211
      %v4222 = vadd.f32 %v4198, %v4216
      %v4223 = vadd.f32 %v4199, %v4217
      %4224 = vset.pattern.permute.xlu0 48
      %4225 = vperm.xlu0 %4224, %v3058
      %v4226 = vpop.permute.xlu0 %4225
      %v4228 = vmul.f32 %v3154, %v4226
      %v4229 = vmul.f32 %v3155, %v4226
      %v4230 = vmul.f32 %v3156, %v4226
      %4234 = vrot.lane.b32.xlu0 %v4228, 32
      %v4235 = vpop.permute.xlu0 %4234
      %4236 = vrot.lane.b32.xlu0 %v4229, 32
      %v4237 = vpop.permute.xlu0 %4236
      %4238 = vrot.lane.b32.xlu0 %v4230, 32
      %v4239 = vpop.permute.xlu0 %4238
      %v4240 = vsel %vm395, %v4235, %v4237
      %v4241 = vsel %vm395, %v4237, %v4239
      %v4245 = vadd.f32 %v4221, %v4235
      %v4246 = vadd.f32 %v4222, %v4240
      %v4247 = vadd.f32 %v4223, %v4241
      %4251 = vrot.lane.b32.xlu0 %v4245, 45
      %v4252 = vpop.permute.xlu0 %4251
      %4253 = vrot.lane.b32.xlu0 %v4246, 45
      %v4254 = vpop.permute.xlu0 %4253
      %4255 = vrot.lane.b32.xlu0 %v4247, 45
      %v4256 = vpop.permute.xlu0 %4255
      %v4257 = vsel %vm1449, %v4252, %v4254
      %v4258 = vsel %vm1449, %v4254, %v4256
      %v4261 = vsel %vm1438, %v4257, 0.0
      %v4262 = vsel %vm1439, %v4258, 0.0
      %v4263 = vadd.f32 %v4092, %v4261
      %v4264 = vadd.f32 %v4093, %v4262
      %4265 = vset.pattern.permute.xlu0 49
      %4266 = vperm.xlu0 %4265, %v3058
      %v4267 = vpop.permute.xlu0 %4266
      %v4269 = vadd.f32 %v4263, %v4267
      %v4270 = vadd.f32 %v4264, %v4267
      %v4271 = vrot.slane %v4269, 4
      %v4272 = vadd.f32 %v4269, %v4271
      %v4273 = vrot.slane %v4272, 2
      %v4274 = vadd.f32 %v4272, %v4273
      %v4275 = vrot.slane %v4274, 1
      %v4276 = vadd.f32 %v4274, %v4275
      %v4277 = vrot.slane %v4270, 4
      %v4278 = vadd.f32 %v4270, %v4277
      %v4279 = vrot.slane %v4278, 2
      %v4280 = vadd.f32 %v4278, %v4279
      %v4281 = vrot.slane %v4280, 1
      %v4282 = vadd.f32 %v4280, %v4281
      %v4283 = vmul.f32 %v4276, %v1476
      %v4284 = vmul.f32 %v4282, %v1476
      %v4285 = vmul.f32 %v4269, %v4269
      %v4286 = vmul.f32 %v4270, %v4270
      %v4287 = vrot.slane %v4285, 4
      %v4288 = vadd.f32 %v4285, %v4287
      %v4289 = vrot.slane %v4288, 2
      %v4290 = vadd.f32 %v4288, %v4289
      %v4291 = vrot.slane %v4290, 1
      %v4292 = vadd.f32 %v4290, %v4291
      %v4293 = vrot.slane %v4286, 4
      %v4294 = vadd.f32 %v4286, %v4293
      %v4295 = vrot.slane %v4294, 2
      %v4296 = vadd.f32 %v4294, %v4295
      %v4297 = vrot.slane %v4296, 1
      %v4298 = vadd.f32 %v4296, %v4297
      %v4299 = vmul.f32 %v4292, %v1476
      %v4300 = vmul.f32 %v4298, %v1476
      %v4301 = vmul.f32 %v4283, %v4283
      %v4302 = vmul.f32 %v4284, %v4284
      %v4303 = vsub.f32 %v4299, %v4301
      %v4304 = vsub.f32 %v4300, %v4302
      %v4305 = vadd.f32 %v4303, 1e-06
      %v4306 = vadd.f32 %v4304, 1e-06
      %v4307 = vrsqrt.pop %v4305
      %v4308 = vrsqrt.pop %v4306
      %v4309 = vsub.f32 %v4269, %v4283
      %v4310 = vsub.f32 %v4270, %v4284
      %v4311 = vmul.f32 %v4309, %v4307
      %v4312 = vmul.f32 %v4310, %v4308
      %4314 = vset.pattern.permute.xlu0 32
      %4315 = vperm.xlu0 %4314, %v3060
      %v4316 = vpop.permute.xlu0 %4315
      %v4318 = vmul.f32 %v4311, %v4316
      %v4319 = vmul.f32 %v4312, %v4316
      %4320 = vset.pattern.permute.xlu0 33
      %4321 = vperm.xlu0 %4320, %v3060
      %v4322 = vpop.permute.xlu0 %4321
      %v4324 = vadd.f32 %v4318, %v4322
      %v4325 = vadd.f32 %v4319, %v4322
      %4327 = vset.pattern.permute.xlu0 8
      %4328 = vperm.xlu0 %4327, %v3062
      %v4329 = vpop.permute.xlu0 %4328
      %4332 = vset.pattern.permute.xlu0 8
      %4333 = vperm.xlu0 %4332, %v3063
      %v4334 = vpop.permute.xlu0 %4333
      %4337 = vset.pattern.permute.xlu0 8
      %4338 = vperm.xlu0 %4337, %v3064
      %v4339 = vpop.permute.xlu0 %4338
      %4342 = vset.pattern.permute.xlu0 8
      %4343 = vperm.xlu0 %4342, %v3065
      %v4344 = vpop.permute.xlu0 %4343
      %v4346 = vsel %vm1540, %v3062, 0
      %v4348 = vsel %vm1540, %v3063, 0
      %v4350 = vsel %vm1540, %v3064, 0
      %v4352 = vsel %vm1540, %v3065, 0
      %4354 = vmatprep.subr.mxu0 0.0
      %4355 = vmatpush1.msra.mxu0 0.0
      %4356 = vmatprep.subr.mxu0 0.0
      %4357 = vmatpush1.msra.mxu0 0.0
      %4358 = vmatprep.subr.mxu0 0.0
      %4359 = vmatpush1.msra.mxu0 0.0
      %4360 = vmatprep.subr.mxu0 0.0
      %4361 = vmatpush1.msra.mxu0 0.0
      %4362 = vmatprep.subr.mxu0 0.0
      %4363 = vmatpush1.msra.mxu0 0.0
      %4364 = vmatprep.subr.mxu0 0.0
      %4365 = vmatpush1.msra.mxu0 0.0
      %4366 = vmatprep.subr.mxu0 0.0
      %4367 = vmatpush1.msra.mxu0 0.0
      %4368 = vmatprep.subr.mxu0 0.0
      %4369 = vmatpush1.msra.mxu0 0.0
      %4370 = vmatprep.subr.mxu0 0.0
      %4371 = vmatpush1.msra.mxu0 0.0
      %4372 = vmatprep.subr.mxu0 0.0
      %4373 = vmatpush1.msra.mxu0 0.0
      %4374 = vmatprep.subr.mxu0 0.0
      %4375 = vmatpush1.msra.mxu0 0.0
      %4376 = vmatprep.subr.mxu0 0.0
      %4377 = vmatpush1.msra.mxu0 0.0
      %4378 = vmatprep.subr.mxu0 0.0
      %4379 = vmatpush1.msra.mxu0 0.0
      %4380 = vmatprep.subr.mxu0 0.0
      %4381 = vmatpush1.msra.mxu0 0.0
      %4382 = vmatprep.subr.mxu0 0.0
      %4383 = vmatpush1.msra.mxu0 0.0
      %v4384 = vand.u32 %v4325, 4294901760
      %4385 = vmatprep.subr.mxu0 %v4384
      %v4386 = vand.u32 %v4324, 4294901760
      %4387 = vmatpush1.msra.mxu0 %v4386
      %4388 = vmatprep.subr.mxu0 0.0
      %4389 = vmatpush2.msra.mxu0 0.0
      %4390 = vmatprep.subr.mxu0 0.0
      %4391 = vmatpush2.msra.mxu0 0.0
      %4392 = vmatprep.subr.mxu0 0.0
      %4393 = vmatpush2.msra.mxu0 0.0
      %4394 = vmatprep.subr.mxu0 0.0
      %4395 = vmatpush2.msra.mxu0 0.0
      %4396 = vmatprep.subr.mxu0 0.0
      %4397 = vmatpush2.msra.mxu0 0.0
      %4398 = vmatprep.subr.mxu0 0.0
      %4399 = vmatpush2.msra.mxu0 0.0
      %4400 = vmatprep.subr.mxu0 0.0
      %4401 = vmatpush2.msra.mxu0 0.0
      %4402 = vmatprep.subr.mxu0 0.0
      %4403 = vmatpush2.msra.mxu0 0.0
      %4404 = vmatprep.subr.mxu0 0.0
      %4405 = vmatpush2.msra.mxu0 0.0
      %4406 = vmatprep.subr.mxu0 0.0
      %4407 = vmatpush2.msra.mxu0 0.0
      %4408 = vmatprep.subr.mxu0 0.0
      %4409 = vmatpush2.msra.mxu0 0.0
      %4410 = vmatprep.subr.mxu0 0.0
      %4411 = vmatpush2.msra.mxu0 0.0
      %4412 = vmatprep.subr.mxu0 0.0
      %4413 = vmatpush2.msra.mxu0 0.0
      %4414 = vmatprep.subr.mxu0 0.0
      %4415 = vmatpush2.msra.mxu0 0.0
      %4416 = vmatprep.subr.mxu0 0.0
      %4417 = vmatpush2.msra.mxu0 0.0
      %4418 = vmatprep.subr.mxu0 0.0
      %4419 = vmatpush2.msra.mxu0 0.0
      %4420 = vmatprep.mubr.f32.mxu0 0.0
      %v4421 = vand.u32 %v4346, 4294901760
      %v4422 = vsub.f32 %v4346, %v4421
      %v4423 = vand.u32 %v4422, 4294901760
      %v4424 = vsub.f32 %v4422, %v4423
      %v4425 = vand.u32 %v4424, 4294901760
      %4426 = vmatmul.mubr.f32.gmra.mxu0 %v4425
      %v4427 = vpop.f32.mrf.mxu0
      %v4428 = vadd.f32 %v4329, %v4427
      %v4429 = vpop.f32.mrf.mxu0
      %v4430 = vadd.f32 %v4329, %v4429
      %4431 = vmatprep.mubr.f32.mxu0 0.0
      %v4432 = vand.u32 %v4348, 4294901760
      %v4433 = vsub.f32 %v4348, %v4432
      %v4434 = vand.u32 %v4433, 4294901760
      %v4435 = vsub.f32 %v4433, %v4434
      %v4436 = vand.u32 %v4435, 4294901760
      %4437 = vmatmul.mubr.f32.gmra.mxu0 %v4436
      %v4438 = vpop.f32.mrf.mxu0
      %v4439 = vadd.f32 %v4334, %v4438
      %v4440 = vpop.f32.mrf.mxu0
      %v4441 = vadd.f32 %v4334, %v4440
      %4442 = vmatprep.mubr.f32.mxu0 0.0
      %v4443 = vand.u32 %v4350, 4294901760
      %v4444 = vsub.f32 %v4350, %v4443
      %v4445 = vand.u32 %v4444, 4294901760
      %v4446 = vsub.f32 %v4444, %v4445
      %v4447 = vand.u32 %v4446, 4294901760
      %4448 = vmatmul.mubr.f32.gmra.mxu0 %v4447
      %v4449 = vpop.f32.mrf.mxu0
      %v4450 = vadd.f32 %v4339, %v4449
      %v4451 = vpop.f32.mrf.mxu0
      %v4452 = vadd.f32 %v4339, %v4451
      %4453 = vmatprep.mubr.f32.mxu0 0.0
      %v4454 = vand.u32 %v4352, 4294901760
      %v4455 = vsub.f32 %v4352, %v4454
      %v4456 = vand.u32 %v4455, 4294901760
      %v4457 = vsub.f32 %v4455, %v4456
      %v4458 = vand.u32 %v4457, 4294901760
      %4459 = vmatmul.mubr.f32.gmra.mxu0 %v4458
      %v4460 = vpop.f32.mrf.mxu0
      %v4461 = vadd.f32 %v4344, %v4460
      %v4462 = vpop.f32.mrf.mxu0
      %v4463 = vadd.f32 %v4344, %v4462
      %4464 = vdwg.mxu0
      %4465 = vmatprep.subr.mxu0 0.0
      %4466 = vmatpush1.msra.mxu0 0.0
      %4467 = vmatprep.subr.mxu0 0.0
      %4468 = vmatpush1.msra.mxu0 0.0
      %4469 = vmatprep.subr.mxu0 0.0
      %4470 = vmatpush1.msra.mxu0 0.0
      %4471 = vmatprep.subr.mxu0 0.0
      %4472 = vmatpush1.msra.mxu0 0.0
      %4473 = vmatprep.subr.mxu0 0.0
      %4474 = vmatpush1.msra.mxu0 0.0
      %4475 = vmatprep.subr.mxu0 0.0
      %4476 = vmatpush1.msra.mxu0 0.0
      %4477 = vmatprep.subr.mxu0 0.0
      %4478 = vmatpush1.msra.mxu0 0.0
      %4479 = vmatprep.subr.mxu0 0.0
      %4480 = vmatpush1.msra.mxu0 0.0
      %4481 = vmatprep.subr.mxu0 0.0
      %4482 = vmatpush1.msra.mxu0 0.0
      %4483 = vmatprep.subr.mxu0 0.0
      %4484 = vmatpush1.msra.mxu0 0.0
      %4485 = vmatprep.subr.mxu0 0.0
      %4486 = vmatpush1.msra.mxu0 0.0
      %4487 = vmatprep.subr.mxu0 0.0
      %4488 = vmatpush1.msra.mxu0 0.0
      %4489 = vmatprep.subr.mxu0 0.0
      %4490 = vmatpush1.msra.mxu0 0.0
      %4491 = vmatprep.subr.mxu0 0.0
      %4492 = vmatpush1.msra.mxu0 0.0
      %4493 = vmatprep.subr.mxu0 0.0
      %4494 = vmatpush1.msra.mxu0 0.0
      %v4495 = vand.u32 %v4325, 4294901760
      %v4496 = vsub.f32 %v4325, %v4495
      %v4497 = vand.u32 %v4496, 4294901760
      %v4498 = vsub.f32 %v4496, %v4497
      %v4499 = vand.u32 %v4498, 4294901760
      %4500 = vmatprep.subr.mxu0 %v4499
      %v4501 = vand.u32 %v4324, 4294901760
      %v4502 = vsub.f32 %v4324, %v4501
      %v4503 = vand.u32 %v4502, 4294901760
      %v4504 = vsub.f32 %v4502, %v4503
      %v4505 = vand.u32 %v4504, 4294901760
      %4506 = vmatpush1.msra.mxu0 %v4505
      %4507 = vmatprep.subr.mxu0 0.0
      %4508 = vmatpush2.msra.mxu0 0.0
      %4509 = vmatprep.subr.mxu0 0.0
      %4510 = vmatpush2.msra.mxu0 0.0
      %4511 = vmatprep.subr.mxu0 0.0
      %4512 = vmatpush2.msra.mxu0 0.0
      %4513 = vmatprep.subr.mxu0 0.0
      %4514 = vmatpush2.msra.mxu0 0.0
      %4515 = vmatprep.subr.mxu0 0.0
      %4516 = vmatpush2.msra.mxu0 0.0
      %4517 = vmatprep.subr.mxu0 0.0
      %4518 = vmatpush2.msra.mxu0 0.0
      %4519 = vmatprep.subr.mxu0 0.0
      %4520 = vmatpush2.msra.mxu0 0.0
      %4521 = vmatprep.subr.mxu0 0.0
      %4522 = vmatpush2.msra.mxu0 0.0
      %4523 = vmatprep.subr.mxu0 0.0
      %4524 = vmatpush2.msra.mxu0 0.0
      %4525 = vmatprep.subr.mxu0 0.0
      %4526 = vmatpush2.msra.mxu0 0.0
      %4527 = vmatprep.subr.mxu0 0.0
      %4528 = vmatpush2.msra.mxu0 0.0
      %4529 = vmatprep.subr.mxu0 0.0
      %4530 = vmatpush2.msra.mxu0 0.0
      %4531 = vmatprep.subr.mxu0 0.0
      %4532 = vmatpush2.msra.mxu0 0.0
      %4533 = vmatprep.subr.mxu0 0.0
      %4534 = vmatpush2.msra.mxu0 0.0
      %4535 = vmatprep.subr.mxu0 0.0
      %4536 = vmatpush2.msra.mxu0 0.0
      %4537 = vmatprep.subr.mxu0 0.0
      %4538 = vmatpush2.msra.mxu0 0.0
      %4539 = vmatprep.mubr.f32.mxu0 0.0
      %v4540 = vand.u32 %v4346, 4294901760
      %4541 = vmatmul.mubr.f32.gmra.mxu0 %v4540
      %v4542 = vpop.f32.mrf.mxu0
      %v4543 = vadd.f32 %v4428, %v4542
      %v4544 = vpop.f32.mrf.mxu0
      %v4545 = vadd.f32 %v4430, %v4544
      %4546 = vmatprep.mubr.f32.mxu0 0.0
      %v4547 = vand.u32 %v4348, 4294901760
      %4548 = vmatmul.mubr.f32.gmra.mxu0 %v4547
      %v4549 = vpop.f32.mrf.mxu0
      %v4550 = vadd.f32 %v4439, %v4549
      %v4551 = vpop.f32.mrf.mxu0
      %v4552 = vadd.f32 %v4441, %v4551
      %4553 = vmatprep.mubr.f32.mxu0 0.0
      %v4554 = vand.u32 %v4350, 4294901760
      %4555 = vmatmul.mubr.f32.gmra.mxu0 %v4554
      %v4556 = vpop.f32.mrf.mxu0
      %v4557 = vadd.f32 %v4450, %v4556
      %v4558 = vpop.f32.mrf.mxu0
      %v4559 = vadd.f32 %v4452, %v4558
      %4560 = vmatprep.mubr.f32.mxu0 0.0
      %v4561 = vand.u32 %v4352, 4294901760
      %4562 = vmatmul.mubr.f32.gmra.mxu0 %v4561
      %v4563 = vpop.f32.mrf.mxu0
      %v4564 = vadd.f32 %v4461, %v4563
      %v4565 = vpop.f32.mrf.mxu0
      %v4566 = vadd.f32 %v4463, %v4565
      %4567 = vdwg.mxu0
      %4568 = vmatprep.subr.mxu0 0.0
      %4569 = vmatpush1.msra.mxu0 0.0
      %4570 = vmatprep.subr.mxu0 0.0
      %4571 = vmatpush1.msra.mxu0 0.0
      %4572 = vmatprep.subr.mxu0 0.0
      %4573 = vmatpush1.msra.mxu0 0.0
      %4574 = vmatprep.subr.mxu0 0.0
      %4575 = vmatpush1.msra.mxu0 0.0
      %4576 = vmatprep.subr.mxu0 0.0
      %4577 = vmatpush1.msra.mxu0 0.0
      %4578 = vmatprep.subr.mxu0 0.0
      %4579 = vmatpush1.msra.mxu0 0.0
      %4580 = vmatprep.subr.mxu0 0.0
      %4581 = vmatpush1.msra.mxu0 0.0
      %4582 = vmatprep.subr.mxu0 0.0
      %4583 = vmatpush1.msra.mxu0 0.0
      %4584 = vmatprep.subr.mxu0 0.0
      %4585 = vmatpush1.msra.mxu0 0.0
      %4586 = vmatprep.subr.mxu0 0.0
      %4587 = vmatpush1.msra.mxu0 0.0
      %4588 = vmatprep.subr.mxu0 0.0
      %4589 = vmatpush1.msra.mxu0 0.0
      %4590 = vmatprep.subr.mxu0 0.0
      %4591 = vmatpush1.msra.mxu0 0.0
      %4592 = vmatprep.subr.mxu0 0.0
      %4593 = vmatpush1.msra.mxu0 0.0
      %4594 = vmatprep.subr.mxu0 0.0
      %4595 = vmatpush1.msra.mxu0 0.0
      %4596 = vmatprep.subr.mxu0 0.0
      %4597 = vmatpush1.msra.mxu0 0.0
      %v4598 = vand.u32 %v4325, 4294901760
      %v4599 = vsub.f32 %v4325, %v4598
      %4600 = vmatprep.subr.mxu0 %v4599
      %v4601 = vand.u32 %v4324, 4294901760
      %v4602 = vsub.f32 %v4324, %v4601
      %4603 = vmatpush1.msra.mxu0 %v4602
      %4604 = vmatprep.subr.mxu0 0.0
      %4605 = vmatpush2.msra.mxu0 0.0
      %4606 = vmatprep.subr.mxu0 0.0
      %4607 = vmatpush2.msra.mxu0 0.0
      %4608 = vmatprep.subr.mxu0 0.0
      %4609 = vmatpush2.msra.mxu0 0.0
      %4610 = vmatprep.subr.mxu0 0.0
      %4611 = vmatpush2.msra.mxu0 0.0
      %4612 = vmatprep.subr.mxu0 0.0
      %4613 = vmatpush2.msra.mxu0 0.0
      %4614 = vmatprep.subr.mxu0 0.0
      %4615 = vmatpush2.msra.mxu0 0.0
      %4616 = vmatprep.subr.mxu0 0.0
      %4617 = vmatpush2.msra.mxu0 0.0
      %4618 = vmatprep.subr.mxu0 0.0
      %4619 = vmatpush2.msra.mxu0 0.0
      %4620 = vmatprep.subr.mxu0 0.0
      %4621 = vmatpush2.msra.mxu0 0.0
      %4622 = vmatprep.subr.mxu0 0.0
      %4623 = vmatpush2.msra.mxu0 0.0
      %4624 = vmatprep.subr.mxu0 0.0
      %4625 = vmatpush2.msra.mxu0 0.0
      %4626 = vmatprep.subr.mxu0 0.0
      %4627 = vmatpush2.msra.mxu0 0.0
      %4628 = vmatprep.subr.mxu0 0.0
      %4629 = vmatpush2.msra.mxu0 0.0
      %4630 = vmatprep.subr.mxu0 0.0
      %4631 = vmatpush2.msra.mxu0 0.0
      %4632 = vmatprep.subr.mxu0 0.0
      %4633 = vmatpush2.msra.mxu0 0.0
      %4634 = vmatprep.subr.mxu0 0.0
      %4635 = vmatpush2.msra.mxu0 0.0
      %4636 = vmatprep.mubr.f32.mxu0 0.0
      %v4637 = vand.u32 %v4346, 4294901760
      %v4638 = vsub.f32 %v4346, %v4637
      %4639 = vmatmul.mubr.f32.gmra.mxu0 %v4638
      %v4640 = vpop.f32.mrf.mxu0
      %v4641 = vadd.f32 %v4543, %v4640
      %v4642 = vpop.f32.mrf.mxu0
      %v4643 = vadd.f32 %v4545, %v4642
      %4644 = vmatprep.mubr.f32.mxu0 0.0
      %v4645 = vand.u32 %v4348, 4294901760
      %v4646 = vsub.f32 %v4348, %v4645
      %4647 = vmatmul.mubr.f32.gmra.mxu0 %v4646
      %v4648 = vpop.f32.mrf.mxu0
      %v4649 = vadd.f32 %v4550, %v4648
      %v4650 = vpop.f32.mrf.mxu0
      %v4651 = vadd.f32 %v4552, %v4650
      %4652 = vmatprep.mubr.f32.mxu0 0.0
      %v4653 = vand.u32 %v4350, 4294901760
      %v4654 = vsub.f32 %v4350, %v4653
      %4655 = vmatmul.mubr.f32.gmra.mxu0 %v4654
      %v4656 = vpop.f32.mrf.mxu0
      %v4657 = vadd.f32 %v4557, %v4656
      %v4658 = vpop.f32.mrf.mxu0
      %v4659 = vadd.f32 %v4559, %v4658
      %4660 = vmatprep.mubr.f32.mxu0 0.0
      %v4661 = vand.u32 %v4352, 4294901760
      %v4662 = vsub.f32 %v4352, %v4661
      %4663 = vmatmul.mubr.f32.gmra.mxu0 %v4662
      %v4664 = vpop.f32.mrf.mxu0
      %v4665 = vadd.f32 %v4564, %v4664
      %v4666 = vpop.f32.mrf.mxu0
      %v4667 = vadd.f32 %v4566, %v4666
      %4668 = vdwg.mxu0
      %4669 = vmatprep.subr.mxu0 0.0
      %4670 = vmatpush1.msra.mxu0 0.0
      %4671 = vmatprep.subr.mxu0 0.0
      %4672 = vmatpush1.msra.mxu0 0.0
      %4673 = vmatprep.subr.mxu0 0.0
      %4674 = vmatpush1.msra.mxu0 0.0
      %4675 = vmatprep.subr.mxu0 0.0
      %4676 = vmatpush1.msra.mxu0 0.0
      %4677 = vmatprep.subr.mxu0 0.0
      %4678 = vmatpush1.msra.mxu0 0.0
      %4679 = vmatprep.subr.mxu0 0.0
      %4680 = vmatpush1.msra.mxu0 0.0
      %4681 = vmatprep.subr.mxu0 0.0
      %4682 = vmatpush1.msra.mxu0 0.0
      %4683 = vmatprep.subr.mxu0 0.0
      %4684 = vmatpush1.msra.mxu0 0.0
      %4685 = vmatprep.subr.mxu0 0.0
      %4686 = vmatpush1.msra.mxu0 0.0
      %4687 = vmatprep.subr.mxu0 0.0
      %4688 = vmatpush1.msra.mxu0 0.0
      %4689 = vmatprep.subr.mxu0 0.0
      %4690 = vmatpush1.msra.mxu0 0.0
      %4691 = vmatprep.subr.mxu0 0.0
      %4692 = vmatpush1.msra.mxu0 0.0
      %4693 = vmatprep.subr.mxu0 0.0
      %4694 = vmatpush1.msra.mxu0 0.0
      %4695 = vmatprep.subr.mxu0 0.0
      %4696 = vmatpush1.msra.mxu0 0.0
      %4697 = vmatprep.subr.mxu0 0.0
      %4698 = vmatpush1.msra.mxu0 0.0
      %v4699 = vand.u32 %v4325, 4294901760
      %4700 = vmatprep.subr.mxu0 %v4699
      %v4701 = vand.u32 %v4324, 4294901760
      %4702 = vmatpush1.msra.mxu0 %v4701
      %4703 = vmatprep.subr.mxu0 0.0
      %4704 = vmatpush2.msra.mxu0 0.0
      %4705 = vmatprep.subr.mxu0 0.0
      %4706 = vmatpush2.msra.mxu0 0.0
      %4707 = vmatprep.subr.mxu0 0.0
      %4708 = vmatpush2.msra.mxu0 0.0
      %4709 = vmatprep.subr.mxu0 0.0
      %4710 = vmatpush2.msra.mxu0 0.0
      %4711 = vmatprep.subr.mxu0 0.0
      %4712 = vmatpush2.msra.mxu0 0.0
      %4713 = vmatprep.subr.mxu0 0.0
      %4714 = vmatpush2.msra.mxu0 0.0
      %4715 = vmatprep.subr.mxu0 0.0
      %4716 = vmatpush2.msra.mxu0 0.0
      %4717 = vmatprep.subr.mxu0 0.0
      %4718 = vmatpush2.msra.mxu0 0.0
      %4719 = vmatprep.subr.mxu0 0.0
      %4720 = vmatpush2.msra.mxu0 0.0
      %4721 = vmatprep.subr.mxu0 0.0
      %4722 = vmatpush2.msra.mxu0 0.0
      %4723 = vmatprep.subr.mxu0 0.0
      %4724 = vmatpush2.msra.mxu0 0.0
      %4725 = vmatprep.subr.mxu0 0.0
      %4726 = vmatpush2.msra.mxu0 0.0
      %4727 = vmatprep.subr.mxu0 0.0
      %4728 = vmatpush2.msra.mxu0 0.0
      %4729 = vmatprep.subr.mxu0 0.0
      %4730 = vmatpush2.msra.mxu0 0.0
      %4731 = vmatprep.subr.mxu0 0.0
      %4732 = vmatpush2.msra.mxu0 0.0
      %4733 = vmatprep.subr.mxu0 0.0
      %4734 = vmatpush2.msra.mxu0 0.0
      %4735 = vmatprep.mubr.f32.mxu0 0.0
      %v4736 = vand.u32 %v4346, 4294901760
      %v4737 = vsub.f32 %v4346, %v4736
      %v4738 = vand.u32 %v4737, 4294901760
      %4739 = vmatmul.mubr.f32.gmra.mxu0 %v4738
      %v4740 = vpop.f32.mrf.mxu0
      %v4741 = vadd.f32 %v4641, %v4740
      %v4742 = vpop.f32.mrf.mxu0
      %v4743 = vadd.f32 %v4643, %v4742
      %4744 = vmatprep.mubr.f32.mxu0 0.0
      %v4745 = vand.u32 %v4348, 4294901760
      %v4746 = vsub.f32 %v4348, %v4745
      %v4747 = vand.u32 %v4746, 4294901760
      %4748 = vmatmul.mubr.f32.gmra.mxu0 %v4747
      %v4749 = vpop.f32.mrf.mxu0
      %v4750 = vadd.f32 %v4649, %v4749
      %v4751 = vpop.f32.mrf.mxu0
      %v4752 = vadd.f32 %v4651, %v4751
      %4753 = vmatprep.mubr.f32.mxu0 0.0
      %v4754 = vand.u32 %v4350, 4294901760
      %v4755 = vsub.f32 %v4350, %v4754
      %v4756 = vand.u32 %v4755, 4294901760
      %4757 = vmatmul.mubr.f32.gmra.mxu0 %v4756
      %v4758 = vpop.f32.mrf.mxu0
      %v4759 = vadd.f32 %v4657, %v4758
      %v4760 = vpop.f32.mrf.mxu0
      %v4761 = vadd.f32 %v4659, %v4760
      %4762 = vmatprep.mubr.f32.mxu0 0.0
      %v4763 = vand.u32 %v4352, 4294901760
      %v4764 = vsub.f32 %v4352, %v4763
      %v4765 = vand.u32 %v4764, 4294901760
      %4766 = vmatmul.mubr.f32.gmra.mxu0 %v4765
      %v4767 = vpop.f32.mrf.mxu0
      %v4768 = vadd.f32 %v4665, %v4767
      %v4769 = vpop.f32.mrf.mxu0
      %v4770 = vadd.f32 %v4667, %v4769
      %4771 = vdwg.mxu0
      %4772 = vmatprep.subr.mxu0 0.0
      %4773 = vmatpush1.msra.mxu0 0.0
      %4774 = vmatprep.subr.mxu0 0.0
      %4775 = vmatpush1.msra.mxu0 0.0
      %4776 = vmatprep.subr.mxu0 0.0
      %4777 = vmatpush1.msra.mxu0 0.0
      %4778 = vmatprep.subr.mxu0 0.0
      %4779 = vmatpush1.msra.mxu0 0.0
      %4780 = vmatprep.subr.mxu0 0.0
      %4781 = vmatpush1.msra.mxu0 0.0
      %4782 = vmatprep.subr.mxu0 0.0
      %4783 = vmatpush1.msra.mxu0 0.0
      %4784 = vmatprep.subr.mxu0 0.0
      %4785 = vmatpush1.msra.mxu0 0.0
      %4786 = vmatprep.subr.mxu0 0.0
      %4787 = vmatpush1.msra.mxu0 0.0
      %4788 = vmatprep.subr.mxu0 0.0
      %4789 = vmatpush1.msra.mxu0 0.0
      %4790 = vmatprep.subr.mxu0 0.0
      %4791 = vmatpush1.msra.mxu0 0.0
      %4792 = vmatprep.subr.mxu0 0.0
      %4793 = vmatpush1.msra.mxu0 0.0
      %4794 = vmatprep.subr.mxu0 0.0
      %4795 = vmatpush1.msra.mxu0 0.0
      %4796 = vmatprep.subr.mxu0 0.0
      %4797 = vmatpush1.msra.mxu0 0.0
      %4798 = vmatprep.subr.mxu0 0.0
      %4799 = vmatpush1.msra.mxu0 0.0
      %4800 = vmatprep.subr.mxu0 0.0
      %4801 = vmatpush1.msra.mxu0 0.0
      %v4802 = vand.u32 %v4325, 4294901760
      %v4803 = vsub.f32 %v4325, %v4802
      %v4804 = vand.u32 %v4803, 4294901760
      %4805 = vmatprep.subr.mxu0 %v4804
      %v4806 = vand.u32 %v4324, 4294901760
      %v4807 = vsub.f32 %v4324, %v4806
      %v4808 = vand.u32 %v4807, 4294901760
      %4809 = vmatpush1.msra.mxu0 %v4808
      %4810 = vmatprep.subr.mxu0 0.0
      %4811 = vmatpush2.msra.mxu0 0.0
      %4812 = vmatprep.subr.mxu0 0.0
      %4813 = vmatpush2.msra.mxu0 0.0
      %4814 = vmatprep.subr.mxu0 0.0
      %4815 = vmatpush2.msra.mxu0 0.0
      %4816 = vmatprep.subr.mxu0 0.0
      %4817 = vmatpush2.msra.mxu0 0.0
      %4818 = vmatprep.subr.mxu0 0.0
      %4819 = vmatpush2.msra.mxu0 0.0
      %4820 = vmatprep.subr.mxu0 0.0
      %4821 = vmatpush2.msra.mxu0 0.0
      %4822 = vmatprep.subr.mxu0 0.0
      %4823 = vmatpush2.msra.mxu0 0.0
      %4824 = vmatprep.subr.mxu0 0.0
      %4825 = vmatpush2.msra.mxu0 0.0
      %4826 = vmatprep.subr.mxu0 0.0
      %4827 = vmatpush2.msra.mxu0 0.0
      %4828 = vmatprep.subr.mxu0 0.0
      %4829 = vmatpush2.msra.mxu0 0.0
      %4830 = vmatprep.subr.mxu0 0.0
      %4831 = vmatpush2.msra.mxu0 0.0
      %4832 = vmatprep.subr.mxu0 0.0
      %4833 = vmatpush2.msra.mxu0 0.0
      %4834 = vmatprep.subr.mxu0 0.0
      %4835 = vmatpush2.msra.mxu0 0.0
      %4836 = vmatprep.subr.mxu0 0.0
      %4837 = vmatpush2.msra.mxu0 0.0
      %4838 = vmatprep.subr.mxu0 0.0
      %4839 = vmatpush2.msra.mxu0 0.0
      %4840 = vmatprep.subr.mxu0 0.0
      %4841 = vmatpush2.msra.mxu0 0.0
      %4842 = vmatprep.mubr.f32.mxu0 0.0
      %v4843 = vand.u32 %v4346, 4294901760
      %4844 = vmatmul.mubr.f32.gmra.mxu0 %v4843
      %v4845 = vpop.f32.mrf.mxu0
      %v4846 = vadd.f32 %v4741, %v4845
      %v4847 = vpop.f32.mrf.mxu0
      %v4848 = vadd.f32 %v4743, %v4847
      %4849 = vmatprep.mubr.f32.mxu0 0.0
      %v4850 = vand.u32 %v4348, 4294901760
      %4851 = vmatmul.mubr.f32.gmra.mxu0 %v4850
      %v4852 = vpop.f32.mrf.mxu0
      %v4853 = vadd.f32 %v4750, %v4852
      %v4854 = vpop.f32.mrf.mxu0
      %v4855 = vadd.f32 %v4752, %v4854
      %4856 = vmatprep.mubr.f32.mxu0 0.0
      %v4857 = vand.u32 %v4350, 4294901760
      %4858 = vmatmul.mubr.f32.gmra.mxu0 %v4857
      %v4859 = vpop.f32.mrf.mxu0
      %v4860 = vadd.f32 %v4759, %v4859
      %v4861 = vpop.f32.mrf.mxu0
      %v4862 = vadd.f32 %v4761, %v4861
      %4863 = vmatprep.mubr.f32.mxu0 0.0
      %v4864 = vand.u32 %v4352, 4294901760
      %4865 = vmatmul.mubr.f32.gmra.mxu0 %v4864
      %v4866 = vpop.f32.mrf.mxu0
      %v4867 = vadd.f32 %v4768, %v4866
      %v4868 = vpop.f32.mrf.mxu0
      %v4869 = vadd.f32 %v4770, %v4868
      %4870 = vdwg.mxu0
      %4871 = vmatprep.subr.mxu0 0.0
      %4872 = vmatpush1.msra.mxu0 0.0
      %4873 = vmatprep.subr.mxu0 0.0
      %4874 = vmatpush1.msra.mxu0 0.0
      %4875 = vmatprep.subr.mxu0 0.0
      %4876 = vmatpush1.msra.mxu0 0.0
      %4877 = vmatprep.subr.mxu0 0.0
      %4878 = vmatpush1.msra.mxu0 0.0
      %4879 = vmatprep.subr.mxu0 0.0
      %4880 = vmatpush1.msra.mxu0 0.0
      %4881 = vmatprep.subr.mxu0 0.0
      %4882 = vmatpush1.msra.mxu0 0.0
      %4883 = vmatprep.subr.mxu0 0.0
      %4884 = vmatpush1.msra.mxu0 0.0
      %4885 = vmatprep.subr.mxu0 0.0
      %4886 = vmatpush1.msra.mxu0 0.0
      %4887 = vmatprep.subr.mxu0 0.0
      %4888 = vmatpush1.msra.mxu0 0.0
      %4889 = vmatprep.subr.mxu0 0.0
      %4890 = vmatpush1.msra.mxu0 0.0
      %4891 = vmatprep.subr.mxu0 0.0
      %4892 = vmatpush1.msra.mxu0 0.0
      %4893 = vmatprep.subr.mxu0 0.0
      %4894 = vmatpush1.msra.mxu0 0.0
      %4895 = vmatprep.subr.mxu0 0.0
      %4896 = vmatpush1.msra.mxu0 0.0
      %4897 = vmatprep.subr.mxu0 0.0
      %4898 = vmatpush1.msra.mxu0 0.0
      %4899 = vmatprep.subr.mxu0 0.0
      %4900 = vmatpush1.msra.mxu0 0.0
      %v4901 = vand.u32 %v4325, 4294901760
      %4902 = vmatprep.subr.mxu0 %v4901
      %v4903 = vand.u32 %v4324, 4294901760
      %4904 = vmatpush1.msra.mxu0 %v4903
      %4905 = vmatprep.subr.mxu0 0.0
      %4906 = vmatpush2.msra.mxu0 0.0
      %4907 = vmatprep.subr.mxu0 0.0
      %4908 = vmatpush2.msra.mxu0 0.0
      %4909 = vmatprep.subr.mxu0 0.0
      %4910 = vmatpush2.msra.mxu0 0.0
      %4911 = vmatprep.subr.mxu0 0.0
      %4912 = vmatpush2.msra.mxu0 0.0
      %4913 = vmatprep.subr.mxu0 0.0
      %4914 = vmatpush2.msra.mxu0 0.0
      %4915 = vmatprep.subr.mxu0 0.0
      %4916 = vmatpush2.msra.mxu0 0.0
      %4917 = vmatprep.subr.mxu0 0.0
      %4918 = vmatpush2.msra.mxu0 0.0
      %4919 = vmatprep.subr.mxu0 0.0
      %4920 = vmatpush2.msra.mxu0 0.0
      %4921 = vmatprep.subr.mxu0 0.0
      %4922 = vmatpush2.msra.mxu0 0.0
      %4923 = vmatprep.subr.mxu0 0.0
      %4924 = vmatpush2.msra.mxu0 0.0
      %4925 = vmatprep.subr.mxu0 0.0
      %4926 = vmatpush2.msra.mxu0 0.0
      %4927 = vmatprep.subr.mxu0 0.0
      %4928 = vmatpush2.msra.mxu0 0.0
      %4929 = vmatprep.subr.mxu0 0.0
      %4930 = vmatpush2.msra.mxu0 0.0
      %4931 = vmatprep.subr.mxu0 0.0
      %4932 = vmatpush2.msra.mxu0 0.0
      %4933 = vmatprep.subr.mxu0 0.0
      %4934 = vmatpush2.msra.mxu0 0.0
      %4935 = vmatprep.subr.mxu0 0.0
      %4936 = vmatpush2.msra.mxu0 0.0
      %4937 = vmatprep.mubr.f32.mxu0 0.0
      %v4938 = vand.u32 %v4346, 4294901760
      %4939 = vmatmul.mubr.f32.gmra.mxu0 %v4938
      %v4940 = vpop.f32.mrf.mxu0
      %v4941 = vadd.f32 %v4846, %v4940
      %v4942 = vpop.f32.mrf.mxu0
      %v4943 = vadd.f32 %v4848, %v4942
      %4944 = vmatprep.mubr.f32.mxu0 0.0
      %v4945 = vand.u32 %v4348, 4294901760
      %4946 = vmatmul.mubr.f32.gmra.mxu0 %v4945
      %v4947 = vpop.f32.mrf.mxu0
      %v4948 = vadd.f32 %v4853, %v4947
      %v4949 = vpop.f32.mrf.mxu0
      %v4950 = vadd.f32 %v4855, %v4949
      %4951 = vmatprep.mubr.f32.mxu0 0.0
      %v4952 = vand.u32 %v4350, 4294901760
      %4953 = vmatmul.mubr.f32.gmra.mxu0 %v4952
      %v4954 = vpop.f32.mrf.mxu0
      %v4955 = vadd.f32 %v4860, %v4954
      %v4956 = vpop.f32.mrf.mxu0
      %v4957 = vadd.f32 %v4862, %v4956
      %4958 = vmatprep.mubr.f32.mxu0 0.0
      %v4959 = vand.u32 %v4352, 4294901760
      %4960 = vmatmul.mubr.f32.gmra.mxu0 %v4959
      %v4961 = vpop.f32.mrf.mxu0
      %v4962 = vadd.f32 %v4867, %v4961
      %v4963 = vpop.f32.mrf.mxu0
      %v4964 = vadd.f32 %v4869, %v4963
      %4965 = vdwg.mxu0
      %v4966 = vmul.f32 %v4941, 0.5
      %v4967 = vmul.f32 %v4943, 0.5
      %v4968 = vmul.f32 %v4948, 0.5
      %v4969 = vmul.f32 %v4950, 0.5
      %v4970 = vmul.f32 %v4955, 0.5
      %v4971 = vmul.f32 %v4957, 0.5
      %v4972 = vmul.f32 %v4962, 0.5
      %v4973 = vmul.f32 %v4964, 0.5
      %v4974 = vmul.f32 %v4941, 0.70710677
      %v4975 = vmul.f32 %v4943, 0.70710677
      %v4976 = vmul.f32 %v4948, 0.70710677
      %v4977 = vmul.f32 %v4950, 0.70710677
      %v4978 = vmul.f32 %v4955, 0.70710677
      %v4979 = vmul.f32 %v4957, 0.70710677
      %v4980 = vmul.f32 %v4962, 0.70710677
      %v4981 = vmul.f32 %v4964, 0.70710677
      %v4982 = vand.u32 2147483647, %v4974
      %v4983 = vand.u32 2147483647, %v4975
      %v4984 = vand.u32 2147483647, %v4976
      %v4985 = vand.u32 2147483647, %v4977
      %v4986 = vand.u32 2147483647, %v4978
      %v4987 = vand.u32 2147483647, %v4979
      %v4988 = vand.u32 2147483647, %v4980
      %v4989 = vand.u32 2147483647, %v4981
      %v4990 = vmul.f32 %v4982, 0.3275911
      %v4991 = vmul.f32 %v4983, 0.3275911
      %v4992 = vmul.f32 %v4984, 0.3275911
      %v4993 = vmul.f32 %v4985, 0.3275911
      %v4994 = vmul.f32 %v4986, 0.3275911
      %v4995 = vmul.f32 %v4987, 0.3275911
      %v4996 = vmul.f32 %v4988, 0.3275911
      %v4997 = vmul.f32 %v4989, 0.3275911
      %v4998 = vadd.f32 %v4990, 1.0
      %v4999 = vadd.f32 %v4991, 1.0
      %v5000 = vadd.f32 %v4992, 1.0
      %v5001 = vadd.f32 %v4993, 1.0
      %v5002 = vadd.f32 %v4994, 1.0
      %v5003 = vadd.f32 %v4995, 1.0
      %v5004 = vadd.f32 %v4996, 1.0
      %v5005 = vadd.f32 %v4997, 1.0
      %v5006 = vrcp.pop %v4998
      %v5007 = vmul.f32 1.0, %v5006
      %v5008 = vrcp.pop %v4999
      %v5009 = vmul.f32 1.0, %v5008
      %v5010 = vrcp.pop %v5000
      %v5011 = vmul.f32 1.0, %v5010
      %v5012 = vrcp.pop %v5001
      %v5013 = vmul.f32 1.0, %v5012
      %v5014 = vrcp.pop %v5002
      %v5015 = vmul.f32 1.0, %v5014
      %v5016 = vrcp.pop %v5003
      %v5017 = vmul.f32 1.0, %v5016
      %v5018 = vrcp.pop %v5004
      %v5019 = vmul.f32 1.0, %v5018
      %v5020 = vrcp.pop %v5005
      %v5021 = vmul.f32 1.0, %v5020
      %v5022 = vmul.f32 %v5007, 1.0614054
      %v5023 = vmul.f32 %v5009, 1.0614054
      %v5024 = vmul.f32 %v5011, 1.0614054
      %v5025 = vmul.f32 %v5013, 1.0614054
      %v5026 = vmul.f32 %v5015, 1.0614054
      %v5027 = vmul.f32 %v5017, 1.0614054
      %v5028 = vmul.f32 %v5019, 1.0614054
      %v5029 = vmul.f32 %v5021, 1.0614054
      %v5030 = vadd.f32 %v5022, -1.4531521
      %v5031 = vadd.f32 %v5023, -1.4531521
      %v5032 = vadd.f32 %v5024, -1.4531521
      %v5033 = vadd.f32 %v5025, -1.4531521
      %v5034 = vadd.f32 %v5026, -1.4531521
      %v5035 = vadd.f32 %v5027, -1.4531521
      %v5036 = vadd.f32 %v5028, -1.4531521
      %v5037 = vadd.f32 %v5029, -1.4531521
      %v5038 = vmul.f32 %v5030, %v5007
      %v5039 = vmul.f32 %v5031, %v5009
      %v5040 = vmul.f32 %v5032, %v5011
      %v5041 = vmul.f32 %v5033, %v5013
      %v5042 = vmul.f32 %v5034, %v5015
      %v5043 = vmul.f32 %v5035, %v5017
      %v5044 = vmul.f32 %v5036, %v5019
      %v5045 = vmul.f32 %v5037, %v5021
      %v5046 = vadd.f32 %v5038, 1.4214138
      %v5047 = vadd.f32 %v5039, 1.4214138
      %v5048 = vadd.f32 %v5040, 1.4214138
      %v5049 = vadd.f32 %v5041, 1.4214138
      %v5050 = vadd.f32 %v5042, 1.4214138
      %v5051 = vadd.f32 %v5043, 1.4214138
      %v5052 = vadd.f32 %v5044, 1.4214138
      %v5053 = vadd.f32 %v5045, 1.4214138
      %v5054 = vmul.f32 %v5046, %v5007
      %v5055 = vmul.f32 %v5047, %v5009
      %v5056 = vmul.f32 %v5048, %v5011
      %v5057 = vmul.f32 %v5049, %v5013
      %v5058 = vmul.f32 %v5050, %v5015
      %v5059 = vmul.f32 %v5051, %v5017
      %v5060 = vmul.f32 %v5052, %v5019
      %v5061 = vmul.f32 %v5053, %v5021
      %v5062 = vadd.f32 %v5054, -0.28449672
      %v5063 = vadd.f32 %v5055, -0.28449672
      %v5064 = vadd.f32 %v5056, -0.28449672
      %v5065 = vadd.f32 %v5057, -0.28449672
      %v5066 = vadd.f32 %v5058, -0.28449672
      %v5067 = vadd.f32 %v5059, -0.28449672
      %v5068 = vadd.f32 %v5060, -0.28449672
      %v5069 = vadd.f32 %v5061, -0.28449672
      %v5070 = vmul.f32 %v5062, %v5007
      %v5071 = vmul.f32 %v5063, %v5009
      %v5072 = vmul.f32 %v5064, %v5011
      %v5073 = vmul.f32 %v5065, %v5013
      %v5074 = vmul.f32 %v5066, %v5015
      %v5075 = vmul.f32 %v5067, %v5017
      %v5076 = vmul.f32 %v5068, %v5019
      %v5077 = vmul.f32 %v5069, %v5021
      %v5078 = vadd.f32 %v5070, 0.2548296
      %v5079 = vadd.f32 %v5071, 0.2548296
      %v5080 = vadd.f32 %v5072, 0.2548296
      %v5081 = vadd.f32 %v5073, 0.2548296
      %v5082 = vadd.f32 %v5074, 0.2548296
      %v5083 = vadd.f32 %v5075, 0.2548296
      %v5084 = vadd.f32 %v5076, 0.2548296
      %v5085 = vadd.f32 %v5077, 0.2548296
      %v5086 = vmul.f32 %v5078, %v5007
      %v5087 = vmul.f32 %v5079, %v5009
      %v5088 = vmul.f32 %v5080, %v5011
      %v5089 = vmul.f32 %v5081, %v5013
      %v5090 = vmul.f32 %v5082, %v5015
      %v5091 = vmul.f32 %v5083, %v5017
      %v5092 = vmul.f32 %v5084, %v5019
      %v5093 = vmul.f32 %v5085, %v5021
      %v5094 = vsub.f32 0.0, %v4982
      %v5095 = vsub.f32 0.0, %v4983
      %v5096 = vsub.f32 0.0, %v4984
      %v5097 = vsub.f32 0.0, %v4985
      %v5098 = vsub.f32 0.0, %v4986
      %v5099 = vsub.f32 0.0, %v4987
      %v5100 = vsub.f32 0.0, %v4988
      %v5101 = vsub.f32 0.0, %v4989
      %v5102 = vmul.f32 %v5094, %v4982
      %v5103 = vmul.f32 %v5095, %v4983
      %v5104 = vmul.f32 %v5096, %v4984
      %v5105 = vmul.f32 %v5097, %v4985
      %v5106 = vmul.f32 %v5098, %v4986
      %v5107 = vmul.f32 %v5099, %v4987
      %v5108 = vmul.f32 %v5100, %v4988
      %v5109 = vmul.f32 %v5101, %v4989
      %v5110 = vmul.f32 %v5102, 1.442695
      %v5111 = vpow.pop %v5110
      %v5112 = vmul.f32 %v5103, 1.442695
      %v5113 = vpow.pop %v5112
      %v5114 = vmul.f32 %v5104, 1.442695
      %v5115 = vpow.pop %v5114
      %v5116 = vmul.f32 %v5105, 1.442695
      %v5117 = vpow.pop %v5116
      %v5118 = vmul.f32 %v5106, 1.442695
      %v5119 = vpow.pop %v5118
      %v5120 = vmul.f32 %v5107, 1.442695
      %v5121 = vpow.pop %v5120
      %v5122 = vmul.f32 %v5108, 1.442695
      %v5123 = vpow.pop %v5122
      %v5124 = vmul.f32 %v5109, 1.442695
      %v5125 = vpow.pop %v5124
      %v5126 = vmul.f32 %v5086, %v5111
      %v5127 = vmul.f32 %v5087, %v5113
      %v5128 = vmul.f32 %v5088, %v5115
      %v5129 = vmul.f32 %v5089, %v5117
      %v5130 = vmul.f32 %v5090, %v5119
      %v5131 = vmul.f32 %v5091, %v5121
      %v5132 = vmul.f32 %v5092, %v5123
      %v5133 = vmul.f32 %v5093, %v5125
      %v5134 = vsub.f32 1.0, %v5126
      %v5135 = vsub.f32 1.0, %v5127
      %v5136 = vsub.f32 1.0, %v5128
      %v5137 = vsub.f32 1.0, %v5129
      %v5138 = vsub.f32 1.0, %v5130
      %v5139 = vsub.f32 1.0, %v5131
      %v5140 = vsub.f32 1.0, %v5132
      %v5141 = vsub.f32 1.0, %v5133
      %vm5142 = vcmp.ge.f32.partialorder %v4974, 0.0
      %vm5143 = vcmp.ge.f32.partialorder %v4975, 0.0
      %vm5144 = vcmp.ge.f32.partialorder %v4976, 0.0
      %vm5145 = vcmp.ge.f32.partialorder %v4977, 0.0
      %vm5146 = vcmp.ge.f32.partialorder %v4978, 0.0
      %vm5147 = vcmp.ge.f32.partialorder %v4979, 0.0
      %vm5148 = vcmp.ge.f32.partialorder %v4980, 0.0
      %vm5149 = vcmp.ge.f32.partialorder %v4981, 0.0
      %v5150 = vsub.f32 0.0, %v5134
      %v5151 = vsub.f32 0.0, %v5135
      %v5152 = vsub.f32 0.0, %v5136
      %v5153 = vsub.f32 0.0, %v5137
      %v5154 = vsub.f32 0.0, %v5138
      %v5155 = vsub.f32 0.0, %v5139
      %v5156 = vsub.f32 0.0, %v5140
      %v5157 = vsub.f32 0.0, %v5141
      %v5158 = vsel %vm5142, %v5134, %v5150
      %v5159 = vsel %vm5143, %v5135, %v5151
      %v5160 = vsel %vm5144, %v5136, %v5152
      %v5161 = vsel %vm5145, %v5137, %v5153
      %v5162 = vsel %vm5146, %v5138, %v5154
      %v5163 = vsel %vm5147, %v5139, %v5155
      %v5164 = vsel %vm5148, %v5140, %v5156
      %v5165 = vsel %vm5149, %v5141, %v5157
      %v5166 = vadd.f32 %v5158, 1.0
      %v5167 = vadd.f32 %v5159, 1.0
      %v5168 = vadd.f32 %v5160, 1.0
      %v5169 = vadd.f32 %v5161, 1.0
      %v5170 = vadd.f32 %v5162, 1.0
      %v5171 = vadd.f32 %v5163, 1.0
      %v5172 = vadd.f32 %v5164, 1.0
      %v5173 = vadd.f32 %v5165, 1.0
      %v5174 = vmul.f32 %v4966, %v5166
      %v5175 = vmul.f32 %v4967, %v5167
      %v5176 = vmul.f32 %v4968, %v5168
      %v5177 = vmul.f32 %v4969, %v5169
      %v5178 = vmul.f32 %v4970, %v5170
      %v5179 = vmul.f32 %v4971, %v5171
      %v5180 = vmul.f32 %v4972, %v5172
      %v5181 = vmul.f32 %v4973, %v5173
      %v5182 = vmul.f32 %v5174, %v5174
      %v5183 = vmul.f32 %v5175, %v5175
      %v5184 = vmul.f32 %v5176, %v5176
      %v5185 = vmul.f32 %v5177, %v5177
      %v5186 = vmul.f32 %v5178, %v5178
      %v5187 = vmul.f32 %v5179, %v5179
      %v5188 = vmul.f32 %v5180, %v5180
      %v5189 = vmul.f32 %v5181, %v5181
      %v5190 = vadd.f32 %v5182, %v5183
      %5191 = vadd.xlane.f32.xlu0 %v5190
      %v5192 = vpop.xlane.xlu0 %5191
      %v5193 = vadd.f32 %v5184, %v5185
      %5194 = vadd.xlane.f32.xlu0 %v5193
      %v5195 = vpop.xlane.xlu0 %5194
      %v5196 = vadd.f32 %v5186, %v5187
      %5197 = vadd.xlane.f32.xlu0 %v5196
      %v5198 = vpop.xlane.xlu0 %5197
      %v5199 = vadd.f32 %v5188, %v5189
      %5200 = vadd.xlane.f32.xlu0 %v5199
      %v5201 = vpop.xlane.xlu0 %5200
      %v5202 = vrsqrt.pop %v5192
      %v5203 = vmul.f32 %v5192, %v5202
      %vm5204 = vcmp.eq.f32.partialorder %v5192, inf
      %v5205 = vsel %vm5204, %v5192, %v5203
      %vm5206 = vcmp.eq.f32.partialorder %v5192, 0.0
      %v5207 = vand.u32 %v5192, 2147483648
      %v5208 = vsel %vm5206, %v5207, %v5205
      %v5209 = vrsqrt.pop %v5195
      %v5210 = vmul.f32 %v5195, %v5209
      %vm5211 = vcmp.eq.f32.partialorder %v5195, inf
      %v5212 = vsel %vm5211, %v5195, %v5210
      %vm5213 = vcmp.eq.f32.partialorder %v5195, 0.0
      %v5214 = vand.u32 %v5195, 2147483648
      %v5215 = vsel %vm5213, %v5214, %v5212
      %v5216 = vrsqrt.pop %v5198
      %v5217 = vmul.f32 %v5198, %v5216
      %vm5218 = vcmp.eq.f32.partialorder %v5198, inf
      %v5219 = vsel %vm5218, %v5198, %v5217
      %vm5220 = vcmp.eq.f32.partialorder %v5198, 0.0
      %v5221 = vand.u32 %v5198, 2147483648
      %v5222 = vsel %vm5220, %v5221, %v5219
      %v5223 = vrsqrt.pop %v5201
      %v5224 = vmul.f32 %v5201, %v5223
      %vm5225 = vcmp.eq.f32.partialorder %v5201, inf
      %v5226 = vsel %vm5225, %v5201, %v5224
      %vm5227 = vcmp.eq.f32.partialorder %v5201, 0.0
      %v5228 = vand.u32 %v5201, 2147483648
      %v5229 = vsel %vm5227, %v5228, %v5226
      %v5230 = vadd.f32 %v5208, %v5215
      %v5231 = vadd.f32 %v5230, %v5222
      %v5232 = vadd.f32 %v5231, %v5229
      %v5233 = vrot.slane %v5232, 4
      %v5234 = vadd.f32 %v5232, %v5233
      %v5235 = vrot.slane %v5234, 2
      %v5236 = vadd.f32 %v5234, %v5235
      %v5237 = vrot.slane %v5236, 1
      %v5238 = vadd.f32 %v5236, %v5237
      %v5239 = vmul.f32 %v5238, %v2434
      %v5240 = vadd.f32 %v5239, 1e-06
      %v5241 = vrcp.pop %v5240
      %v5242 = vmul.f32 %v5208, %v5241
      %v5243 = vmul.f32 %v5215, %v5241
      %v5244 = vmul.f32 %v5222, %v5241
      %v5245 = vmul.f32 %v5229, %v5241
      %v5246 = vmul.f32 %v5174, %v5242
      %v5247 = vmul.f32 %v5175, %v5242
      %v5248 = vmul.f32 %v5176, %v5243
      %v5249 = vmul.f32 %v5177, %v5243
      %v5250 = vmul.f32 %v5178, %v5244
      %v5251 = vmul.f32 %v5179, %v5244
      %v5252 = vmul.f32 %v5180, %v5245
      %v5253 = vmul.f32 %v5181, %v5245
      %5254 = vset.pattern.permute.xlu0 9
      %5255 = vperm.xlu0 %5254, %v3062
      %v5256 = vpop.permute.xlu0 %5255
      %5258 = vset.pattern.permute.xlu0 9
      %5259 = vperm.xlu0 %5258, %v3063
      %v5260 = vpop.permute.xlu0 %5259
      %5262 = vset.pattern.permute.xlu0 9
      %5263 = vperm.xlu0 %5262, %v3064
      %v5264 = vpop.permute.xlu0 %5263
      %5266 = vset.pattern.permute.xlu0 9
      %5267 = vperm.xlu0 %5266, %v3065
      %v5268 = vpop.permute.xlu0 %5267
      %v5270 = vmul.f32 %v5256, %v5246
      %v5271 = vmul.f32 %v5256, %v5247
      %v5272 = vmul.f32 %v5260, %v5248
      %v5273 = vmul.f32 %v5260, %v5249
      %v5274 = vmul.f32 %v5264, %v5250
      %v5275 = vmul.f32 %v5264, %v5251
      %v5276 = vmul.f32 %v5268, %v5252
      %v5277 = vmul.f32 %v5268, %v5253
      %5278 = vset.pattern.permute.xlu0 10
      %5279 = vperm.xlu0 %5278, %v3062
      %v5280 = vpop.permute.xlu0 %5279
      %5282 = vset.pattern.permute.xlu0 10
      %5283 = vperm.xlu0 %5282, %v3063
      %v5284 = vpop.permute.xlu0 %5283
      %5286 = vset.pattern.permute.xlu0 10
      %5287 = vperm.xlu0 %5286, %v3064
      %v5288 = vpop.permute.xlu0 %5287
      %5290 = vset.pattern.permute.xlu0 10
      %5291 = vperm.xlu0 %5290, %v3065
      %v5292 = vpop.permute.xlu0 %5291
      %v5294 = vadd.f32 %v5270, %v5280
      %v5295 = vadd.f32 %v5271, %v5280
      %v5296 = vadd.f32 %v5272, %v5284
      %v5297 = vadd.f32 %v5273, %v5284
      %v5298 = vadd.f32 %v5274, %v5288
      %v5299 = vadd.f32 %v5275, %v5288
      %v5300 = vadd.f32 %v5276, %v5292
      %v5301 = vadd.f32 %v5277, %v5292
      %v5302 = vadd.f32 %v5294, %v5174
      %v5303 = vadd.f32 %v5295, %v5175
      %v5304 = vadd.f32 %v5296, %v5176
      %v5305 = vadd.f32 %v5297, %v5177
      %v5306 = vadd.f32 %v5298, %v5178
      %v5307 = vadd.f32 %v5299, %v5179
      %v5308 = vadd.f32 %v5300, %v5180
      %v5309 = vadd.f32 %v5301, %v5181
      %5310 = vset.pattern.permute.xlu0 34
      %5311 = vperm.xlu0 %5310, %v3060
      %v5312 = vpop.permute.xlu0 %5311
      %v5314 = vsel %vm395, %v3060, 0
      %5316 = vmatprep.subr.mxu0 0.0
      %5317 = vmatpush1.msra.mxu0 0.0
      %5318 = vmatprep.subr.mxu0 0.0
      %5319 = vmatpush1.msra.mxu0 0.0
      %5320 = vmatprep.subr.mxu0 0.0
      %5321 = vmatpush1.msra.mxu0 0.0
      %5322 = vmatprep.subr.mxu0 0.0
      %5323 = vmatpush1.msra.mxu0 0.0
      %5324 = vmatprep.subr.mxu0 0.0
      %5325 = vmatpush1.msra.mxu0 0.0
      %5326 = vmatprep.subr.mxu0 0.0
      %5327 = vmatpush1.msra.mxu0 0.0
      %5328 = vmatprep.subr.mxu0 0.0
      %5329 = vmatpush1.msra.mxu0 0.0
      %5330 = vmatprep.subr.mxu0 0.0
      %5331 = vmatpush1.msra.mxu0 0.0
      %5332 = vmatprep.subr.mxu0 0.0
      %5333 = vmatpush1.msra.mxu0 0.0
      %5334 = vmatprep.subr.mxu0 0.0
      %5335 = vmatpush1.msra.mxu0 0.0
      %5336 = vmatprep.subr.mxu0 0.0
      %5337 = vmatpush1.msra.mxu0 0.0
      %5338 = vmatprep.subr.mxu0 0.0
      %5339 = vmatpush1.msra.mxu0 0.0
      %v5340 = vand.u32 %v5309, 4294901760
      %5341 = vmatprep.subr.mxu0 %v5340
      %v5342 = vand.u32 %v5308, 4294901760
      %5343 = vmatpush1.msra.mxu0 %v5342
      %v5344 = vand.u32 %v5307, 4294901760
      %5345 = vmatprep.subr.mxu0 %v5344
      %v5346 = vand.u32 %v5306, 4294901760
      %5347 = vmatpush1.msra.mxu0 %v5346
      %v5348 = vand.u32 %v5305, 4294901760
      %5349 = vmatprep.subr.mxu0 %v5348
      %v5350 = vand.u32 %v5304, 4294901760
      %5351 = vmatpush1.msra.mxu0 %v5350
      %v5352 = vand.u32 %v5303, 4294901760
      %5353 = vmatprep.subr.mxu0 %v5352
      %v5354 = vand.u32 %v5302, 4294901760
      %5355 = vmatpush1.msra.mxu0 %v5354
      %5356 = vmatprep.subr.mxu0 0.0
      %5357 = vmatpush2.msra.mxu0 0.0
      %5358 = vmatprep.subr.mxu0 0.0
      %5359 = vmatpush2.msra.mxu0 0.0
      %5360 = vmatprep.subr.mxu0 0.0
      %5361 = vmatpush2.msra.mxu0 0.0
      %5362 = vmatprep.subr.mxu0 0.0
      %5363 = vmatpush2.msra.mxu0 0.0
      %5364 = vmatprep.subr.mxu0 0.0
      %5365 = vmatpush2.msra.mxu0 0.0
      %5366 = vmatprep.subr.mxu0 0.0
      %5367 = vmatpush2.msra.mxu0 0.0
      %5368 = vmatprep.subr.mxu0 0.0
      %5369 = vmatpush2.msra.mxu0 0.0
      %5370 = vmatprep.subr.mxu0 0.0
      %5371 = vmatpush2.msra.mxu0 0.0
      %5372 = vmatprep.subr.mxu0 0.0
      %5373 = vmatpush2.msra.mxu0 0.0
      %5374 = vmatprep.subr.mxu0 0.0
      %5375 = vmatpush2.msra.mxu0 0.0
      %5376 = vmatprep.subr.mxu0 0.0
      %5377 = vmatpush2.msra.mxu0 0.0
      %5378 = vmatprep.subr.mxu0 0.0
      %5379 = vmatpush2.msra.mxu0 0.0
      %5380 = vmatprep.subr.mxu0 0.0
      %5381 = vmatpush2.msra.mxu0 0.0
      %5382 = vmatprep.subr.mxu0 0.0
      %5383 = vmatpush2.msra.mxu0 0.0
      %5384 = vmatprep.subr.mxu0 0.0
      %5385 = vmatpush2.msra.mxu0 0.0
      %5386 = vmatprep.subr.mxu0 0.0
      %5387 = vmatpush2.msra.mxu0 0.0
      %5388 = vmatprep.mubr.f32.mxu0 0.0
      %v5389 = vand.u32 %v5314, 4294901760
      %v5390 = vsub.f32 %v5314, %v5389
      %v5391 = vand.u32 %v5390, 4294901760
      %v5392 = vsub.f32 %v5390, %v5391
      %v5393 = vand.u32 %v5392, 4294901760
      %5394 = vmatmul.mubr.f32.gmra.mxu0 %v5393
      %v5395 = vpop.f32.mrf.mxu0
      %v5396 = vadd.f32 %v5312, %v5395
      %v5397 = vpop.f32.mrf.mxu0
      %v5398 = vadd.f32 %v5312, %v5397
      %5399 = vdwg.mxu0
      %5400 = vmatprep.subr.mxu0 0.0
      %5401 = vmatpush1.msra.mxu0 0.0
      %5402 = vmatprep.subr.mxu0 0.0
      %5403 = vmatpush1.msra.mxu0 0.0
      %5404 = vmatprep.subr.mxu0 0.0
      %5405 = vmatpush1.msra.mxu0 0.0
      %5406 = vmatprep.subr.mxu0 0.0
      %5407 = vmatpush1.msra.mxu0 0.0
      %5408 = vmatprep.subr.mxu0 0.0
      %5409 = vmatpush1.msra.mxu0 0.0
      %5410 = vmatprep.subr.mxu0 0.0
      %5411 = vmatpush1.msra.mxu0 0.0
      %5412 = vmatprep.subr.mxu0 0.0
      %5413 = vmatpush1.msra.mxu0 0.0
      %5414 = vmatprep.subr.mxu0 0.0
      %5415 = vmatpush1.msra.mxu0 0.0
      %5416 = vmatprep.subr.mxu0 0.0
      %5417 = vmatpush1.msra.mxu0 0.0
      %5418 = vmatprep.subr.mxu0 0.0
      %5419 = vmatpush1.msra.mxu0 0.0
      %5420 = vmatprep.subr.mxu0 0.0
      %5421 = vmatpush1.msra.mxu0 0.0
      %5422 = vmatprep.subr.mxu0 0.0
      %5423 = vmatpush1.msra.mxu0 0.0
      %v5424 = vand.u32 %v5309, 4294901760
      %v5425 = vsub.f32 %v5309, %v5424
      %v5426 = vand.u32 %v5425, 4294901760
      %v5427 = vsub.f32 %v5425, %v5426
      %v5428 = vand.u32 %v5427, 4294901760
      %5429 = vmatprep.subr.mxu0 %v5428
      %v5430 = vand.u32 %v5308, 4294901760
      %v5431 = vsub.f32 %v5308, %v5430
      %v5432 = vand.u32 %v5431, 4294901760
      %v5433 = vsub.f32 %v5431, %v5432
      %v5434 = vand.u32 %v5433, 4294901760
      %5435 = vmatpush1.msra.mxu0 %v5434
      %v5436 = vand.u32 %v5307, 4294901760
      %v5437 = vsub.f32 %v5307, %v5436
      %v5438 = vand.u32 %v5437, 4294901760
      %v5439 = vsub.f32 %v5437, %v5438
      %v5440 = vand.u32 %v5439, 4294901760
      %5441 = vmatprep.subr.mxu0 %v5440
      %v5442 = vand.u32 %v5306, 4294901760
      %v5443 = vsub.f32 %v5306, %v5442
      %v5444 = vand.u32 %v5443, 4294901760
      %v5445 = vsub.f32 %v5443, %v5444
      %v5446 = vand.u32 %v5445, 4294901760
      %5447 = vmatpush1.msra.mxu0 %v5446
      %v5448 = vand.u32 %v5305, 4294901760
      %v5449 = vsub.f32 %v5305, %v5448
      %v5450 = vand.u32 %v5449, 4294901760
      %v5451 = vsub.f32 %v5449, %v5450
      %v5452 = vand.u32 %v5451, 4294901760
      %5453 = vmatprep.subr.mxu0 %v5452
      %v5454 = vand.u32 %v5304, 4294901760
      %v5455 = vsub.f32 %v5304, %v5454
      %v5456 = vand.u32 %v5455, 4294901760
      %v5457 = vsub.f32 %v5455, %v5456
      %v5458 = vand.u32 %v5457, 4294901760
      %5459 = vmatpush1.msra.mxu0 %v5458
      %v5460 = vand.u32 %v5303, 4294901760
      %v5461 = vsub.f32 %v5303, %v5460
      %v5462 = vand.u32 %v5461, 4294901760
      %v5463 = vsub.f32 %v5461, %v5462
      %v5464 = vand.u32 %v5463, 4294901760
      %5465 = vmatprep.subr.mxu0 %v5464
      %v5466 = vand.u32 %v5302, 4294901760
      %v5467 = vsub.f32 %v5302, %v5466
      %v5468 = vand.u32 %v5467, 4294901760
      %v5469 = vsub.f32 %v5467, %v5468
      %v5470 = vand.u32 %v5469, 4294901760
      %5471 = vmatpush1.msra.mxu0 %v5470
      %5472 = vmatprep.subr.mxu0 0.0
      %5473 = vmatpush2.msra.mxu0 0.0
      %5474 = vmatprep.subr.mxu0 0.0
      %5475 = vmatpush2.msra.mxu0 0.0
      %5476 = vmatprep.subr.mxu0 0.0
      %5477 = vmatpush2.msra.mxu0 0.0
      %5478 = vmatprep.subr.mxu0 0.0
      %5479 = vmatpush2.msra.mxu0 0.0
      %5480 = vmatprep.subr.mxu0 0.0
      %5481 = vmatpush2.msra.mxu0 0.0
      %5482 = vmatprep.subr.mxu0 0.0
      %5483 = vmatpush2.msra.mxu0 0.0
      %5484 = vmatprep.subr.mxu0 0.0
      %5485 = vmatpush2.msra.mxu0 0.0
      %5486 = vmatprep.subr.mxu0 0.0
      %5487 = vmatpush2.msra.mxu0 0.0
      %5488 = vmatprep.subr.mxu0 0.0
      %5489 = vmatpush2.msra.mxu0 0.0
      %5490 = vmatprep.subr.mxu0 0.0
      %5491 = vmatpush2.msra.mxu0 0.0
      %5492 = vmatprep.subr.mxu0 0.0
      %5493 = vmatpush2.msra.mxu0 0.0
      %5494 = vmatprep.subr.mxu0 0.0
      %5495 = vmatpush2.msra.mxu0 0.0
      %5496 = vmatprep.subr.mxu0 0.0
      %5497 = vmatpush2.msra.mxu0 0.0
      %5498 = vmatprep.subr.mxu0 0.0
      %5499 = vmatpush2.msra.mxu0 0.0
      %5500 = vmatprep.subr.mxu0 0.0
      %5501 = vmatpush2.msra.mxu0 0.0
      %5502 = vmatprep.subr.mxu0 0.0
      %5503 = vmatpush2.msra.mxu0 0.0
      %5504 = vmatprep.mubr.f32.mxu0 0.0
      %v5505 = vand.u32 %v5314, 4294901760
      %5506 = vmatmul.mubr.f32.gmra.mxu0 %v5505
      %v5507 = vpop.f32.mrf.mxu0
      %v5508 = vadd.f32 %v5396, %v5507
      %v5509 = vpop.f32.mrf.mxu0
      %v5510 = vadd.f32 %v5398, %v5509
      %5511 = vdwg.mxu0
      %5512 = vmatprep.subr.mxu0 0.0
      %5513 = vmatpush1.msra.mxu0 0.0
      %5514 = vmatprep.subr.mxu0 0.0
      %5515 = vmatpush1.msra.mxu0 0.0
      %5516 = vmatprep.subr.mxu0 0.0
      %5517 = vmatpush1.msra.mxu0 0.0
      %5518 = vmatprep.subr.mxu0 0.0
      %5519 = vmatpush1.msra.mxu0 0.0
      %5520 = vmatprep.subr.mxu0 0.0
      %5521 = vmatpush1.msra.mxu0 0.0
      %5522 = vmatprep.subr.mxu0 0.0
      %5523 = vmatpush1.msra.mxu0 0.0
      %5524 = vmatprep.subr.mxu0 0.0
      %5525 = vmatpush1.msra.mxu0 0.0
      %5526 = vmatprep.subr.mxu0 0.0
      %5527 = vmatpush1.msra.mxu0 0.0
      %5528 = vmatprep.subr.mxu0 0.0
      %5529 = vmatpush1.msra.mxu0 0.0
      %5530 = vmatprep.subr.mxu0 0.0
      %5531 = vmatpush1.msra.mxu0 0.0
      %5532 = vmatprep.subr.mxu0 0.0
      %5533 = vmatpush1.msra.mxu0 0.0
      %5534 = vmatprep.subr.mxu0 0.0
      %5535 = vmatpush1.msra.mxu0 0.0
      %v5536 = vand.u32 %v5309, 4294901760
      %v5537 = vsub.f32 %v5309, %v5536
      %5538 = vmatprep.subr.mxu0 %v5537
      %v5539 = vand.u32 %v5308, 4294901760
      %v5540 = vsub.f32 %v5308, %v5539
      %5541 = vmatpush1.msra.mxu0 %v5540
      %v5542 = vand.u32 %v5307, 4294901760
      %v5543 = vsub.f32 %v5307, %v5542
      %5544 = vmatprep.subr.mxu0 %v5543
      %v5545 = vand.u32 %v5306, 4294901760
      %v5546 = vsub.f32 %v5306, %v5545
      %5547 = vmatpush1.msra.mxu0 %v5546
      %v5548 = vand.u32 %v5305, 4294901760
      %v5549 = vsub.f32 %v5305, %v5548
      %5550 = vmatprep.subr.mxu0 %v5549
      %v5551 = vand.u32 %v5304, 4294901760
      %v5552 = vsub.f32 %v5304, %v5551
      %5553 = vmatpush1.msra.mxu0 %v5552
      %v5554 = vand.u32 %v5303, 4294901760
      %v5555 = vsub.f32 %v5303, %v5554
      %5556 = vmatprep.subr.mxu0 %v5555
      %v5557 = vand.u32 %v5302, 4294901760
      %v5558 = vsub.f32 %v5302, %v5557
      %5559 = vmatpush1.msra.mxu0 %v5558
      %5560 = vmatprep.subr.mxu0 0.0
      %5561 = vmatpush2.msra.mxu0 0.0
      %5562 = vmatprep.subr.mxu0 0.0
      %5563 = vmatpush2.msra.mxu0 0.0
      %5564 = vmatprep.subr.mxu0 0.0
      %5565 = vmatpush2.msra.mxu0 0.0
      %5566 = vmatprep.subr.mxu0 0.0
      %5567 = vmatpush2.msra.mxu0 0.0
      %5568 = vmatprep.subr.mxu0 0.0
      %5569 = vmatpush2.msra.mxu0 0.0
      %5570 = vmatprep.subr.mxu0 0.0
      %5571 = vmatpush2.msra.mxu0 0.0
      %5572 = vmatprep.subr.mxu0 0.0
      %5573 = vmatpush2.msra.mxu0 0.0
      %5574 = vmatprep.subr.mxu0 0.0
      %5575 = vmatpush2.msra.mxu0 0.0
      %5576 = vmatprep.subr.mxu0 0.0
      %5577 = vmatpush2.msra.mxu0 0.0
      %5578 = vmatprep.subr.mxu0 0.0
      %5579 = vmatpush2.msra.mxu0 0.0
      %5580 = vmatprep.subr.mxu0 0.0
      %5581 = vmatpush2.msra.mxu0 0.0
      %5582 = vmatprep.subr.mxu0 0.0
      %5583 = vmatpush2.msra.mxu0 0.0
      %5584 = vmatprep.subr.mxu0 0.0
      %5585 = vmatpush2.msra.mxu0 0.0
      %5586 = vmatprep.subr.mxu0 0.0
      %5587 = vmatpush2.msra.mxu0 0.0
      %5588 = vmatprep.subr.mxu0 0.0
      %5589 = vmatpush2.msra.mxu0 0.0
      %5590 = vmatprep.subr.mxu0 0.0
      %5591 = vmatpush2.msra.mxu0 0.0
      %5592 = vmatprep.mubr.f32.mxu0 0.0
      %v5593 = vand.u32 %v5314, 4294901760
      %v5594 = vsub.f32 %v5314, %v5593
      %5595 = vmatmul.mubr.f32.gmra.mxu0 %v5594
      %v5596 = vpop.f32.mrf.mxu0
      %v5597 = vadd.f32 %v5508, %v5596
      %v5598 = vpop.f32.mrf.mxu0
      %v5599 = vadd.f32 %v5510, %v5598
      %5600 = vdwg.mxu0
      %5601 = vmatprep.subr.mxu0 0.0
      %5602 = vmatpush1.msra.mxu0 0.0
      %5603 = vmatprep.subr.mxu0 0.0
      %5604 = vmatpush1.msra.mxu0 0.0
      %5605 = vmatprep.subr.mxu0 0.0
      %5606 = vmatpush1.msra.mxu0 0.0
      %5607 = vmatprep.subr.mxu0 0.0
      %5608 = vmatpush1.msra.mxu0 0.0
      %5609 = vmatprep.subr.mxu0 0.0
      %5610 = vmatpush1.msra.mxu0 0.0
      %5611 = vmatprep.subr.mxu0 0.0
      %5612 = vmatpush1.msra.mxu0 0.0
      %5613 = vmatprep.subr.mxu0 0.0
      %5614 = vmatpush1.msra.mxu0 0.0
      %5615 = vmatprep.subr.mxu0 0.0
      %5616 = vmatpush1.msra.mxu0 0.0
      %5617 = vmatprep.subr.mxu0 0.0
      %5618 = vmatpush1.msra.mxu0 0.0
      %5619 = vmatprep.subr.mxu0 0.0
      %5620 = vmatpush1.msra.mxu0 0.0
      %5621 = vmatprep.subr.mxu0 0.0
      %5622 = vmatpush1.msra.mxu0 0.0
      %5623 = vmatprep.subr.mxu0 0.0
      %5624 = vmatpush1.msra.mxu0 0.0
      %v5625 = vand.u32 %v5309, 4294901760
      %5626 = vmatprep.subr.mxu0 %v5625
      %v5627 = vand.u32 %v5308, 4294901760
      %5628 = vmatpush1.msra.mxu0 %v5627
      %v5629 = vand.u32 %v5307, 4294901760
      %5630 = vmatprep.subr.mxu0 %v5629
      %v5631 = vand.u32 %v5306, 4294901760
      %5632 = vmatpush1.msra.mxu0 %v5631
      %v5633 = vand.u32 %v5305, 4294901760
      %5634 = vmatprep.subr.mxu0 %v5633
      %v5635 = vand.u32 %v5304, 4294901760
      %5636 = vmatpush1.msra.mxu0 %v5635
      %v5637 = vand.u32 %v5303, 4294901760
      %5638 = vmatprep.subr.mxu0 %v5637
      %v5639 = vand.u32 %v5302, 4294901760
      %5640 = vmatpush1.msra.mxu0 %v5639
      %5641 = vmatprep.subr.mxu0 0.0
      %5642 = vmatpush2.msra.mxu0 0.0
      %5643 = vmatprep.subr.mxu0 0.0
      %5644 = vmatpush2.msra.mxu0 0.0
      %5645 = vmatprep.subr.mxu0 0.0
      %5646 = vmatpush2.msra.mxu0 0.0
      %5647 = vmatprep.subr.mxu0 0.0
      %5648 = vmatpush2.msra.mxu0 0.0
      %5649 = vmatprep.subr.mxu0 0.0
      %5650 = vmatpush2.msra.mxu0 0.0
      %5651 = vmatprep.subr.mxu0 0.0
      %5652 = vmatpush2.msra.mxu0 0.0
      %5653 = vmatprep.subr.mxu0 0.0
      %5654 = vmatpush2.msra.mxu0 0.0
      %5655 = vmatprep.subr.mxu0 0.0
      %5656 = vmatpush2.msra.mxu0 0.0
      %5657 = vmatprep.subr.mxu0 0.0
      %5658 = vmatpush2.msra.mxu0 0.0
      %5659 = vmatprep.subr.mxu0 0.0
      %5660 = vmatpush2.msra.mxu0 0.0
      %5661 = vmatprep.subr.mxu0 0.0
      %5662 = vmatpush2.msra.mxu0 0.0
      %5663 = vmatprep.subr.mxu0 0.0
      %5664 = vmatpush2.msra.mxu0 0.0
      %5665 = vmatprep.subr.mxu0 0.0
      %5666 = vmatpush2.msra.mxu0 0.0
      %5667 = vmatprep.subr.mxu0 0.0
      %5668 = vmatpush2.msra.mxu0 0.0
      %5669 = vmatprep.subr.mxu0 0.0
      %5670 = vmatpush2.msra.mxu0 0.0
      %5671 = vmatprep.subr.mxu0 0.0
      %5672 = vmatpush2.msra.mxu0 0.0
      %5673 = vmatprep.mubr.f32.mxu0 0.0
      %v5674 = vand.u32 %v5314, 4294901760
      %v5675 = vsub.f32 %v5314, %v5674
      %v5676 = vand.u32 %v5675, 4294901760
      %5677 = vmatmul.mubr.f32.gmra.mxu0 %v5676
      %v5678 = vpop.f32.mrf.mxu0
      %v5679 = vadd.f32 %v5597, %v5678
      %v5680 = vpop.f32.mrf.mxu0
      %v5681 = vadd.f32 %v5599, %v5680
      %5682 = vdwg.mxu0
      %5683 = vmatprep.subr.mxu0 0.0
      %5684 = vmatpush1.msra.mxu0 0.0
      %5685 = vmatprep.subr.mxu0 0.0
      %5686 = vmatpush1.msra.mxu0 0.0
      %5687 = vmatprep.subr.mxu0 0.0
      %5688 = vmatpush1.msra.mxu0 0.0
      %5689 = vmatprep.subr.mxu0 0.0
      %5690 = vmatpush1.msra.mxu0 0.0
      %5691 = vmatprep.subr.mxu0 0.0
      %5692 = vmatpush1.msra.mxu0 0.0
      %5693 = vmatprep.subr.mxu0 0.0
      %5694 = vmatpush1.msra.mxu0 0.0
      %5695 = vmatprep.subr.mxu0 0.0
      %5696 = vmatpush1.msra.mxu0 0.0
      %5697 = vmatprep.subr.mxu0 0.0
      %5698 = vmatpush1.msra.mxu0 0.0
      %5699 = vmatprep.subr.mxu0 0.0
      %5700 = vmatpush1.msra.mxu0 0.0
      %5701 = vmatprep.subr.mxu0 0.0
      %5702 = vmatpush1.msra.mxu0 0.0
      %5703 = vmatprep.subr.mxu0 0.0
      %5704 = vmatpush1.msra.mxu0 0.0
      %5705 = vmatprep.subr.mxu0 0.0
      %5706 = vmatpush1.msra.mxu0 0.0
      %v5707 = vand.u32 %v5309, 4294901760
      %v5708 = vsub.f32 %v5309, %v5707
      %v5709 = vand.u32 %v5708, 4294901760
      %5710 = vmatprep.subr.mxu0 %v5709
      %v5711 = vand.u32 %v5308, 4294901760
      %v5712 = vsub.f32 %v5308, %v5711
      %v5713 = vand.u32 %v5712, 4294901760
      %5714 = vmatpush1.msra.mxu0 %v5713
      %v5715 = vand.u32 %v5307, 4294901760
      %v5716 = vsub.f32 %v5307, %v5715
      %v5717 = vand.u32 %v5716, 4294901760
      %5718 = vmatprep.subr.mxu0 %v5717
      %v5719 = vand.u32 %v5306, 4294901760
      %v5720 = vsub.f32 %v5306, %v5719
      %v5721 = vand.u32 %v5720, 4294901760
      %5722 = vmatpush1.msra.mxu0 %v5721
      %v5723 = vand.u32 %v5305, 4294901760
      %v5724 = vsub.f32 %v5305, %v5723
      %v5725 = vand.u32 %v5724, 4294901760
      %5726 = vmatprep.subr.mxu0 %v5725
      %v5727 = vand.u32 %v5304, 4294901760
      %v5728 = vsub.f32 %v5304, %v5727
      %v5729 = vand.u32 %v5728, 4294901760
      %5730 = vmatpush1.msra.mxu0 %v5729
      %v5731 = vand.u32 %v5303, 4294901760
      %v5732 = vsub.f32 %v5303, %v5731
      %v5733 = vand.u32 %v5732, 4294901760
      %5734 = vmatprep.subr.mxu0 %v5733
      %v5735 = vand.u32 %v5302, 4294901760
      %v5736 = vsub.f32 %v5302, %v5735
      %v5737 = vand.u32 %v5736, 4294901760
      %5738 = vmatpush1.msra.mxu0 %v5737
      %5739 = vmatprep.subr.mxu0 0.0
      %5740 = vmatpush2.msra.mxu0 0.0
      %5741 = vmatprep.subr.mxu0 0.0
      %5742 = vmatpush2.msra.mxu0 0.0
      %5743 = vmatprep.subr.mxu0 0.0
      %5744 = vmatpush2.msra.mxu0 0.0
      %5745 = vmatprep.subr.mxu0 0.0
      %5746 = vmatpush2.msra.mxu0 0.0
      %5747 = vmatprep.subr.mxu0 0.0
      %5748 = vmatpush2.msra.mxu0 0.0
      %5749 = vmatprep.subr.mxu0 0.0
      %5750 = vmatpush2.msra.mxu0 0.0
      %5751 = vmatprep.subr.mxu0 0.0
      %5752 = vmatpush2.msra.mxu0 0.0
      %5753 = vmatprep.subr.mxu0 0.0
      %5754 = vmatpush2.msra.mxu0 0.0
      %5755 = vmatprep.subr.mxu0 0.0
      %5756 = vmatpush2.msra.mxu0 0.0
      %5757 = vmatprep.subr.mxu0 0.0
      %5758 = vmatpush2.msra.mxu0 0.0
      %5759 = vmatprep.subr.mxu0 0.0
      %5760 = vmatpush2.msra.mxu0 0.0
      %5761 = vmatprep.subr.mxu0 0.0
      %5762 = vmatpush2.msra.mxu0 0.0
      %5763 = vmatprep.subr.mxu0 0.0
      %5764 = vmatpush2.msra.mxu0 0.0
      %5765 = vmatprep.subr.mxu0 0.0
      %5766 = vmatpush2.msra.mxu0 0.0
      %5767 = vmatprep.subr.mxu0 0.0
      %5768 = vmatpush2.msra.mxu0 0.0
      %5769 = vmatprep.subr.mxu0 0.0
      %5770 = vmatpush2.msra.mxu0 0.0
      %5771 = vmatprep.mubr.f32.mxu0 0.0
      %v5772 = vand.u32 %v5314, 4294901760
      %5773 = vmatmul.mubr.f32.gmra.mxu0 %v5772
      %v5774 = vpop.f32.mrf.mxu0
      %v5775 = vadd.f32 %v5679, %v5774
      %v5776 = vpop.f32.mrf.mxu0
      %v5777 = vadd.f32 %v5681, %v5776
      %5778 = vdwg.mxu0
      %5779 = vmatprep.subr.mxu0 0.0
      %5780 = vmatpush1.msra.mxu0 0.0
      %5781 = vmatprep.subr.mxu0 0.0
      %5782 = vmatpush1.msra.mxu0 0.0
      %5783 = vmatprep.subr.mxu0 0.0
      %5784 = vmatpush1.msra.mxu0 0.0
      %5785 = vmatprep.subr.mxu0 0.0
      %5786 = vmatpush1.msra.mxu0 0.0
      %5787 = vmatprep.subr.mxu0 0.0
      %5788 = vmatpush1.msra.mxu0 0.0
      %5789 = vmatprep.subr.mxu0 0.0
      %5790 = vmatpush1.msra.mxu0 0.0
      %5791 = vmatprep.subr.mxu0 0.0
      %5792 = vmatpush1.msra.mxu0 0.0
      %5793 = vmatprep.subr.mxu0 0.0
      %5794 = vmatpush1.msra.mxu0 0.0
      %5795 = vmatprep.subr.mxu0 0.0
      %5796 = vmatpush1.msra.mxu0 0.0
      %5797 = vmatprep.subr.mxu0 0.0
      %5798 = vmatpush1.msra.mxu0 0.0
      %5799 = vmatprep.subr.mxu0 0.0
      %5800 = vmatpush1.msra.mxu0 0.0
      %5801 = vmatprep.subr.mxu0 0.0
      %5802 = vmatpush1.msra.mxu0 0.0
      %v5803 = vand.u32 %v5309, 4294901760
      %5804 = vmatprep.subr.mxu0 %v5803
      %v5805 = vand.u32 %v5308, 4294901760
      %5806 = vmatpush1.msra.mxu0 %v5805
      %v5807 = vand.u32 %v5307, 4294901760
      %5808 = vmatprep.subr.mxu0 %v5807
      %v5809 = vand.u32 %v5306, 4294901760
      %5810 = vmatpush1.msra.mxu0 %v5809
      %v5811 = vand.u32 %v5305, 4294901760
      %5812 = vmatprep.subr.mxu0 %v5811
      %v5813 = vand.u32 %v5304, 4294901760
      %5814 = vmatpush1.msra.mxu0 %v5813
      %v5815 = vand.u32 %v5303, 4294901760
      %5816 = vmatprep.subr.mxu0 %v5815
      %v5817 = vand.u32 %v5302, 4294901760
      %5818 = vmatpush1.msra.mxu0 %v5817
      %5819 = vmatprep.subr.mxu0 0.0
      %5820 = vmatpush2.msra.mxu0 0.0
      %5821 = vmatprep.subr.mxu0 0.0
      %5822 = vmatpush2.msra.mxu0 0.0
      %5823 = vmatprep.subr.mxu0 0.0
      %5824 = vmatpush2.msra.mxu0 0.0
      %5825 = vmatprep.subr.mxu0 0.0
      %5826 = vmatpush2.msra.mxu0 0.0
      %5827 = vmatprep.subr.mxu0 0.0
      %5828 = vmatpush2.msra.mxu0 0.0
      %5829 = vmatprep.subr.mxu0 0.0
      %5830 = vmatpush2.msra.mxu0 0.0
      %5831 = vmatprep.subr.mxu0 0.0
      %5832 = vmatpush2.msra.mxu0 0.0
      %5833 = vmatprep.subr.mxu0 0.0
      %5834 = vmatpush2.msra.mxu0 0.0
      %5835 = vmatprep.subr.mxu0 0.0
      %5836 = vmatpush2.msra.mxu0 0.0
      %5837 = vmatprep.subr.mxu0 0.0
      %5838 = vmatpush2.msra.mxu0 0.0
      %5839 = vmatprep.subr.mxu0 0.0
      %5840 = vmatpush2.msra.mxu0 0.0
      %5841 = vmatprep.subr.mxu0 0.0
      %5842 = vmatpush2.msra.mxu0 0.0
      %5843 = vmatprep.subr.mxu0 0.0
      %5844 = vmatpush2.msra.mxu0 0.0
      %5845 = vmatprep.subr.mxu0 0.0
      %5846 = vmatpush2.msra.mxu0 0.0
      %5847 = vmatprep.subr.mxu0 0.0
      %5848 = vmatpush2.msra.mxu0 0.0
      %5849 = vmatprep.subr.mxu0 0.0
      %5850 = vmatpush2.msra.mxu0 0.0
      %5851 = vmatprep.mubr.f32.mxu0 0.0
      %v5852 = vand.u32 %v5314, 4294901760
      %5853 = vmatmul.mubr.f32.gmra.mxu0 %v5852
      %v5854 = vpop.f32.mrf.mxu0
      %v5855 = vadd.f32 %v5775, %v5854
      %v5856 = vpop.f32.mrf.mxu0
      %v5857 = vadd.f32 %v5777, %v5856
      %5858 = vdwg.mxu0
      %v5859 = vadd.f32 %v3055, %v5855
      %v5860 = vadd.f32 %v3056, %v5857
      %5861 = vst [vmem:[%s197] sm:$0xff] %v5859
      %5862 = vst [vmem:[%s197 + $0x8] sm:$0xff] %v5860
      %p5863 = scmp.lt.s32.totalorder %s15, 1
      %s5864 = scalar_select %p5863, %s15, 1
      %s5865 = smul.addr %s5864, 2
      %s5866 = smul.addr %s5865, 8
      %s5867 = scalar_lea.vmem %s4, %s5866
      // Predicated region
      $region37: #{convnext_stage.1} parent=35 // pred_check
        %p5868 = pneg %p122
      $region38: #{convnext_stage.1} parent=35 // pred_check_branch
        %5870 = sbr.rel (%p5868) target = $region40
      $region39: #{convnext_stage.1} parent=35 // pred_region
        _
      $region40: #{convnext_stage.1} parent=35 // pred_fallthru
        _
    $region36: #{convnext_stage.1} parent=5 // pred_fallthru
      _
    %p5871 = scmp.le.s32.totalorder 2, %s10
    // Predicated region
    $region41: #{convnext_stage.1} parent=5 // pred_check
      %p5872 = pneg %p5871
    $region42: #{convnext_stage.1} parent=5 // pred_check_branch
      %5874 = sbr.rel (%p5872) target = $region44
    $region43: #{convnext_stage.1} parent=5 // pred_region
      %s5875 = ssub.s32 %s10, 2
      // Predicated region
      $region45: #{convnext_stage.1} parent=43 // pred_check
        %p5876 = pneg %p128
      $region46: #{convnext_stage.1} parent=43 // pred_check_branch
        %5878 = sbr.rel (%p5876) target = $region48
      $region47: #{convnext_stage.1} parent=43 // pred_region
        %p5879 = scmp.lt.s32.totalorder %s16, 1
        %s5880 = scalar_select %p5879, %s16, 1
        %s5881 = smul.addr %s5880, 2
        %s5882 = smul.addr %s5881, 8
        %s5883 = scalar_lea.vmem %s4, %s5882
      $region48: #{convnext_stage.1} parent=43 // pred_fallthru
        _
    $region44: #{convnext_stage.1} parent=5 // pred_fallthru
      _
  $region6: #{convnext_stage.1} parent=0 // loop_footer
    %s14 = sadd.s32 1, %s10
  $region7: #{convnext_stage.1} parent=0 // loop_footer_branch
    %9 = sbr.rel target = $region3
  $region8: #{convnext_stage.1} parent=0 // loop_exit
    _

</llo_original>
